<compile_context>
chip_gen: v7x
topology: tpu7x:2x2x1
jax: 0.10.0
libtpu: 0.0.40
codegen_flags: <defaults>
</compile_context>

<pallas_src>
import functools

import numpy as np
import jax
import jax.numpy as jnp
from jax.experimental import pallas as pl
from jax.experimental.pallas import tpu as pltpu


# ----------------------------------------------------------------------------
# Trace-time (numpy) construction of 0/1 tap-selection matrices.
# sel[t*Mout + r, c] == 1 iff output position r of tap t reads input flat
# position c; out-of-bounds (padding) taps are all-zero rows -> contribute 0,
# which is exactly conv zero-padding (and is safe for max-pool on ReLU inputs).
# ----------------------------------------------------------------------------
@functools.lru_cache(maxsize=None)
def _tap_select(h, w, k, stride, pad):
    ho = (h + 2 * pad - k) // stride + 1
    wo = (w + 2 * pad - k) // stride + 1
    sel = np.zeros((k * k, ho * wo, h * w), np.float32)
    for ki in range(k):
        for kj in range(k):
            t = ki * k + kj
            for oi in range(ho):
                ii = oi * stride + ki - pad
                if ii < 0 or ii >= h:
                    continue
                for oj in range(wo):
                    jj = oj * stride + kj - pad
                    if jj < 0 or jj >= w:
                        continue
                    sel[t, oi * wo + oj, ii * w + jj] = 1.0
    return sel.reshape(k * k * ho * wo, h * w), ho, wo


# ----------------------------------------------------------------------------
# The single fused kernel: one batch element per grid step.
# ----------------------------------------------------------------------------
def _fused_forward_kernel(p1_ref, w1_ref, b1_ref,
                          sp_ref,
                          s1_ref, wl1_ref, bl1_ref,
                          s2_ref, wl2_ref, bl2_ref,
                          s3_ref, wl3_ref, bl3_ref,
                          sc_ref, wc2_ref, bc2_ref,
                          wf1_ref, bf1_ref, wf2_ref, bf2_ref,
                          out_ref):
    f32, bf16 = jnp.float32, jnp.bfloat16

    def mm_bias(p, w_ref, b_ref, relu=True):
        y = jnp.dot(p, w_ref[...], preferred_element_type=f32) + b_ref[...]
        return jnp.maximum(y, 0.0) if relu else y

    def taps(sel_ref, x, n_taps=9):
        # One selection matmul gathers all taps; returns n_taps [Mout, C] tiles.
        m_out = sel_ref.shape[0] // n_taps
        t = jnp.dot(sel_ref[...], x, preferred_element_type=f32)
        return [t[i * m_out:(i + 1) * m_out, :] for i in range(n_taps)]

    def conv3x3(sel_ref, x, w_ref, b_ref):
        patches = jnp.concatenate(taps(sel_ref, x), axis=1).astype(bf16)
        return mm_bias(patches, w_ref, b_ref)

    # Conv1 (+ folded BN + ReLU); im2col patches were built on the host.
    a = mm_bias(p1_ref[0], w1_ref, b1_ref).astype(bf16)          # [289, 64]

    # MaxPool 3x3 / stride 2 / pad 1 — zero padding taps are safe since a >= 0.
    win = taps(sp_ref, a)
    m = win[0]
    for t in win[1:]:
        m = jnp.maximum(m, t)
    x = m.astype(bf16)                                           # [81, 64]

    # Residual blocks: BN and the 1x1 shortcut are folded into the 3x3 weights.
    x = conv3x3(s1_ref, x, wl1_ref, bl1_ref).astype(bf16)        # [25, 128]
    x = conv3x3(s2_ref, x, wl2_ref, bl2_ref).astype(bf16)        # [25, 256]
    x = conv3x3(s3_ref, x, wl3_ref, bl3_ref).astype(bf16)        # [25, 128]

    # Conv2 (+ folded BN + ReLU).
    y = conv3x3(sc_ref, x, wc2_ref, bc2_ref)                     # [9, 256] f32

    # GlobalAvgPool (3x3 -> 1x1), FC1 + ReLU, Dropout(identity), FC2.
    g = jnp.sum(y, axis=0, keepdims=True) * (1.0 / y.shape[0])   # [1, 256]
    h = mm_bias(g.astype(bf16), wf1_ref, bf1_ref)                # [1, 256]
    logits = jnp.dot(h.astype(bf16), wf2_ref[...],
                     preferred_element_type=f32) + bf2_ref[...]  # [1, nc]
    out_ref[0] = logits.astype(out_ref.dtype)


# ----------------------------------------------------------------------------
# Forward wrapper: tiny host glue (conv1 im2col) + one pallas_call.
# ----------------------------------------------------------------------------
def task3net_forward(x_nchw, params):
    n, c_in, h_in, w_in = x_nchw.shape

    # NCHW -> NHWC (pure reshape when C == 1) + conv1 im2col (tiny input only).
    if c_in == 1:
        x = x_nchw.reshape(n, h_in, w_in, 1)
    else:
        x = jnp.transpose(x_nchw, (0, 2, 3, 1))
    xp = jnp.pad(x, ((0, 0), (2, 2), (2, 2), (0, 0)))
    h1 = (h_in + 4 - 5) // 2 + 1
    w1 = (w_in + 4 - 5) // 2 + 1
    cols = [xp[:, ki:ki + 2 * h1 - 1:2, kj:kj + 2 * w1 - 1:2, :]
            for ki in range(5) for kj in range(5)]
    p1 = jnp.stack(cols, axis=3).reshape(n, h1 * w1, 25 * c_in)
    p1 = p1.astype(jnp.bfloat16)

    # Tap-selection matrices (trace-time constants, exact in bf16).
    sp_np, hp, wp = _tap_select(h1, w1, 3, 2, 1)     # maxpool: 17 -> 9
    s1_np, ha, wa = _tap_select(hp, wp, 3, 2, 1)     # layer1:   9 -> 5
    s23_np, _, _ = _tap_select(ha, wa, 3, 1, 1)      # layer2/3: 5 -> 5
    sc_np, hc, wc = _tap_select(ha, wa, 3, 2, 1)     # conv2:    5 -> 3
    # The model's AvgPool2d(3) + Linear(256) requires a 3x3 conv2 output.
    assert (hc, wc) == (3, 3), (hc, wc)
    sp = jnp.asarray(sp_np, jnp.bfloat16)
    s1 = jnp.asarray(s1_np, jnp.bfloat16)
    s23 = jnp.asarray(s23_np, jnp.bfloat16)
    sc = jnp.asarray(sc_np, jnp.bfloat16)

    w1c, b1c = params["conv1"]
    wl1, bl1 = params["layer1"]
    wl2, bl2 = params["layer2"]
    wl3, bl3 = params["layer3"]
    wc2, bc2 = params["conv2"]
    wf1, bf1 = params["fc1"]
    wf2, bf2 = params["fc2"]
    num_classes = wf2.shape[1]

    const_args = (w1c, b1c, sp, s1, wl1, bl1, s23, wl2, bl2, s23, wl3, bl3,
                  sc, wc2, bc2, wf1, bf1, wf2, bf2)

    def _resident(a):  # full-array block, constant index -> VMEM-resident
        assert a.ndim == 2
        return pl.BlockSpec(a.shape, lambda b: (0, 0))

    in_specs = ([pl.BlockSpec((1, h1 * w1, 25 * c_in), lambda b: (b, 0, 0))]
                + [_resident(a) for a in const_args])

    # Advisory cost estimate for XLA's scheduler.
    c0, c1, c2, c3 = w1c.shape[1], wl1.shape[1], wl2.shape[1], wl3.shape[1]
    macs = n * (
        h1 * w1 * w1c.shape[0] * c0
        + sp.shape[0] * sp.shape[1] * c0
        + s1.shape[0] * s1.shape[1] * c0 + ha * wa * wl1.shape[0] * c1
        + s23.shape[0] * s23.shape[1] * c1 + ha * wa * wl2.shape[0] * c2
        + s23.shape[0] * s23.shape[1] * c2 + ha * wa * wl3.shape[0] * c3
        + sc.shape[0] * sc.shape[1] * c3 + hc * wc * wc2.shape[0] * wc2.shape[1]
        + wf1.shape[0] * wf1.shape[1] + wf2.shape[0] * wf2.shape[1])
    bytes_accessed = int(p1.size * 2
                         + sum(a.size * a.dtype.itemsize for a in const_args)
                         + n * num_classes * 4)

    out = pl.pallas_call(
        _fused_forward_kernel,
        grid=(n,),
        in_specs=in_specs,
        out_specs=pl.BlockSpec((1, 1, num_classes), lambda b: (b, 0, 0)),
        out_shape=jax.ShapeDtypeStruct((n, 1, num_classes), jnp.float32),
        compiler_params=pltpu.CompilerParams(
            dimension_semantics=("parallel",)),
        cost_estimate=pl.CostEstimate(flops=int(2 * macs), transcendentals=0,
                                      bytes_accessed=bytes_accessed),
    )(p1, *const_args)
    return out[:, 0, :]


# ----------------------------------------------------------------------------
# Parameter init: inference-mode BN folded into conv weights; the 1x1 shortcut
# of every Repeated_block folded into the 3x3 center tap; weights stored
# pre-flattened in matmul form ([K, Cout] bf16), biases as [1, Cout] f32.
# ----------------------------------------------------------------------------
def _fold_bn(w, b, gamma, beta, mean, var, eps=1e-5):
    s = gamma / jnp.sqrt(var + eps)
    return w * s, (b - mean) * s + beta


def _init_conv_bn(key, k, cin, cout):
    k1, k2, k3, k4, k5, k6 = jax.random.split(key, 6)
    fan_in = k * k * cin
    w = jax.random.normal(k1, (k, k, cin, cout), jnp.float32) / jnp.sqrt(fan_in)
    b = 0.1 * jax.random.normal(k2, (cout,), jnp.float32)
    gamma = 1.0 + 0.1 * jax.random.normal(k3, (cout,), jnp.float32)
    beta = 0.1 * jax.random.normal(k4, (cout,), jnp.float32)
    mean = 0.1 * jax.random.normal(k5, (cout,), jnp.float32)
    var = jnp.abs(jax.random.normal(k6, (cout,), jnp.float32)) + 0.5
    return _fold_bn(w, b, gamma, beta, mean, var)


def _pack_conv(wb):
    w, b = wb
    kh, kw, cin, cout = w.shape
    return w.reshape(kh * kw * cin, cout).astype(jnp.bfloat16), b.reshape(1, -1)


def _fold_block(main, short):
    # relu(BN_m(conv3x3(x)) + BN_s(conv1x1(x))) == relu(conv3x3(x; W') + b'):
    # with identical stride, the 1x1 (pad=0) shortcut reads exactly the pixel
    # of the 3x3 (pad=1) center tap, so it folds into W'[1, 1, :, :].
    wm, bm = main
    ws, bs = short
    wm = wm.at[1, 1].add(ws[0, 0])
    return _pack_conv((wm, bm + bs))


def _init_fc(key, cin, cout):
    k1, k2 = jax.random.split(key)
    w = jax.random.normal(k1, (cin, cout), jnp.float32) / jnp.sqrt(cin)
    b = 0.1 * jax.random.normal(k2, (cout,), jnp.float32)
    return w.astype(jnp.bfloat16), b.reshape(1, -1)


def init_params(key, num_channels=1, num_classes=2):
    ks = jax.random.split(key, 10)
    return {
        "conv1": _pack_conv(_init_conv_bn(ks[0], 5, num_channels, 64)),
        "layer1": _fold_block(_init_conv_bn(ks[1], 3, 64, 128),
                              _init_conv_bn(ks[2], 1, 64, 128)),
        "layer2": _fold_block(_init_conv_bn(ks[3], 3, 128, 256),
                              _init_conv_bn(ks[4], 1, 128, 256)),
        "layer3": _fold_block(_init_conv_bn(ks[5], 3, 256, 128),
                              _init_conv_bn(ks[6], 1, 256, 128)),
        "conv2": _pack_conv(_init_conv_bn(ks[7], 3, 128, 256)),
        "fc1": _init_fc(ks[8], 256, 256),
        "fc2": _init_fc(ks[9], 256, num_classes),
    }


if __name__ == "__main__":
    key = jax.random.PRNGKey(0)
    k_x, k_p = jax.random.split(key)
    # MFCC-style input: batch=2, 1 channel, 33x33 (so GlobalAvgPool sees 3x3).
    x = jax.random.normal(k_x, (2, 1, 33, 33), jnp.float32)
    params = init_params(k_p, num_channels=1, num_classes=2)

    fwd = jax.jit(task3net_forward)
    out = jax.block_until_ready(fwd(x, params))
    assert out.shape == (2, 2), out.shape
    assert bool(jnp.all(jnp.isfinite(out)))
    print("KERNEL_OK")
</pallas_src>

<mosaic_0001>
module attributes {stable_mosaic.version = 11 : i64} {
  func.func @_fused_forward_kernel(%arg0: i32, %arg1: memref<1x289x25xbf16, #tpu.memory_space<vmem>>, %arg2: memref<25x64xbf16, #tpu.memory_space<vmem>>, %arg3: memref<1x64xf32, #tpu.memory_space<vmem>>, %arg4: memref<729x289xbf16, #tpu.memory_space<vmem>>, %arg5: memref<225x81xbf16, #tpu.memory_space<vmem>>, %arg6: memref<576x128xbf16, #tpu.memory_space<vmem>>, %arg7: memref<1x128xf32, #tpu.memory_space<vmem>>, %arg8: memref<225x25xbf16, #tpu.memory_space<vmem>>, %arg9: memref<1152x256xbf16, #tpu.memory_space<vmem>>, %arg10: memref<1x256xf32, #tpu.memory_space<vmem>>, %arg11: memref<225x25xbf16, #tpu.memory_space<vmem>>, %arg12: memref<2304x128xbf16, #tpu.memory_space<vmem>>, %arg13: memref<1x128xf32, #tpu.memory_space<vmem>>, %arg14: memref<81x25xbf16, #tpu.memory_space<vmem>>, %arg15: memref<1152x256xbf16, #tpu.memory_space<vmem>>, %arg16: memref<1x256xf32, #tpu.memory_space<vmem>>, %arg17: memref<256x256xbf16, #tpu.memory_space<vmem>>, %arg18: memref<1x256xf32, #tpu.memory_space<vmem>>, %arg19: memref<256x2xbf16, #tpu.memory_space<vmem>>, %arg20: memref<1x2xf32, #tpu.memory_space<vmem>>, %arg21: memref<1x1x2xf32, #tpu.memory_space<vmem>>) attributes {dimension_semantics = [#tpu.dimension_semantics<parallel>], iteration_bounds = array<i64: 2>, scalar_prefetch = 0 : i64, scratch_operands = 0 : i64, tpu.core_type = #tpu.core_type<tc>, window_params = [{transform_indices = @transform_0, window_bounds = array<i64: 1, 289, 25>}, {pipeline_mode = #tpu.pipeline_mode<synchronous>, transform_indices = @transform_1, window_bounds = array<i64: 25, 64>}, {pipeline_mode = #tpu.pipeline_mode<synchronous>, transform_indices = @transform_2, window_bounds = array<i64: 1, 64>}, {pipeline_mode = #tpu.pipeline_mode<synchronous>, transform_indices = @transform_3, window_bounds = array<i64: 729, 289>}, {pipeline_mode = #tpu.pipeline_mode<synchronous>, transform_indices = @transform_4, window_bounds = array<i64: 225, 81>}, {pipeline_mode = #tpu.pipeline_mode<synchronous>, transform_indices = @transform_5, window_bounds = array<i64: 576, 128>}, {pipeline_mode = #tpu.pipeline_mode<synchronous>, transform_indices = @transform_6, window_bounds = array<i64: 1, 128>}, {pipeline_mode = #tpu.pipeline_mode<synchronous>, transform_indices = @transform_7, window_bounds = array<i64: 225, 25>}, {pipeline_mode = #tpu.pipeline_mode<synchronous>, transform_indices = @transform_8, window_bounds = array<i64: 1152, 256>}, {pipeline_mode = #tpu.pipeline_mode<synchronous>, transform_indices = @transform_9, window_bounds = array<i64: 1, 256>}, {pipeline_mode = #tpu.pipeline_mode<synchronous>, transform_indices = @transform_10, window_bounds = array<i64: 225, 25>}, {pipeline_mode = #tpu.pipeline_mode<synchronous>, transform_indices = @transform_11, window_bounds = array<i64: 2304, 128>}, {pipeline_mode = #tpu.pipeline_mode<synchronous>, transform_indices = @transform_12, window_bounds = array<i64: 1, 128>}, {pipeline_mode = #tpu.pipeline_mode<synchronous>, transform_indices = @transform_13, window_bounds = array<i64: 81, 25>}, {pipeline_mode = #tpu.pipeline_mode<synchronous>, transform_indices = @transform_14, window_bounds = array<i64: 1152, 256>}, {pipeline_mode = #tpu.pipeline_mode<synchronous>, transform_indices = @transform_15, window_bounds = array<i64: 1, 256>}, {pipeline_mode = #tpu.pipeline_mode<synchronous>, transform_indices = @transform_16, window_bounds = array<i64: 256, 256>}, {pipeline_mode = #tpu.pipeline_mode<synchronous>, transform_indices = @transform_17, window_bounds = array<i64: 1, 256>}, {pipeline_mode = #tpu.pipeline_mode<synchronous>, transform_indices = @transform_18, window_bounds = array<i64: 256, 2>}, {pipeline_mode = #tpu.pipeline_mode<synchronous>, transform_indices = @transform_19, window_bounds = array<i64: 1, 2>}, {transform_indices = @transform_20, window_bounds = array<i64: 1, 1, 2>}]} {
    %c0 = arith.constant 0 : index
    %c0_0 = arith.constant 0 : index
    %c0_1 = arith.constant 0 : index
    %0 = vector.load %arg1[%c0, %c0_0, %c0_1] : memref<1x289x25xbf16, #tpu.memory_space<vmem>>, vector<1x289x25xbf16>
    %1 = vector.shape_cast %0 : vector<1x289x25xbf16> to vector<289x25xbf16>
    %c0_2 = arith.constant 0 : index
    %c0_3 = arith.constant 0 : index
    %2 = vector.load %arg2[%c0_2, %c0_3] : memref<25x64xbf16, #tpu.memory_space<vmem>>, vector<25x64xbf16>
    %cst = arith.constant dense<0.000000e+00> : vector<289x64xf32>
    %3 = tpu.matmul %1, %2, %cst {dimension_numbers = #tpu.dot_dimension_numbers<[1], [0], [0], [1], [0, 0, 1, 1], [], []>} : vector<289x25xbf16>, vector<25x64xbf16>, vector<289x64xf32> -> vector<289x64xf32>
    %c0_4 = arith.constant 0 : index
    %c0_5 = arith.constant 0 : index
    %4 = vector.load %arg3[%c0_4, %c0_5] : memref<1x64xf32, #tpu.memory_space<vmem>>, vector<1x64xf32>
    %5 = vector.broadcast %4 : vector<1x64xf32> to vector<289x64xf32>
    %6 = arith.addf %3, %5 : vector<289x64xf32>
    %cst_6 = arith.constant 0.000000e+00 : f32
    %7 = vector.broadcast %cst_6 : f32 to vector<289x64xf32>
    %8 = arith.maximumf %6, %7 : vector<289x64xf32>
    %9 = arith.truncf %8 : vector<289x64xf32> to vector<289x64xbf16>
    %c0_7 = arith.constant 0 : index
    %c0_8 = arith.constant 0 : index
    %10 = vector.load %arg4[%c0_7, %c0_8] : memref<729x289xbf16, #tpu.memory_space<vmem>>, vector<729x289xbf16>
    %cst_9 = arith.constant dense<0.000000e+00> : vector<729x64xf32>
    %11 = tpu.matmul %10, %9, %cst_9 {dimension_numbers = #tpu.dot_dimension_numbers<[1], [0], [0], [1], [0, 0, 1, 1], [], []>} : vector<729x289xbf16>, vector<289x64xbf16>, vector<729x64xf32> -> vector<729x64xf32>
    %12 = vector.extract_strided_slice %11 {offsets = [0, 0], sizes = [81, 64], strides = [1, 1]} : vector<729x64xf32> to vector<81x64xf32>
    %13 = vector.extract_strided_slice %11 {offsets = [81, 0], sizes = [81, 64], strides = [1, 1]} : vector<729x64xf32> to vector<81x64xf32>
    %14 = vector.extract_strided_slice %11 {offsets = [162, 0], sizes = [81, 64], strides = [1, 1]} : vector<729x64xf32> to vector<81x64xf32>
    %15 = vector.extract_strided_slice %11 {offsets = [243, 0], sizes = [81, 64], strides = [1, 1]} : vector<729x64xf32> to vector<81x64xf32>
    %16 = vector.extract_strided_slice %11 {offsets = [324, 0], sizes = [81, 64], strides = [1, 1]} : vector<729x64xf32> to vector<81x64xf32>
    %17 = vector.extract_strided_slice %11 {offsets = [405, 0], sizes = [81, 64], strides = [1, 1]} : vector<729x64xf32> to vector<81x64xf32>
    %18 = vector.extract_strided_slice %11 {offsets = [486, 0], sizes = [81, 64], strides = [1, 1]} : vector<729x64xf32> to vector<81x64xf32>
    %19 = vector.extract_strided_slice %11 {offsets = [567, 0], sizes = [81, 64], strides = [1, 1]} : vector<729x64xf32> to vector<81x64xf32>
    %20 = vector.extract_strided_slice %11 {offsets = [648, 0], sizes = [81, 64], strides = [1, 1]} : vector<729x64xf32> to vector<81x64xf32>
    %21 = arith.maximumf %12, %13 : vector<81x64xf32>
    %22 = arith.maximumf %21, %14 : vector<81x64xf32>
    %23 = arith.maximumf %22, %15 : vector<81x64xf32>
    %24 = arith.maximumf %23, %16 : vector<81x64xf32>
    %25 = arith.maximumf %24, %17 : vector<81x64xf32>
    %26 = arith.maximumf %25, %18 : vector<81x64xf32>
    %27 = arith.maximumf %26, %19 : vector<81x64xf32>
    %28 = arith.maximumf %27, %20 : vector<81x64xf32>
    %29 = arith.truncf %28 : vector<81x64xf32> to vector<81x64xbf16>
    %c0_10 = arith.constant 0 : index
    %c0_11 = arith.constant 0 : index
    %30 = vector.load %arg5[%c0_10, %c0_11] : memref<225x81xbf16, #tpu.memory_space<vmem>>, vector<225x81xbf16>
    %cst_12 = arith.constant dense<0.000000e+00> : vector<225x64xf32>
    %31 = tpu.matmul %30, %29, %cst_12 {dimension_numbers = #tpu.dot_dimension_numbers<[1], [0], [0], [1], [0, 0, 1, 1], [], []>} : vector<225x81xbf16>, vector<81x64xbf16>, vector<225x64xf32> -> vector<225x64xf32>
    %32 = vector.extract_strided_slice %31 {offsets = [0, 0], sizes = [25, 64], strides = [1, 1]} : vector<225x64xf32> to vector<25x64xf32>
    %33 = vector.extract_strided_slice %31 {offsets = [25, 0], sizes = [25, 64], strides = [1, 1]} : vector<225x64xf32> to vector<25x64xf32>
    %34 = vector.extract_strided_slice %31 {offsets = [50, 0], sizes = [25, 64], strides = [1, 1]} : vector<225x64xf32> to vector<25x64xf32>
    %35 = vector.extract_strided_slice %31 {offsets = [75, 0], sizes = [25, 64], strides = [1, 1]} : vector<225x64xf32> to vector<25x64xf32>
    %36 = vector.extract_strided_slice %31 {offsets = [100, 0], sizes = [25, 64], strides = [1, 1]} : vector<225x64xf32> to vector<25x64xf32>
    %37 = vector.extract_strided_slice %31 {offsets = [125, 0], sizes = [25, 64], strides = [1, 1]} : vector<225x64xf32> to vector<25x64xf32>
    %38 = vector.extract_strided_slice %31 {offsets = [150, 0], sizes = [25, 64], strides = [1, 1]} : vector<225x64xf32> to vector<25x64xf32>
    %39 = vector.extract_strided_slice %31 {offsets = [175, 0], sizes = [25, 64], strides = [1, 1]} : vector<225x64xf32> to vector<25x64xf32>
    %40 = vector.extract_strided_slice %31 {offsets = [200, 0], sizes = [25, 64], strides = [1, 1]} : vector<225x64xf32> to vector<25x64xf32>
    %41 = tpu.concatenate %32, %33, %34, %35, %36, %37, %38, %39, %40 in 1 : vector<25x64xf32>, vector<25x64xf32>, vector<25x64xf32>, vector<25x64xf32>, vector<25x64xf32>, vector<25x64xf32>, vector<25x64xf32>, vector<25x64xf32>, vector<25x64xf32> -> vector<25x576xf32>
    %42 = arith.truncf %41 : vector<25x576xf32> to vector<25x576xbf16>
    %c0_13 = arith.constant 0 : index
    %c0_14 = arith.constant 0 : index
    %43 = vector.load %arg6[%c0_13, %c0_14] : memref<576x128xbf16, #tpu.memory_space<vmem>>, vector<576x128xbf16>
    %cst_15 = arith.constant dense<0.000000e+00> : vector<25x128xf32>
    %44 = tpu.matmul %42, %43, %cst_15 {dimension_numbers = #tpu.dot_dimension_numbers<[1], [0], [0], [1], [0, 0, 1, 1], [], []>} : vector<25x576xbf16>, vector<576x128xbf16>, vector<25x128xf32> -> vector<25x128xf32>
    %c0_16 = arith.constant 0 : index
    %c0_17 = arith.constant 0 : index
    %45 = vector.load %arg7[%c0_16, %c0_17] : memref<1x128xf32, #tpu.memory_space<vmem>>, vector<1x128xf32>
    %46 = vector.broadcast %45 : vector<1x128xf32> to vector<25x128xf32>
    %47 = arith.addf %44, %46 : vector<25x128xf32>
    %cst_18 = arith.constant 0.000000e+00 : f32
    %48 = vector.broadcast %cst_18 : f32 to vector<25x128xf32>
    %49 = arith.maximumf %47, %48 : vector<25x128xf32>
    %50 = arith.truncf %49 : vector<25x128xf32> to vector<25x128xbf16>
    %c0_19 = arith.constant 0 : index
    %c0_20 = arith.constant 0 : index
    %51 = vector.load %arg8[%c0_19, %c0_20] : memref<225x25xbf16, #tpu.memory_space<vmem>>, vector<225x25xbf16>
    %cst_21 = arith.constant dense<0.000000e+00> : vector<225x128xf32>
    %52 = tpu.matmul %51, %50, %cst_21 {dimension_numbers = #tpu.dot_dimension_numbers<[1], [0], [0], [1], [0, 0, 1, 1], [], []>} : vector<225x25xbf16>, vector<25x128xbf16>, vector<225x128xf32> -> vector<225x128xf32>
    %53 = vector.extract_strided_slice %52 {offsets = [0, 0], sizes = [25, 128], strides = [1, 1]} : vector<225x128xf32> to vector<25x128xf32>
    %54 = vector.extract_strided_slice %52 {offsets = [25, 0], sizes = [25, 128], strides = [1, 1]} : vector<225x128xf32> to vector<25x128xf32>
    %55 = vector.extract_strided_slice %52 {offsets = [50, 0], sizes = [25, 128], strides = [1, 1]} : vector<225x128xf32> to vector<25x128xf32>
    %56 = vector.extract_strided_slice %52 {offsets = [75, 0], sizes = [25, 128], strides = [1, 1]} : vector<225x128xf32> to vector<25x128xf32>
    %57 = vector.extract_strided_slice %52 {offsets = [100, 0], sizes = [25, 128], strides = [1, 1]} : vector<225x128xf32> to vector<25x128xf32>
    %58 = vector.extract_strided_slice %52 {offsets = [125, 0], sizes = [25, 128], strides = [1, 1]} : vector<225x128xf32> to vector<25x128xf32>
    %59 = vector.extract_strided_slice %52 {offsets = [150, 0], sizes = [25, 128], strides = [1, 1]} : vector<225x128xf32> to vector<25x128xf32>
    %60 = vector.extract_strided_slice %52 {offsets = [175, 0], sizes = [25, 128], strides = [1, 1]} : vector<225x128xf32> to vector<25x128xf32>
    %61 = vector.extract_strided_slice %52 {offsets = [200, 0], sizes = [25, 128], strides = [1, 1]} : vector<225x128xf32> to vector<25x128xf32>
    %62 = tpu.concatenate %53, %54, %55, %56, %57, %58, %59, %60, %61 in 1 : vector<25x128xf32>, vector<25x128xf32>, vector<25x128xf32>, vector<25x128xf32>, vector<25x128xf32>, vector<25x128xf32>, vector<25x128xf32>, vector<25x128xf32>, vector<25x128xf32> -> vector<25x1152xf32>
    %63 = arith.truncf %62 : vector<25x1152xf32> to vector<25x1152xbf16>
    %c0_22 = arith.constant 0 : index
    %c0_23 = arith.constant 0 : index
    %64 = vector.load %arg9[%c0_22, %c0_23] : memref<1152x256xbf16, #tpu.memory_space<vmem>>, vector<1152x256xbf16>
    %cst_24 = arith.constant dense<0.000000e+00> : vector<25x256xf32>
    %65 = tpu.matmul %63, %64, %cst_24 {dimension_numbers = #tpu.dot_dimension_numbers<[1], [0], [0], [1], [0, 0, 1, 1], [], []>} : vector<25x1152xbf16>, vector<1152x256xbf16>, vector<25x256xf32> -> vector<25x256xf32>
    %c0_25 = arith.constant 0 : index
    %c0_26 = arith.constant 0 : index
    %66 = vector.load %arg10[%c0_25, %c0_26] : memref<1x256xf32, #tpu.memory_space<vmem>>, vector<1x256xf32>
    %67 = vector.broadcast %66 : vector<1x256xf32> to vector<25x256xf32>
    %68 = arith.addf %65, %67 : vector<25x256xf32>
    %cst_27 = arith.constant 0.000000e+00 : f32
    %69 = vector.broadcast %cst_27 : f32 to vector<25x256xf32>
    %70 = arith.maximumf %68, %69 : vector<25x256xf32>
    %71 = arith.truncf %70 : vector<25x256xf32> to vector<25x256xbf16>
    %c0_28 = arith.constant 0 : index
    %c0_29 = arith.constant 0 : index
    %72 = vector.load %arg11[%c0_28, %c0_29] : memref<225x25xbf16, #tpu.memory_space<vmem>>, vector<225x25xbf16>
    %cst_30 = arith.constant dense<0.000000e+00> : vector<225x256xf32>
    %73 = tpu.matmul %72, %71, %cst_30 {dimension_numbers = #tpu.dot_dimension_numbers<[1], [0], [0], [1], [0, 0, 1, 1], [], []>} : vector<225x25xbf16>, vector<25x256xbf16>, vector<225x256xf32> -> vector<225x256xf32>
    %74 = vector.extract_strided_slice %73 {offsets = [0, 0], sizes = [25, 256], strides = [1, 1]} : vector<225x256xf32> to vector<25x256xf32>
    %75 = vector.extract_strided_slice %73 {offsets = [25, 0], sizes = [25, 256], strides = [1, 1]} : vector<225x256xf32> to vector<25x256xf32>
    %76 = vector.extract_strided_slice %73 {offsets = [50, 0], sizes = [25, 256], strides = [1, 1]} : vector<225x256xf32> to vector<25x256xf32>
    %77 = vector.extract_strided_slice %73 {offsets = [75, 0], sizes = [25, 256], strides = [1, 1]} : vector<225x256xf32> to vector<25x256xf32>
    %78 = vector.extract_strided_slice %73 {offsets = [100, 0], sizes = [25, 256], strides = [1, 1]} : vector<225x256xf32> to vector<25x256xf32>
    %79 = vector.extract_strided_slice %73 {offsets = [125, 0], sizes = [25, 256], strides = [1, 1]} : vector<225x256xf32> to vector<25x256xf32>
    %80 = vector.extract_strided_slice %73 {offsets = [150, 0], sizes = [25, 256], strides = [1, 1]} : vector<225x256xf32> to vector<25x256xf32>
    %81 = vector.extract_strided_slice %73 {offsets = [175, 0], sizes = [25, 256], strides = [1, 1]} : vector<225x256xf32> to vector<25x256xf32>
    %82 = vector.extract_strided_slice %73 {offsets = [200, 0], sizes = [25, 256], strides = [1, 1]} : vector<225x256xf32> to vector<25x256xf32>
    %83 = tpu.concatenate %74, %75, %76, %77, %78, %79, %80, %81, %82 in 1 : vector<25x256xf32>, vector<25x256xf32>, vector<25x256xf32>, vector<25x256xf32>, vector<25x256xf32>, vector<25x256xf32>, vector<25x256xf32>, vector<25x256xf32>, vector<25x256xf32> -> vector<25x2304xf32>
    %84 = arith.truncf %83 : vector<25x2304xf32> to vector<25x2304xbf16>
    %c0_31 = arith.constant 0 : index
    %c0_32 = arith.constant 0 : index
    %85 = vector.load %arg12[%c0_31, %c0_32] : memref<2304x128xbf16, #tpu.memory_space<vmem>>, vector<2304x128xbf16>
    %cst_33 = arith.constant dense<0.000000e+00> : vector<25x128xf32>
    %86 = tpu.matmul %84, %85, %cst_33 {dimension_numbers = #tpu.dot_dimension_numbers<[1], [0], [0], [1], [0, 0, 1, 1], [], []>} : vector<25x2304xbf16>, vector<2304x128xbf16>, vector<25x128xf32> -> vector<25x128xf32>
    %c0_34 = arith.constant 0 : index
    %c0_35 = arith.constant 0 : index
    %87 = vector.load %arg13[%c0_34, %c0_35] : memref<1x128xf32, #tpu.memory_space<vmem>>, vector<1x128xf32>
    %88 = vector.broadcast %87 : vector<1x128xf32> to vector<25x128xf32>
    %89 = arith.addf %86, %88 : vector<25x128xf32>
    %cst_36 = arith.constant 0.000000e+00 : f32
    %90 = vector.broadcast %cst_36 : f32 to vector<25x128xf32>
    %91 = arith.maximumf %89, %90 : vector<25x128xf32>
    %92 = arith.truncf %91 : vector<25x128xf32> to vector<25x128xbf16>
    %c0_37 = arith.constant 0 : index
    %c0_38 = arith.constant 0 : index
    %93 = vector.load %arg14[%c0_37, %c0_38] : memref<81x25xbf16, #tpu.memory_space<vmem>>, vector<81x25xbf16>
    %cst_39 = arith.constant dense<0.000000e+00> : vector<81x128xf32>
    %94 = tpu.matmul %93, %92, %cst_39 {dimension_numbers = #tpu.dot_dimension_numbers<[1], [0], [0], [1], [0, 0, 1, 1], [], []>} : vector<81x25xbf16>, vector<25x128xbf16>, vector<81x128xf32> -> vector<81x128xf32>
    %95 = vector.extract_strided_slice %94 {offsets = [0, 0], sizes = [9, 128], strides = [1, 1]} : vector<81x128xf32> to vector<9x128xf32>
    %96 = vector.extract_strided_slice %94 {offsets = [9, 0], sizes = [9, 128], strides = [1, 1]} : vector<81x128xf32> to vector<9x128xf32>
    %97 = vector.extract_strided_slice %94 {offsets = [18, 0], sizes = [9, 128], strides = [1, 1]} : vector<81x128xf32> to vector<9x128xf32>
    %98 = vector.extract_strided_slice %94 {offsets = [27, 0], sizes = [9, 128], strides = [1, 1]} : vector<81x128xf32> to vector<9x128xf32>
    %99 = vector.extract_strided_slice %94 {offsets = [36, 0], sizes = [9, 128], strides = [1, 1]} : vector<81x128xf32> to vector<9x128xf32>
    %100 = vector.extract_strided_slice %94 {offsets = [45, 0], sizes = [9, 128], strides = [1, 1]} : vector<81x128xf32> to vector<9x128xf32>
    %101 = vector.extract_strided_slice %94 {offsets = [54, 0], sizes = [9, 128], strides = [1, 1]} : vector<81x128xf32> to vector<9x128xf32>
    %102 = vector.extract_strided_slice %94 {offsets = [63, 0], sizes = [9, 128], strides = [1, 1]} : vector<81x128xf32> to vector<9x128xf32>
    %103 = vector.extract_strided_slice %94 {offsets = [72, 0], sizes = [9, 128], strides = [1, 1]} : vector<81x128xf32> to vector<9x128xf32>
    %104 = tpu.concatenate %95, %96, %97, %98, %99, %100, %101, %102, %103 in 1 : vector<9x128xf32>, vector<9x128xf32>, vector<9x128xf32>, vector<9x128xf32>, vector<9x128xf32>, vector<9x128xf32>, vector<9x128xf32>, vector<9x128xf32>, vector<9x128xf32> -> vector<9x1152xf32>
    %105 = arith.truncf %104 : vector<9x1152xf32> to vector<9x1152xbf16>
    %c0_40 = arith.constant 0 : index
    %c0_41 = arith.constant 0 : index
    %106 = vector.load %arg15[%c0_40, %c0_41] : memref<1152x256xbf16, #tpu.memory_space<vmem>>, vector<1152x256xbf16>
    %cst_42 = arith.constant dense<0.000000e+00> : vector<9x256xf32>
    %107 = tpu.matmul %105, %106, %cst_42 {dimension_numbers = #tpu.dot_dimension_numbers<[1], [0], [0], [1], [0, 0, 1, 1], [], []>} : vector<9x1152xbf16>, vector<1152x256xbf16>, vector<9x256xf32> -> vector<9x256xf32>
    %c0_43 = arith.constant 0 : index
    %c0_44 = arith.constant 0 : index
    %108 = vector.load %arg16[%c0_43, %c0_44] : memref<1x256xf32, #tpu.memory_space<vmem>>, vector<1x256xf32>
    %109 = vector.broadcast %108 : vector<1x256xf32> to vector<9x256xf32>
    %110 = arith.addf %107, %109 : vector<9x256xf32>
    %cst_45 = arith.constant 0.000000e+00 : f32
    %111 = vector.broadcast %cst_45 : f32 to vector<9x256xf32>
    %112 = arith.maximumf %110, %111 : vector<9x256xf32>
    %cst_46 = arith.constant dense<0.000000e+00> : vector<256xf32>
    %113 = vector.multi_reduction <add>, %112, %cst_46 [0] : vector<9x256xf32> to vector<256xf32>
    %114 = vector.shape_cast %113 : vector<256xf32> to vector<1x256xf32>
    %cst_47 = arith.constant 0.111111112 : f32
    %115 = vector.broadcast %cst_47 : f32 to vector<1x256xf32>
    %116 = arith.mulf %114, %115 : vector<1x256xf32>
    %117 = arith.truncf %116 : vector<1x256xf32> to vector<1x256xbf16>
    %c0_48 = arith.constant 0 : index
    %c0_49 = arith.constant 0 : index
    %118 = vector.load %arg17[%c0_48, %c0_49] : memref<256x256xbf16, #tpu.memory_space<vmem>>, vector<256x256xbf16>
    %cst_50 = arith.constant dense<0.000000e+00> : vector<1x256xf32>
    %119 = tpu.matmul %117, %118, %cst_50 {dimension_numbers = #tpu.dot_dimension_numbers<[1], [0], [0], [1], [0, 0, 1, 1], [], []>} : vector<1x256xbf16>, vector<256x256xbf16>, vector<1x256xf32> -> vector<1x256xf32>
    %c0_51 = arith.constant 0 : index
    %c0_52 = arith.constant 0 : index
    %120 = vector.load %arg18[%c0_51, %c0_52] : memref<1x256xf32, #tpu.memory_space<vmem>>, vector<1x256xf32>
    %121 = arith.addf %119, %120 : vector<1x256xf32>
    %cst_53 = arith.constant 0.000000e+00 : f32
    %122 = vector.broadcast %cst_53 : f32 to vector<1x256xf32>
    %123 = arith.maximumf %121, %122 : vector<1x256xf32>
    %124 = arith.truncf %123 : vector<1x256xf32> to vector<1x256xbf16>
    %c0_54 = arith.constant 0 : index
    %c0_55 = arith.constant 0 : index
    %125 = vector.load %arg19[%c0_54, %c0_55] : memref<256x2xbf16, #tpu.memory_space<vmem>>, vector<256x2xbf16>
    %cst_56 = arith.constant dense<0.000000e+00> : vector<1x2xf32>
    %126 = tpu.matmul %124, %125, %cst_56 {dimension_numbers = #tpu.dot_dimension_numbers<[1], [0], [0], [1], [0, 0, 1, 1], [], []>} : vector<1x256xbf16>, vector<256x2xbf16>, vector<1x2xf32> -> vector<1x2xf32>
    %c0_57 = arith.constant 0 : index
    %c0_58 = arith.constant 0 : index
    %127 = vector.load %arg20[%c0_57, %c0_58] : memref<1x2xf32, #tpu.memory_space<vmem>>, vector<1x2xf32>
    %128 = arith.addf %126, %127 : vector<1x2xf32>
    %c0_59 = arith.constant 0 : index
    %c0_60 = arith.constant 0 : index
    %c0_61 = arith.constant 0 : index
    %129 = vector.load %arg21[%c0_59, %c0_60, %c0_61] : memref<1x1x2xf32, #tpu.memory_space<vmem>>, vector<1x1x2xf32>
    %130 = vector.shape_cast %129 : vector<1x1x2xf32> to vector<1x2xf32>
    %131 = vector.shape_cast %128 : vector<1x2xf32> to vector<1x1x2xf32>
    tpu.vector_store %arg21[%c0_59, %c0_60, %c0_61], %131 {strides = array<i32>} : memref<1x1x2xf32, #tpu.memory_space<vmem>>, vector<1x1x2xf32>,
    return
  }
  func.func @transform_0(%arg0: i32) -> (i32, i32, i32) {
    %c0_i32 = arith.constant 0 : i32
    %c0_i32_0 = arith.constant 0 : i32
    %c0_i32_1 = arith.constant 0 : i32
    return %arg0, %c0_i32, %c0_i32_0 : i32, i32, i32
  }
  func.func @transform_1(%arg0: i32) -> (i32, i32) {
    %c0_i32 = arith.constant 0 : i32
    %c0_i32_0 = arith.constant 0 : i32
    %c0_i32_1 = arith.constant 0 : i32
    return %c0_i32, %c0_i32_0 : i32, i32
  }
  func.func @transform_2(%arg0: i32) -> (i32, i32) {
    %c0_i32 = arith.constant 0 : i32
    %c0_i32_0 = arith.constant 0 : i32
    %c0_i32_1 = arith.constant 0 : i32
    return %c0_i32, %c0_i32_0 : i32, i32
  }
  func.func @transform_3(%arg0: i32) -> (i32, i32) {
    %c0_i32 = arith.constant 0 : i32
    %c0_i32_0 = arith.constant 0 : i32
    %c0_i32_1 = arith.constant 0 : i32
    return %c0_i32, %c0_i32_0 : i32, i32
  }
  func.func @transform_4(%arg0: i32) -> (i32, i32) {
    %c0_i32 = arith.constant 0 : i32
    %c0_i32_0 = arith.constant 0 : i32
    %c0_i32_1 = arith.constant 0 : i32
    return %c0_i32, %c0_i32_0 : i32, i32
  }
  func.func @transform_5(%arg0: i32) -> (i32, i32) {
    %c0_i32 = arith.constant 0 : i32
    %c0_i32_0 = arith.constant 0 : i32
    %c0_i32_1 = arith.constant 0 : i32
    return %c0_i32, %c0_i32_0 : i32, i32
  }
  func.func @transform_6(%arg0: i32) -> (i32, i32) {
    %c0_i32 = arith.constant 0 : i32
    %c0_i32_0 = arith.constant 0 : i32
    %c0_i32_1 = arith.constant 0 : i32
    return %c0_i32, %c0_i32_0 : i32, i32
  }
  func.func @transform_7(%arg0: i32) -> (i32, i32) {
    %c0_i32 = arith.constant 0 : i32
    %c0_i32_0 = arith.constant 0 : i32
    %c0_i32_1 = arith.constant 0 : i32
    return %c0_i32, %c0_i32_0 : i32, i32
  }
  func.func @transform_8(%arg0: i32) -> (i32, i32) {
    %c0_i32 = arith.constant 0 : i32
    %c0_i32_0 = arith.constant 0 : i32
    %c0_i32_1 = arith.constant 0 : i32
    return %c0_i32, %c0_i32_0 : i32, i32
  }
  func.func @transform_9(%arg0: i32) -> (i32, i32) {
    %c0_i32 = arith.constant 0 : i32
    %c0_i32_0 = arith.constant 0 : i32
    %c0_i32_1 = arith.constant 0 : i32
    return %c0_i32, %c0_i32_0 : i32, i32
  }
  func.func @transform_10(%arg0: i32) -> (i32, i32) {
    %c0_i32 = arith.constant 0 : i32
    %c0_i32_0 = arith.constant 0 : i32
    %c0_i32_1 = arith.constant 0 : i32
    return %c0_i32, %c0_i32_0 : i32, i32
  }
  func.func @transform_11(%arg0: i32) -> (i32, i32) {
    %c0_i32 = arith.constant 0 : i32
    %c0_i32_0 = arith.constant 0 : i32
    %c0_i32_1 = arith.constant 0 : i32
    return %c0_i32, %c0_i32_0 : i32, i32
  }
  func.func @transform_12(%arg0: i32) -> (i32, i32) {
    %c0_i32 = arith.constant 0 : i32
    %c0_i32_0 = arith.constant 0 : i32
    %c0_i32_1 = arith.constant 0 : i32
    return %c0_i32, %c0_i32_0 : i32, i32
  }
  func.func @transform_13(%arg0: i32) -> (i32, i32) {
    %c0_i32 = arith.constant 0 : i32
    %c0_i32_0 = arith.constant 0 : i32
    %c0_i32_1 = arith.constant 0 : i32
    return %c0_i32, %c0_i32_0 : i32, i32
  }
  func.func @transform_14(%arg0: i32) -> (i32, i32) {
    %c0_i32 = arith.constant 0 : i32
    %c0_i32_0 = arith.constant 0 : i32
    %c0_i32_1 = arith.constant 0 : i32
    return %c0_i32, %c0_i32_0 : i32, i32
  }
  func.func @transform_15(%arg0: i32) -> (i32, i32) {
    %c0_i32 = arith.constant 0 : i32
    %c0_i32_0 = arith.constant 0 : i32
    %c0_i32_1 = arith.constant 0 : i32
    return %c0_i32, %c0_i32_0 : i32, i32
  }
  func.func @transform_16(%arg0: i32) -> (i32, i32) {
    %c0_i32 = arith.constant 0 : i32
    %c0_i32_0 = arith.constant 0 : i32
    %c0_i32_1 = arith.constant 0 : i32
    return %c0_i32, %c0_i32_0 : i32, i32
  }
  func.func @transform_17(%arg0: i32) -> (i32, i32) {
    %c0_i32 = arith.constant 0 : i32
    %c0_i32_0 = arith.constant 0 : i32
    %c0_i32_1 = arith.constant 0 : i32
    return %c0_i32, %c0_i32_0 : i32, i32
  }
  func.func @transform_18(%arg0: i32) -> (i32, i32) {
    %c0_i32 = arith.constant 0 : i32
    %c0_i32_0 = arith.constant 0 : i32
    %c0_i32_1 = arith.constant 0 : i32
    return %c0_i32, %c0_i32_0 : i32, i32
  }
  func.func @transform_19(%arg0: i32) -> (i32, i32) {
    %c0_i32 = arith.constant 0 : i32
    %c0_i32_0 = arith.constant 0 : i32
    %c0_i32_1 = arith.constant 0 : i32
    return %c0_i32, %c0_i32_0 : i32, i32
  }
  func.func @transform_20(%arg0: i32) -> (i32, i32, i32) {
    %c0_i32 = arith.constant 0 : i32
    %c0_i32_0 = arith.constant 0 : i32
    %c0_i32_1 = arith.constant 0 : i32
    return %arg0, %c0_i32, %c0_i32_0 : i32, i32, i32
  }
}

</mosaic_0001>

<llo_original>
// kernel: task3net_forward.1
$region0: #{task3net_forward.1}
  #allocation0 [shape = 'u32[]', space=smem, size = 0x4, offset = 0x4, fixed_abs, tag = 'smem constant byte address 0x4 - core index']
  #allocation1 [shape = 'u32[144,128]{1,0:T(1,128)}', space=vmem, size = 0x12000, scoped, tag = 'internal scratch']
  %s0 = inlined_call_operand.vmem [shape: bf16[2,289,25], index: 0, kind: input, shape index: {}]
  %s1 = inlined_call_operand.hbm [shape: bf16[25,64], index: 1, kind: input, shape index: {}]
  %s2 = inlined_call_operand.vmem [shape: f32[1,64], index: 2, kind: input, shape index: {}]
  %s3 = inlined_call_operand.vmem [shape: bf16[729,289], index: 3, kind: input, shape index: {}]
  %s4 = inlined_call_operand.hbm [shape: bf16[225,81], index: 4, kind: input, shape index: {}]
  %s5 = inlined_call_operand.hbm [shape: bf16[576,128], index: 5, kind: input, shape index: {}]
  %s6 = inlined_call_operand.vmem [shape: f32[1,128], index: 6, kind: input, shape index: {}]
  %s7 = inlined_call_operand.vmem [shape: bf16[225,25], index: 7, kind: input, shape index: {}, may-alias: {7,10}]
  %s8 = inlined_call_operand.vmem [shape: bf16[1152,256], index: 8, kind: input, shape index: {}]
  %s9 = inlined_call_operand.vmem [shape: f32[1,256], index: 9, kind: input, shape index: {}]
  %s10 = inlined_call_operand.vmem [shape: bf16[225,25], index: 10, kind: input, shape index: {}, may-alias: {7,10}]
  %s11 = inlined_call_operand.vmem [shape: bf16[2304,128], index: 11, kind: input, shape index: {}]
  %s12 = inlined_call_operand.vmem [shape: f32[1,128], index: 12, kind: input, shape index: {}]
  %s13 = inlined_call_operand.hbm [shape: bf16[81,25], index: 13, kind: input, shape index: {}]
  %s14 = inlined_call_operand.vmem [shape: bf16[1152,256], index: 14, kind: input, shape index: {}]
  %s15 = inlined_call_operand.vmem [shape: f32[1,256], index: 15, kind: input, shape index: {}]
  %s16 = inlined_call_operand.hbm [shape: bf16[256,256], index: 16, kind: input, shape index: {}]
  %s17 = inlined_call_operand.vmem [shape: f32[1,256], index: 17, kind: input, shape index: {}]
  %s18 = inlined_call_operand.vmem [shape: bf16[256,2], index: 18, kind: input, shape index: {}]
  %s19 = inlined_call_operand.vmem [shape: f32[1,2], index: 19, kind: input, shape index: {}]
  %s20 = inlined_call_operand.hbm [shape: f32[2,1,2], index: 20, kind: output, shape index: {}]
  %s21 = sld [smem:[#allocation0]]
  $region133: #{task3net_forward.1} parent=0
    _
  %s23 = ssub.s32 1, %s21
  %s24 = scalar_select 0, %s23, %s21
  $region1: #{task3net_forward.1} parent=0
    #allocation2 [shape = 'u8[8192]{0}', space=vmem, size = 0x2000, scoped, tag = 'input window, operand 1, single buffered']
    #allocation3 [shape = 's32[2]{0}', space=sflag, size = 0x8, scoped, tag = 'scoped memory for task3net_forward.1']
    #allocation4 [shape = 's32[2]{0}', space=sflag, size = 0x8, scoped, tag = 'scoped memory for task3net_forward.1']
    #allocation5 [shape = 'u8[59392]{0}', space=vmem, size = 0xe800, scoped, tag = 'input window, operand 4, single buffered']
    #allocation6 [shape = 's32[1]{0}', space=sflag, size = 0x4, scoped, tag = 'scoped memory for task3net_forward.1']
    #allocation7 [shape = 'u8[147456]{0}', space=vmem, size = 0x24000, scoped, tag = 'input window, operand 5, single buffered']
    #allocation8 [shape = 'u8[22528]{0}', space=vmem, size = 0x5800, scoped, tag = 'input window, operand 13, single buffered']
    #allocation9 [shape = 's32[1]{0}', space=sflag, size = 0x4, scoped, tag = 'scoped memory for task3net_forward.1']
    #allocation10 [shape = 'u8[131072]{0}', space=vmem, size = 0x20000, scoped, tag = 'input window, operand 16, single buffered']
    #allocation11 [shape = 'u8[1024]{0}', space=vmem, size = 0x400, scoped, tag = 'output window, operand 0']
    %25 = vsyncpa [#allocation3], 0
    %26 = vsyncpa [#allocation6], 0
    %27 = vsyncpa [#allocation9], 0
    %28 = vsyncpa [#allocation4], 0
    %s29 = scalar_lea.sflag [#allocation4], 1
    %30 = vsyncpa %s29, 0
    loop: start=0, step=1, limit=4
    $region2: #{task3net_forward.1} parent=1 // loop_pre_header
      _
    $region3: #{task3net_forward.1} parent=1 // loop_header
      %s32 = sphi 0, %s36
      %p33 = scmp.ge.s32.totalorder %s32, 4
      %s42 = sphi 0, %s44
      %s45 = sphi 0, %s42
      %s46 = sphi 0, %s45
      %s62 = sphi 0, %s46
      %s66 = sphi 0, %s66
      %s68 = sphi 0, %s66
      %s69 = sphi 0, %s68
      %s83 = sphi 0, %s69
      %s87 = sphi 0, %s87
      %s89 = sphi 0, %s87
      %s90 = sphi 0, %s89
      %s104 = sphi 0, %s90
      %s108 = sphi 0, %s108
      %s110 = sphi 0, %s108
      %s111 = sphi 0, %s110
      %s125 = sphi 0, %s111
      %s129 = sphi 0, %s129
      %s131 = sphi 0, %s129
      %s132 = sphi 0, %s131
      %s146 = sphi 0, %s132
      %s150 = sphi 0, %s150
      %s152 = sphi 0, %s150
      %s153 = sphi 0, %s152
      %s167 = sphi 0, %s153
      %s171 = sphi 0, %s171
      %s173 = sphi 0, %s171
      %s174 = sphi 0, %s173
      %s188 = sphi 0, %s174
      %s192 = sphi 0, %s192
      %s194 = sphi 0, %s192
      %s195 = sphi 0, %s194
      %s209 = sphi 0, %s195
      %s213 = sphi 0, %s213
      %s215 = sphi 0, %s213
      %s216 = sphi 0, %s215
      %s230 = sphi 0, %s216
      %s234 = sphi 0, %s234
      %s236 = sphi 0, %s234
      %s237 = sphi 0, %s236
      %s251 = sphi 0, %s237
      %s255 = sphi 0, %s255
      %s257 = sphi 0, %s255
      %s258 = sphi 0, %s257
      %s272 = sphi 0, %s258
      %s276 = sphi 0, %s276
      %s278 = sphi 0, %s276
      %s279 = sphi 0, %s278
      %s293 = sphi 0, %s279
      %s297 = sphi 0, %s297
      %s299 = sphi 0, %s297
      %s300 = sphi 0, %s299
      %s314 = sphi 0, %s300
      %s318 = sphi 0, %s318
      %s320 = sphi 0, %s318
      %s321 = sphi 0, %s320
      %s335 = sphi 0, %s321
      %s339 = sphi 0, %s339
      %s341 = sphi 0, %s339
      %s342 = sphi 0, %s341
      %s356 = sphi 0, %s342
      %s360 = sphi 0, %s360
      %s362 = sphi 0, %s360
      %s363 = sphi 0, %s362
      %s377 = sphi 0, %s363
      %s381 = sphi 0, %s381
      %s383 = sphi 0, %s381
      %s384 = sphi 0, %s383
      %s398 = sphi 0, %s384
      %s402 = sphi 0, %s402
      %s404 = sphi 0, %s402
      %s405 = sphi 0, %s404
      %s419 = sphi 0, %s405
      %s423 = sphi 0, %s423
      %s425 = sphi 0, %s423
      %s426 = sphi 0, %s425
      %s440 = sphi 0, %s426
      %s444 = sphi 0, %s444
      %s446 = sphi 0, %s444
      %s447 = sphi 0, %s446
      %s461 = sphi 0, %s447
      %s467 = sphi 0, %s469
      %s470 = sphi 0, %s467
      %s471 = sphi 0, %s470
      %s487 = sphi 0, %s471
    $region4: #{task3net_forward.1} parent=1 // loop_header_branch
      %35 = sbr.rel (%p33) target = $region8
    $region5: #{task3net_forward.1} parent=1 // loop_body
      %s37 = ssub.s32 %s32, 1
      %s38 = ssub.s32 %s32, 2
      %s39 = sadd.s32 %s32, 1
      %s40 = ssub.s32 %s32, %s39
      %p41 = scmp.eq.s32.totalorder %s40, 0
      %s43 = sadd.s32 %s42, 1
      %s44 = scalar_select %p41, %s42, %s43
      %p47 = pneg %p41
      %p48 = scmp.eq.s32.totalorder %s32, 1
      %p49 = por %p47, %p48
      %p50 = scmp.ne.s32.totalorder %s42, %s45
      %p51 = scmp.eq.s32.totalorder %s32, 0
      %p52 = por %p50, %p51
      %p53 = scmp.ne.s32.totalorder %s42, %s45
      %p54 = scmp.eq.s32.totalorder %s37, 1
      %p55 = por %p53, %p54
      %p56 = scmp.ne.s32.totalorder %s45, %s46
      %p57 = scmp.eq.s32.totalorder %s37, 0
      %p58 = por %p56, %p57
      %p59 = scmp.ne.s32.totalorder %s45, %s46
      %p60 = scmp.eq.s32.totalorder %s38, 1
      %p61 = por %p59, %p60
      %p63 = scmp.ne.s32.totalorder %s46, %s62
      %p64 = scmp.eq.s32.totalorder %s38, 0
      %p65 = por %p63, %p64
      %s67 = sadd.s32 %s66, 1
      %p70 = scmp.eq.s32.totalorder %s32, 1
      %p71 = scmp.ne.s32.totalorder %s66, %s68
      %p72 = scmp.eq.s32.totalorder %s32, 0
      %p73 = por %p71, %p72
      %p74 = scmp.ne.s32.totalorder %s66, %s68
      %p75 = scmp.eq.s32.totalorder %s37, 1
      %p76 = por %p74, %p75
      %p77 = scmp.ne.s32.totalorder %s68, %s69
      %p78 = scmp.eq.s32.totalorder %s37, 0
      %p79 = por %p77, %p78
      %p80 = scmp.ne.s32.totalorder %s68, %s69
      %p81 = scmp.eq.s32.totalorder %s38, 1
      %p82 = por %p80, %p81
      %p84 = scmp.ne.s32.totalorder %s69, %s83
      %p85 = scmp.eq.s32.totalorder %s38, 0
      %p86 = por %p84, %p85
      %s88 = sadd.s32 %s87, 1
      %p91 = scmp.eq.s32.totalorder %s32, 1
      %p92 = scmp.ne.s32.totalorder %s87, %s89
      %p93 = scmp.eq.s32.totalorder %s32, 0
      %p94 = por %p92, %p93
      %p95 = scmp.ne.s32.totalorder %s87, %s89
      %p96 = scmp.eq.s32.totalorder %s37, 1
      %p97 = por %p95, %p96
      %p98 = scmp.ne.s32.totalorder %s89, %s90
      %p99 = scmp.eq.s32.totalorder %s37, 0
      %p100 = por %p98, %p99
      %p101 = scmp.ne.s32.totalorder %s89, %s90
      %p102 = scmp.eq.s32.totalorder %s38, 1
      %p103 = por %p101, %p102
      %p105 = scmp.ne.s32.totalorder %s90, %s104
      %p106 = scmp.eq.s32.totalorder %s38, 0
      %p107 = por %p105, %p106
      %s109 = sadd.s32 %s108, 1
      %p112 = scmp.eq.s32.totalorder %s32, 1
      %p113 = scmp.ne.s32.totalorder %s108, %s110
      %p114 = scmp.eq.s32.totalorder %s32, 0
      %p115 = por %p113, %p114
      %p116 = scmp.ne.s32.totalorder %s108, %s110
      %p117 = scmp.eq.s32.totalorder %s37, 1
      %p118 = por %p116, %p117
      %p119 = scmp.ne.s32.totalorder %s110, %s111
      %p120 = scmp.eq.s32.totalorder %s37, 0
      %p121 = por %p119, %p120
      %p122 = scmp.ne.s32.totalorder %s110, %s111
      %p123 = scmp.eq.s32.totalorder %s38, 1
      %p124 = por %p122, %p123
      %p126 = scmp.ne.s32.totalorder %s111, %s125
      %p127 = scmp.eq.s32.totalorder %s38, 0
      %p128 = por %p126, %p127
      %s130 = sadd.s32 %s129, 1
      %p133 = scmp.eq.s32.totalorder %s32, 1
      %p134 = scmp.ne.s32.totalorder %s129, %s131
      %p135 = scmp.eq.s32.totalorder %s32, 0
      %p136 = por %p134, %p135
      %p137 = scmp.ne.s32.totalorder %s129, %s131
      %p138 = scmp.eq.s32.totalorder %s37, 1
      %p139 = por %p137, %p138
      %p140 = scmp.ne.s32.totalorder %s131, %s132
      %p141 = scmp.eq.s32.totalorder %s37, 0
      %p142 = por %p140, %p141
      %p143 = scmp.ne.s32.totalorder %s131, %s132
      %p144 = scmp.eq.s32.totalorder %s38, 1
      %p145 = por %p143, %p144
      %p147 = scmp.ne.s32.totalorder %s132, %s146
      %p148 = scmp.eq.s32.totalorder %s38, 0
      %p149 = por %p147, %p148
      %s151 = sadd.s32 %s150, 1
      %p154 = scmp.eq.s32.totalorder %s32, 1
      %p155 = scmp.ne.s32.totalorder %s150, %s152
      %p156 = scmp.eq.s32.totalorder %s32, 0
      %p157 = por %p155, %p156
      %p158 = scmp.ne.s32.totalorder %s150, %s152
      %p159 = scmp.eq.s32.totalorder %s37, 1
      %p160 = por %p158, %p159
      %p161 = scmp.ne.s32.totalorder %s152, %s153
      %p162 = scmp.eq.s32.totalorder %s37, 0
      %p163 = por %p161, %p162
      %p164 = scmp.ne.s32.totalorder %s152, %s153
      %p165 = scmp.eq.s32.totalorder %s38, 1
      %p166 = por %p164, %p165
      %p168 = scmp.ne.s32.totalorder %s153, %s167
      %p169 = scmp.eq.s32.totalorder %s38, 0
      %p170 = por %p168, %p169
      %s172 = sadd.s32 %s171, 1
      %p175 = scmp.eq.s32.totalorder %s32, 1
      %p176 = scmp.ne.s32.totalorder %s171, %s173
      %p177 = scmp.eq.s32.totalorder %s32, 0
      %p178 = por %p176, %p177
      %p179 = scmp.ne.s32.totalorder %s171, %s173
      %p180 = scmp.eq.s32.totalorder %s37, 1
      %p181 = por %p179, %p180
      %p182 = scmp.ne.s32.totalorder %s173, %s174
      %p183 = scmp.eq.s32.totalorder %s37, 0
      %p184 = por %p182, %p183
      %p185 = scmp.ne.s32.totalorder %s173, %s174
      %p186 = scmp.eq.s32.totalorder %s38, 1
      %p187 = por %p185, %p186
      %p189 = scmp.ne.s32.totalorder %s174, %s188
      %p190 = scmp.eq.s32.totalorder %s38, 0
      %p191 = por %p189, %p190
      %s193 = sadd.s32 %s192, 1
      %p196 = scmp.eq.s32.totalorder %s32, 1
      %p197 = scmp.ne.s32.totalorder %s192, %s194
      %p198 = scmp.eq.s32.totalorder %s32, 0
      %p199 = por %p197, %p198
      %p200 = scmp.ne.s32.totalorder %s192, %s194
      %p201 = scmp.eq.s32.totalorder %s37, 1
      %p202 = por %p200, %p201
      %p203 = scmp.ne.s32.totalorder %s194, %s195
      %p204 = scmp.eq.s32.totalorder %s37, 0
      %p205 = por %p203, %p204
      %p206 = scmp.ne.s32.totalorder %s194, %s195
      %p207 = scmp.eq.s32.totalorder %s38, 1
      %p208 = por %p206, %p207
      %p210 = scmp.ne.s32.totalorder %s195, %s209
      %p211 = scmp.eq.s32.totalorder %s38, 0
      %p212 = por %p210, %p211
      %s214 = sadd.s32 %s213, 1
      %p217 = scmp.eq.s32.totalorder %s32, 1
      %p218 = scmp.ne.s32.totalorder %s213, %s215
      %p219 = scmp.eq.s32.totalorder %s32, 0
      %p220 = por %p218, %p219
      %p221 = scmp.ne.s32.totalorder %s213, %s215
      %p222 = scmp.eq.s32.totalorder %s37, 1
      %p223 = por %p221, %p222
      %p224 = scmp.ne.s32.totalorder %s215, %s216
      %p225 = scmp.eq.s32.totalorder %s37, 0
      %p226 = por %p224, %p225
      %p227 = scmp.ne.s32.totalorder %s215, %s216
      %p228 = scmp.eq.s32.totalorder %s38, 1
      %p229 = por %p227, %p228
      %p231 = scmp.ne.s32.totalorder %s216, %s230
      %p232 = scmp.eq.s32.totalorder %s38, 0
      %p233 = por %p231, %p232
      %s235 = sadd.s32 %s234, 1
      %p238 = scmp.eq.s32.totalorder %s32, 1
      %p239 = scmp.ne.s32.totalorder %s234, %s236
      %p240 = scmp.eq.s32.totalorder %s32, 0
      %p241 = por %p239, %p240
      %p242 = scmp.ne.s32.totalorder %s234, %s236
      %p243 = scmp.eq.s32.totalorder %s37, 1
      %p244 = por %p242, %p243
      %p245 = scmp.ne.s32.totalorder %s236, %s237
      %p246 = scmp.eq.s32.totalorder %s37, 0
      %p247 = por %p245, %p246
      %p248 = scmp.ne.s32.totalorder %s236, %s237
      %p249 = scmp.eq.s32.totalorder %s38, 1
      %p250 = por %p248, %p249
      %p252 = scmp.ne.s32.totalorder %s237, %s251
      %p253 = scmp.eq.s32.totalorder %s38, 0
      %p254 = por %p252, %p253
      %s256 = sadd.s32 %s255, 1
      %p259 = scmp.eq.s32.totalorder %s32, 1
      %p260 = scmp.ne.s32.totalorder %s255, %s257
      %p261 = scmp.eq.s32.totalorder %s32, 0
      %p262 = por %p260, %p261
      %p263 = scmp.ne.s32.totalorder %s255, %s257
      %p264 = scmp.eq.s32.totalorder %s37, 1
      %p265 = por %p263, %p264
      %p266 = scmp.ne.s32.totalorder %s257, %s258
      %p267 = scmp.eq.s32.totalorder %s37, 0
      %p268 = por %p266, %p267
      %p269 = scmp.ne.s32.totalorder %s257, %s258
      %p270 = scmp.eq.s32.totalorder %s38, 1
      %p271 = por %p269, %p270
      %p273 = scmp.ne.s32.totalorder %s258, %s272
      %p274 = scmp.eq.s32.totalorder %s38, 0
      %p275 = por %p273, %p274
      %s277 = sadd.s32 %s276, 1
      %p280 = scmp.eq.s32.totalorder %s32, 1
      %p281 = scmp.ne.s32.totalorder %s276, %s278
      %p282 = scmp.eq.s32.totalorder %s32, 0
      %p283 = por %p281, %p282
      %p284 = scmp.ne.s32.totalorder %s276, %s278
      %p285 = scmp.eq.s32.totalorder %s37, 1
      %p286 = por %p284, %p285
      %p287 = scmp.ne.s32.totalorder %s278, %s279
      %p288 = scmp.eq.s32.totalorder %s37, 0
      %p289 = por %p287, %p288
      %p290 = scmp.ne.s32.totalorder %s278, %s279
      %p291 = scmp.eq.s32.totalorder %s38, 1
      %p292 = por %p290, %p291
      %p294 = scmp.ne.s32.totalorder %s279, %s293
      %p295 = scmp.eq.s32.totalorder %s38, 0
      %p296 = por %p294, %p295
      %s298 = sadd.s32 %s297, 1
      %p301 = scmp.eq.s32.totalorder %s32, 1
      %p302 = scmp.ne.s32.totalorder %s297, %s299
      %p303 = scmp.eq.s32.totalorder %s32, 0
      %p304 = por %p302, %p303
      %p305 = scmp.ne.s32.totalorder %s297, %s299
      %p306 = scmp.eq.s32.totalorder %s37, 1
      %p307 = por %p305, %p306
      %p308 = scmp.ne.s32.totalorder %s299, %s300
      %p309 = scmp.eq.s32.totalorder %s37, 0
      %p310 = por %p308, %p309
      %p311 = scmp.ne.s32.totalorder %s299, %s300
      %p312 = scmp.eq.s32.totalorder %s38, 1
      %p313 = por %p311, %p312
      %p315 = scmp.ne.s32.totalorder %s300, %s314
      %p316 = scmp.eq.s32.totalorder %s38, 0
      %p317 = por %p315, %p316
      %s319 = sadd.s32 %s318, 1
      %p322 = scmp.eq.s32.totalorder %s32, 1
      %p323 = scmp.ne.s32.totalorder %s318, %s320
      %p324 = scmp.eq.s32.totalorder %s32, 0
      %p325 = por %p323, %p324
      %p326 = scmp.ne.s32.totalorder %s318, %s320
      %p327 = scmp.eq.s32.totalorder %s37, 1
      %p328 = por %p326, %p327
      %p329 = scmp.ne.s32.totalorder %s320, %s321
      %p330 = scmp.eq.s32.totalorder %s37, 0
      %p331 = por %p329, %p330
      %p332 = scmp.ne.s32.totalorder %s320, %s321
      %p333 = scmp.eq.s32.totalorder %s38, 1
      %p334 = por %p332, %p333
      %p336 = scmp.ne.s32.totalorder %s321, %s335
      %p337 = scmp.eq.s32.totalorder %s38, 0
      %p338 = por %p336, %p337
      %s340 = sadd.s32 %s339, 1
      %p343 = scmp.eq.s32.totalorder %s32, 1
      %p344 = scmp.ne.s32.totalorder %s339, %s341
      %p345 = scmp.eq.s32.totalorder %s32, 0
      %p346 = por %p344, %p345
      %p347 = scmp.ne.s32.totalorder %s339, %s341
      %p348 = scmp.eq.s32.totalorder %s37, 1
      %p349 = por %p347, %p348
      %p350 = scmp.ne.s32.totalorder %s341, %s342
      %p351 = scmp.eq.s32.totalorder %s37, 0
      %p352 = por %p350, %p351
      %p353 = scmp.ne.s32.totalorder %s341, %s342
      %p354 = scmp.eq.s32.totalorder %s38, 1
      %p355 = por %p353, %p354
      %p357 = scmp.ne.s32.totalorder %s342, %s356
      %p358 = scmp.eq.s32.totalorder %s38, 0
      %p359 = por %p357, %p358
      %s361 = sadd.s32 %s360, 1
      %p364 = scmp.eq.s32.totalorder %s32, 1
      %p365 = scmp.ne.s32.totalorder %s360, %s362
      %p366 = scmp.eq.s32.totalorder %s32, 0
      %p367 = por %p365, %p366
      %p368 = scmp.ne.s32.totalorder %s360, %s362
      %p369 = scmp.eq.s32.totalorder %s37, 1
      %p370 = por %p368, %p369
      %p371 = scmp.ne.s32.totalorder %s362, %s363
      %p372 = scmp.eq.s32.totalorder %s37, 0
      %p373 = por %p371, %p372
      %p374 = scmp.ne.s32.totalorder %s362, %s363
      %p375 = scmp.eq.s32.totalorder %s38, 1
      %p376 = por %p374, %p375
      %p378 = scmp.ne.s32.totalorder %s363, %s377
      %p379 = scmp.eq.s32.totalorder %s38, 0
      %p380 = por %p378, %p379
      %s382 = sadd.s32 %s381, 1
      %p385 = scmp.eq.s32.totalorder %s32, 1
      %p386 = scmp.ne.s32.totalorder %s381, %s383
      %p387 = scmp.eq.s32.totalorder %s32, 0
      %p388 = por %p386, %p387
      %p389 = scmp.ne.s32.totalorder %s381, %s383
      %p390 = scmp.eq.s32.totalorder %s37, 1
      %p391 = por %p389, %p390
      %p392 = scmp.ne.s32.totalorder %s383, %s384
      %p393 = scmp.eq.s32.totalorder %s37, 0
      %p394 = por %p392, %p393
      %p395 = scmp.ne.s32.totalorder %s383, %s384
      %p396 = scmp.eq.s32.totalorder %s38, 1
      %p397 = por %p395, %p396
      %p399 = scmp.ne.s32.totalorder %s384, %s398
      %p400 = scmp.eq.s32.totalorder %s38, 0
      %p401 = por %p399, %p400
      %s403 = sadd.s32 %s402, 1
      %p406 = scmp.eq.s32.totalorder %s32, 1
      %p407 = scmp.ne.s32.totalorder %s402, %s404
      %p408 = scmp.eq.s32.totalorder %s32, 0
      %p409 = por %p407, %p408
      %p410 = scmp.ne.s32.totalorder %s402, %s404
      %p411 = scmp.eq.s32.totalorder %s37, 1
      %p412 = por %p410, %p411
      %p413 = scmp.ne.s32.totalorder %s404, %s405
      %p414 = scmp.eq.s32.totalorder %s37, 0
      %p415 = por %p413, %p414
      %p416 = scmp.ne.s32.totalorder %s404, %s405
      %p417 = scmp.eq.s32.totalorder %s38, 1
      %p418 = por %p416, %p417
      %p420 = scmp.ne.s32.totalorder %s405, %s419
      %p421 = scmp.eq.s32.totalorder %s38, 0
      %p422 = por %p420, %p421
      %s424 = sadd.s32 %s423, 1
      %p427 = scmp.eq.s32.totalorder %s32, 1
      %p428 = scmp.ne.s32.totalorder %s423, %s425
      %p429 = scmp.eq.s32.totalorder %s32, 0
      %p430 = por %p428, %p429
      %p431 = scmp.ne.s32.totalorder %s423, %s425
      %p432 = scmp.eq.s32.totalorder %s37, 1
      %p433 = por %p431, %p432
      %p434 = scmp.ne.s32.totalorder %s425, %s426
      %p435 = scmp.eq.s32.totalorder %s37, 0
      %p436 = por %p434, %p435
      %p437 = scmp.ne.s32.totalorder %s425, %s426
      %p438 = scmp.eq.s32.totalorder %s38, 1
      %p439 = por %p437, %p438
      %p441 = scmp.ne.s32.totalorder %s426, %s440
      %p442 = scmp.eq.s32.totalorder %s38, 0
      %p443 = por %p441, %p442
      %s445 = sadd.s32 %s444, 1
      %p448 = scmp.eq.s32.totalorder %s32, 1
      %p449 = scmp.ne.s32.totalorder %s444, %s446
      %p450 = scmp.eq.s32.totalorder %s32, 0
      %p451 = por %p449, %p450
      %p452 = scmp.ne.s32.totalorder %s444, %s446
      %p453 = scmp.eq.s32.totalorder %s37, 1
      %p454 = por %p452, %p453
      %p455 = scmp.ne.s32.totalorder %s446, %s447
      %p456 = scmp.eq.s32.totalorder %s37, 0
      %p457 = por %p455, %p456
      %p458 = scmp.ne.s32.totalorder %s446, %s447
      %p459 = scmp.eq.s32.totalorder %s38, 1
      %p460 = por %p458, %p459
      %p462 = scmp.ne.s32.totalorder %s447, %s461
      %p463 = scmp.eq.s32.totalorder %s38, 0
      %p464 = por %p462, %p463
      %s465 = ssub.s32 %s32, %s39
      %p466 = scmp.eq.s32.totalorder %s465, 0
      %s468 = sadd.s32 %s467, 1
      %s469 = scalar_select %p466, %s467, %s468
      %p472 = pneg %p466
      %p473 = scmp.eq.s32.totalorder %s32, 1
      %p474 = por %p472, %p473
      %p475 = scmp.ne.s32.totalorder %s467, %s470
      %p476 = scmp.eq.s32.totalorder %s32, 0
      %p477 = por %p475, %p476
      %p478 = scmp.ne.s32.totalorder %s467, %s470
      %p479 = scmp.eq.s32.totalorder %s37, 1
      %p480 = por %p478, %p479
      %p481 = scmp.ne.s32.totalorder %s470, %s471
      %p482 = scmp.eq.s32.totalorder %s37, 0
      %p483 = por %p481, %p482
      %p484 = scmp.ne.s32.totalorder %s470, %s471
      %p485 = scmp.eq.s32.totalorder %s38, 1
      %p486 = por %p484, %p485
      %p488 = scmp.ne.s32.totalorder %s471, %s487
      %p489 = scmp.eq.s32.totalorder %s38, 0
      %p490 = por %p488, %p489
      %p491 = scmp.le.s32.totalorder 1, %s32
      %p492 = scmp.lt.s32.totalorder %s32, 3
      %p493 = pnand %p491, %p492
      %p494 = pneg %p493
      // Predicated region
      $region9: #{task3net_forward.1} parent=5 // pred_check
        _
      $region10: #{task3net_forward.1} parent=5 // pred_check_branch
        %496 = sbr.rel (%p493) target = $region12
      $region11: #{task3net_forward.1} parent=5 // pred_region
        %s497 = ssub.s32 %s32, 1
        // Predicated region
        $region13: #{task3net_forward.1} parent=11 // pred_check
          %p498 = pneg %p79
        $region14: #{task3net_forward.1} parent=11 // pred_check_branch
          %500 = sbr.rel (%p498) target = $region16
        $region15: #{task3net_forward.1} parent=11 // pred_region
          %s502 = ssub.s32 256, 256
          %503 = vsyncadd [#allocation3], %s502
          %s504 = sshll.u32 [#allocation2], 4
          %s505 = int_to_ptr.vmem [resolvable:$true] %s504
          %510 = dma.hbm_to_vmem [thread:$0]  %s1, 256, %s505, [#allocation3], 64, 64, 4
        $region16: #{task3net_forward.1} parent=11 // pred_fallthru
          _
        // Predicated region
        $region17: #{task3net_forward.1} parent=11 // pred_check
          %p511 = pneg %p100
        $region18: #{task3net_forward.1} parent=11 // pred_check_branch
          %513 = sbr.rel (%p511) target = $region20
        $region19: #{task3net_forward.1} parent=11 // pred_region
          _
        $region20: #{task3net_forward.1} parent=11 // pred_fallthru
          _
        // Predicated region
        $region21: #{task3net_forward.1} parent=11 // pred_check
          %p514 = pneg %p121
        $region22: #{task3net_forward.1} parent=11 // pred_check_branch
          %516 = sbr.rel (%p514) target = $region24
        $region23: #{task3net_forward.1} parent=11 // pred_region
          _
        $region24: #{task3net_forward.1} parent=11 // pred_fallthru
          _
        // Predicated region
        $region25: #{task3net_forward.1} parent=11 // pred_check
          %p517 = pneg %p142
        $region26: #{task3net_forward.1} parent=11 // pred_check_branch
          %519 = sbr.rel (%p517) target = $region28
        $region27: #{task3net_forward.1} parent=11 // pred_region
          %s521 = ssub.s32 1856, 1856
          %522 = vsyncadd [#allocation6], %s521
          %s523 = sshll.u32 [#allocation5], 4
          %s524 = int_to_ptr.vmem [resolvable:$true] %s523
          %529 = dma.hbm_to_vmem [thread:$0]  %s4, 1856, %s524, [#allocation6], 64, 64, 4
        $region28: #{task3net_forward.1} parent=11 // pred_fallthru
          _
        // Predicated region
        $region29: #{task3net_forward.1} parent=11 // pred_check
          %p530 = pneg %p163
        $region30: #{task3net_forward.1} parent=11 // pred_check_branch
          %532 = sbr.rel (%p530) target = $region32
        $region31: #{task3net_forward.1} parent=11 // pred_region
          %s534 = ssub.s32 4608, 4608
          %535 = vsyncadd [#allocation6], %s534
          %s536 = sshll.u32 [#allocation7], 4
          %s537 = int_to_ptr.vmem [resolvable:$true] %s536
          %542 = dma.hbm_to_vmem [thread:$0]  %s5, 4608, %s537, [#allocation6], 64, 64, 4
        $region32: #{task3net_forward.1} parent=11 // pred_fallthru
          _
        // Predicated region
        $region33: #{task3net_forward.1} parent=11 // pred_check
          %p543 = pneg %p184
        $region34: #{task3net_forward.1} parent=11 // pred_check_branch
          %545 = sbr.rel (%p543) target = $region36
        $region35: #{task3net_forward.1} parent=11 // pred_region
          _
        $region36: #{task3net_forward.1} parent=11 // pred_fallthru
          _
        // Predicated region
        $region37: #{task3net_forward.1} parent=11 // pred_check
          %p546 = pneg %p205
        $region38: #{task3net_forward.1} parent=11 // pred_check_branch
          %548 = sbr.rel (%p546) target = $region40
        $region39: #{task3net_forward.1} parent=11 // pred_region
          _
        $region40: #{task3net_forward.1} parent=11 // pred_fallthru
          _
        // Predicated region
        $region41: #{task3net_forward.1} parent=11 // pred_check
          %p549 = pneg %p226
        $region42: #{task3net_forward.1} parent=11 // pred_check_branch
          %551 = sbr.rel (%p549) target = $region44
        $region43: #{task3net_forward.1} parent=11 // pred_region
          _
        $region44: #{task3net_forward.1} parent=11 // pred_fallthru
          _
        // Predicated region
        $region45: #{task3net_forward.1} parent=11 // pred_check
          %p552 = pneg %p247
        $region46: #{task3net_forward.1} parent=11 // pred_check_branch
          %554 = sbr.rel (%p552) target = $region48
        $region47: #{task3net_forward.1} parent=11 // pred_region
          _
        $region48: #{task3net_forward.1} parent=11 // pred_fallthru
          _
        // Predicated region
        $region49: #{task3net_forward.1} parent=11 // pred_check
          %p555 = pneg %p268
        $region50: #{task3net_forward.1} parent=11 // pred_check_branch
          %557 = sbr.rel (%p555) target = $region52
        $region51: #{task3net_forward.1} parent=11 // pred_region
          _
        $region52: #{task3net_forward.1} parent=11 // pred_fallthru
          _
        // Predicated region
        $region53: #{task3net_forward.1} parent=11 // pred_check
          %p558 = pneg %p289
        $region54: #{task3net_forward.1} parent=11 // pred_check_branch
          %560 = sbr.rel (%p558) target = $region56
        $region55: #{task3net_forward.1} parent=11 // pred_region
          _
        $region56: #{task3net_forward.1} parent=11 // pred_fallthru
          _
        // Predicated region
        $region57: #{task3net_forward.1} parent=11 // pred_check
          %p561 = pneg %p310
        $region58: #{task3net_forward.1} parent=11 // pred_check_branch
          %563 = sbr.rel (%p561) target = $region60
        $region59: #{task3net_forward.1} parent=11 // pred_region
          _
        $region60: #{task3net_forward.1} parent=11 // pred_fallthru
          _
        // Predicated region
        $region61: #{task3net_forward.1} parent=11 // pred_check
          %p564 = pneg %p331
        $region62: #{task3net_forward.1} parent=11 // pred_check_branch
          %566 = sbr.rel (%p564) target = $region64
        $region63: #{task3net_forward.1} parent=11 // pred_region
          %s568 = ssub.s32 704, 704
          %569 = vsyncadd [#allocation9], %s568
          %s570 = sshll.u32 [#allocation8], 4
          %s571 = int_to_ptr.vmem [resolvable:$true] %s570
          %576 = dma.hbm_to_vmem [thread:$0]  %s13, 704, %s571, [#allocation9], 64, 64, 4
        $region64: #{task3net_forward.1} parent=11 // pred_fallthru
          _
        // Predicated region
        $region65: #{task3net_forward.1} parent=11 // pred_check
          %p577 = pneg %p352
        $region66: #{task3net_forward.1} parent=11 // pred_check_branch
          %579 = sbr.rel (%p577) target = $region68
        $region67: #{task3net_forward.1} parent=11 // pred_region
          _
        $region68: #{task3net_forward.1} parent=11 // pred_fallthru
          _
        // Predicated region
        $region69: #{task3net_forward.1} parent=11 // pred_check
          %p580 = pneg %p373
        $region70: #{task3net_forward.1} parent=11 // pred_check_branch
          %582 = sbr.rel (%p580) target = $region72
        $region71: #{task3net_forward.1} parent=11 // pred_region
          _
        $region72: #{task3net_forward.1} parent=11 // pred_fallthru
          _
        // Predicated region
        $region73: #{task3net_forward.1} parent=11 // pred_check
          %p583 = pneg %p394
        $region74: #{task3net_forward.1} parent=11 // pred_check_branch
          %585 = sbr.rel (%p583) target = $region76
        $region75: #{task3net_forward.1} parent=11 // pred_region
          %s587 = ssub.s32 4096, 4096
          %588 = vsyncadd [#allocation9], %s587
          %s589 = sshll.u32 [#allocation10], 4
          %s590 = int_to_ptr.vmem [resolvable:$true] %s589
          %595 = dma.hbm_to_vmem [thread:$0]  %s16, 4096, %s590, [#allocation9], 128, 128, 8
        $region76: #{task3net_forward.1} parent=11 // pred_fallthru
          _
        // Predicated region
        $region77: #{task3net_forward.1} parent=11 // pred_check
          %p596 = pneg %p415
        $region78: #{task3net_forward.1} parent=11 // pred_check_branch
          %598 = sbr.rel (%p596) target = $region80
        $region79: #{task3net_forward.1} parent=11 // pred_region
          _
        $region80: #{task3net_forward.1} parent=11 // pred_fallthru
          _
        // Predicated region
        $region81: #{task3net_forward.1} parent=11 // pred_check
          %p599 = pneg %p436
        $region82: #{task3net_forward.1} parent=11 // pred_check_branch
          %601 = sbr.rel (%p599) target = $region84
        $region83: #{task3net_forward.1} parent=11 // pred_region
          _
        $region84: #{task3net_forward.1} parent=11 // pred_fallthru
          _
        // Predicated region
        $region85: #{task3net_forward.1} parent=11 // pred_check
          %p602 = pneg %p457
        $region86: #{task3net_forward.1} parent=11 // pred_check_branch
          %604 = sbr.rel (%p602) target = $region88
        $region87: #{task3net_forward.1} parent=11 // pred_region
          _
        $region88: #{task3net_forward.1} parent=11 // pred_fallthru
          _
      $region12: #{task3net_forward.1} parent=5 // pred_fallthru
        _
      %p605 = scmp.lt.s32.totalorder %s32, 2
      // Predicated region
      $region89: #{task3net_forward.1} parent=5 // pred_check
        %p606 = pneg %p605
      $region90: #{task3net_forward.1} parent=5 // pred_check_branch
        %608 = sbr.rel (%p606) target = $region92
      $region91: #{task3net_forward.1} parent=5 // pred_region
        // Predicated region
        $region93: #{task3net_forward.1} parent=91 // pred_check
          %p609 = pneg %p52
        $region94: #{task3net_forward.1} parent=91 // pred_check_branch
          %611 = sbr.rel (%p609) target = $region96
        $region95: #{task3net_forward.1} parent=91 // pred_region
          %p612 = scmp.lt.s32.totalorder %s32, 1
          %s613 = scalar_select %p612, %s32, 1
          %s614 = smul.addr %s613, 37
          %s615 = smul.addr %s614, 4
          %s616 = scalar_lea.vmem %s0, %s615
        $region96: #{task3net_forward.1} parent=91 // pred_fallthru
          _
      $region92: #{task3net_forward.1} parent=5 // pred_fallthru
        _
      %p617 = scmp.le.s32.totalorder 1, %s32
      %p618 = scmp.lt.s32.totalorder %s32, 3
      %p619 = pnand %p617, %p618
      %p620 = pneg %p619
      // Predicated region
      $region97: #{task3net_forward.1} parent=5 // pred_check
        _
      $region98: #{task3net_forward.1} parent=5 // pred_check_branch
        %622 = sbr.rel (%p619) target = $region100
      $region99: #{task3net_forward.1} parent=5 // pred_region
        %s623 = ssub.s32 %s32, 1
        // Predicated region
        $region101: #{task3net_forward.1} parent=99 // pred_check
          %p624 = pneg %p79
        $region102: #{task3net_forward.1} parent=99 // pred_check_branch
          %626 = sbr.rel (%p624) target = $region104
        $region103: #{task3net_forward.1} parent=99 // pred_region
          %627 = dma.done [#allocation3], 256
        $region104: #{task3net_forward.1} parent=99 // pred_fallthru
          _
        // Predicated region
        $region105: #{task3net_forward.1} parent=99 // pred_check
          %p628 = pneg %p142
        $region106: #{task3net_forward.1} parent=99 // pred_check_branch
          %630 = sbr.rel (%p628) target = $region108
        $region107: #{task3net_forward.1} parent=99 // pred_region
          %631 = dma.done [#allocation6], 1856
        $region108: #{task3net_forward.1} parent=99 // pred_fallthru
          _
        // Predicated region
        $region109: #{task3net_forward.1} parent=99 // pred_check
          %p632 = pneg %p163
        $region110: #{task3net_forward.1} parent=99 // pred_check_branch
          %634 = sbr.rel (%p632) target = $region112
        $region111: #{task3net_forward.1} parent=99 // pred_region
          %635 = dma.done [#allocation6], 4608
        $region112: #{task3net_forward.1} parent=99 // pred_fallthru
          _
        // Predicated region
        $region113: #{task3net_forward.1} parent=99 // pred_check
          %p636 = pneg %p331
        $region114: #{task3net_forward.1} parent=99 // pred_check_branch
          %638 = sbr.rel (%p636) target = $region116
        $region115: #{task3net_forward.1} parent=99 // pred_region
          %639 = dma.done [#allocation9], 704
        $region116: #{task3net_forward.1} parent=99 // pred_fallthru
          _
        // Predicated region
        $region117: #{task3net_forward.1} parent=99 // pred_check
          %p640 = pneg %p394
        $region118: #{task3net_forward.1} parent=99 // pred_check_branch
          %642 = sbr.rel (%p640) target = $region120
        $region119: #{task3net_forward.1} parent=99 // pred_region
          %643 = dma.done [#allocation9], 4096
        $region120: #{task3net_forward.1} parent=99 // pred_fallthru
          _
        %p644 = scmp.lt.s32.totalorder %s37, 1
        %s645 = scalar_select %p644, %s37, 1
        %s646 = smul.addr %s645, 37
        %s647 = smul.addr %s646, 4
        %s648 = scalar_lea.vmem %s0, %s647
        %p649 = pneg %p58
        %p650 = pneg %p55
        %p651 = pneg %p79
        %p652 = pneg %p76
        %p653 = pneg %p100
        %p654 = pneg %p97
        %p655 = pneg %p121
        %p656 = pneg %p118
        %p657 = pneg %p142
        %p658 = pneg %p139
        %p659 = pneg %p163
        %p660 = pneg %p160
        %p661 = pneg %p184
        %p662 = pneg %p181
        %p663 = pneg %p205
        %p664 = pneg %p202
        %p665 = pneg %p226
        %p666 = pneg %p223
        %p667 = pneg %p247
        %p668 = pneg %p244
        %p669 = pneg %p268
        %p670 = pneg %p265
        %p671 = pneg %p289
        %p672 = pneg %p286
        %p673 = pneg %p310
        %p674 = pneg %p307
        %p675 = pneg %p331
        %p676 = pneg %p328
        %p677 = pneg %p352
        %p678 = pneg %p349
        %p679 = pneg %p373
        %p680 = pneg %p370
        %p681 = pneg %p394
        %p682 = pneg %p391
        %p683 = pneg %p415
        %p684 = pneg %p412
        %p685 = pneg %p436
        %p686 = pneg %p433
        %p687 = pneg %p457
        %p688 = pneg %p454
        %p689 = pneg %p483
        %p690 = pneg %p480
        %s691 = sand.u32 %s470, 1
        %s692 = scalar_lea.sflag [#allocation4], %s691
        %s693 = sand.u32 %s470, 1
        %s694 = scalar_lea.vmem [#allocation11], %s693
        %p695 = scmp.lt.s32.totalorder %s37, 1
        %s696 = scalar_select %p695, %s37, 1
        %s697 = smul.addr %s696, 37
        %s698 = smul.addr %s697, 4
        %s699 = scalar_lea.vmem %s0, %s698
        %v701 = vld [vmem:[%s699] sm:$0xf]
        %v702 = vld [vmem:[%s699 + $0x4] sm:$0xf]
        %v703 = vld [vmem:[%s699 + $0x8] sm:$0xf]
        %v704 = vld [vmem:[%s699 + $0xc] sm:$0xf]
        %v705 = vld [vmem:[%s699 + $0x10] sm:$0xf]
        %v706 = vld [vmem:[%s699 + $0x14] sm:$0xf]
        %v707 = vld [vmem:[%s699 + $0x18] sm:$0xf]
        %v708 = vld [vmem:[%s699 + $0x1c] sm:$0xf]
        %v709 = vld [vmem:[%s699 + $0x20] sm:$0xf]
        %v710 = vld [vmem:[%s699 + $0x24] sm:$0xf]
        %v711 = vld [vmem:[%s699 + $0x28] sm:$0xf]
        %v712 = vld [vmem:[%s699 + $0x2c] sm:$0xf]
        %v713 = vld [vmem:[%s699 + $0x30] sm:$0xf]
        %v714 = vld [vmem:[%s699 + $0x34] sm:$0xf]
        %v715 = vld [vmem:[%s699 + $0x38] sm:$0xf]
        %v716 = vld [vmem:[%s699 + $0x3c] sm:$0xf]
        %v717 = vld [vmem:[%s699 + $0x40] sm:$0xf]
        %v718 = vld [vmem:[%s699 + $0x44] sm:$0xf]
        %v719 = vld [vmem:[%s699 + $0x48] sm:$0xf]
        %v720 = vld [vmem:[%s699 + $0x4c] sm:$0xf]
        %v721 = vld [vmem:[%s699 + $0x50] sm:$0xf]
        %v722 = vld [vmem:[%s699 + $0x54] sm:$0xf]
        %v723 = vld [vmem:[%s699 + $0x58] sm:$0xf]
        %v724 = vld [vmem:[%s699 + $0x5c] sm:$0xf]
        %v725 = vld [vmem:[%s699 + $0x60] sm:$0xf]
        %v726 = vld [vmem:[%s699 + $0x64] sm:$0xf]
        %v727 = vld [vmem:[%s699 + $0x68] sm:$0xf]
        %v728 = vld [vmem:[%s699 + $0x6c] sm:$0xf]
        %v729 = vld [vmem:[%s699 + $0x70] sm:$0xf]
        %v730 = vld [vmem:[%s699 + $0x74] sm:$0xf]
        %v731 = vld [vmem:[%s699 + $0x78] sm:$0xf]
        %v732 = vld [vmem:[%s699 + $0x7c] sm:$0xf]
        %v733 = vld [vmem:[%s699 + $0x80] sm:$0xf]
        %v734 = vld [vmem:[%s699 + $0x84] sm:$0xf]
        %v735 = vld [vmem:[%s699 + $0x88] sm:$0xf]
        %v736 = vld [vmem:[%s699 + $0x8c] sm:$0xf]
        %v737 = vld [vmem:[%s699 + $0x90] sm:$0x1]
        %v738 = vld [vmem:[#allocation2] sm:$0xf]
        %v739 = vld [vmem:[#allocation2 + $0x4] sm:$0xf]
        %v740 = vld [vmem:[#allocation2 + $0x8] sm:$0xf]
        %v741 = vld [vmem:[#allocation2 + $0xc] sm:$0x1]
        %v742 = vld [vmem:[%s2] sm:$0x1]
        %v744 = vlaneseq
        %v745 = vshrl.u32 %v744, 7
        %v746 = vsub.s32 0, %v745
        %v747 = vrot.slane %v742, %v746
        %v786 = vunpack.c.l.b16 %v701
        %v787 = vunpack.c.l.b16 %v702
        %v788 = vunpack.c.l.b16 %v703
        %v789 = vunpack.c.l.b16 %v704
        %v790 = vunpack.c.l.b16 %v705
        %v791 = vunpack.c.l.b16 %v706
        %v792 = vunpack.c.l.b16 %v707
        %v793 = vunpack.c.l.b16 %v708
        %v794 = vunpack.c.l.b16 %v709
        %v795 = vunpack.c.l.b16 %v710
        %v796 = vunpack.c.l.b16 %v711
        %v797 = vunpack.c.l.b16 %v712
        %v798 = vunpack.c.l.b16 %v713
        %v799 = vunpack.c.l.b16 %v714
        %v800 = vunpack.c.l.b16 %v715
        %v801 = vunpack.c.l.b16 %v716
        %v802 = vunpack.c.l.b16 %v717
        %v803 = vunpack.c.l.b16 %v718
        %v804 = vunpack.c.l.b16 %v719
        %v805 = vunpack.c.l.b16 %v720
        %v806 = vunpack.c.l.b16 %v721
        %v807 = vunpack.c.l.b16 %v722
        %v808 = vunpack.c.l.b16 %v723
        %v809 = vunpack.c.l.b16 %v724
        %v810 = vunpack.c.l.b16 %v725
        %v811 = vunpack.c.l.b16 %v726
        %v812 = vunpack.c.l.b16 %v727
        %v813 = vunpack.c.l.b16 %v728
        %v814 = vunpack.c.l.b16 %v729
        %v815 = vunpack.c.l.b16 %v730
        %v816 = vunpack.c.l.b16 %v731
        %v817 = vunpack.c.l.b16 %v732
        %v818 = vunpack.c.l.b16 %v733
        %v819 = vunpack.c.l.b16 %v734
        %v820 = vunpack.c.l.b16 %v735
        %v821 = vunpack.c.l.b16 %v736
        %v822 = vunpack.c.l.b16 %v737
        %v823 = vpack.c.b16 %v787, %v786
        %v824 = vpack.c.b16 %v789, %v788
        %v825 = vpack.c.b16 %v791, %v790
        %v826 = vpack.c.b16 %v793, %v792
        %v827 = vpack.c.b16 %v795, %v794
        %v828 = vpack.c.b16 %v797, %v796
        %v829 = vpack.c.b16 %v799, %v798
        %v830 = vpack.c.b16 %v801, %v800
        %v831 = vpack.c.b16 %v803, %v802
        %v832 = vpack.c.b16 %v805, %v804
        %v833 = vpack.c.b16 %v807, %v806
        %v834 = vpack.c.b16 %v809, %v808
        %v835 = vpack.c.b16 %v811, %v810
        %v836 = vpack.c.b16 %v813, %v812
        %v837 = vpack.c.b16 %v815, %v814
        %v838 = vpack.c.b16 %v817, %v816
        %v839 = vpack.c.b16 %v819, %v818
        %v840 = vpack.c.b16 %v821, %v820
        %v841 = vpack.c.b16 %v822, %v822
        %v846 = vunpack.c.l.b16 %v738
        %v847 = vunpack.c.l.b16 %v739
        %v848 = vunpack.c.l.b16 %v740
        %v849 = vunpack.c.l.b16 %v741
        %v850 = vpack.c.b16 %v847, %v846
        %v851 = vpack.c.b16 %v849, %v848
        %vm853 = vcmask 203776
        %v855 = vsel %vm853, %v823, 0
        %v858 = vsel %vm853, %v824, 0
        %v861 = vsel %vm853, %v825, 0
        %v864 = vsel %vm853, %v826, 0
        %v867 = vsel %vm853, %v827, 0
        %v870 = vsel %vm853, %v828, 0
        %v873 = vsel %vm853, %v829, 0
        %v876 = vsel %vm853, %v830, 0
        %v879 = vsel %vm853, %v831, 0
        %v882 = vsel %vm853, %v832, 0
        %v885 = vsel %vm853, %v833, 0
        %v888 = vsel %vm853, %v834, 0
        %v891 = vsel %vm853, %v835, 0
        %v894 = vsel %vm853, %v836, 0
        %v897 = vsel %vm853, %v837, 0
        %v900 = vsel %vm853, %v838, 0
        %v903 = vsel %vm853, %v839, 0
        %v906 = vsel %vm853, %v840, 0
        %v909 = vsel %vm853, %v841, 0
        %vm911 = vcmask 1043456
        %vm912 = vcmask 1044480
        %v913 = vsel %vm911, 4294967295, 65535
        %v914 = vsel %vm912, %v913, 0
        %v916 = vand.u32 %v851, %v914
        %918 = vmatprep.subr.bf16.mxu0 0
        %919 = vmatpush1.bf16.msra.mxu0 %v850
        %920 = vmatprep.subr.bf16.mxu0 0
        %921 = vmatpush1.bf16.msra.mxu0 %v916
        %922 = vmatprep.subr.bf16.mxu0 0
        %923 = vmatpush1.bf16.msra.mxu0 0
        %924 = vmatprep.subr.bf16.mxu0 0
        %925 = vmatpush1.bf16.msra.mxu0 0
        %926 = vmatprep.subr.bf16.mxu0 0
        %927 = vmatpush1.bf16.msra.mxu0 0
        %928 = vmatprep.subr.bf16.mxu0 0
        %929 = vmatpush1.bf16.msra.mxu0 0
        %930 = vmatprep.subr.bf16.mxu0 0
        %931 = vmatpush1.bf16.msra.mxu0 0
        %932 = vmatprep.subr.bf16.mxu0 0
        %933 = vmatpush1.bf16.msra.mxu0 0
        %934 = vmatprep.subr.bf16.mxu0 0
        %935 = vmatpush1.bf16.msra.mxu0 0
        %936 = vmatprep.subr.bf16.mxu0 0
        %937 = vmatpush1.bf16.msra.mxu0 0
        %938 = vmatprep.subr.bf16.mxu0 0
        %939 = vmatpush1.bf16.msra.mxu0 0
        %940 = vmatprep.subr.bf16.mxu0 0
        %941 = vmatpush1.bf16.msra.mxu0 0
        %942 = vmatprep.subr.bf16.mxu0 0
        %943 = vmatpush1.bf16.msra.mxu0 0
        %944 = vmatprep.subr.bf16.mxu0 0
        %945 = vmatpush1.bf16.msra.mxu0 0
        %946 = vmatprep.subr.bf16.mxu0 0
        %947 = vmatpush1.bf16.msra.mxu0 0
        %948 = vmatprep.subr.bf16.mxu0 0
        %949 = vmatpush1.bf16.msra.mxu0 0
        %950 = vmatprep.mubr.bf16.mxu0 0
        %951 = vmatmul.mubr.bf16.gmra.mrb[0].mxu0 %v855
        %v952 = vpop.f32.mrb[0].mxu0
        %v953 = vadd.f32 %v747, %v952
        %v954 = vpop.f32.mrb[0].mxu0
        %v955 = vpop.f32.mrb[0].mxu0
        %v956 = vadd.f32 %v747, %v955
        %v957 = vpop.f32.mrb[0].mxu0
        %958 = vmatprep.mubr.bf16.mxu0 0
        %959 = vmatmul.mubr.bf16.gmra.mrb[0].mxu0 %v858
        %v960 = vpop.f32.mrb[0].mxu0
        %v961 = vadd.f32 %v747, %v960
        %v962 = vpop.f32.mrb[0].mxu0
        %v963 = vpop.f32.mrb[0].mxu0
        %v964 = vadd.f32 %v747, %v963
        %v965 = vpop.f32.mrb[0].mxu0
        %966 = vmatprep.mubr.bf16.mxu0 0
        %967 = vmatmul.mubr.bf16.gmra.mrb[0].mxu0 %v861
        %v968 = vpop.f32.mrb[0].mxu0
        %v969 = vadd.f32 %v747, %v968
        %v970 = vpop.f32.mrb[0].mxu0
        %v971 = vpop.f32.mrb[0].mxu0
        %v972 = vadd.f32 %v747, %v971
        %v973 = vpop.f32.mrb[0].mxu0
        %974 = vmatprep.mubr.bf16.mxu0 0
        %975 = vmatmul.mubr.bf16.gmra.mrb[0].mxu0 %v864
        %v976 = vpop.f32.mrb[0].mxu0
        %v977 = vadd.f32 %v747, %v976
        %v978 = vpop.f32.mrb[0].mxu0
        %v979 = vpop.f32.mrb[0].mxu0
        %v980 = vadd.f32 %v747, %v979
        %v981 = vpop.f32.mrb[0].mxu0
        %982 = vmatprep.mubr.bf16.mxu0 0
        %983 = vmatmul.mubr.bf16.gmra.mrb[0].mxu0 %v867
        %v984 = vpop.f32.mrb[0].mxu0
        %v985 = vadd.f32 %v747, %v984
        %v986 = vpop.f32.mrb[0].mxu0
        %v987 = vpop.f32.mrb[0].mxu0
        %v988 = vadd.f32 %v747, %v987
        %v989 = vpop.f32.mrb[0].mxu0
        %990 = vmatprep.mubr.bf16.mxu0 0
        %991 = vmatmul.mubr.bf16.gmra.mrb[0].mxu0 %v870
        %v992 = vpop.f32.mrb[0].mxu0
        %v993 = vadd.f32 %v747, %v992
        %v994 = vpop.f32.mrb[0].mxu0
        %v995 = vpop.f32.mrb[0].mxu0
        %v996 = vadd.f32 %v747, %v995
        %v997 = vpop.f32.mrb[0].mxu0
        %998 = vmatprep.mubr.bf16.mxu0 0
        %999 = vmatmul.mubr.bf16.gmra.mrb[0].mxu0 %v873
        %v1000 = vpop.f32.mrb[0].mxu0
        %v1001 = vadd.f32 %v747, %v1000
        %v1002 = vpop.f32.mrb[0].mxu0
        %v1003 = vpop.f32.mrb[0].mxu0
        %v1004 = vadd.f32 %v747, %v1003
        %v1005 = vpop.f32.mrb[0].mxu0
        %1006 = vmatprep.mubr.bf16.mxu0 0
        %1007 = vmatmul.mubr.bf16.gmra.mrb[0].mxu0 %v876
        %v1008 = vpop.f32.mrb[0].mxu0
        %v1009 = vadd.f32 %v747, %v1008
        %v1010 = vpop.f32.mrb[0].mxu0
        %v1011 = vpop.f32.mrb[0].mxu0
        %v1012 = vadd.f32 %v747, %v1011
        %v1013 = vpop.f32.mrb[0].mxu0
        %1014 = vmatprep.mubr.bf16.mxu0 0
        %1015 = vmatmul.mubr.bf16.gmra.mrb[0].mxu0 %v879
        %v1016 = vpop.f32.mrb[0].mxu0
        %v1017 = vadd.f32 %v747, %v1016
        %v1018 = vpop.f32.mrb[0].mxu0
        %v1019 = vpop.f32.mrb[0].mxu0
        %v1020 = vadd.f32 %v747, %v1019
        %v1021 = vpop.f32.mrb[0].mxu0
        %1022 = vmatprep.mubr.bf16.mxu0 0
        %1023 = vmatmul.mubr.bf16.gmra.mrb[0].mxu0 %v882
        %v1024 = vpop.f32.mrb[0].mxu0
        %v1025 = vadd.f32 %v747, %v1024
        %v1026 = vpop.f32.mrb[0].mxu0
        %v1027 = vpop.f32.mrb[0].mxu0
        %v1028 = vadd.f32 %v747, %v1027
        %v1029 = vpop.f32.mrb[0].mxu0
        %1030 = vmatprep.mubr.bf16.mxu0 0
        %1031 = vmatmul.mubr.bf16.gmra.mrb[0].mxu0 %v885
        %v1032 = vpop.f32.mrb[0].mxu0
        %v1033 = vadd.f32 %v747, %v1032
        %v1034 = vpop.f32.mrb[0].mxu0
        %v1035 = vpop.f32.mrb[0].mxu0
        %v1036 = vadd.f32 %v747, %v1035
        %v1037 = vpop.f32.mrb[0].mxu0
        %1038 = vmatprep.mubr.bf16.mxu0 0
        %1039 = vmatmul.mubr.bf16.gmra.mrb[0].mxu0 %v888
        %v1040 = vpop.f32.mrb[0].mxu0
        %v1041 = vadd.f32 %v747, %v1040
        %v1042 = vpop.f32.mrb[0].mxu0
        %v1043 = vpop.f32.mrb[0].mxu0
        %v1044 = vadd.f32 %v747, %v1043
        %v1045 = vpop.f32.mrb[0].mxu0
        %1046 = vmatprep.mubr.bf16.mxu0 0
        %1047 = vmatmul.mubr.bf16.gmra.mrb[0].mxu0 %v891
        %v1048 = vpop.f32.mrb[0].mxu0
        %v1049 = vadd.f32 %v747, %v1048
        %v1050 = vpop.f32.mrb[0].mxu0
        %v1051 = vpop.f32.mrb[0].mxu0
        %v1052 = vadd.f32 %v747, %v1051
        %v1053 = vpop.f32.mrb[0].mxu0
        %1054 = vmatprep.mubr.bf16.mxu0 0
        %1055 = vmatmul.mubr.bf16.gmra.mrb[0].mxu0 %v894
        %v1056 = vpop.f32.mrb[0].mxu0
        %v1057 = vadd.f32 %v747, %v1056
        %v1058 = vpop.f32.mrb[0].mxu0
        %v1059 = vpop.f32.mrb[0].mxu0
        %v1060 = vadd.f32 %v747, %v1059
        %v1061 = vpop.f32.mrb[0].mxu0
        %1062 = vmatprep.mubr.bf16.mxu0 0
        %1063 = vmatmul.mubr.bf16.gmra.mrb[0].mxu0 %v897
        %v1064 = vpop.f32.mrb[0].mxu0
        %v1065 = vadd.f32 %v747, %v1064
        %v1066 = vpop.f32.mrb[0].mxu0
        %v1067 = vpop.f32.mrb[0].mxu0
        %v1068 = vadd.f32 %v747, %v1067
        %v1069 = vpop.f32.mrb[0].mxu0
        %1070 = vmatprep.mubr.bf16.mxu0 0
        %1071 = vmatmul.mubr.bf16.gmra.mrb[0].mxu0 %v900
        %v1072 = vpop.f32.mrb[0].mxu0
        %v1073 = vadd.f32 %v747, %v1072
        %v1074 = vpop.f32.mrb[0].mxu0
        %v1075 = vpop.f32.mrb[0].mxu0
        %v1076 = vadd.f32 %v747, %v1075
        %v1077 = vpop.f32.mrb[0].mxu0
        %1078 = vmatprep.mubr.bf16.mxu0 0
        %1079 = vmatmul.mubr.bf16.gmra.mrb[0].mxu0 %v903
        %v1080 = vpop.f32.mrb[0].mxu0
        %v1081 = vadd.f32 %v747, %v1080
        %v1082 = vpop.f32.mrb[0].mxu0
        %v1083 = vpop.f32.mrb[0].mxu0
        %v1084 = vadd.f32 %v747, %v1083
        %v1085 = vpop.f32.mrb[0].mxu0
        %1086 = vmatprep.mubr.bf16.mxu0 0
        %1087 = vmatmul.mubr.bf16.gmra.mrb[0].mxu0 %v906
        %v1088 = vpop.f32.mrb[0].mxu0
        %v1089 = vadd.f32 %v747, %v1088
        %v1090 = vpop.f32.mrb[0].mxu0
        %v1091 = vpop.f32.mrb[0].mxu0
        %v1092 = vadd.f32 %v747, %v1091
        %v1093 = vpop.f32.mrb[0].mxu0
        %1094 = vmatprep.mubr.bf16.mxu0 0
        %1095 = vmatmul.mubr.bf16.gmra.mrb[0].mxu0 %v909
        %v1096 = vpop.f32.mrb[0].mxu0
        %v1097 = vadd.f32 %v747, %v1096
        %v1098 = vpop.f32.mrb[0].mxu0
        %v1099 = vpop.f32.mrb[0].mxu0
        %v1100 = vpop.f32.mrb[0].mxu0
        %1101 = vdwg.mxu0
        %v1102 = vmax.f32 %v953, 0.0
        %v1103 = vmax.f32 %v956, 0.0
        %v1104 = vmax.f32 %v961, 0.0
        %v1105 = vmax.f32 %v964, 0.0
        %v1106 = vmax.f32 %v969, 0.0
        %v1107 = vmax.f32 %v972, 0.0
        %v1108 = vmax.f32 %v977, 0.0
        %v1109 = vmax.f32 %v980, 0.0
        %v1110 = vmax.f32 %v985, 0.0
        %v1111 = vmax.f32 %v988, 0.0
        %v1112 = vmax.f32 %v993, 0.0
        %v1113 = vmax.f32 %v996, 0.0
        %v1114 = vmax.f32 %v1001, 0.0
        %v1115 = vmax.f32 %v1004, 0.0
        %v1116 = vmax.f32 %v1009, 0.0
        %v1117 = vmax.f32 %v1012, 0.0
        %v1118 = vmax.f32 %v1017, 0.0
        %v1119 = vmax.f32 %v1020, 0.0
        %v1120 = vmax.f32 %v1025, 0.0
        %v1121 = vmax.f32 %v1028, 0.0
        %v1122 = vmax.f32 %v1033, 0.0
        %v1123 = vmax.f32 %v1036, 0.0
        %v1124 = vmax.f32 %v1041, 0.0
        %v1125 = vmax.f32 %v1044, 0.0
        %v1126 = vmax.f32 %v1049, 0.0
        %v1127 = vmax.f32 %v1052, 0.0
        %v1128 = vmax.f32 %v1057, 0.0
        %v1129 = vmax.f32 %v1060, 0.0
        %v1130 = vmax.f32 %v1065, 0.0
        %v1131 = vmax.f32 %v1068, 0.0
        %v1132 = vmax.f32 %v1073, 0.0
        %v1133 = vmax.f32 %v1076, 0.0
        %v1134 = vmax.f32 %v1081, 0.0
        %v1135 = vmax.f32 %v1084, 0.0
        %v1136 = vmax.f32 %v1089, 0.0
        %v1137 = vmax.f32 %v1092, 0.0
        %v1138 = vmax.f32 %v1097, 0.0
        %v1139 = vpack.c.bf16 %v1103, %v1102
        %v1140 = vpack.c.bf16 %v1105, %v1104
        %v1141 = vpack.c.bf16 %v1107, %v1106
        %v1142 = vpack.c.bf16 %v1109, %v1108
        %v1143 = vpack.c.bf16 %v1111, %v1110
        %v1144 = vpack.c.bf16 %v1113, %v1112
        %v1145 = vpack.c.bf16 %v1115, %v1114
        %v1146 = vpack.c.bf16 %v1117, %v1116
        %v1147 = vpack.c.bf16 %v1119, %v1118
        %v1148 = vpack.c.bf16 %v1121, %v1120
        %v1149 = vpack.c.bf16 %v1123, %v1122
        %v1150 = vpack.c.bf16 %v1125, %v1124
        %v1151 = vpack.c.bf16 %v1127, %v1126
        %v1152 = vpack.c.bf16 %v1129, %v1128
        %v1153 = vpack.c.bf16 %v1131, %v1130
        %v1154 = vpack.c.bf16 %v1133, %v1132
        %v1155 = vpack.c.bf16 %v1135, %v1134
        %v1156 = vpack.c.bf16 %v1137, %v1136
        %v1157 = vpack.c.bf16 %v1138, %v1138
        %v1158 = vld [vmem:[%s3] sm:$0xff]
        %v1159 = vld [vmem:[%s3 + $0x8] sm:$0xf]
        %v1160 = vld [vmem:[%s3 + $0xc] sm:$0xff]
        %v1161 = vld [vmem:[%s3 + $0x14] sm:$0xf]
        %v1162 = vld [vmem:[%s3 + $0x18] sm:$0xff]
        %v1163 = vld [vmem:[%s3 + $0x20] sm:$0xf]
        %v1164 = vld [vmem:[%s3 + $0x24] sm:$0xff]
        %v1165 = vld [vmem:[%s3 + $0x2c] sm:$0xf]
        %v1166 = vld [vmem:[%s3 + $0x30] sm:$0xff]
        %v1167 = vld [vmem:[%s3 + $0x38] sm:$0xf]
        %v1168 = vld [vmem:[%s3 + $0x3c] sm:$0xff]
        %v1169 = vld [vmem:[%s3 + $0x44] sm:$0xf]
        %v1170 = vld [vmem:[%s3 + $0x48] sm:$0xff]
        %v1171 = vld [vmem:[%s3 + $0x50] sm:$0xf]
        %v1172 = vld [vmem:[%s3 + $0x54] sm:$0xff]
        %v1173 = vld [vmem:[%s3 + $0x5c] sm:$0xf]
        %v1174 = vld [vmem:[%s3 + $0x60] sm:$0xff]
        %v1175 = vld [vmem:[%s3 + $0x68] sm:$0xf]
        %v1176 = vld [vmem:[%s3 + $0x6c] sm:$0xff]
        %v1177 = vld [vmem:[%s3 + $0x74] sm:$0xf]
        %v1178 = vld [vmem:[%s3 + $0x78] sm:$0xff]
        %v1179 = vld [vmem:[%s3 + $0x80] sm:$0xf]
        %v1180 = vld [vmem:[%s3 + $0x84] sm:$0xff]
        %v1181 = vld [vmem:[%s3 + $0x8c] sm:$0xf]
        %v1182 = vld [vmem:[%s3 + $0x90] sm:$0xff]
        %v1183 = vld [vmem:[%s3 + $0x98] sm:$0xf]
        %v1184 = vld [vmem:[%s3 + $0x9c] sm:$0xff]
        %v1185 = vld [vmem:[%s3 + $0xa4] sm:$0xf]
        %v1186 = vld [vmem:[%s3 + $0xa8] sm:$0xff]
        %v1187 = vld [vmem:[%s3 + $0xb0] sm:$0xf]
        %v1188 = vld [vmem:[%s3 + $0xb4] sm:$0xff]
        %v1189 = vld [vmem:[%s3 + $0xbc] sm:$0xf]
        %v1190 = vld [vmem:[%s3 + $0xc0] sm:$0xff]
        %v1191 = vld [vmem:[%s3 + $0xc8] sm:$0xf]
        %v1192 = vld [vmem:[%s3 + $0xcc] sm:$0xff]
        %v1193 = vld [vmem:[%s3 + $0xd4] sm:$0xf]
        %v1194 = vld [vmem:[%s3 + $0xd8] sm:$0xff]
        %v1195 = vld [vmem:[%s3 + $0xe0] sm:$0xf]
        %v1196 = vld [vmem:[%s3 + $0xe4] sm:$0xff]
        %v1197 = vld [vmem:[%s3 + $0xec] sm:$0xf]
        %v1198 = vld [vmem:[%s3 + $0xf0] sm:$0xff]
        %v1199 = vld [vmem:[%s3 + $0xf8] sm:$0xf]
        %v1200 = vld [vmem:[%s3 + $0xfc] sm:$0xff]
        %v1201 = vld [vmem:[%s3 + $0x104] sm:$0xf]
        %v1202 = vld [vmem:[%s3 + $0x108] sm:$0xff]
        %v1203 = vld [vmem:[%s3 + $0x110] sm:$0xf]
        %v1204 = vld [vmem:[%s3 + $0x114] sm:$0xff]
        %v1205 = vld [vmem:[%s3 + $0x11c] sm:$0xf]
        %v1206 = vld [vmem:[%s3 + $0x120] sm:$0xff]
        %v1207 = vld [vmem:[%s3 + $0x128] sm:$0xf]
        %v1208 = vld [vmem:[%s3 + $0x12c] sm:$0xff]
        %v1209 = vld [vmem:[%s3 + $0x134] sm:$0xf]
        %v1210 = vld [vmem:[%s3 + $0x138] sm:$0xff]
        %v1211 = vld [vmem:[%s3 + $0x140] sm:$0xf]
        %v1212 = vld [vmem:[%s3 + $0x144] sm:$0xff]
        %v1213 = vld [vmem:[%s3 + $0x14c] sm:$0xf]
        %v1214 = vld [vmem:[%s3 + $0x150] sm:$0xff]
        %v1215 = vld [vmem:[%s3 + $0x158] sm:$0xf]
        %v1216 = vld [vmem:[%s3 + $0x15c] sm:$0xff]
        %v1217 = vld [vmem:[%s3 + $0x164] sm:$0xf]
        %v1218 = vld [vmem:[%s3 + $0x168] sm:$0xff]
        %v1219 = vld [vmem:[%s3 + $0x170] sm:$0xf]
        %v1220 = vld [vmem:[%s3 + $0x174] sm:$0xff]
        %v1221 = vld [vmem:[%s3 + $0x17c] sm:$0xf]
        %v1222 = vld [vmem:[%s3 + $0x180] sm:$0xff]
        %v1223 = vld [vmem:[%s3 + $0x188] sm:$0xf]
        %v1224 = vld [vmem:[%s3 + $0x18c] sm:$0xff]
        %v1225 = vld [vmem:[%s3 + $0x194] sm:$0xf]
        %v1226 = vld [vmem:[%s3 + $0x198] sm:$0xff]
        %v1227 = vld [vmem:[%s3 + $0x1a0] sm:$0xf]
        %v1228 = vld [vmem:[%s3 + $0x1a4] sm:$0xff]
        %v1229 = vld [vmem:[%s3 + $0x1ac] sm:$0xf]
        %v1230 = vld [vmem:[%s3 + $0x1b0] sm:$0xff]
        %v1231 = vld [vmem:[%s3 + $0x1b8] sm:$0xf]
        %v1232 = vld [vmem:[%s3 + $0x1bc] sm:$0xff]
        %v1233 = vld [vmem:[%s3 + $0x1c4] sm:$0xf]
        %v1234 = vld [vmem:[%s3 + $0x1c8] sm:$0xff]
        %v1235 = vld [vmem:[%s3 + $0x1d0] sm:$0xf]
        %v1236 = vld [vmem:[%s3 + $0x1d4] sm:$0xff]
        %v1237 = vld [vmem:[%s3 + $0x1dc] sm:$0xf]
        %v1238 = vld [vmem:[%s3 + $0x1e0] sm:$0xff]
        %v1239 = vld [vmem:[%s3 + $0x1e8] sm:$0xf]
        %v1240 = vld [vmem:[%s3 + $0x1ec] sm:$0xff]
        %v1241 = vld [vmem:[%s3 + $0x1f4] sm:$0xf]
        %v1242 = vld [vmem:[%s3 + $0x1f8] sm:$0xff]
        %v1243 = vld [vmem:[%s3 + $0x200] sm:$0xf]
        %v1244 = vld [vmem:[%s3 + $0x204] sm:$0xff]
        %v1245 = vld [vmem:[%s3 + $0x20c] sm:$0xf]
        %v1246 = vld [vmem:[%s3 + $0x210] sm:$0xff]
        %v1247 = vld [vmem:[%s3 + $0x218] sm:$0xf]
        %v1248 = vld [vmem:[%s3 + $0x21c] sm:$0xff]
        %v1249 = vld [vmem:[%s3 + $0x224] sm:$0xf]
        %v1250 = vld [vmem:[%s3 + $0x228] sm:$0xff]
        %v1251 = vld [vmem:[%s3 + $0x230] sm:$0xf]
        %v1252 = vld [vmem:[%s3 + $0x234] sm:$0xff]
        %v1253 = vld [vmem:[%s3 + $0x23c] sm:$0xf]
        %v1254 = vld [vmem:[%s3 + $0x240] sm:$0xff]
        %v1255 = vld [vmem:[%s3 + $0x248] sm:$0xf]
        %v1256 = vld [vmem:[%s3 + $0x24c] sm:$0xff]
        %v1257 = vld [vmem:[%s3 + $0x254] sm:$0xf]
        %v1258 = vld [vmem:[%s3 + $0x258] sm:$0xff]
        %v1259 = vld [vmem:[%s3 + $0x260] sm:$0xf]
        %v1260 = vld [vmem:[%s3 + $0x264] sm:$0xff]
        %v1261 = vld [vmem:[%s3 + $0x26c] sm:$0xf]
        %v1262 = vld [vmem:[%s3 + $0x270] sm:$0xff]
        %v1263 = vld [vmem:[%s3 + $0x278] sm:$0xf]
        %v1264 = vld [vmem:[%s3 + $0x27c] sm:$0xff]
        %v1265 = vld [vmem:[%s3 + $0x284] sm:$0xf]
        %v1266 = vld [vmem:[%s3 + $0x288] sm:$0xff]
        %v1267 = vld [vmem:[%s3 + $0x290] sm:$0xf]
        %v1268 = vld [vmem:[%s3 + $0x294] sm:$0xff]
        %v1269 = vld [vmem:[%s3 + $0x29c] sm:$0xf]
        %v1270 = vld [vmem:[%s3 + $0x2a0] sm:$0xff]
        %v1271 = vld [vmem:[%s3 + $0x2a8] sm:$0xf]
        %v1272 = vld [vmem:[%s3 + $0x2ac] sm:$0xff]
        %v1273 = vld [vmem:[%s3 + $0x2b4] sm:$0xf]
        %v1274 = vld [vmem:[%s3 + $0x2b8] sm:$0xff]
        %v1275 = vld [vmem:[%s3 + $0x2c0] sm:$0xf]
        %v1276 = vld [vmem:[%s3 + $0x2c4] sm:$0xff]
        %v1277 = vld [vmem:[%s3 + $0x2cc] sm:$0xf]
        %v1278 = vld [vmem:[%s3 + $0x2d0] sm:$0xff]
        %v1279 = vld [vmem:[%s3 + $0x2d8] sm:$0xf]
        %v1280 = vld [vmem:[%s3 + $0x2dc] sm:$0xff]
        %v1281 = vld [vmem:[%s3 + $0x2e4] sm:$0xf]
        %v1282 = vld [vmem:[%s3 + $0x2e8] sm:$0xff]
        %v1283 = vld [vmem:[%s3 + $0x2f0] sm:$0xf]
        %v1284 = vld [vmem:[%s3 + $0x2f4] sm:$0xff]
        %v1285 = vld [vmem:[%s3 + $0x2fc] sm:$0xf]
        %v1286 = vld [vmem:[%s3 + $0x300] sm:$0xff]
        %v1287 = vld [vmem:[%s3 + $0x308] sm:$0xf]
        %v1288 = vld [vmem:[%s3 + $0x30c] sm:$0xff]
        %v1289 = vld [vmem:[%s3 + $0x314] sm:$0xf]
        %v1290 = vld [vmem:[%s3 + $0x318] sm:$0xff]
        %v1291 = vld [vmem:[%s3 + $0x320] sm:$0xf]
        %v1292 = vld [vmem:[%s3 + $0x324] sm:$0xff]
        %v1293 = vld [vmem:[%s3 + $0x32c] sm:$0xf]
        %v1294 = vld [vmem:[%s3 + $0x330] sm:$0xff]
        %v1295 = vld [vmem:[%s3 + $0x338] sm:$0xf]
        %v1296 = vld [vmem:[%s3 + $0x33c] sm:$0xff]
        %v1297 = vld [vmem:[%s3 + $0x344] sm:$0xf]
        %v1298 = vld [vmem:[%s3 + $0x348] sm:$0xff]
        %v1299 = vld [vmem:[%s3 + $0x350] sm:$0xf]
        %v1300 = vld [vmem:[%s3 + $0x354] sm:$0xff]
        %v1301 = vld [vmem:[%s3 + $0x35c] sm:$0xf]
        %v1302 = vld [vmem:[%s3 + $0x360] sm:$0xff]
        %v1303 = vld [vmem:[%s3 + $0x368] sm:$0xf]
        %v1304 = vld [vmem:[%s3 + $0x36c] sm:$0xff]
        %v1305 = vld [vmem:[%s3 + $0x374] sm:$0xf]
        %v1306 = vld [vmem:[%s3 + $0x378] sm:$0xff]
        %v1307 = vld [vmem:[%s3 + $0x380] sm:$0xf]
        %v1308 = vld [vmem:[%s3 + $0x384] sm:$0xff]
        %v1309 = vld [vmem:[%s3 + $0x38c] sm:$0xf]
        %v1310 = vld [vmem:[%s3 + $0x390] sm:$0xff]
        %v1311 = vld [vmem:[%s3 + $0x398] sm:$0xf]
        %v1312 = vld [vmem:[%s3 + $0x39c] sm:$0xff]
        %v1313 = vld [vmem:[%s3 + $0x3a4] sm:$0xf]
        %v1314 = vld [vmem:[%s3 + $0x3a8] sm:$0xff]
        %v1315 = vld [vmem:[%s3 + $0x3b0] sm:$0xf]
        %v1316 = vld [vmem:[%s3 + $0x3b4] sm:$0xff]
        %v1317 = vld [vmem:[%s3 + $0x3bc] sm:$0xf]
        %v1318 = vld [vmem:[%s3 + $0x3c0] sm:$0xff]
        %v1319 = vld [vmem:[%s3 + $0x3c8] sm:$0xf]
        %v1320 = vld [vmem:[%s3 + $0x3cc] sm:$0xff]
        %v1321 = vld [vmem:[%s3 + $0x3d4] sm:$0xf]
        %v1322 = vld [vmem:[%s3 + $0x3d8] sm:$0xff]
        %v1323 = vld [vmem:[%s3 + $0x3e0] sm:$0xf]
        %v1324 = vld [vmem:[%s3 + $0x3e4] sm:$0xff]
        %v1325 = vld [vmem:[%s3 + $0x3ec] sm:$0xf]
        %v1326 = vld [vmem:[%s3 + $0x3f0] sm:$0xff]
        %v1327 = vld [vmem:[%s3 + $0x3f8] sm:$0xf]
        %v1328 = vld [vmem:[%s3 + $0x3fc] sm:$0xff]
        %v1329 = vld [vmem:[%s3 + $0x404] sm:$0xf]
        %v1330 = vld [vmem:[%s3 + $0x408] sm:$0xff]
        %v1331 = vld [vmem:[%s3 + $0x410] sm:$0xf]
        %v1332 = vld [vmem:[%s3 + $0x414] sm:$0xff]
        %v1333 = vld [vmem:[%s3 + $0x41c] sm:$0xf]
        %v1334 = vld [vmem:[%s3 + $0x420] sm:$0xff]
        %v1335 = vld [vmem:[%s3 + $0x428] sm:$0xf]
        %v1336 = vld [vmem:[%s3 + $0x42c] sm:$0xff]
        %v1337 = vld [vmem:[%s3 + $0x434] sm:$0xf]
        %v1338 = vld [vmem:[%s3 + $0x438] sm:$0xff]
        %v1339 = vld [vmem:[%s3 + $0x440] sm:$0xf]
        %v1340 = vld [vmem:[%s3 + $0x444] sm:$0x11]
        %v1341 = vld [vmem:[%s3 + $0x44c] sm:$0x1]
        %v1526 = vunpack.c.l.b16 %v1158
        %v1527 = vunpack.c.h.b16 %v1158
        %v1528 = vunpack.c.l.b16 %v1159
        %v1529 = vunpack.c.l.b16 %v1160
        %v1530 = vunpack.c.h.b16 %v1160
        %v1531 = vunpack.c.l.b16 %v1161
        %v1532 = vunpack.c.l.b16 %v1162
        %v1533 = vunpack.c.h.b16 %v1162
        %v1534 = vunpack.c.l.b16 %v1163
        %v1535 = vunpack.c.l.b16 %v1164
        %v1536 = vunpack.c.h.b16 %v1164
        %v1537 = vunpack.c.l.b16 %v1165
        %v1538 = vunpack.c.l.b16 %v1166
        %v1539 = vunpack.c.h.b16 %v1166
        %v1540 = vunpack.c.l.b16 %v1167
        %v1541 = vunpack.c.l.b16 %v1168
        %v1542 = vunpack.c.h.b16 %v1168
        %v1543 = vunpack.c.l.b16 %v1169
        %v1544 = vunpack.c.l.b16 %v1170
        %v1545 = vunpack.c.h.b16 %v1170
        %v1546 = vunpack.c.l.b16 %v1171
        %v1547 = vunpack.c.l.b16 %v1172
        %v1548 = vunpack.c.h.b16 %v1172
        %v1549 = vunpack.c.l.b16 %v1173
        %v1550 = vunpack.c.l.b16 %v1174
        %v1551 = vunpack.c.h.b16 %v1174
        %v1552 = vunpack.c.l.b16 %v1175
        %v1553 = vunpack.c.l.b16 %v1176
        %v1554 = vunpack.c.h.b16 %v1176
        %v1555 = vunpack.c.l.b16 %v1177
        %v1556 = vunpack.c.l.b16 %v1178
        %v1557 = vunpack.c.h.b16 %v1178
        %v1558 = vunpack.c.l.b16 %v1179
        %v1559 = vunpack.c.l.b16 %v1180
        %v1560 = vunpack.c.h.b16 %v1180
        %v1561 = vunpack.c.l.b16 %v1181
        %v1562 = vunpack.c.l.b16 %v1182
        %v1563 = vunpack.c.h.b16 %v1182
        %v1564 = vunpack.c.l.b16 %v1183
        %v1565 = vunpack.c.l.b16 %v1184
        %v1566 = vunpack.c.h.b16 %v1184
        %v1567 = vunpack.c.l.b16 %v1185
        %v1568 = vunpack.c.l.b16 %v1186
        %v1569 = vunpack.c.h.b16 %v1186
        %v1570 = vunpack.c.l.b16 %v1187
        %v1571 = vunpack.c.l.b16 %v1188
        %v1572 = vunpack.c.h.b16 %v1188
        %v1573 = vunpack.c.l.b16 %v1189
        %v1574 = vunpack.c.l.b16 %v1190
        %v1575 = vunpack.c.h.b16 %v1190
        %v1576 = vunpack.c.l.b16 %v1191
        %v1577 = vunpack.c.l.b16 %v1192
        %v1578 = vunpack.c.h.b16 %v1192
        %v1579 = vunpack.c.l.b16 %v1193
        %v1580 = vunpack.c.l.b16 %v1194
        %v1581 = vunpack.c.h.b16 %v1194
        %v1582 = vunpack.c.l.b16 %v1195
        %v1583 = vunpack.c.l.b16 %v1196
        %v1584 = vunpack.c.h.b16 %v1196
        %v1585 = vunpack.c.l.b16 %v1197
        %v1586 = vunpack.c.l.b16 %v1198
        %v1587 = vunpack.c.h.b16 %v1198
        %v1588 = vunpack.c.l.b16 %v1199
        %v1589 = vunpack.c.l.b16 %v1200
        %v1590 = vunpack.c.h.b16 %v1200
        %v1591 = vunpack.c.l.b16 %v1201
        %v1592 = vunpack.c.l.b16 %v1202
        %v1593 = vunpack.c.h.b16 %v1202
        %v1594 = vunpack.c.l.b16 %v1203
        %v1595 = vunpack.c.l.b16 %v1204
        %v1596 = vunpack.c.h.b16 %v1204
        %v1597 = vunpack.c.l.b16 %v1205
        %v1598 = vunpack.c.l.b16 %v1206
        %v1599 = vunpack.c.h.b16 %v1206
        %v1600 = vunpack.c.l.b16 %v1207
        %v1601 = vunpack.c.l.b16 %v1208
        %v1602 = vunpack.c.h.b16 %v1208
        %v1603 = vunpack.c.l.b16 %v1209
        %v1604 = vunpack.c.l.b16 %v1210
        %v1605 = vunpack.c.h.b16 %v1210
        %v1606 = vunpack.c.l.b16 %v1211
        %v1607 = vunpack.c.l.b16 %v1212
        %v1608 = vunpack.c.h.b16 %v1212
        %v1609 = vunpack.c.l.b16 %v1213
        %v1610 = vunpack.c.l.b16 %v1214
        %v1611 = vunpack.c.h.b16 %v1214
        %v1612 = vunpack.c.l.b16 %v1215
        %v1613 = vunpack.c.l.b16 %v1216
        %v1614 = vunpack.c.h.b16 %v1216
        %v1615 = vunpack.c.l.b16 %v1217
        %v1616 = vunpack.c.l.b16 %v1218
        %v1617 = vunpack.c.h.b16 %v1218
        %v1618 = vunpack.c.l.b16 %v1219
        %v1619 = vunpack.c.l.b16 %v1220
        %v1620 = vunpack.c.h.b16 %v1220
        %v1621 = vunpack.c.l.b16 %v1221
        %v1622 = vunpack.c.l.b16 %v1222
        %v1623 = vunpack.c.h.b16 %v1222
        %v1624 = vunpack.c.l.b16 %v1223
        %v1625 = vunpack.c.l.b16 %v1224
        %v1626 = vunpack.c.h.b16 %v1224
        %v1627 = vunpack.c.l.b16 %v1225
        %v1628 = vunpack.c.l.b16 %v1226
        %v1629 = vunpack.c.h.b16 %v1226
        %v1630 = vunpack.c.l.b16 %v1227
        %v1631 = vunpack.c.l.b16 %v1228
        %v1632 = vunpack.c.h.b16 %v1228
        %v1633 = vunpack.c.l.b16 %v1229
        %v1634 = vunpack.c.l.b16 %v1230
        %v1635 = vunpack.c.h.b16 %v1230
        %v1636 = vunpack.c.l.b16 %v1231
        %v1637 = vunpack.c.l.b16 %v1232
        %v1638 = vunpack.c.h.b16 %v1232
        %v1639 = vunpack.c.l.b16 %v1233
        %v1640 = vunpack.c.l.b16 %v1234
        %v1641 = vunpack.c.h.b16 %v1234
        %v1642 = vunpack.c.l.b16 %v1235
        %v1643 = vunpack.c.l.b16 %v1236
        %v1644 = vunpack.c.h.b16 %v1236
        %v1645 = vunpack.c.l.b16 %v1237
        %v1646 = vunpack.c.l.b16 %v1238
        %v1647 = vunpack.c.h.b16 %v1238
        %v1648 = vunpack.c.l.b16 %v1239
        %v1649 = vunpack.c.l.b16 %v1240
        %v1650 = vunpack.c.h.b16 %v1240
        %v1651 = vunpack.c.l.b16 %v1241
        %v1652 = vunpack.c.l.b16 %v1242
        %v1653 = vunpack.c.h.b16 %v1242
        %v1654 = vunpack.c.l.b16 %v1243
        %v1655 = vunpack.c.l.b16 %v1244
        %v1656 = vunpack.c.h.b16 %v1244
        %v1657 = vunpack.c.l.b16 %v1245
        %v1658 = vunpack.c.l.b16 %v1246
        %v1659 = vunpack.c.h.b16 %v1246
        %v1660 = vunpack.c.l.b16 %v1247
        %v1661 = vunpack.c.l.b16 %v1248
        %v1662 = vunpack.c.h.b16 %v1248
        %v1663 = vunpack.c.l.b16 %v1249
        %v1664 = vunpack.c.l.b16 %v1250
        %v1665 = vunpack.c.h.b16 %v1250
        %v1666 = vunpack.c.l.b16 %v1251
        %v1667 = vunpack.c.l.b16 %v1252
        %v1668 = vunpack.c.h.b16 %v1252
        %v1669 = vunpack.c.l.b16 %v1253
        %v1670 = vunpack.c.l.b16 %v1254
        %v1671 = vunpack.c.h.b16 %v1254
        %v1672 = vunpack.c.l.b16 %v1255
        %v1673 = vunpack.c.l.b16 %v1256
        %v1674 = vunpack.c.h.b16 %v1256
        %v1675 = vunpack.c.l.b16 %v1257
        %v1676 = vunpack.c.l.b16 %v1258
        %v1677 = vunpack.c.h.b16 %v1258
        %v1678 = vunpack.c.l.b16 %v1259
        %v1679 = vunpack.c.l.b16 %v1260
        %v1680 = vunpack.c.h.b16 %v1260
        %v1681 = vunpack.c.l.b16 %v1261
        %v1682 = vunpack.c.l.b16 %v1262
        %v1683 = vunpack.c.h.b16 %v1262
        %v1684 = vunpack.c.l.b16 %v1263
        %v1685 = vunpack.c.l.b16 %v1264
        %v1686 = vunpack.c.h.b16 %v1264
        %v1687 = vunpack.c.l.b16 %v1265
        %v1688 = vunpack.c.l.b16 %v1266
        %v1689 = vunpack.c.h.b16 %v1266
        %v1690 = vunpack.c.l.b16 %v1267
        %v1691 = vunpack.c.l.b16 %v1268
        %v1692 = vunpack.c.h.b16 %v1268
        %v1693 = vunpack.c.l.b16 %v1269
        %v1694 = vunpack.c.l.b16 %v1270
        %v1695 = vunpack.c.h.b16 %v1270
        %v1696 = vunpack.c.l.b16 %v1271
        %v1697 = vunpack.c.l.b16 %v1272
        %v1698 = vunpack.c.h.b16 %v1272
        %v1699 = vunpack.c.l.b16 %v1273
        %v1700 = vunpack.c.l.b16 %v1274
        %v1701 = vunpack.c.h.b16 %v1274
        %v1702 = vunpack.c.l.b16 %v1275
        %v1703 = vunpack.c.l.b16 %v1276
        %v1704 = vunpack.c.h.b16 %v1276
        %v1705 = vunpack.c.l.b16 %v1277
        %v1706 = vunpack.c.l.b16 %v1278
        %v1707 = vunpack.c.h.b16 %v1278
        %v1708 = vunpack.c.l.b16 %v1279
        %v1709 = vunpack.c.l.b16 %v1280
        %v1710 = vunpack.c.h.b16 %v1280
        %v1711 = vunpack.c.l.b16 %v1281
        %v1712 = vunpack.c.l.b16 %v1282
        %v1713 = vunpack.c.h.b16 %v1282
        %v1714 = vunpack.c.l.b16 %v1283
        %v1715 = vunpack.c.l.b16 %v1284
        %v1716 = vunpack.c.h.b16 %v1284
        %v1717 = vunpack.c.l.b16 %v1285
        %v1718 = vunpack.c.l.b16 %v1286
        %v1719 = vunpack.c.h.b16 %v1286
        %v1720 = vunpack.c.l.b16 %v1287
        %v1721 = vunpack.c.l.b16 %v1288
        %v1722 = vunpack.c.h.b16 %v1288
        %v1723 = vunpack.c.l.b16 %v1289
        %v1724 = vunpack.c.l.b16 %v1290
        %v1725 = vunpack.c.h.b16 %v1290
        %v1726 = vunpack.c.l.b16 %v1291
        %v1727 = vunpack.c.l.b16 %v1292
        %v1728 = vunpack.c.h.b16 %v1292
        %v1729 = vunpack.c.l.b16 %v1293
        %v1730 = vunpack.c.l.b16 %v1294
        %v1731 = vunpack.c.h.b16 %v1294
        %v1732 = vunpack.c.l.b16 %v1295
        %v1733 = vunpack.c.l.b16 %v1296
        %v1734 = vunpack.c.h.b16 %v1296
        %v1735 = vunpack.c.l.b16 %v1297
        %v1736 = vunpack.c.l.b16 %v1298
        %v1737 = vunpack.c.h.b16 %v1298
        %v1738 = vunpack.c.l.b16 %v1299
        %v1739 = vunpack.c.l.b16 %v1300
        %v1740 = vunpack.c.h.b16 %v1300
        %v1741 = vunpack.c.l.b16 %v1301
        %v1742 = vunpack.c.l.b16 %v1302
        %v1743 = vunpack.c.h.b16 %v1302
        %v1744 = vunpack.c.l.b16 %v1303
        %v1745 = vunpack.c.l.b16 %v1304
        %v1746 = vunpack.c.h.b16 %v1304
        %v1747 = vunpack.c.l.b16 %v1305
        %v1748 = vunpack.c.l.b16 %v1306
        %v1749 = vunpack.c.h.b16 %v1306
        %v1750 = vunpack.c.l.b16 %v1307
        %v1751 = vunpack.c.l.b16 %v1308
        %v1752 = vunpack.c.h.b16 %v1308
        %v1753 = vunpack.c.l.b16 %v1309
        %v1754 = vunpack.c.l.b16 %v1310
        %v1755 = vunpack.c.h.b16 %v1310
        %v1756 = vunpack.c.l.b16 %v1311
        %v1757 = vunpack.c.l.b16 %v1312
        %v1758 = vunpack.c.h.b16 %v1312
        %v1759 = vunpack.c.l.b16 %v1313
        %v1760 = vunpack.c.l.b16 %v1314
        %v1761 = vunpack.c.h.b16 %v1314
        %v1762 = vunpack.c.l.b16 %v1315
        %v1763 = vunpack.c.l.b16 %v1316
        %v1764 = vunpack.c.h.b16 %v1316
        %v1765 = vunpack.c.l.b16 %v1317
        %v1766 = vunpack.c.l.b16 %v1318
        %v1767 = vunpack.c.h.b16 %v1318
        %v1768 = vunpack.c.l.b16 %v1319
        %v1769 = vunpack.c.l.b16 %v1320
        %v1770 = vunpack.c.h.b16 %v1320
        %v1771 = vunpack.c.l.b16 %v1321
        %v1772 = vunpack.c.l.b16 %v1322
        %v1773 = vunpack.c.h.b16 %v1322
        %v1774 = vunpack.c.l.b16 %v1323
        %v1775 = vunpack.c.l.b16 %v1324
        %v1776 = vunpack.c.h.b16 %v1324
        %v1777 = vunpack.c.l.b16 %v1325
        %v1778 = vunpack.c.l.b16 %v1326
        %v1779 = vunpack.c.h.b16 %v1326
        %v1780 = vunpack.c.l.b16 %v1327
        %v1781 = vunpack.c.l.b16 %v1328
        %v1782 = vunpack.c.h.b16 %v1328
        %v1783 = vunpack.c.l.b16 %v1329
        %v1784 = vunpack.c.l.b16 %v1330
        %v1785 = vunpack.c.h.b16 %v1330
        %v1786 = vunpack.c.l.b16 %v1331
        %v1787 = vunpack.c.l.b16 %v1332
        %v1788 = vunpack.c.h.b16 %v1332
        %v1789 = vunpack.c.l.b16 %v1333
        %v1790 = vunpack.c.l.b16 %v1334
        %v1791 = vunpack.c.h.b16 %v1334
        %v1792 = vunpack.c.l.b16 %v1335
        %v1793 = vunpack.c.l.b16 %v1336
        %v1794 = vunpack.c.h.b16 %v1336
        %v1795 = vunpack.c.l.b16 %v1337
        %v1796 = vunpack.c.l.b16 %v1338
        %v1797 = vunpack.c.h.b16 %v1338
        %v1798 = vunpack.c.l.b16 %v1339
        %v1799 = vunpack.c.l.b16 %v1340
        %v1800 = vunpack.c.h.b16 %v1340
        %v1801 = vunpack.c.l.b16 %v1341
        %v1802 = vpack.c.b16 %v1529, %v1526
        %v1803 = vpack.c.b16 %v1530, %v1527
        %v1804 = vpack.c.b16 %v1531, %v1528
        %v1805 = vpack.c.b16 %v1535, %v1532
        %v1806 = vpack.c.b16 %v1536, %v1533
        %v1807 = vpack.c.b16 %v1537, %v1534
        %v1808 = vpack.c.b16 %v1541, %v1538
        %v1809 = vpack.c.b16 %v1542, %v1539
        %v1810 = vpack.c.b16 %v1543, %v1540
        %v1811 = vpack.c.b16 %v1547, %v1544
        %v1812 = vpack.c.b16 %v1548, %v1545
        %v1813 = vpack.c.b16 %v1549, %v1546
        %v1814 = vpack.c.b16 %v1553, %v1550
        %v1815 = vpack.c.b16 %v1554, %v1551
        %v1816 = vpack.c.b16 %v1555, %v1552
        %v1817 = vpack.c.b16 %v1559, %v1556
        %v1818 = vpack.c.b16 %v1560, %v1557
        %v1819 = vpack.c.b16 %v1561, %v1558
        %v1820 = vpack.c.b16 %v1565, %v1562
        %v1821 = vpack.c.b16 %v1566, %v1563
        %v1822 = vpack.c.b16 %v1567, %v1564
        %v1823 = vpack.c.b16 %v1571, %v1568
        %v1824 = vpack.c.b16 %v1572, %v1569
        %v1825 = vpack.c.b16 %v1573, %v1570
        %v1826 = vpack.c.b16 %v1577, %v1574
        %v1827 = vpack.c.b16 %v1578, %v1575
        %v1828 = vpack.c.b16 %v1579, %v1576
        %v1829 = vpack.c.b16 %v1583, %v1580
        %v1830 = vpack.c.b16 %v1584, %v1581
        %v1831 = vpack.c.b16 %v1585, %v1582
        %v1832 = vpack.c.b16 %v1589, %v1586
        %v1833 = vpack.c.b16 %v1590, %v1587
        %v1834 = vpack.c.b16 %v1591, %v1588
        %v1835 = vpack.c.b16 %v1595, %v1592
        %v1836 = vpack.c.b16 %v1596, %v1593
        %v1837 = vpack.c.b16 %v1597, %v1594
        %v1838 = vpack.c.b16 %v1601, %v1598
        %v1839 = vpack.c.b16 %v1602, %v1599
        %v1840 = vpack.c.b16 %v1603, %v1600
        %v1841 = vpack.c.b16 %v1607, %v1604
        %v1842 = vpack.c.b16 %v1608, %v1605
        %v1843 = vpack.c.b16 %v1609, %v1606
        %v1844 = vpack.c.b16 %v1613, %v1610
        %v1845 = vpack.c.b16 %v1614, %v1611
        %v1846 = vpack.c.b16 %v1615, %v1612
        %v1847 = vpack.c.b16 %v1619, %v1616
        %v1848 = vpack.c.b16 %v1620, %v1617
        %v1849 = vpack.c.b16 %v1621, %v1618
        %v1850 = vpack.c.b16 %v1625, %v1622
        %v1851 = vpack.c.b16 %v1626, %v1623
        %v1852 = vpack.c.b16 %v1627, %v1624
        %v1853 = vpack.c.b16 %v1631, %v1628
        %v1854 = vpack.c.b16 %v1632, %v1629
        %v1855 = vpack.c.b16 %v1633, %v1630
        %v1856 = vpack.c.b16 %v1637, %v1634
        %v1857 = vpack.c.b16 %v1638, %v1635
        %v1858 = vpack.c.b16 %v1639, %v1636
        %v1859 = vpack.c.b16 %v1643, %v1640
        %v1860 = vpack.c.b16 %v1644, %v1641
        %v1861 = vpack.c.b16 %v1645, %v1642
        %v1862 = vpack.c.b16 %v1649, %v1646
        %v1863 = vpack.c.b16 %v1650, %v1647
        %v1864 = vpack.c.b16 %v1651, %v1648
        %v1865 = vpack.c.b16 %v1655, %v1652
        %v1866 = vpack.c.b16 %v1656, %v1653
        %v1867 = vpack.c.b16 %v1657, %v1654
        %v1868 = vpack.c.b16 %v1661, %v1658
        %v1869 = vpack.c.b16 %v1662, %v1659
        %v1870 = vpack.c.b16 %v1663, %v1660
        %v1871 = vpack.c.b16 %v1667, %v1664
        %v1872 = vpack.c.b16 %v1668, %v1665
        %v1873 = vpack.c.b16 %v1669, %v1666
        %v1874 = vpack.c.b16 %v1673, %v1670
        %v1875 = vpack.c.b16 %v1674, %v1671
        %v1876 = vpack.c.b16 %v1675, %v1672
        %v1877 = vpack.c.b16 %v1679, %v1676
        %v1878 = vpack.c.b16 %v1680, %v1677
        %v1879 = vpack.c.b16 %v1681, %v1678
        %v1880 = vpack.c.b16 %v1685, %v1682
        %v1881 = vpack.c.b16 %v1686, %v1683
        %v1882 = vpack.c.b16 %v1687, %v1684
        %v1883 = vpack.c.b16 %v1691, %v1688
        %v1884 = vpack.c.b16 %v1692, %v1689
        %v1885 = vpack.c.b16 %v1693, %v1690
        %v1886 = vpack.c.b16 %v1697, %v1694
        %v1887 = vpack.c.b16 %v1698, %v1695
        %v1888 = vpack.c.b16 %v1699, %v1696
        %v1889 = vpack.c.b16 %v1703, %v1700
        %v1890 = vpack.c.b16 %v1704, %v1701
        %v1891 = vpack.c.b16 %v1705, %v1702
        %v1892 = vpack.c.b16 %v1709, %v1706
        %v1893 = vpack.c.b16 %v1710, %v1707
        %v1894 = vpack.c.b16 %v1711, %v1708
        %v1895 = vpack.c.b16 %v1715, %v1712
        %v1896 = vpack.c.b16 %v1716, %v1713
        %v1897 = vpack.c.b16 %v1717, %v1714
        %v1898 = vpack.c.b16 %v1721, %v1718
        %v1899 = vpack.c.b16 %v1722, %v1719
        %v1900 = vpack.c.b16 %v1723, %v1720
        %v1901 = vpack.c.b16 %v1727, %v1724
        %v1902 = vpack.c.b16 %v1728, %v1725
        %v1903 = vpack.c.b16 %v1729, %v1726
        %v1904 = vpack.c.b16 %v1733, %v1730
        %v1905 = vpack.c.b16 %v1734, %v1731
        %v1906 = vpack.c.b16 %v1735, %v1732
        %v1907 = vpack.c.b16 %v1739, %v1736
        %v1908 = vpack.c.b16 %v1740, %v1737
        %v1909 = vpack.c.b16 %v1741, %v1738
        %v1910 = vpack.c.b16 %v1745, %v1742
        %v1911 = vpack.c.b16 %v1746, %v1743
        %v1912 = vpack.c.b16 %v1747, %v1744
        %v1913 = vpack.c.b16 %v1751, %v1748
        %v1914 = vpack.c.b16 %v1752, %v1749
        %v1915 = vpack.c.b16 %v1753, %v1750
        %v1916 = vpack.c.b16 %v1757, %v1754
        %v1917 = vpack.c.b16 %v1758, %v1755
        %v1918 = vpack.c.b16 %v1759, %v1756
        %v1919 = vpack.c.b16 %v1763, %v1760
        %v1920 = vpack.c.b16 %v1764, %v1761
        %v1921 = vpack.c.b16 %v1765, %v1762
        %v1922 = vpack.c.b16 %v1769, %v1766
        %v1923 = vpack.c.b16 %v1770, %v1767
        %v1924 = vpack.c.b16 %v1771, %v1768
        %v1925 = vpack.c.b16 %v1775, %v1772
        %v1926 = vpack.c.b16 %v1776, %v1773
        %v1927 = vpack.c.b16 %v1777, %v1774
        %v1928 = vpack.c.b16 %v1781, %v1778
        %v1929 = vpack.c.b16 %v1782, %v1779
        %v1930 = vpack.c.b16 %v1783, %v1780
        %v1931 = vpack.c.b16 %v1787, %v1784
        %v1932 = vpack.c.b16 %v1788, %v1785
        %v1933 = vpack.c.b16 %v1789, %v1786
        %v1934 = vpack.c.b16 %v1793, %v1790
        %v1935 = vpack.c.b16 %v1794, %v1791
        %v1936 = vpack.c.b16 %v1795, %v1792
        %v1937 = vpack.c.b16 %v1799, %v1796
        %v1938 = vpack.c.b16 %v1800, %v1797
        %v1939 = vpack.c.b16 %v1801, %v1798
        %vm2032 = vcmask 269312
        %v2034 = vsel %vm2032, %v1804, 0
        %v2037 = vsel %vm2032, %v1807, 0
        %v2040 = vsel %vm2032, %v1810, 0
        %v2043 = vsel %vm2032, %v1813, 0
        %v2046 = vsel %vm2032, %v1816, 0
        %v2049 = vsel %vm2032, %v1819, 0
        %v2052 = vsel %vm2032, %v1822, 0
        %v2055 = vsel %vm2032, %v1825, 0
        %v2058 = vsel %vm2032, %v1828, 0
        %v2061 = vsel %vm2032, %v1831, 0
        %v2064 = vsel %vm2032, %v1834, 0
        %v2067 = vsel %vm2032, %v1837, 0
        %v2070 = vsel %vm2032, %v1840, 0
        %v2073 = vsel %vm2032, %v1843, 0
        %v2076 = vsel %vm2032, %v1846, 0
        %v2079 = vsel %vm2032, %v1849, 0
        %v2082 = vsel %vm2032, %v1852, 0
        %v2085 = vsel %vm2032, %v1855, 0
        %v2088 = vsel %vm2032, %v1858, 0
        %v2091 = vsel %vm2032, %v1861, 0
        %v2094 = vsel %vm2032, %v1864, 0
        %v2097 = vsel %vm2032, %v1867, 0
        %v2100 = vsel %vm2032, %v1870, 0
        %v2103 = vsel %vm2032, %v1873, 0
        %v2106 = vsel %vm2032, %v1876, 0
        %v2109 = vsel %vm2032, %v1879, 0
        %v2112 = vsel %vm2032, %v1882, 0
        %v2115 = vsel %vm2032, %v1885, 0
        %v2118 = vsel %vm2032, %v1888, 0
        %v2121 = vsel %vm2032, %v1891, 0
        %v2124 = vsel %vm2032, %v1894, 0
        %v2127 = vsel %vm2032, %v1897, 0
        %v2130 = vsel %vm2032, %v1900, 0
        %v2133 = vsel %vm2032, %v1903, 0
        %v2136 = vsel %vm2032, %v1906, 0
        %v2139 = vsel %vm2032, %v1909, 0
        %v2142 = vsel %vm2032, %v1912, 0
        %v2145 = vsel %vm2032, %v1915, 0
        %v2148 = vsel %vm2032, %v1918, 0
        %v2151 = vsel %vm2032, %v1921, 0
        %v2154 = vsel %vm2032, %v1924, 0
        %v2157 = vsel %vm2032, %v1927, 0
        %v2160 = vsel %vm2032, %v1930, 0
        %v2163 = vsel %vm2032, %v1933, 0
        %v2166 = vsel %vm2032, %v1936, 0
        %v2169 = vsel %vm2032, %v1939, 0
        %vm2171 = vcmask 1040384
        %v2172 = vsel 0, 4294967295, 65535
        %v2173 = vsel %vm2171, %v2172, 0
        %v2175 = vand.u32 %v1157, %v2173
        %2177 = vmatprep.subr.bf16.mxu0 0
        %2178 = vmatpush1.bf16.msra.mxu0 %v1139
        %2179 = vmatprep.subr.bf16.mxu0 0
        %2180 = vmatpush1.bf16.msra.mxu0 %v1140
        %2181 = vmatprep.subr.bf16.mxu0 0
        %2182 = vmatpush1.bf16.msra.mxu0 %v1141
        %2183 = vmatprep.subr.bf16.mxu0 0
        %2184 = vmatpush1.bf16.msra.mxu0 %v1142
        %2185 = vmatprep.subr.bf16.mxu0 0
        %2186 = vmatpush1.bf16.msra.mxu0 %v1143
        %2187 = vmatprep.subr.bf16.mxu0 0
        %2188 = vmatpush1.bf16.msra.mxu0 %v1144
        %2189 = vmatprep.subr.bf16.mxu0 0
        %2190 = vmatpush1.bf16.msra.mxu0 %v1145
        %2191 = vmatprep.subr.bf16.mxu0 0
        %2192 = vmatpush1.bf16.msra.mxu0 %v1146
        %2193 = vmatprep.subr.bf16.mxu0 0
        %2194 = vmatpush1.bf16.msra.mxu0 %v1147
        %2195 = vmatprep.subr.bf16.mxu0 0
        %2196 = vmatpush1.bf16.msra.mxu0 %v1148
        %2197 = vmatprep.subr.bf16.mxu0 0
        %2198 = vmatpush1.bf16.msra.mxu0 %v1149
        %2199 = vmatprep.subr.bf16.mxu0 0
        %2200 = vmatpush1.bf16.msra.mxu0 %v1150
        %2201 = vmatprep.subr.bf16.mxu0 0
        %2202 = vmatpush1.bf16.msra.mxu0 %v1151
        %2203 = vmatprep.subr.bf16.mxu0 0
        %2204 = vmatpush1.bf16.msra.mxu0 %v1152
        %2205 = vmatprep.subr.bf16.mxu0 0
        %2206 = vmatpush1.bf16.msra.mxu0 %v1153
        %2207 = vmatprep.subr.bf16.mxu0 0
        %2208 = vmatpush1.bf16.msra.mxu0 %v1154
        %2209 = vmatprep.mubr.bf16.mxu0 %v1803
        %2210 = vmatmul.mubr.bf16.gmra.mrb[0].mxu0 %v1802
        %v2211 = vpop.f32.mrb[0].mxu0
        %v2212 = vadd.f32 0.0, %v2211
        %v2213 = vpop.f32.mrb[0].mxu0
        %v2214 = vpop.f32.mrb[0].mxu0
        %v2215 = vadd.f32 0.0, %v2214
        %v2216 = vpop.f32.mrb[0].mxu0
        %2217 = vmatprep.mubr.bf16.mxu0 %v1806
        %2218 = vmatmul.mubr.bf16.gmra.mrb[0].mxu0 %v1805
        %v2219 = vpop.f32.mrb[0].mxu0
        %v2220 = vadd.f32 0.0, %v2219
        %v2221 = vpop.f32.mrb[0].mxu0
        %v2222 = vpop.f32.mrb[0].mxu0
        %v2223 = vadd.f32 0.0, %v2222
        %v2224 = vpop.f32.mrb[0].mxu0
        %2225 = vmatprep.mubr.bf16.mxu0 %v1809
        %2226 = vmatmul.mubr.bf16.gmra.mrb[0].mxu0 %v1808
        %v2227 = vpop.f32.mrb[0].mxu0
        %v2228 = vadd.f32 0.0, %v2227
        %v2229 = vpop.f32.mrb[0].mxu0
        %v2230 = vpop.f32.mrb[0].mxu0
        %v2231 = vadd.f32 0.0, %v2230
        %v2232 = vpop.f32.mrb[0].mxu0
        %2233 = vmatprep.mubr.bf16.mxu0 %v1812
        %2234 = vmatmul.mubr.bf16.gmra.mrb[0].mxu0 %v1811
        %v2235 = vpop.f32.mrb[0].mxu0
        %v2236 = vadd.f32 0.0, %v2235
        %v2237 = vpop.f32.mrb[0].mxu0
        %v2238 = vpop.f32.mrb[0].mxu0
        %v2239 = vadd.f32 0.0, %v2238
        %v2240 = vpop.f32.mrb[0].mxu0
        %2241 = vmatprep.mubr.bf16.mxu0 %v1815
        %2242 = vmatmul.mubr.bf16.gmra.mrb[0].mxu0 %v1814
        %v2243 = vpop.f32.mrb[0].mxu0
        %v2244 = vadd.f32 0.0, %v2243
        %v2245 = vpop.f32.mrb[0].mxu0
        %v2246 = vpop.f32.mrb[0].mxu0
        %v2247 = vadd.f32 0.0, %v2246
        %v2248 = vpop.f32.mrb[0].mxu0
        %2249 = vmatprep.mubr.bf16.mxu0 %v1818
        %2250 = vmatmul.mubr.bf16.gmra.mrb[0].mxu0 %v1817
        %v2251 = vpop.f32.mrb[0].mxu0
        %v2252 = vadd.f32 0.0, %v2251
        %v2253 = vpop.f32.mrb[0].mxu0
        %v2254 = vpop.f32.mrb[0].mxu0
        %v2255 = vadd.f32 0.0, %v2254
        %v2256 = vpop.f32.mrb[0].mxu0
        %2257 = vmatprep.mubr.bf16.mxu0 %v1821
        %2258 = vmatmul.mubr.bf16.gmra.mrb[0].mxu0 %v1820
        %v2259 = vpop.f32.mrb[0].mxu0
        %v2260 = vadd.f32 0.0, %v2259
        %v2261 = vpop.f32.mrb[0].mxu0
        %v2262 = vpop.f32.mrb[0].mxu0
        %v2263 = vadd.f32 0.0, %v2262
        %v2264 = vpop.f32.mrb[0].mxu0
        %2265 = vmatprep.mubr.bf16.mxu0 %v1824
        %2266 = vmatmul.mubr.bf16.gmra.mrb[0].mxu0 %v1823
        %v2267 = vpop.f32.mrb[0].mxu0
        %v2268 = vadd.f32 0.0, %v2267
        %v2269 = vpop.f32.mrb[0].mxu0
        %v2270 = vpop.f32.mrb[0].mxu0
        %v2271 = vadd.f32 0.0, %v2270
        %v2272 = vpop.f32.mrb[0].mxu0
        %2273 = vmatprep.mubr.bf16.mxu0 %v1827
        %2274 = vmatmul.mubr.bf16.gmra.mrb[0].mxu0 %v1826
        %v2275 = vpop.f32.mrb[0].mxu0
        %v2276 = vadd.f32 0.0, %v2275
        %v2277 = vpop.f32.mrb[0].mxu0
        %v2278 = vpop.f32.mrb[0].mxu0
        %v2279 = vadd.f32 0.0, %v2278
        %v2280 = vpop.f32.mrb[0].mxu0
        %2281 = vmatprep.mubr.bf16.mxu0 %v1830
        %2282 = vmatmul.mubr.bf16.gmra.mrb[0].mxu0 %v1829
        %v2283 = vpop.f32.mrb[0].mxu0
        %v2284 = vadd.f32 0.0, %v2283
        %v2285 = vpop.f32.mrb[0].mxu0
        %v2286 = vpop.f32.mrb[0].mxu0
        %v2287 = vadd.f32 0.0, %v2286
        %v2288 = vpop.f32.mrb[0].mxu0
        %2289 = vmatprep.mubr.bf16.mxu0 %v1833
        %2290 = vmatmul.mubr.bf16.gmra.mrb[0].mxu0 %v1832
        %v2291 = vpop.f32.mrb[0].mxu0
        %v2292 = vadd.f32 0.0, %v2291
        %v2293 = vpop.f32.mrb[0].mxu0
        %v2294 = vpop.f32.mrb[0].mxu0
        %v2295 = vadd.f32 0.0, %v2294
        %v2296 = vpop.f32.mrb[0].mxu0
        %2297 = vmatprep.mubr.bf16.mxu0 %v1836
        %2298 = vmatmul.mubr.bf16.gmra.mrb[0].mxu0 %v1835
        %v2299 = vpop.f32.mrb[0].mxu0
        %v2300 = vadd.f32 0.0, %v2299
        %v2301 = vpop.f32.mrb[0].mxu0
        %v2302 = vpop.f32.mrb[0].mxu0
        %v2303 = vadd.f32 0.0, %v2302
        %v2304 = vpop.f32.mrb[0].mxu0
        %2305 = vmatprep.mubr.bf16.mxu0 %v1839
        %2306 = vmatmul.mubr.bf16.gmra.mrb[0].mxu0 %v1838
        %v2307 = vpop.f32.mrb[0].mxu0
        %v2308 = vadd.f32 0.0, %v2307
        %v2309 = vpop.f32.mrb[0].mxu0
        %v2310 = vpop.f32.mrb[0].mxu0
        %v2311 = vadd.f32 0.0, %v2310
        %v2312 = vpop.f32.mrb[0].mxu0
        %2313 = vmatprep.mubr.bf16.mxu0 %v1842
        %2314 = vmatmul.mubr.bf16.gmra.mrb[0].mxu0 %v1841
        %v2315 = vpop.f32.mrb[0].mxu0
        %v2316 = vadd.f32 0.0, %v2315
        %v2317 = vpop.f32.mrb[0].mxu0
        %v2318 = vpop.f32.mrb[0].mxu0
        %v2319 = vadd.f32 0.0, %v2318
        %v2320 = vpop.f32.mrb[0].mxu0
        %2321 = vmatprep.mubr.bf16.mxu0 %v1845
        %2322 = vmatmul.mubr.bf16.gmra.mrb[0].mxu0 %v1844
        %v2323 = vpop.f32.mrb[0].mxu0
        %v2324 = vadd.f32 0.0, %v2323
        %v2325 = vpop.f32.mrb[0].mxu0
        %v2326 = vpop.f32.mrb[0].mxu0
        %v2327 = vadd.f32 0.0, %v2326
        %v2328 = vpop.f32.mrb[0].mxu0
        %2329 = vmatprep.mubr.bf16.mxu0 %v1848
        %2330 = vmatmul.mubr.bf16.gmra.mrb[0].mxu0 %v1847
        %v2331 = vpop.f32.mrb[0].mxu0
        %v2332 = vadd.f32 0.0, %v2331
        %v2333 = vpop.f32.mrb[0].mxu0
        %v2334 = vpop.f32.mrb[0].mxu0
        %v2335 = vadd.f32 0.0, %v2334
        %v2336 = vpop.f32.mrb[0].mxu0
        %2337 = vmatprep.mubr.bf16.mxu0 %v1851
        %2338 = vmatmul.mubr.bf16.gmra.mrb[0].mxu0 %v1850
        %v2339 = vpop.f32.mrb[0].mxu0
        %v2340 = vadd.f32 0.0, %v2339
        %v2341 = vpop.f32.mrb[0].mxu0
        %v2342 = vpop.f32.mrb[0].mxu0
        %v2343 = vadd.f32 0.0, %v2342
        %v2344 = vpop.f32.mrb[0].mxu0
        %2345 = vmatprep.mubr.bf16.mxu0 %v1854
        %2346 = vmatmul.mubr.bf16.gmra.mrb[0].mxu0 %v1853
        %v2347 = vpop.f32.mrb[0].mxu0
        %v2348 = vadd.f32 0.0, %v2347
        %v2349 = vpop.f32.mrb[0].mxu0
        %v2350 = vpop.f32.mrb[0].mxu0
        %v2351 = vadd.f32 0.0, %v2350
        %v2352 = vpop.f32.mrb[0].mxu0
        %2353 = vmatprep.mubr.bf16.mxu0 %v1857
        %2354 = vmatmul.mubr.bf16.gmra.mrb[0].mxu0 %v1856
        %v2355 = vpop.f32.mrb[0].mxu0
        %v2356 = vadd.f32 0.0, %v2355
        %v2357 = vpop.f32.mrb[0].mxu0
        %v2358 = vpop.f32.mrb[0].mxu0
        %v2359 = vadd.f32 0.0, %v2358
        %v2360 = vpop.f32.mrb[0].mxu0
        %2361 = vmatprep.mubr.bf16.mxu0 %v1860
        %2362 = vmatmul.mubr.bf16.gmra.mrb[0].mxu0 %v1859
        %v2363 = vpop.f32.mrb[0].mxu0
        %v2364 = vadd.f32 0.0, %v2363
        %v2365 = vpop.f32.mrb[0].mxu0
        %v2366 = vpop.f32.mrb[0].mxu0
        %v2367 = vadd.f32 0.0, %v2366
        %v2368 = vpop.f32.mrb[0].mxu0
        %2369 = vmatprep.mubr.bf16.mxu0 %v1863
        %2370 = vmatmul.mubr.bf16.gmra.mrb[0].mxu0 %v1862
        %v2371 = vpop.f32.mrb[0].mxu0
        %v2372 = vadd.f32 0.0, %v2371
        %v2373 = vpop.f32.mrb[0].mxu0
        %v2374 = vpop.f32.mrb[0].mxu0
        %v2375 = vadd.f32 0.0, %v2374
        %v2376 = vpop.f32.mrb[0].mxu0
        %2377 = vmatprep.mubr.bf16.mxu0 %v1866
        %2378 = vmatmul.mubr.bf16.gmra.mrb[0].mxu0 %v1865
        %v2379 = vpop.f32.mrb[0].mxu0
        %v2380 = vadd.f32 0.0, %v2379
        %v2381 = vpop.f32.mrb[0].mxu0
        %v2382 = vpop.f32.mrb[0].mxu0
        %v2383 = vadd.f32 0.0, %v2382
        %v2384 = vpop.f32.mrb[0].mxu0
        %2385 = vmatprep.mubr.bf16.mxu0 %v1869
        %2386 = vmatmul.mubr.bf16.gmra.mrb[0].mxu0 %v1868
        %v2387 = vpop.f32.mrb[0].mxu0
        %v2388 = vadd.f32 0.0, %v2387
        %v2389 = vpop.f32.mrb[0].mxu0
        %v2390 = vpop.f32.mrb[0].mxu0
        %v2391 = vadd.f32 0.0, %v2390
        %v2392 = vpop.f32.mrb[0].mxu0
        %2393 = vmatprep.mubr.bf16.mxu0 %v1872
        %2394 = vmatmul.mubr.bf16.gmra.mrb[0].mxu0 %v1871
        %v2395 = vpop.f32.mrb[0].mxu0
        %v2396 = vadd.f32 0.0, %v2395
        %v2397 = vpop.f32.mrb[0].mxu0
        %v2398 = vpop.f32.mrb[0].mxu0
        %v2399 = vadd.f32 0.0, %v2398
        %v2400 = vpop.f32.mrb[0].mxu0
        %2401 = vmatprep.mubr.bf16.mxu0 %v1875
        %2402 = vmatmul.mubr.bf16.gmra.mrb[0].mxu0 %v1874
        %v2403 = vpop.f32.mrb[0].mxu0
        %v2404 = vadd.f32 0.0, %v2403
        %v2405 = vpop.f32.mrb[0].mxu0
        %v2406 = vpop.f32.mrb[0].mxu0
        %v2407 = vadd.f32 0.0, %v2406
        %v2408 = vpop.f32.mrb[0].mxu0
        %2409 = vmatprep.mubr.bf16.mxu0 %v1878
        %2410 = vmatmul.mubr.bf16.gmra.mrb[0].mxu0 %v1877
        %v2411 = vpop.f32.mrb[0].mxu0
        %v2412 = vadd.f32 0.0, %v2411
        %v2413 = vpop.f32.mrb[0].mxu0
        %v2414 = vpop.f32.mrb[0].mxu0
        %v2415 = vadd.f32 0.0, %v2414
        %v2416 = vpop.f32.mrb[0].mxu0
        %2417 = vmatprep.mubr.bf16.mxu0 %v1881
        %2418 = vmatmul.mubr.bf16.gmra.mrb[0].mxu0 %v1880
        %v2419 = vpop.f32.mrb[0].mxu0
        %v2420 = vadd.f32 0.0, %v2419
        %v2421 = vpop.f32.mrb[0].mxu0
        %v2422 = vpop.f32.mrb[0].mxu0
        %v2423 = vadd.f32 0.0, %v2422
        %v2424 = vpop.f32.mrb[0].mxu0
        %2425 = vmatprep.mubr.bf16.mxu0 %v1884
        %2426 = vmatmul.mubr.bf16.gmra.mrb[0].mxu0 %v1883
        %v2427 = vpop.f32.mrb[0].mxu0
        %v2428 = vadd.f32 0.0, %v2427
        %v2429 = vpop.f32.mrb[0].mxu0
        %v2430 = vpop.f32.mrb[0].mxu0
        %v2431 = vadd.f32 0.0, %v2430
        %v2432 = vpop.f32.mrb[0].mxu0
        %2433 = vmatprep.mubr.bf16.mxu0 %v1887
        %2434 = vmatmul.mubr.bf16.gmra.mrb[0].mxu0 %v1886
        %v2435 = vpop.f32.mrb[0].mxu0
        %v2436 = vadd.f32 0.0, %v2435
        %v2437 = vpop.f32.mrb[0].mxu0
        %v2438 = vpop.f32.mrb[0].mxu0
        %v2439 = vadd.f32 0.0, %v2438
        %v2440 = vpop.f32.mrb[0].mxu0
        %2441 = vmatprep.mubr.bf16.mxu0 %v1890
        %2442 = vmatmul.mubr.bf16.gmra.mrb[0].mxu0 %v1889
        %v2443 = vpop.f32.mrb[0].mxu0
        %v2444 = vadd.f32 0.0, %v2443
        %v2445 = vpop.f32.mrb[0].mxu0
        %v2446 = vpop.f32.mrb[0].mxu0
        %v2447 = vadd.f32 0.0, %v2446
        %v2448 = vpop.f32.mrb[0].mxu0
        %2449 = vmatprep.mubr.bf16.mxu0 %v1893
        %2450 = vmatmul.mubr.bf16.gmra.mrb[0].mxu0 %v1892
        %v2451 = vpop.f32.mrb[0].mxu0
        %v2452 = vadd.f32 0.0, %v2451
        %v2453 = vpop.f32.mrb[0].mxu0
        %v2454 = vpop.f32.mrb[0].mxu0
        %v2455 = vadd.f32 0.0, %v2454
        %v2456 = vpop.f32.mrb[0].mxu0
        %2457 = vmatprep.mubr.bf16.mxu0 %v1896
        %2458 = vmatmul.mubr.bf16.gmra.mrb[0].mxu0 %v1895
        %v2459 = vpop.f32.mrb[0].mxu0
        %v2460 = vadd.f32 0.0, %v2459
        %v2461 = vpop.f32.mrb[0].mxu0
        %v2462 = vpop.f32.mrb[0].mxu0
        %v2463 = vadd.f32 0.0, %v2462
        %v2464 = vpop.f32.mrb[0].mxu0
        %2465 = vmatprep.mubr.bf16.mxu0 %v1899
        %2466 = vmatmul.mubr.bf16.gmra.mrb[0].mxu0 %v1898
        %v2467 = vpop.f32.mrb[0].mxu0
        %v2468 = vadd.f32 0.0, %v2467
        %v2469 = vpop.f32.mrb[0].mxu0
        %v2470 = vpop.f32.mrb[0].mxu0
        %v2471 = vadd.f32 0.0, %v2470
        %v2472 = vpop.f32.mrb[0].mxu0
        %2473 = vmatprep.mubr.bf16.mxu0 %v1902
        %2474 = vmatmul.mubr.bf16.gmra.mrb[0].mxu0 %v1901
        %v2475 = vpop.f32.mrb[0].mxu0
        %v2476 = vadd.f32 0.0, %v2475
        %v2477 = vpop.f32.mrb[0].mxu0
        %v2478 = vpop.f32.mrb[0].mxu0
        %v2479 = vadd.f32 0.0, %v2478
        %v2480 = vpop.f32.mrb[0].mxu0
        %2481 = vmatprep.mubr.bf16.mxu0 %v1905
        %2482 = vmatmul.mubr.bf16.gmra.mrb[0].mxu0 %v1904
        %v2483 = vpop.f32.mrb[0].mxu0
        %v2484 = vadd.f32 0.0, %v2483
        %v2485 = vpop.f32.mrb[0].mxu0
        %v2486 = vpop.f32.mrb[0].mxu0
        %v2487 = vadd.f32 0.0, %v2486
        %v2488 = vpop.f32.mrb[0].mxu0
        %2489 = vmatprep.mubr.bf16.mxu0 %v1908
        %2490 = vmatmul.mubr.bf16.gmra.mrb[0].mxu0 %v1907
        %v2491 = vpop.f32.mrb[0].mxu0
        %v2492 = vadd.f32 0.0, %v2491
        %v2493 = vpop.f32.mrb[0].mxu0
        %v2494 = vpop.f32.mrb[0].mxu0
        %v2495 = vadd.f32 0.0, %v2494
        %v2496 = vpop.f32.mrb[0].mxu0
        %2497 = vmatprep.mubr.bf16.mxu0 %v1911
        %2498 = vmatmul.mubr.bf16.gmra.mrb[0].mxu0 %v1910
        %v2499 = vpop.f32.mrb[0].mxu0
        %v2500 = vadd.f32 0.0, %v2499
        %v2501 = vpop.f32.mrb[0].mxu0
        %v2502 = vpop.f32.mrb[0].mxu0
        %v2503 = vadd.f32 0.0, %v2502
        %v2504 = vpop.f32.mrb[0].mxu0
        %2505 = vmatprep.mubr.bf16.mxu0 %v1914
        %2506 = vmatmul.mubr.bf16.gmra.mrb[0].mxu0 %v1913
        %v2507 = vpop.f32.mrb[0].mxu0
        %v2508 = vadd.f32 0.0, %v2507
        %v2509 = vpop.f32.mrb[0].mxu0
        %v2510 = vpop.f32.mrb[0].mxu0
        %v2511 = vadd.f32 0.0, %v2510
        %v2512 = vpop.f32.mrb[0].mxu0
        %2513 = vmatprep.mubr.bf16.mxu0 %v1917
        %2514 = vmatmul.mubr.bf16.gmra.mrb[0].mxu0 %v1916
        %v2515 = vpop.f32.mrb[0].mxu0
        %v2516 = vadd.f32 0.0, %v2515
        %v2517 = vpop.f32.mrb[0].mxu0
        %v2518 = vpop.f32.mrb[0].mxu0
        %v2519 = vadd.f32 0.0, %v2518
        %v2520 = vpop.f32.mrb[0].mxu0
        %2521 = vmatprep.mubr.bf16.mxu0 %v1920
        %2522 = vmatmul.mubr.bf16.gmra.mrb[0].mxu0 %v1919
        %v2523 = vpop.f32.mrb[0].mxu0
        %v2524 = vadd.f32 0.0, %v2523
        %v2525 = vpop.f32.mrb[0].mxu0
        %v2526 = vpop.f32.mrb[0].mxu0
        %v2527 = vadd.f32 0.0, %v2526
        %v2528 = vpop.f32.mrb[0].mxu0
        %2529 = vmatprep.mubr.bf16.mxu0 %v1923
        %2530 = vmatmul.mubr.bf16.gmra.mrb[0].mxu0 %v1922
        %v2531 = vpop.f32.mrb[0].mxu0
        %v2532 = vadd.f32 0.0, %v2531
        %v2533 = vpop.f32.mrb[0].mxu0
        %v2534 = vpop.f32.mrb[0].mxu0
        %v2535 = vadd.f32 0.0, %v2534
        %v2536 = vpop.f32.mrb[0].mxu0
        %2537 = vmatprep.mubr.bf16.mxu0 %v1926
        %2538 = vmatmul.mubr.bf16.gmra.mrb[0].mxu0 %v1925
        %v2539 = vpop.f32.mrb[0].mxu0
        %v2540 = vadd.f32 0.0, %v2539
        %v2541 = vpop.f32.mrb[0].mxu0
        %v2542 = vpop.f32.mrb[0].mxu0
        %v2543 = vadd.f32 0.0, %v2542
        %v2544 = vpop.f32.mrb[0].mxu0
        %2545 = vmatprep.mubr.bf16.mxu0 %v1929
        %2546 = vmatmul.mubr.bf16.gmra.mrb[0].mxu0 %v1928
        %v2547 = vpop.f32.mrb[0].mxu0
        %v2548 = vadd.f32 0.0, %v2547
        %v2549 = vpop.f32.mrb[0].mxu0
        %v2550 = vpop.f32.mrb[0].mxu0
        %v2551 = vadd.f32 0.0, %v2550
        %v2552 = vpop.f32.mrb[0].mxu0
        %2553 = vmatprep.mubr.bf16.mxu0 %v1932
        %2554 = vmatmul.mubr.bf16.gmra.mrb[0].mxu0 %v1931
        %v2555 = vpop.f32.mrb[0].mxu0
        %v2556 = vadd.f32 0.0, %v2555
        %v2557 = vpop.f32.mrb[0].mxu0
        %v2558 = vpop.f32.mrb[0].mxu0
        %v2559 = vadd.f32 0.0, %v2558
        %v2560 = vpop.f32.mrb[0].mxu0
        %2561 = vmatprep.mubr.bf16.mxu0 %v1935
        %2562 = vmatmul.mubr.bf16.gmra.mrb[0].mxu0 %v1934
        %v2563 = vpop.f32.mrb[0].mxu0
        %v2564 = vadd.f32 0.0, %v2563
        %v2565 = vpop.f32.mrb[0].mxu0
        %v2566 = vpop.f32.mrb[0].mxu0
        %v2567 = vadd.f32 0.0, %v2566
        %v2568 = vpop.f32.mrb[0].mxu0
        %2569 = vmatprep.mubr.bf16.mxu0 %v1938
        %2570 = vmatmul.mubr.bf16.gmra.mrb[0].mxu0 %v1937
        %v2571 = vpop.f32.mrb[0].mxu0
        %v2572 = vadd.f32 0.0, %v2571
        %v2573 = vpop.f32.mrb[0].mxu0
        %v2574 = vpop.f32.mrb[0].mxu0
        %v2575 = vadd.f32 0.0, %v2574
        %v2576 = vpop.f32.mrb[0].mxu0
        %2577 = vdwg.mxu0
        %2578 = vmatprep.subr.bf16.mxu0 0
        %2579 = vmatpush1.bf16.msra.mxu0 %v1155
        %2580 = vmatprep.subr.bf16.mxu0 0
        %2581 = vmatpush1.bf16.msra.mxu0 %v1156
        %2582 = vmatprep.subr.bf16.mxu0 0
        %2583 = vmatpush1.bf16.msra.mxu0 %v2175
        %2584 = vmatprep.subr.bf16.mxu0 0
        %2585 = vmatpush1.bf16.msra.mxu0 0
        %2586 = vmatprep.subr.bf16.mxu0 0
        %2587 = vmatpush1.bf16.msra.mxu0 0
        %2588 = vmatprep.subr.bf16.mxu0 0
        %2589 = vmatpush1.bf16.msra.mxu0 0
        %2590 = vmatprep.subr.bf16.mxu0 0
        %2591 = vmatpush1.bf16.msra.mxu0 0
        %2592 = vmatprep.subr.bf16.mxu0 0
        %2593 = vmatpush1.bf16.msra.mxu0 0
        %2594 = vmatprep.subr.bf16.mxu0 0
        %2595 = vmatpush1.bf16.msra.mxu0 0
        %2596 = vmatprep.subr.bf16.mxu0 0
        %2597 = vmatpush1.bf16.msra.mxu0 0
        %2598 = vmatprep.subr.bf16.mxu0 0
        %2599 = vmatpush1.bf16.msra.mxu0 0
        %2600 = vmatprep.subr.bf16.mxu0 0
        %2601 = vmatpush1.bf16.msra.mxu0 0
        %2602 = vmatprep.subr.bf16.mxu0 0
        %2603 = vmatpush1.bf16.msra.mxu0 0
        %2604 = vmatprep.subr.bf16.mxu0 0
        %2605 = vmatpush1.bf16.msra.mxu0 0
        %2606 = vmatprep.subr.bf16.mxu0 0
        %2607 = vmatpush1.bf16.msra.mxu0 0
        %2608 = vmatprep.subr.bf16.mxu0 0
        %2609 = vmatpush1.bf16.msra.mxu0 0
        %2610 = vmatprep.mubr.bf16.mxu0 0
        %2611 = vmatmul.mubr.bf16.gmra.mrb[0].mxu0 %v2034
        %v2612 = vpop.f32.mrb[0].mxu0
        %v2613 = vadd.f32 %v2212, %v2612
        %v2614 = vpop.f32.mrb[0].mxu0
        %v2615 = vpop.f32.mrb[0].mxu0
        %v2616 = vadd.f32 %v2215, %v2615
        %v2617 = vpop.f32.mrb[0].mxu0
        %2618 = vmatprep.mubr.bf16.mxu0 0
        %2619 = vmatmul.mubr.bf16.gmra.mrb[0].mxu0 %v2037
        %v2620 = vpop.f32.mrb[0].mxu0
        %v2621 = vadd.f32 %v2220, %v2620
        %v2622 = vpop.f32.mrb[0].mxu0
        %v2623 = vpop.f32.mrb[0].mxu0
        %v2624 = vadd.f32 %v2223, %v2623
        %v2625 = vpop.f32.mrb[0].mxu0
        %2626 = vmatprep.mubr.bf16.mxu0 0
        %2627 = vmatmul.mubr.bf16.gmra.mrb[0].mxu0 %v2040
        %v2628 = vpop.f32.mrb[0].mxu0
        %v2629 = vadd.f32 %v2228, %v2628
        %v2630 = vpop.f32.mrb[0].mxu0
        %v2631 = vpop.f32.mrb[0].mxu0
        %v2632 = vadd.f32 %v2231, %v2631
        %v2633 = vpop.f32.mrb[0].mxu0
        %2634 = vmatprep.mubr.bf16.mxu0 0
        %2635 = vmatmul.mubr.bf16.gmra.mrb[0].mxu0 %v2043
        %v2636 = vpop.f32.mrb[0].mxu0
        %v2637 = vadd.f32 %v2236, %v2636
        %v2638 = vpop.f32.mrb[0].mxu0
        %v2639 = vpop.f32.mrb[0].mxu0
        %v2640 = vadd.f32 %v2239, %v2639
        %v2641 = vpop.f32.mrb[0].mxu0
        %2642 = vmatprep.mubr.bf16.mxu0 0
        %2643 = vmatmul.mubr.bf16.gmra.mrb[0].mxu0 %v2046
        %v2644 = vpop.f32.mrb[0].mxu0
        %v2645 = vadd.f32 %v2244, %v2644
        %v2646 = vpop.f32.mrb[0].mxu0
        %v2647 = vpop.f32.mrb[0].mxu0
        %v2648 = vadd.f32 %v2247, %v2647
        %v2649 = vpop.f32.mrb[0].mxu0
        %2650 = vmatprep.mubr.bf16.mxu0 0
        %2651 = vmatmul.mubr.bf16.gmra.mrb[0].mxu0 %v2049
        %v2652 = vpop.f32.mrb[0].mxu0
        %v2653 = vadd.f32 %v2252, %v2652
        %v2654 = vpop.f32.mrb[0].mxu0
        %v2655 = vpop.f32.mrb[0].mxu0
        %v2656 = vadd.f32 %v2255, %v2655
        %v2657 = vpop.f32.mrb[0].mxu0
        %2658 = vmatprep.mubr.bf16.mxu0 0
        %2659 = vmatmul.mubr.bf16.gmra.mrb[0].mxu0 %v2052
        %v2660 = vpop.f32.mrb[0].mxu0
        %v2661 = vadd.f32 %v2260, %v2660
        %v2662 = vpop.f32.mrb[0].mxu0
        %v2663 = vpop.f32.mrb[0].mxu0
        %v2664 = vadd.f32 %v2263, %v2663
        %v2665 = vpop.f32.mrb[0].mxu0
        %2666 = vmatprep.mubr.bf16.mxu0 0
        %2667 = vmatmul.mubr.bf16.gmra.mrb[0].mxu0 %v2055
        %v2668 = vpop.f32.mrb[0].mxu0
        %v2669 = vadd.f32 %v2268, %v2668
        %v2670 = vpop.f32.mrb[0].mxu0
        %v2671 = vpop.f32.mrb[0].mxu0
        %v2672 = vadd.f32 %v2271, %v2671
        %v2673 = vpop.f32.mrb[0].mxu0
        %2674 = vmatprep.mubr.bf16.mxu0 0
        %2675 = vmatmul.mubr.bf16.gmra.mrb[0].mxu0 %v2058
        %v2676 = vpop.f32.mrb[0].mxu0
        %v2677 = vadd.f32 %v2276, %v2676
        %v2678 = vpop.f32.mrb[0].mxu0
        %v2679 = vpop.f32.mrb[0].mxu0
        %v2680 = vadd.f32 %v2279, %v2679
        %v2681 = vpop.f32.mrb[0].mxu0
        %2682 = vmatprep.mubr.bf16.mxu0 0
        %2683 = vmatmul.mubr.bf16.gmra.mrb[0].mxu0 %v2061
        %v2684 = vpop.f32.mrb[0].mxu0
        %v2685 = vadd.f32 %v2284, %v2684
        %v2686 = vpop.f32.mrb[0].mxu0
        %v2687 = vpop.f32.mrb[0].mxu0
        %v2688 = vadd.f32 %v2287, %v2687
        %v2689 = vpop.f32.mrb[0].mxu0
        %2690 = vmatprep.mubr.bf16.mxu0 0
        %2691 = vmatmul.mubr.bf16.gmra.mrb[0].mxu0 %v2064
        %v2692 = vpop.f32.mrb[0].mxu0
        %v2693 = vadd.f32 %v2292, %v2692
        %v2694 = vpop.f32.mrb[0].mxu0
        %v2695 = vpop.f32.mrb[0].mxu0
        %v2696 = vadd.f32 %v2295, %v2695
        %v2697 = vpop.f32.mrb[0].mxu0
        %2698 = vmatprep.mubr.bf16.mxu0 0
        %2699 = vmatmul.mubr.bf16.gmra.mrb[0].mxu0 %v2067
        %v2700 = vpop.f32.mrb[0].mxu0
        %v2701 = vadd.f32 %v2300, %v2700
        %v2702 = vpop.f32.mrb[0].mxu0
        %v2703 = vpop.f32.mrb[0].mxu0
        %v2704 = vadd.f32 %v2303, %v2703
        %v2705 = vpop.f32.mrb[0].mxu0
        %2706 = vmatprep.mubr.bf16.mxu0 0
        %2707 = vmatmul.mubr.bf16.gmra.mrb[0].mxu0 %v2070
        %v2708 = vpop.f32.mrb[0].mxu0
        %v2709 = vadd.f32 %v2308, %v2708
        %v2710 = vpop.f32.mrb[0].mxu0
        %v2711 = vpop.f32.mrb[0].mxu0
        %v2712 = vadd.f32 %v2311, %v2711
        %v2713 = vpop.f32.mrb[0].mxu0
        %2714 = vmatprep.mubr.bf16.mxu0 0
        %2715 = vmatmul.mubr.bf16.gmra.mrb[0].mxu0 %v2073
        %v2716 = vpop.f32.mrb[0].mxu0
        %v2717 = vadd.f32 %v2316, %v2716
        %v2718 = vpop.f32.mrb[0].mxu0
        %v2719 = vpop.f32.mrb[0].mxu0
        %v2720 = vadd.f32 %v2319, %v2719
        %v2721 = vpop.f32.mrb[0].mxu0
        %2722 = vmatprep.mubr.bf16.mxu0 0
        %2723 = vmatmul.mubr.bf16.gmra.mrb[0].mxu0 %v2076
        %v2724 = vpop.f32.mrb[0].mxu0
        %v2725 = vadd.f32 %v2324, %v2724
        %v2726 = vpop.f32.mrb[0].mxu0
        %v2727 = vpop.f32.mrb[0].mxu0
        %v2728 = vadd.f32 %v2327, %v2727
        %v2729 = vpop.f32.mrb[0].mxu0
        %2730 = vmatprep.mubr.bf16.mxu0 0
        %2731 = vmatmul.mubr.bf16.gmra.mrb[0].mxu0 %v2079
        %v2732 = vpop.f32.mrb[0].mxu0
        %v2733 = vadd.f32 %v2332, %v2732
        %v2734 = vpop.f32.mrb[0].mxu0
        %v2735 = vpop.f32.mrb[0].mxu0
        %v2736 = vadd.f32 %v2335, %v2735
        %v2737 = vpop.f32.mrb[0].mxu0
        %2738 = vmatprep.mubr.bf16.mxu0 0
        %2739 = vmatmul.mubr.bf16.gmra.mrb[0].mxu0 %v2082
        %v2740 = vpop.f32.mrb[0].mxu0
        %v2741 = vadd.f32 %v2340, %v2740
        %v2742 = vpop.f32.mrb[0].mxu0
        %v2743 = vpop.f32.mrb[0].mxu0
        %v2744 = vadd.f32 %v2343, %v2743
        %v2745 = vpop.f32.mrb[0].mxu0
        %2746 = vmatprep.mubr.bf16.mxu0 0
        %2747 = vmatmul.mubr.bf16.gmra.mrb[0].mxu0 %v2085
        %v2748 = vpop.f32.mrb[0].mxu0
        %v2749 = vadd.f32 %v2348, %v2748
        %v2750 = vpop.f32.mrb[0].mxu0
        %v2751 = vpop.f32.mrb[0].mxu0
        %v2752 = vadd.f32 %v2351, %v2751
        %v2753 = vpop.f32.mrb[0].mxu0
        %2754 = vmatprep.mubr.bf16.mxu0 0
        %2755 = vmatmul.mubr.bf16.gmra.mrb[0].mxu0 %v2088
        %v2756 = vpop.f32.mrb[0].mxu0
        %v2757 = vadd.f32 %v2356, %v2756
        %v2758 = vpop.f32.mrb[0].mxu0
        %v2759 = vpop.f32.mrb[0].mxu0
        %v2760 = vadd.f32 %v2359, %v2759
        %v2761 = vpop.f32.mrb[0].mxu0
        %2762 = vmatprep.mubr.bf16.mxu0 0
        %2763 = vmatmul.mubr.bf16.gmra.mrb[0].mxu0 %v2091
        %v2764 = vpop.f32.mrb[0].mxu0
        %v2765 = vadd.f32 %v2364, %v2764
        %v2766 = vpop.f32.mrb[0].mxu0
        %v2767 = vpop.f32.mrb[0].mxu0
        %v2768 = vadd.f32 %v2367, %v2767
        %v2769 = vpop.f32.mrb[0].mxu0
        %2770 = vmatprep.mubr.bf16.mxu0 0
        %2771 = vmatmul.mubr.bf16.gmra.mrb[0].mxu0 %v2094
        %v2772 = vpop.f32.mrb[0].mxu0
        %v2773 = vadd.f32 %v2372, %v2772
        %v2774 = vpop.f32.mrb[0].mxu0
        %v2775 = vpop.f32.mrb[0].mxu0
        %v2776 = vadd.f32 %v2375, %v2775
        %v2777 = vpop.f32.mrb[0].mxu0
        %2778 = vmatprep.mubr.bf16.mxu0 0
        %2779 = vmatmul.mubr.bf16.gmra.mrb[0].mxu0 %v2097
        %v2780 = vpop.f32.mrb[0].mxu0
        %v2781 = vadd.f32 %v2380, %v2780
        %v2782 = vpop.f32.mrb[0].mxu0
        %v2783 = vpop.f32.mrb[0].mxu0
        %v2784 = vadd.f32 %v2383, %v2783
        %v2785 = vpop.f32.mrb[0].mxu0
        %2786 = vmatprep.mubr.bf16.mxu0 0
        %2787 = vmatmul.mubr.bf16.gmra.mrb[0].mxu0 %v2100
        %v2788 = vpop.f32.mrb[0].mxu0
        %v2789 = vadd.f32 %v2388, %v2788
        %v2790 = vpop.f32.mrb[0].mxu0
        %v2791 = vpop.f32.mrb[0].mxu0
        %v2792 = vadd.f32 %v2391, %v2791
        %v2793 = vpop.f32.mrb[0].mxu0
        %2794 = vmatprep.mubr.bf16.mxu0 0
        %2795 = vmatmul.mubr.bf16.gmra.mrb[0].mxu0 %v2103
        %v2796 = vpop.f32.mrb[0].mxu0
        %v2797 = vadd.f32 %v2396, %v2796
        %v2798 = vpop.f32.mrb[0].mxu0
        %v2799 = vpop.f32.mrb[0].mxu0
        %v2800 = vadd.f32 %v2399, %v2799
        %v2801 = vpop.f32.mrb[0].mxu0
        %2802 = vmatprep.mubr.bf16.mxu0 0
        %2803 = vmatmul.mubr.bf16.gmra.mrb[0].mxu0 %v2106
        %v2804 = vpop.f32.mrb[0].mxu0
        %v2805 = vadd.f32 %v2404, %v2804
        %v2806 = vpop.f32.mrb[0].mxu0
        %v2807 = vpop.f32.mrb[0].mxu0
        %v2808 = vadd.f32 %v2407, %v2807
        %v2809 = vpop.f32.mrb[0].mxu0
        %2810 = vmatprep.mubr.bf16.mxu0 0
        %2811 = vmatmul.mubr.bf16.gmra.mrb[0].mxu0 %v2109
        %v2812 = vpop.f32.mrb[0].mxu0
        %v2813 = vadd.f32 %v2412, %v2812
        %v2814 = vpop.f32.mrb[0].mxu0
        %v2815 = vpop.f32.mrb[0].mxu0
        %v2816 = vadd.f32 %v2415, %v2815
        %v2817 = vpop.f32.mrb[0].mxu0
        %2818 = vmatprep.mubr.bf16.mxu0 0
        %2819 = vmatmul.mubr.bf16.gmra.mrb[0].mxu0 %v2112
        %v2820 = vpop.f32.mrb[0].mxu0
        %v2821 = vadd.f32 %v2420, %v2820
        %v2822 = vpop.f32.mrb[0].mxu0
        %v2823 = vpop.f32.mrb[0].mxu0
        %v2824 = vadd.f32 %v2423, %v2823
        %v2825 = vpop.f32.mrb[0].mxu0
        %2826 = vmatprep.mubr.bf16.mxu0 0
        %2827 = vmatmul.mubr.bf16.gmra.mrb[0].mxu0 %v2115
        %v2828 = vpop.f32.mrb[0].mxu0
        %v2829 = vadd.f32 %v2428, %v2828
        %v2830 = vpop.f32.mrb[0].mxu0
        %v2831 = vpop.f32.mrb[0].mxu0
        %v2832 = vadd.f32 %v2431, %v2831
        %v2833 = vpop.f32.mrb[0].mxu0
        %2834 = vmatprep.mubr.bf16.mxu0 0
        %2835 = vmatmul.mubr.bf16.gmra.mrb[0].mxu0 %v2118
        %v2836 = vpop.f32.mrb[0].mxu0
        %v2837 = vadd.f32 %v2436, %v2836
        %v2838 = vpop.f32.mrb[0].mxu0
        %v2839 = vpop.f32.mrb[0].mxu0
        %v2840 = vadd.f32 %v2439, %v2839
        %v2841 = vpop.f32.mrb[0].mxu0
        %2842 = vmatprep.mubr.bf16.mxu0 0
        %2843 = vmatmul.mubr.bf16.gmra.mrb[0].mxu0 %v2121
        %v2844 = vpop.f32.mrb[0].mxu0
        %v2845 = vadd.f32 %v2444, %v2844
        %v2846 = vpop.f32.mrb[0].mxu0
        %v2847 = vpop.f32.mrb[0].mxu0
        %v2848 = vadd.f32 %v2447, %v2847
        %v2849 = vpop.f32.mrb[0].mxu0
        %2850 = vmatprep.mubr.bf16.mxu0 0
        %2851 = vmatmul.mubr.bf16.gmra.mrb[0].mxu0 %v2124
        %v2852 = vpop.f32.mrb[0].mxu0
        %v2853 = vadd.f32 %v2452, %v2852
        %v2854 = vpop.f32.mrb[0].mxu0
        %v2855 = vpop.f32.mrb[0].mxu0
        %v2856 = vadd.f32 %v2455, %v2855
        %v2857 = vpop.f32.mrb[0].mxu0
        %2858 = vmatprep.mubr.bf16.mxu0 0
        %2859 = vmatmul.mubr.bf16.gmra.mrb[0].mxu0 %v2127
        %v2860 = vpop.f32.mrb[0].mxu0
        %v2861 = vadd.f32 %v2460, %v2860
        %v2862 = vpop.f32.mrb[0].mxu0
        %v2863 = vpop.f32.mrb[0].mxu0
        %v2864 = vadd.f32 %v2463, %v2863
        %v2865 = vpop.f32.mrb[0].mxu0
        %2866 = vmatprep.mubr.bf16.mxu0 0
        %2867 = vmatmul.mubr.bf16.gmra.mrb[0].mxu0 %v2130
        %v2868 = vpop.f32.mrb[0].mxu0
        %v2869 = vadd.f32 %v2468, %v2868
        %v2870 = vpop.f32.mrb[0].mxu0
        %v2871 = vpop.f32.mrb[0].mxu0
        %v2872 = vadd.f32 %v2471, %v2871
        %v2873 = vpop.f32.mrb[0].mxu0
        %2874 = vmatprep.mubr.bf16.mxu0 0
        %2875 = vmatmul.mubr.bf16.gmra.mrb[0].mxu0 %v2133
        %v2876 = vpop.f32.mrb[0].mxu0
        %v2877 = vadd.f32 %v2476, %v2876
        %v2878 = vpop.f32.mrb[0].mxu0
        %v2879 = vpop.f32.mrb[0].mxu0
        %v2880 = vadd.f32 %v2479, %v2879
        %v2881 = vpop.f32.mrb[0].mxu0
        %2882 = vmatprep.mubr.bf16.mxu0 0
        %2883 = vmatmul.mubr.bf16.gmra.mrb[0].mxu0 %v2136
        %v2884 = vpop.f32.mrb[0].mxu0
        %v2885 = vadd.f32 %v2484, %v2884
        %v2886 = vpop.f32.mrb[0].mxu0
        %v2887 = vpop.f32.mrb[0].mxu0
        %v2888 = vadd.f32 %v2487, %v2887
        %v2889 = vpop.f32.mrb[0].mxu0
        %2890 = vmatprep.mubr.bf16.mxu0 0
        %2891 = vmatmul.mubr.bf16.gmra.mrb[0].mxu0 %v2139
        %v2892 = vpop.f32.mrb[0].mxu0
        %v2893 = vadd.f32 %v2492, %v2892
        %v2894 = vpop.f32.mrb[0].mxu0
        %v2895 = vpop.f32.mrb[0].mxu0
        %v2896 = vadd.f32 %v2495, %v2895
        %v2897 = vpop.f32.mrb[0].mxu0
        %2898 = vmatprep.mubr.bf16.mxu0 0
        %2899 = vmatmul.mubr.bf16.gmra.mrb[0].mxu0 %v2142
        %v2900 = vpop.f32.mrb[0].mxu0
        %v2901 = vadd.f32 %v2500, %v2900
        %v2902 = vpop.f32.mrb[0].mxu0
        %v2903 = vpop.f32.mrb[0].mxu0
        %v2904 = vadd.f32 %v2503, %v2903
        %v2905 = vpop.f32.mrb[0].mxu0
        %2906 = vmatprep.mubr.bf16.mxu0 0
        %2907 = vmatmul.mubr.bf16.gmra.mrb[0].mxu0 %v2145
        %v2908 = vpop.f32.mrb[0].mxu0
        %v2909 = vadd.f32 %v2508, %v2908
        %v2910 = vpop.f32.mrb[0].mxu0
        %v2911 = vpop.f32.mrb[0].mxu0
        %v2912 = vadd.f32 %v2511, %v2911
        %v2913 = vpop.f32.mrb[0].mxu0
        %2914 = vmatprep.mubr.bf16.mxu0 0
        %2915 = vmatmul.mubr.bf16.gmra.mrb[0].mxu0 %v2148
        %v2916 = vpop.f32.mrb[0].mxu0
        %v2917 = vadd.f32 %v2516, %v2916
        %v2918 = vpop.f32.mrb[0].mxu0
        %v2919 = vpop.f32.mrb[0].mxu0
        %v2920 = vadd.f32 %v2519, %v2919
        %v2921 = vpop.f32.mrb[0].mxu0
        %2922 = vmatprep.mubr.bf16.mxu0 0
        %2923 = vmatmul.mubr.bf16.gmra.mrb[0].mxu0 %v2151
        %v2924 = vpop.f32.mrb[0].mxu0
        %v2925 = vadd.f32 %v2524, %v2924
        %v2926 = vpop.f32.mrb[0].mxu0
        %v2927 = vpop.f32.mrb[0].mxu0
        %v2928 = vadd.f32 %v2527, %v2927
        %v2929 = vpop.f32.mrb[0].mxu0
        %2930 = vmatprep.mubr.bf16.mxu0 0
        %2931 = vmatmul.mubr.bf16.gmra.mrb[0].mxu0 %v2154
        %v2932 = vpop.f32.mrb[0].mxu0
        %v2933 = vadd.f32 %v2532, %v2932
        %v2934 = vpop.f32.mrb[0].mxu0
        %v2935 = vpop.f32.mrb[0].mxu0
        %v2936 = vadd.f32 %v2535, %v2935
        %v2937 = vpop.f32.mrb[0].mxu0
        %2938 = vmatprep.mubr.bf16.mxu0 0
        %2939 = vmatmul.mubr.bf16.gmra.mrb[0].mxu0 %v2157
        %v2940 = vpop.f32.mrb[0].mxu0
        %v2941 = vadd.f32 %v2540, %v2940
        %v2942 = vpop.f32.mrb[0].mxu0
        %v2943 = vpop.f32.mrb[0].mxu0
        %v2944 = vadd.f32 %v2543, %v2943
        %v2945 = vpop.f32.mrb[0].mxu0
        %2946 = vmatprep.mubr.bf16.mxu0 0
        %2947 = vmatmul.mubr.bf16.gmra.mrb[0].mxu0 %v2160
        %v2948 = vpop.f32.mrb[0].mxu0
        %v2949 = vadd.f32 %v2548, %v2948
        %v2950 = vpop.f32.mrb[0].mxu0
        %v2951 = vpop.f32.mrb[0].mxu0
        %v2952 = vadd.f32 %v2551, %v2951
        %v2953 = vpop.f32.mrb[0].mxu0
        %2954 = vmatprep.mubr.bf16.mxu0 0
        %2955 = vmatmul.mubr.bf16.gmra.mrb[0].mxu0 %v2163
        %v2956 = vpop.f32.mrb[0].mxu0
        %v2957 = vadd.f32 %v2556, %v2956
        %v2958 = vpop.f32.mrb[0].mxu0
        %v2959 = vpop.f32.mrb[0].mxu0
        %v2960 = vadd.f32 %v2559, %v2959
        %v2961 = vpop.f32.mrb[0].mxu0
        %2962 = vmatprep.mubr.bf16.mxu0 0
        %2963 = vmatmul.mubr.bf16.gmra.mrb[0].mxu0 %v2166
        %v2964 = vpop.f32.mrb[0].mxu0
        %v2965 = vadd.f32 %v2564, %v2964
        %v2966 = vpop.f32.mrb[0].mxu0
        %v2967 = vpop.f32.mrb[0].mxu0
        %v2968 = vadd.f32 %v2567, %v2967
        %v2969 = vpop.f32.mrb[0].mxu0
        %2970 = vmatprep.mubr.bf16.mxu0 0
        %2971 = vmatmul.mubr.bf16.gmra.mrb[0].mxu0 %v2169
        %v2972 = vpop.f32.mrb[0].mxu0
        %v2973 = vadd.f32 %v2572, %v2972
        %v2974 = vpop.f32.mrb[0].mxu0
        %v2975 = vpop.f32.mrb[0].mxu0
        %v2976 = vadd.f32 %v2575, %v2975
        %v2977 = vpop.f32.mrb[0].mxu0
        %2978 = vdwg.mxu0
        %vm2990 = vcmask 1046528
        %v2991 = vrot.slane %v2653, 1
        %v2992 = vrot.slane %v2656, 1
        %v2993 = vsel %vm2990, %v2991, %v2992
        %v2994 = vrot.slane %v2661, 1
        %v2995 = vsel %vm2990, %v2992, %v2994
        %v2996 = vrot.slane %v2664, 1
        %v2997 = vsel %vm2990, %v2994, %v2996
        %v2998 = vrot.slane %v2669, 1
        %v2999 = vsel %vm2990, %v2996, %v2998
        %v3000 = vrot.slane %v2672, 1
        %v3001 = vsel %vm2990, %v2998, %v3000
        %v3002 = vrot.slane %v2677, 1
        %v3003 = vsel %vm2990, %v3000, %v3002
        %v3004 = vrot.slane %v2680, 1
        %v3005 = vsel %vm2990, %v3002, %v3004
        %v3006 = vrot.slane %v2685, 1
        %v3007 = vsel %vm2990, %v3004, %v3006
        %v3008 = vrot.slane %v2688, 1
        %v3009 = vsel %vm2990, %v3006, %v3008
        %v3010 = vrot.slane %v2693, 1
        %v3011 = vsel %vm2990, %v3008, %v3010
        %v3023 = vmax.f32 %v2613, %v2993
        %v3024 = vmax.f32 %v2616, %v2995
        %v3025 = vmax.f32 %v2621, %v2997
        %v3026 = vmax.f32 %v2624, %v2999
        %v3027 = vmax.f32 %v2629, %v3001
        %v3028 = vmax.f32 %v2632, %v3003
        %v3029 = vmax.f32 %v2637, %v3005
        %v3030 = vmax.f32 %v2640, %v3007
        %v3031 = vmax.f32 %v2645, %v3009
        %v3032 = vmax.f32 %v2648, %v3011
        %v3033 = vmax.f32 %v2653, %v3010
        %vm3044 = vcmask 1045504
        %v3045 = vrot.slane %v2693, 2
        %v3046 = vrot.slane %v2696, 2
        %v3047 = vsel %vm3044, %v3045, %v3046
        %v3048 = vrot.slane %v2701, 2
        %v3049 = vsel %vm3044, %v3046, %v3048
        %v3050 = vrot.slane %v2704, 2
        %v3051 = vsel %vm3044, %v3048, %v3050
        %v3052 = vrot.slane %v2709, 2
        %v3053 = vsel %vm3044, %v3050, %v3052
        %v3054 = vrot.slane %v2712, 2
        %v3055 = vsel %vm3044, %v3052, %v3054
        %v3056 = vrot.slane %v2717, 2
        %v3057 = vsel %vm3044, %v3054, %v3056
        %v3058 = vrot.slane %v2720, 2
        %v3059 = vsel %vm3044, %v3056, %v3058
        %v3060 = vrot.slane %v2725, 2
        %v3061 = vsel %vm3044, %v3058, %v3060
        %v3062 = vrot.slane %v2728, 2
        %v3063 = vsel %vm3044, %v3060, %v3062
        %v3064 = vrot.slane %v2733, 2
        %v3065 = vsel %vm3044, %v3062, %v3064
        %v3077 = vmax.f32 %v3023, %v3047
        %v3078 = vmax.f32 %v3024, %v3049
        %v3079 = vmax.f32 %v3025, %v3051
        %v3080 = vmax.f32 %v3026, %v3053
        %v3081 = vmax.f32 %v3027, %v3055
        %v3082 = vmax.f32 %v3028, %v3057
        %v3083 = vmax.f32 %v3029, %v3059
        %v3084 = vmax.f32 %v3030, %v3061
        %v3085 = vmax.f32 %v3031, %v3063
        %v3086 = vmax.f32 %v3032, %v3065
        %v3087 = vmax.f32 %v3033, %v3064
        %v3098 = vrot.slane %v2733, 3
        %v3099 = vrot.slane %v2736, 3
        %v3100 = vsel %vm912, %v3098, %v3099
        %v3101 = vrot.slane %v2741, 3
        %v3102 = vsel %vm912, %v3099, %v3101
        %v3103 = vrot.slane %v2744, 3
        %v3104 = vsel %vm912, %v3101, %v3103
        %v3105 = vrot.slane %v2749, 3
        %v3106 = vsel %vm912, %v3103, %v3105
        %v3107 = vrot.slane %v2752, 3
        %v3108 = vsel %vm912, %v3105, %v3107
        %v3109 = vrot.slane %v2757, 3
        %v3110 = vsel %vm912, %v3107, %v3109
        %v3111 = vrot.slane %v2760, 3
        %v3112 = vsel %vm912, %v3109, %v3111
        %v3113 = vrot.slane %v2765, 3
        %v3114 = vsel %vm912, %v3111, %v3113
        %v3115 = vrot.slane %v2768, 3
        %v3116 = vsel %vm912, %v3113, %v3115
        %v3117 = vrot.slane %v2773, 3
        %v3118 = vsel %vm912, %v3115, %v3117
        %v3130 = vmax.f32 %v3077, %v3100
        %v3131 = vmax.f32 %v3078, %v3102
        %v3132 = vmax.f32 %v3079, %v3104
        %v3133 = vmax.f32 %v3080, %v3106
        %v3134 = vmax.f32 %v3081, %v3108
        %v3135 = vmax.f32 %v3082, %v3110
        %v3136 = vmax.f32 %v3083, %v3112
        %v3137 = vmax.f32 %v3084, %v3114
        %v3138 = vmax.f32 %v3085, %v3116
        %v3139 = vmax.f32 %v3086, %v3118
        %v3140 = vmax.f32 %v3087, %v3117
        %v3151 = vrot.slane %v2773, 4
        %v3152 = vrot.slane %v2776, 4
        %v3153 = vsel %vm911, %v3151, %v3152
        %v3154 = vrot.slane %v2781, 4
        %v3155 = vsel %vm911, %v3152, %v3154
        %v3156 = vrot.slane %v2784, 4
        %v3157 = vsel %vm911, %v3154, %v3156
        %v3158 = vrot.slane %v2789, 4
        %v3159 = vsel %vm911, %v3156, %v3158
        %v3160 = vrot.slane %v2792, 4
        %v3161 = vsel %vm911, %v3158, %v3160
        %v3162 = vrot.slane %v2797, 4
        %v3163 = vsel %vm911, %v3160, %v3162
        %v3164 = vrot.slane %v2800, 4
        %v3165 = vsel %vm911, %v3162, %v3164
        %v3166 = vrot.slane %v2805, 4
        %v3167 = vsel %vm911, %v3164, %v3166
        %v3168 = vrot.slane %v2808, 4
        %v3169 = vsel %vm911, %v3166, %v3168
        %v3170 = vrot.slane %v2813, 4
        %v3171 = vsel %vm911, %v3168, %v3170
        %v3183 = vmax.f32 %v3130, %v3153
        %v3184 = vmax.f32 %v3131, %v3155
        %v3185 = vmax.f32 %v3132, %v3157
        %v3186 = vmax.f32 %v3133, %v3159
        %v3187 = vmax.f32 %v3134, %v3161
        %v3188 = vmax.f32 %v3135, %v3163
        %v3189 = vmax.f32 %v3136, %v3165
        %v3190 = vmax.f32 %v3137, %v3167
        %v3191 = vmax.f32 %v3138, %v3169
        %v3192 = vmax.f32 %v3139, %v3171
        %v3193 = vmax.f32 %v3140, %v3170
        %vm3204 = vcmask 1042432
        %v3205 = vrot.slane %v2813, 5
        %v3206 = vrot.slane %v2816, 5
        %v3207 = vsel %vm3204, %v3205, %v3206
        %v3208 = vrot.slane %v2821, 5
        %v3209 = vsel %vm3204, %v3206, %v3208
        %v3210 = vrot.slane %v2824, 5
        %v3211 = vsel %vm3204, %v3208, %v3210
        %v3212 = vrot.slane %v2829, 5
        %v3213 = vsel %vm3204, %v3210, %v3212
        %v3214 = vrot.slane %v2832, 5
        %v3215 = vsel %vm3204, %v3212, %v3214
        %v3216 = vrot.slane %v2837, 5
        %v3217 = vsel %vm3204, %v3214, %v3216
        %v3218 = vrot.slane %v2840, 5
        %v3219 = vsel %vm3204, %v3216, %v3218
        %v3220 = vrot.slane %v2845, 5
        %v3221 = vsel %vm3204, %v3218, %v3220
        %v3222 = vrot.slane %v2848, 5
        %v3223 = vsel %vm3204, %v3220, %v3222
        %v3224 = vrot.slane %v2853, 5
        %v3225 = vsel %vm3204, %v3222, %v3224
        %v3237 = vmax.f32 %v3183, %v3207
        %v3238 = vmax.f32 %v3184, %v3209
        %v3239 = vmax.f32 %v3185, %v3211
        %v3240 = vmax.f32 %v3186, %v3213
        %v3241 = vmax.f32 %v3187, %v3215
        %v3242 = vmax.f32 %v3188, %v3217
        %v3243 = vmax.f32 %v3189, %v3219
        %v3244 = vmax.f32 %v3190, %v3221
        %v3245 = vmax.f32 %v3191, %v3223
        %v3246 = vmax.f32 %v3192, %v3225
        %v3247 = vmax.f32 %v3193, %v3224
        %vm3258 = vcmask 1041408
        %v3259 = vrot.slane %v2853, 6
        %v3260 = vrot.slane %v2856, 6
        %v3261 = vsel %vm3258, %v3259, %v3260
        %v3262 = vrot.slane %v2861, 6
        %v3263 = vsel %vm3258, %v3260, %v3262
        %v3264 = vrot.slane %v2864, 6
        %v3265 = vsel %vm3258, %v3262, %v3264
        %v3266 = vrot.slane %v2869, 6
        %v3267 = vsel %vm3258, %v3264, %v3266
        %v3268 = vrot.slane %v2872, 6
        %v3269 = vsel %vm3258, %v3266, %v3268
        %v3270 = vrot.slane %v2877, 6
        %v3271 = vsel %vm3258, %v3268, %v3270
        %v3272 = vrot.slane %v2880, 6
        %v3273 = vsel %vm3258, %v3270, %v3272
        %v3274 = vrot.slane %v2885, 6
        %v3275 = vsel %vm3258, %v3272, %v3274
        %v3276 = vrot.slane %v2888, 6
        %v3277 = vsel %vm3258, %v3274, %v3276
        %v3278 = vrot.slane %v2893, 6
        %v3279 = vsel %vm3258, %v3276, %v3278
        %v3291 = vmax.f32 %v3237, %v3261
        %v3292 = vmax.f32 %v3238, %v3263
        %v3293 = vmax.f32 %v3239, %v3265
        %v3294 = vmax.f32 %v3240, %v3267
        %v3295 = vmax.f32 %v3241, %v3269
        %v3296 = vmax.f32 %v3242, %v3271
        %v3297 = vmax.f32 %v3243, %v3273
        %v3298 = vmax.f32 %v3244, %v3275
        %v3299 = vmax.f32 %v3245, %v3277
        %v3300 = vmax.f32 %v3246, %v3279
        %v3301 = vmax.f32 %v3247, %v3278
        %v3312 = vrot.slane %v2893, 7
        %v3313 = vrot.slane %v2896, 7
        %v3314 = vsel %vm2171, %v3312, %v3313
        %v3315 = vrot.slane %v2901, 7
        %v3316 = vsel %vm2171, %v3313, %v3315
        %v3317 = vrot.slane %v2904, 7
        %v3318 = vsel %vm2171, %v3315, %v3317
        %v3319 = vrot.slane %v2909, 7
        %v3320 = vsel %vm2171, %v3317, %v3319
        %v3321 = vrot.slane %v2912, 7
        %v3322 = vsel %vm2171, %v3319, %v3321
        %v3323 = vrot.slane %v2917, 7
        %v3324 = vsel %vm2171, %v3321, %v3323
        %v3325 = vrot.slane %v2920, 7
        %v3326 = vsel %vm2171, %v3323, %v3325
        %v3327 = vrot.slane %v2925, 7
        %v3328 = vsel %vm2171, %v3325, %v3327
        %v3329 = vrot.slane %v2928, 7
        %v3330 = vsel %vm2171, %v3327, %v3329
        %v3331 = vrot.slane %v2933, 7
        %v3332 = vsel %vm2171, %v3329, %v3331
        %v3344 = vmax.f32 %v3291, %v3314
        %v3345 = vmax.f32 %v3292, %v3316
        %v3346 = vmax.f32 %v3293, %v3318
        %v3347 = vmax.f32 %v3294, %v3320
        %v3348 = vmax.f32 %v3295, %v3322
        %v3349 = vmax.f32 %v3296, %v3324
        %v3350 = vmax.f32 %v3297, %v3326
        %v3351 = vmax.f32 %v3298, %v3328
        %v3352 = vmax.f32 %v3299, %v3330
        %v3353 = vmax.f32 %v3300, %v3332
        %v3354 = vmax.f32 %v3301, %v3331
        %v3355 = vmax.f32 %v3344, %v2936
        %v3356 = vmax.f32 %v3345, %v2941
        %v3357 = vmax.f32 %v3346, %v2944
        %v3358 = vmax.f32 %v3347, %v2949
        %v3359 = vmax.f32 %v3348, %v2952
        %v3360 = vmax.f32 %v3349, %v2957
        %v3361 = vmax.f32 %v3350, %v2960
        %v3362 = vmax.f32 %v3351, %v2965
        %v3363 = vmax.f32 %v3352, %v2968
        %v3364 = vmax.f32 %v3353, %v2973
        %v3365 = vmax.f32 %v3354, %v2976
        %v3366 = vpack.c.bf16 %v3356, %v3355
        %v3367 = vpack.c.bf16 %v3358, %v3357
        %v3368 = vpack.c.bf16 %v3360, %v3359
        %v3369 = vpack.c.bf16 %v3362, %v3361
        %v3370 = vpack.c.bf16 %v3364, %v3363
        %v3371 = vpack.c.bf16 %v3365, %v3365
        %v3372 = vld [vmem:[#allocation5] sm:$0xf]
        %v3373 = vld [vmem:[#allocation5 + $0x4] sm:$0xf]
        %v3374 = vld [vmem:[#allocation5 + $0x8] sm:$0xf]
        %v3375 = vld [vmem:[#allocation5 + $0xc] sm:$0xf]
        %v3376 = vld [vmem:[#allocation5 + $0x10] sm:$0xf]
        %v3377 = vld [vmem:[#allocation5 + $0x14] sm:$0xf]
        %v3378 = vld [vmem:[#allocation5 + $0x18] sm:$0xf]
        %v3379 = vld [vmem:[#allocation5 + $0x1c] sm:$0xf]
        %v3380 = vld [vmem:[#allocation5 + $0x20] sm:$0xf]
        %v3381 = vld [vmem:[#allocation5 + $0x24] sm:$0xf]
        %v3382 = vld [vmem:[#allocation5 + $0x28] sm:$0xf]
        %v3383 = vld [vmem:[#allocation5 + $0x2c] sm:$0xf]
        %v3384 = vld [vmem:[#allocation5 + $0x30] sm:$0xf]
        %v3385 = vld [vmem:[#allocation5 + $0x34] sm:$0xf]
        %v3386 = vld [vmem:[#allocation5 + $0x38] sm:$0xf]
        %v3387 = vld [vmem:[#allocation5 + $0x3c] sm:$0xf]
        %v3388 = vld [vmem:[#allocation5 + $0x40] sm:$0xf]
        %v3389 = vld [vmem:[#allocation5 + $0x44] sm:$0xf]
        %v3390 = vld [vmem:[#allocation5 + $0x48] sm:$0xf]
        %v3391 = vld [vmem:[#allocation5 + $0x4c] sm:$0xf]
        %v3392 = vld [vmem:[#allocation5 + $0x50] sm:$0xf]
        %v3393 = vld [vmem:[#allocation5 + $0x54] sm:$0xf]
        %v3394 = vld [vmem:[#allocation5 + $0x58] sm:$0xf]
        %v3395 = vld [vmem:[#allocation5 + $0x5c] sm:$0xf]
        %v3396 = vld [vmem:[#allocation5 + $0x60] sm:$0xf]
        %v3397 = vld [vmem:[#allocation5 + $0x64] sm:$0xf]
        %v3398 = vld [vmem:[#allocation5 + $0x68] sm:$0xf]
        %v3399 = vld [vmem:[#allocation5 + $0x6c] sm:$0xf]
        %v3400 = vld [vmem:[#allocation5 + $0x70] sm:$0x1]
        %v3430 = vunpack.c.l.b16 %v3372
        %v3431 = vunpack.c.l.b16 %v3373
        %v3432 = vunpack.c.l.b16 %v3374
        %v3433 = vunpack.c.l.b16 %v3375
        %v3434 = vunpack.c.l.b16 %v3376
        %v3435 = vunpack.c.l.b16 %v3377
        %v3436 = vunpack.c.l.b16 %v3378
        %v3437 = vunpack.c.l.b16 %v3379
        %v3438 = vunpack.c.l.b16 %v3380
        %v3439 = vunpack.c.l.b16 %v3381
        %v3440 = vunpack.c.l.b16 %v3382
        %v3441 = vunpack.c.l.b16 %v3383
        %v3442 = vunpack.c.l.b16 %v3384
        %v3443 = vunpack.c.l.b16 %v3385
        %v3444 = vunpack.c.l.b16 %v3386
        %v3445 = vunpack.c.l.b16 %v3387
        %v3446 = vunpack.c.l.b16 %v3388
        %v3447 = vunpack.c.l.b16 %v3389
        %v3448 = vunpack.c.l.b16 %v3390
        %v3449 = vunpack.c.l.b16 %v3391
        %v3450 = vunpack.c.l.b16 %v3392
        %v3451 = vunpack.c.l.b16 %v3393
        %v3452 = vunpack.c.l.b16 %v3394
        %v3453 = vunpack.c.l.b16 %v3395
        %v3454 = vunpack.c.l.b16 %v3396
        %v3455 = vunpack.c.l.b16 %v3397
        %v3456 = vunpack.c.l.b16 %v3398
        %v3457 = vunpack.c.l.b16 %v3399
        %v3458 = vunpack.c.l.b16 %v3400
        %v3459 = vpack.c.b16 %v3431, %v3430
        %v3460 = vpack.c.b16 %v3433, %v3432
        %v3461 = vpack.c.b16 %v3435, %v3434
        %v3462 = vpack.c.b16 %v3437, %v3436
        %v3463 = vpack.c.b16 %v3439, %v3438
        %v3464 = vpack.c.b16 %v3441, %v3440
        %v3465 = vpack.c.b16 %v3443, %v3442
        %v3466 = vpack.c.b16 %v3445, %v3444
        %v3467 = vpack.c.b16 %v3447, %v3446
        %v3468 = vpack.c.b16 %v3449, %v3448
        %v3469 = vpack.c.b16 %v3451, %v3450
        %v3470 = vpack.c.b16 %v3453, %v3452
        %v3471 = vpack.c.b16 %v3455, %v3454
        %v3472 = vpack.c.b16 %v3457, %v3456
        %v3473 = vpack.c.b16 %v3458, %v3458
        %vm3474 = vcmask 662528
        %v3476 = vsel %vm3474, %v3459, 0
        %v3479 = vsel %vm3474, %v3460, 0
        %v3482 = vsel %vm3474, %v3461, 0
        %v3485 = vsel %vm3474, %v3462, 0
        %v3488 = vsel %vm3474, %v3463, 0
        %v3491 = vsel %vm3474, %v3464, 0
        %v3494 = vsel %vm3474, %v3465, 0
        %v3497 = vsel %vm3474, %v3466, 0
        %v3500 = vsel %vm3474, %v3467, 0
        %v3503 = vsel %vm3474, %v3468, 0
        %v3506 = vsel %vm3474, %v3469, 0
        %v3509 = vsel %vm3474, %v3470, 0
        %v3512 = vsel %vm3474, %v3471, 0
        %v3515 = vsel %vm3474, %v3472, 0
        %v3518 = vsel %vm3474, %v3473, 0
        %v3521 = vand.u32 %v3371, %v2173
        %3523 = vmatprep.subr.bf16.mxu0 0
        %3524 = vmatpush1.bf16.msra.mxu0 %v3366
        %3525 = vmatprep.subr.bf16.mxu0 0
        %3526 = vmatpush1.bf16.msra.mxu0 %v3367
        %3527 = vmatprep.subr.bf16.mxu0 0
        %3528 = vmatpush1.bf16.msra.mxu0 %v3368
        %3529 = vmatprep.subr.bf16.mxu0 0
        %3530 = vmatpush1.bf16.msra.mxu0 %v3369
        %3531 = vmatprep.subr.bf16.mxu0 0
        %3532 = vmatpush1.bf16.msra.mxu0 %v3370
        %3533 = vmatprep.subr.bf16.mxu0 0
        %3534 = vmatpush1.bf16.msra.mxu0 %v3521
        %3535 = vmatprep.subr.bf16.mxu0 0
        %3536 = vmatpush1.bf16.msra.mxu0 0
        %3537 = vmatprep.subr.bf16.mxu0 0
        %3538 = vmatpush1.bf16.msra.mxu0 0
        %3539 = vmatprep.subr.bf16.mxu0 0
        %3540 = vmatpush1.bf16.msra.mxu0 0
        %3541 = vmatprep.subr.bf16.mxu0 0
        %3542 = vmatpush1.bf16.msra.mxu0 0
        %3543 = vmatprep.subr.bf16.mxu0 0
        %3544 = vmatpush1.bf16.msra.mxu0 0
        %3545 = vmatprep.subr.bf16.mxu0 0
        %3546 = vmatpush1.bf16.msra.mxu0 0
        %3547 = vmatprep.subr.bf16.mxu0 0
        %3548 = vmatpush1.bf16.msra.mxu0 0
        %3549 = vmatprep.subr.bf16.mxu0 0
        %3550 = vmatpush1.bf16.msra.mxu0 0
        %3551 = vmatprep.subr.bf16.mxu0 0
        %3552 = vmatpush1.bf16.msra.mxu0 0
        %3553 = vmatprep.subr.bf16.mxu0 0
        %3554 = vmatpush1.bf16.msra.mxu0 0
        %3555 = vmatprep.mubr.bf16.mxu0 0
        %3556 = vmatmul.mubr.bf16.gmra.mrb[0].mxu0 %v3476
        %v3557 = vpop.f32.mrb[0].mxu0
        %v3558 = vadd.f32 0.0, %v3557
        %v3559 = vpop.f32.mrb[0].mxu0
        %v3560 = vpop.f32.mrb[0].mxu0
        %v3561 = vadd.f32 0.0, %v3560
        %v3562 = vpop.f32.mrb[0].mxu0
        %3563 = vmatprep.mubr.bf16.mxu0 0
        %3564 = vmatmul.mubr.bf16.gmra.mrb[0].mxu0 %v3479
        %v3565 = vpop.f32.mrb[0].mxu0
        %v3566 = vadd.f32 0.0, %v3565
        %v3567 = vpop.f32.mrb[0].mxu0
        %v3568 = vpop.f32.mrb[0].mxu0
        %v3569 = vadd.f32 0.0, %v3568
        %v3570 = vpop.f32.mrb[0].mxu0
        %3571 = vmatprep.mubr.bf16.mxu0 0
        %3572 = vmatmul.mubr.bf16.gmra.mrb[0].mxu0 %v3482
        %v3573 = vpop.f32.mrb[0].mxu0
        %v3574 = vadd.f32 0.0, %v3573
        %v3575 = vpop.f32.mrb[0].mxu0
        %v3576 = vpop.f32.mrb[0].mxu0
        %v3577 = vadd.f32 0.0, %v3576
        %v3578 = vpop.f32.mrb[0].mxu0
        %3579 = vmatprep.mubr.bf16.mxu0 0
        %3580 = vmatmul.mubr.bf16.gmra.mrb[0].mxu0 %v3485
        %v3581 = vpop.f32.mrb[0].mxu0
        %v3582 = vadd.f32 0.0, %v3581
        %v3583 = vpop.f32.mrb[0].mxu0
        %v3584 = vpop.f32.mrb[0].mxu0
        %v3585 = vadd.f32 0.0, %v3584
        %v3586 = vpop.f32.mrb[0].mxu0
        %3587 = vmatprep.mubr.bf16.mxu0 0
        %3588 = vmatmul.mubr.bf16.gmra.mrb[0].mxu0 %v3488
        %v3589 = vpop.f32.mrb[0].mxu0
        %v3590 = vadd.f32 0.0, %v3589
        %v3591 = vpop.f32.mrb[0].mxu0
        %v3592 = vpop.f32.mrb[0].mxu0
        %v3593 = vadd.f32 0.0, %v3592
        %v3594 = vpop.f32.mrb[0].mxu0
        %3595 = vmatprep.mubr.bf16.mxu0 0
        %3596 = vmatmul.mubr.bf16.gmra.mrb[0].mxu0 %v3491
        %v3597 = vpop.f32.mrb[0].mxu0
        %v3598 = vadd.f32 0.0, %v3597
        %v3599 = vpop.f32.mrb[0].mxu0
        %v3600 = vpop.f32.mrb[0].mxu0
        %v3601 = vadd.f32 0.0, %v3600
        %v3602 = vpop.f32.mrb[0].mxu0
        %3603 = vmatprep.mubr.bf16.mxu0 0
        %3604 = vmatmul.mubr.bf16.gmra.mrb[0].mxu0 %v3494
        %v3605 = vpop.f32.mrb[0].mxu0
        %v3606 = vadd.f32 0.0, %v3605
        %v3607 = vpop.f32.mrb[0].mxu0
        %v3608 = vpop.f32.mrb[0].mxu0
        %v3609 = vadd.f32 0.0, %v3608
        %v3610 = vpop.f32.mrb[0].mxu0
        %3611 = vmatprep.mubr.bf16.mxu0 0
        %3612 = vmatmul.mubr.bf16.gmra.mrb[0].mxu0 %v3497
        %v3613 = vpop.f32.mrb[0].mxu0
        %v3614 = vadd.f32 0.0, %v3613
        %v3615 = vpop.f32.mrb[0].mxu0
        %v3616 = vpop.f32.mrb[0].mxu0
        %v3617 = vadd.f32 0.0, %v3616
        %v3618 = vpop.f32.mrb[0].mxu0
        %3619 = vmatprep.mubr.bf16.mxu0 0
        %3620 = vmatmul.mubr.bf16.gmra.mrb[0].mxu0 %v3500
        %v3621 = vpop.f32.mrb[0].mxu0
        %v3622 = vadd.f32 0.0, %v3621
        %v3623 = vpop.f32.mrb[0].mxu0
        %v3624 = vpop.f32.mrb[0].mxu0
        %v3625 = vadd.f32 0.0, %v3624
        %v3626 = vpop.f32.mrb[0].mxu0
        %3627 = vmatprep.mubr.bf16.mxu0 0
        %3628 = vmatmul.mubr.bf16.gmra.mrb[0].mxu0 %v3503
        %v3629 = vpop.f32.mrb[0].mxu0
        %v3630 = vadd.f32 0.0, %v3629
        %v3631 = vpop.f32.mrb[0].mxu0
        %v3632 = vpop.f32.mrb[0].mxu0
        %v3633 = vadd.f32 0.0, %v3632
        %v3634 = vpop.f32.mrb[0].mxu0
        %3635 = vmatprep.mubr.bf16.mxu0 0
        %3636 = vmatmul.mubr.bf16.gmra.mrb[0].mxu0 %v3506
        %v3637 = vpop.f32.mrb[0].mxu0
        %v3638 = vadd.f32 0.0, %v3637
        %v3639 = vpop.f32.mrb[0].mxu0
        %v3640 = vpop.f32.mrb[0].mxu0
        %v3641 = vadd.f32 0.0, %v3640
        %v3642 = vpop.f32.mrb[0].mxu0
        %3643 = vmatprep.mubr.bf16.mxu0 0
        %3644 = vmatmul.mubr.bf16.gmra.mrb[0].mxu0 %v3509
        %v3645 = vpop.f32.mrb[0].mxu0
        %v3646 = vadd.f32 0.0, %v3645
        %v3647 = vpop.f32.mrb[0].mxu0
        %v3648 = vpop.f32.mrb[0].mxu0
        %v3649 = vadd.f32 0.0, %v3648
        %v3650 = vpop.f32.mrb[0].mxu0
        %3651 = vmatprep.mubr.bf16.mxu0 0
        %3652 = vmatmul.mubr.bf16.gmra.mrb[0].mxu0 %v3512
        %v3653 = vpop.f32.mrb[0].mxu0
        %v3654 = vadd.f32 0.0, %v3653
        %v3655 = vpop.f32.mrb[0].mxu0
        %v3656 = vpop.f32.mrb[0].mxu0
        %v3657 = vadd.f32 0.0, %v3656
        %v3658 = vpop.f32.mrb[0].mxu0
        %3659 = vmatprep.mubr.bf16.mxu0 0
        %3660 = vmatmul.mubr.bf16.gmra.mrb[0].mxu0 %v3515
        %v3661 = vpop.f32.mrb[0].mxu0
        %v3662 = vadd.f32 0.0, %v3661
        %v3663 = vpop.f32.mrb[0].mxu0
        %v3664 = vpop.f32.mrb[0].mxu0
        %v3665 = vadd.f32 0.0, %v3664
        %v3666 = vpop.f32.mrb[0].mxu0
        %3667 = vmatprep.mubr.bf16.mxu0 0
        %3668 = vmatmul.mubr.bf16.gmra.mrb[0].mxu0 %v3518
        %v3669 = vpop.f32.mrb[0].mxu0
        %v3670 = vadd.f32 0.0, %v3669
        %v3671 = vpop.f32.mrb[0].mxu0
        %v3672 = vpop.f32.mrb[0].mxu0
        %v3673 = vpop.f32.mrb[0].mxu0
        %3674 = vdwg.mxu0
        %v3679 = vrot.slane %v3569, 1
        %v3680 = vrot.slane %v3574, 1
        %v3681 = vsel %vm2990, %v3679, %v3680
        %v3682 = vrot.slane %v3577, 1
        %v3683 = vsel %vm2990, %v3680, %v3682
        %v3684 = vrot.slane %v3582, 1
        %v3685 = vsel %vm2990, %v3682, %v3684
        %3686 = vrot.lane.b32.xlu0 %v3681, 64
        %v3687 = vpop.permute.xlu0 %3686
        %3688 = vrot.lane.b32.xlu0 %v3683, 64
        %v3689 = vpop.permute.xlu0 %3688
        %3690 = vrot.lane.b32.xlu0 %v3685, 64
        %v3691 = vpop.permute.xlu0 %3690
        %3692 = vrot.lane.b32.xlu0 %v3684, 64
        %v3693 = vpop.permute.xlu0 %3692
        %v3701 = vrot.slane %v3582, 2
        %v3702 = vrot.slane %v3585, 2
        %v3703 = vsel %vm3044, %v3701, %v3702
        %v3704 = vrot.slane %v3590, 2
        %v3705 = vsel %vm3044, %v3702, %v3704
        %v3706 = vrot.slane %v3593, 2
        %v3707 = vsel %vm3044, %v3704, %v3706
        %v3715 = vrot.slane %v3593, 3
        %v3716 = vrot.slane %v3598, 3
        %v3717 = vsel %vm912, %v3715, %v3716
        %v3718 = vrot.slane %v3601, 3
        %v3719 = vsel %vm912, %v3716, %v3718
        %v3720 = vrot.slane %v3606, 3
        %v3721 = vsel %vm912, %v3718, %v3720
        %3722 = vrot.lane.b32.xlu0 %v3717, 64
        %v3723 = vpop.permute.xlu0 %3722
        %3724 = vrot.lane.b32.xlu0 %v3719, 64
        %v3725 = vpop.permute.xlu0 %3724
        %3726 = vrot.lane.b32.xlu0 %v3721, 64
        %v3727 = vpop.permute.xlu0 %3726
        %3728 = vrot.lane.b32.xlu0 %v3720, 64
        %v3729 = vpop.permute.xlu0 %3728
        %v3737 = vrot.slane %v3606, 4
        %v3738 = vrot.slane %v3609, 4
        %v3739 = vsel %vm911, %v3737, %v3738
        %v3740 = vrot.slane %v3614, 4
        %v3741 = vsel %vm911, %v3738, %v3740
        %v3742 = vrot.slane %v3617, 4
        %v3743 = vsel %vm911, %v3740, %v3742
        %v3751 = vrot.slane %v3617, 5
        %v3752 = vrot.slane %v3622, 5
        %v3753 = vsel %vm3204, %v3751, %v3752
        %v3754 = vrot.slane %v3625, 5
        %v3755 = vsel %vm3204, %v3752, %v3754
        %v3756 = vrot.slane %v3630, 5
        %v3757 = vsel %vm3204, %v3754, %v3756
        %3758 = vrot.lane.b32.xlu0 %v3753, 64
        %v3759 = vpop.permute.xlu0 %3758
        %3760 = vrot.lane.b32.xlu0 %v3755, 64
        %v3761 = vpop.permute.xlu0 %3760
        %3762 = vrot.lane.b32.xlu0 %v3757, 64
        %v3763 = vpop.permute.xlu0 %3762
        %3764 = vrot.lane.b32.xlu0 %v3756, 64
        %v3765 = vpop.permute.xlu0 %3764
        %v3773 = vrot.slane %v3630, 6
        %v3774 = vrot.slane %v3633, 6
        %v3775 = vsel %vm3258, %v3773, %v3774
        %v3776 = vrot.slane %v3638, 6
        %v3777 = vsel %vm3258, %v3774, %v3776
        %v3778 = vrot.slane %v3641, 6
        %v3779 = vsel %vm3258, %v3776, %v3778
        %v3787 = vrot.slane %v3641, 7
        %v3788 = vrot.slane %v3646, 7
        %v3789 = vsel %vm2171, %v3787, %v3788
        %v3790 = vrot.slane %v3649, 7
        %v3791 = vsel %vm2171, %v3788, %v3790
        %v3792 = vrot.slane %v3654, 7
        %v3793 = vsel %vm2171, %v3790, %v3792
        %3794 = vrot.lane.b32.xlu0 %v3789, 64
        %v3795 = vpop.permute.xlu0 %3794
        %3796 = vrot.lane.b32.xlu0 %v3791, 64
        %v3797 = vpop.permute.xlu0 %3796
        %3798 = vrot.lane.b32.xlu0 %v3793, 64
        %v3799 = vpop.permute.xlu0 %3798
        %3800 = vrot.lane.b32.xlu0 %v3792, 64
        %v3801 = vpop.permute.xlu0 %3800
        %vm3806 = vcmask 523264
        %v3807 = vsel %vm3806, %v3558, %v3687
        %v3808 = vsel %vm3806, %v3561, %v3689
        %v3809 = vsel %vm3806, %v3566, %v3691
        %v3810 = vsel %vm3806, %v3569, %v3693
        %v3811 = vsel %vm3806, %v3703, %v3723
        %v3812 = vsel %vm3806, %v3705, %v3725
        %v3813 = vsel %vm3806, %v3707, %v3727
        %v3814 = vsel %vm3806, %v3706, %v3729
        %v3815 = vsel %vm3806, %v3739, %v3759
        %v3816 = vsel %vm3806, %v3741, %v3761
        %v3817 = vsel %vm3806, %v3743, %v3763
        %v3818 = vsel %vm3806, %v3742, %v3765
        %v3819 = vsel %vm3806, %v3775, %v3795
        %v3820 = vsel %vm3806, %v3777, %v3797
        %v3821 = vsel %vm3806, %v3779, %v3799
        %v3822 = vsel %vm3806, %v3778, %v3801
        %v3823 = vpack.c.bf16 %v3808, %v3807
        %v3824 = vpack.c.bf16 %v3812, %v3811
        %v3825 = vpack.c.bf16 %v3816, %v3815
        %v3826 = vpack.c.bf16 %v3820, %v3819
        %v3827 = vpack.c.bf16 %v3662, %v3657
        %v3828 = vpack.c.bf16 %v3810, %v3809
        %v3829 = vpack.c.bf16 %v3814, %v3813
        %v3830 = vpack.c.bf16 %v3818, %v3817
        %v3831 = vpack.c.bf16 %v3822, %v3821
        %v3832 = vpack.c.bf16 %v3670, %v3665
        %v3833 = vld [vmem:[#allocation7] sm:$0xf]
        %v3834 = vld [vmem:[#allocation7 + $0x4] sm:$0xf]
        %v3835 = vld [vmem:[#allocation7 + $0x8] sm:$0xf]
        %v3836 = vld [vmem:[#allocation7 + $0xc] sm:$0xf]
        %v3837 = vld [vmem:[#allocation7 + $0x10] sm:$0xf]
        %v3838 = vld [vmem:[#allocation7 + $0x14] sm:$0xf]
        %v3839 = vld [vmem:[#allocation7 + $0x18] sm:$0xf]
        %v3840 = vld [vmem:[#allocation7 + $0x1c] sm:$0xf]
        %v3841 = vld [vmem:[#allocation7 + $0x20] sm:$0xf]
        %v3842 = vld [vmem:[#allocation7 + $0x24] sm:$0xf]
        %v3843 = vld [vmem:[#allocation7 + $0x28] sm:$0xf]
        %v3844 = vld [vmem:[#allocation7 + $0x2c] sm:$0xf]
        %v3845 = vld [vmem:[#allocation7 + $0x30] sm:$0xf]
        %v3846 = vld [vmem:[#allocation7 + $0x34] sm:$0xf]
        %v3847 = vld [vmem:[#allocation7 + $0x38] sm:$0xf]
        %v3848 = vld [vmem:[#allocation7 + $0x3c] sm:$0xf]
        %v3849 = vld [vmem:[#allocation7 + $0x40] sm:$0xf]
        %v3850 = vld [vmem:[#allocation7 + $0x44] sm:$0xf]
        %v3851 = vld [vmem:[#allocation7 + $0x48] sm:$0xf]
        %v3852 = vld [vmem:[#allocation7 + $0x4c] sm:$0xf]
        %v3853 = vld [vmem:[#allocation7 + $0x50] sm:$0xf]
        %v3854 = vld [vmem:[#allocation7 + $0x54] sm:$0xf]
        %v3855 = vld [vmem:[#allocation7 + $0x58] sm:$0xf]
        %v3856 = vld [vmem:[#allocation7 + $0x5c] sm:$0xf]
        %v3857 = vld [vmem:[#allocation7 + $0x60] sm:$0xf]
        %v3858 = vld [vmem:[#allocation7 + $0x64] sm:$0xf]
        %v3859 = vld [vmem:[#allocation7 + $0x68] sm:$0xf]
        %v3860 = vld [vmem:[#allocation7 + $0x6c] sm:$0xf]
        %v3861 = vld [vmem:[#allocation7 + $0x70] sm:$0xf]
        %v3862 = vld [vmem:[#allocation7 + $0x74] sm:$0xf]
        %v3863 = vld [vmem:[#allocation7 + $0x78] sm:$0xf]
        %v3864 = vld [vmem:[#allocation7 + $0x7c] sm:$0xf]
        %v3865 = vld [vmem:[#allocation7 + $0x80] sm:$0xf]
        %v3866 = vld [vmem:[#allocation7 + $0x84] sm:$0xf]
        %v3867 = vld [vmem:[#allocation7 + $0x88] sm:$0xf]
        %v3868 = vld [vmem:[#allocation7 + $0x8c] sm:$0xf]
        %v3869 = vld [vmem:[#allocation7 + $0x90] sm:$0xf]
        %v3870 = vld [vmem:[#allocation7 + $0x94] sm:$0xf]
        %v3871 = vld [vmem:[#allocation7 + $0x98] sm:$0xf]
        %v3872 = vld [vmem:[#allocation7 + $0x9c] sm:$0xf]
        %v3873 = vld [vmem:[#allocation7 + $0xa0] sm:$0xf]
        %v3874 = vld [vmem:[#allocation7 + $0xa4] sm:$0xf]
        %v3875 = vld [vmem:[#allocation7 + $0xa8] sm:$0xf]
        %v3876 = vld [vmem:[#allocation7 + $0xac] sm:$0xf]
        %v3877 = vld [vmem:[#allocation7 + $0xb0] sm:$0xf]
        %v3878 = vld [vmem:[#allocation7 + $0xb4] sm:$0xf]
        %v3879 = vld [vmem:[#allocation7 + $0xb8] sm:$0xf]
        %v3880 = vld [vmem:[#allocation7 + $0xbc] sm:$0xf]
        %v3881 = vld [vmem:[#allocation7 + $0xc0] sm:$0xf]
        %v3882 = vld [vmem:[#allocation7 + $0xc4] sm:$0xf]
        %v3883 = vld [vmem:[#allocation7 + $0xc8] sm:$0xf]
        %v3884 = vld [vmem:[#allocation7 + $0xcc] sm:$0xf]
        %v3885 = vld [vmem:[#allocation7 + $0xd0] sm:$0xf]
        %v3886 = vld [vmem:[#allocation7 + $0xd4] sm:$0xf]
        %v3887 = vld [vmem:[#allocation7 + $0xd8] sm:$0xf]
        %v3888 = vld [vmem:[#allocation7 + $0xdc] sm:$0xf]
        %v3889 = vld [vmem:[#allocation7 + $0xe0] sm:$0xf]
        %v3890 = vld [vmem:[#allocation7 + $0xe4] sm:$0xf]
        %v3891 = vld [vmem:[#allocation7 + $0xe8] sm:$0xf]
        %v3892 = vld [vmem:[#allocation7 + $0xec] sm:$0xf]
        %v3893 = vld [vmem:[#allocation7 + $0xf0] sm:$0xf]
        %v3894 = vld [vmem:[#allocation7 + $0xf4] sm:$0xf]
        %v3895 = vld [vmem:[#allocation7 + $0xf8] sm:$0xf]
        %v3896 = vld [vmem:[#allocation7 + $0xfc] sm:$0xf]
        %v3897 = vld [vmem:[#allocation7 + $0x100] sm:$0xf]
        %v3898 = vld [vmem:[#allocation7 + $0x104] sm:$0xf]
        %v3899 = vld [vmem:[#allocation7 + $0x108] sm:$0xf]
        %v3900 = vld [vmem:[#allocation7 + $0x10c] sm:$0xf]
        %v3901 = vld [vmem:[#allocation7 + $0x110] sm:$0xf]
        %v3902 = vld [vmem:[#allocation7 + $0x114] sm:$0xf]
        %v3903 = vld [vmem:[#allocation7 + $0x118] sm:$0xf]
        %v3904 = vld [vmem:[#allocation7 + $0x11c] sm:$0xf]
        %v3905 = vld [vmem:[%s6] sm:$0x1]
        %v3907 = vlaneseq
        %v3908 = vshrl.u32 %v3907, 7
        %v3909 = vsub.s32 0, %v3908
        %v3910 = vrot.slane %v3905, %v3909
        %v3984 = vunpack.c.l.b16 %v3833
        %v3985 = vunpack.c.l.b16 %v3834
        %v3986 = vunpack.c.l.b16 %v3835
        %v3987 = vunpack.c.l.b16 %v3836
        %v3988 = vunpack.c.l.b16 %v3837
        %v3989 = vunpack.c.l.b16 %v3838
        %v3990 = vunpack.c.l.b16 %v3839
        %v3991 = vunpack.c.l.b16 %v3840
        %v3992 = vunpack.c.l.b16 %v3841
        %v3993 = vunpack.c.l.b16 %v3842
        %v3994 = vunpack.c.l.b16 %v3843
        %v3995 = vunpack.c.l.b16 %v3844
        %v3996 = vunpack.c.l.b16 %v3845
        %v3997 = vunpack.c.l.b16 %v3846
        %v3998 = vunpack.c.l.b16 %v3847
        %v3999 = vunpack.c.l.b16 %v3848
        %v4000 = vunpack.c.l.b16 %v3849
        %v4001 = vunpack.c.l.b16 %v3850
        %v4002 = vunpack.c.l.b16 %v3851
        %v4003 = vunpack.c.l.b16 %v3852
        %v4004 = vunpack.c.l.b16 %v3853
        %v4005 = vunpack.c.l.b16 %v3854
        %v4006 = vunpack.c.l.b16 %v3855
        %v4007 = vunpack.c.l.b16 %v3856
        %v4008 = vunpack.c.l.b16 %v3857
        %v4009 = vunpack.c.l.b16 %v3858
        %v4010 = vunpack.c.l.b16 %v3859
        %v4011 = vunpack.c.l.b16 %v3860
        %v4012 = vunpack.c.l.b16 %v3861
        %v4013 = vunpack.c.l.b16 %v3862
        %v4014 = vunpack.c.l.b16 %v3863
        %v4015 = vunpack.c.l.b16 %v3864
        %v4016 = vunpack.c.l.b16 %v3865
        %v4017 = vunpack.c.l.b16 %v3866
        %v4018 = vunpack.c.l.b16 %v3867
        %v4019 = vunpack.c.l.b16 %v3868
        %v4020 = vunpack.c.l.b16 %v3869
        %v4021 = vunpack.c.l.b16 %v3870
        %v4022 = vunpack.c.l.b16 %v3871
        %v4023 = vunpack.c.l.b16 %v3872
        %v4024 = vunpack.c.l.b16 %v3873
        %v4025 = vunpack.c.l.b16 %v3874
        %v4026 = vunpack.c.l.b16 %v3875
        %v4027 = vunpack.c.l.b16 %v3876
        %v4028 = vunpack.c.l.b16 %v3877
        %v4029 = vunpack.c.l.b16 %v3878
        %v4030 = vunpack.c.l.b16 %v3879
        %v4031 = vunpack.c.l.b16 %v3880
        %v4032 = vunpack.c.l.b16 %v3881
        %v4033 = vunpack.c.l.b16 %v3882
        %v4034 = vunpack.c.l.b16 %v3883
        %v4035 = vunpack.c.l.b16 %v3884
        %v4036 = vunpack.c.l.b16 %v3885
        %v4037 = vunpack.c.l.b16 %v3886
        %v4038 = vunpack.c.l.b16 %v3887
        %v4039 = vunpack.c.l.b16 %v3888
        %v4040 = vunpack.c.l.b16 %v3889
        %v4041 = vunpack.c.l.b16 %v3890
        %v4042 = vunpack.c.l.b16 %v3891
        %v4043 = vunpack.c.l.b16 %v3892
        %v4044 = vunpack.c.l.b16 %v3893
        %v4045 = vunpack.c.l.b16 %v3894
        %v4046 = vunpack.c.l.b16 %v3895
        %v4047 = vunpack.c.l.b16 %v3896
        %v4048 = vunpack.c.l.b16 %v3897
        %v4049 = vunpack.c.l.b16 %v3898
        %v4050 = vunpack.c.l.b16 %v3899
        %v4051 = vunpack.c.l.b16 %v3900
        %v4052 = vunpack.c.l.b16 %v3901
        %v4053 = vunpack.c.l.b16 %v3902
        %v4054 = vunpack.c.l.b16 %v3903
        %v4055 = vunpack.c.l.b16 %v3904
        %v4056 = vpack.c.b16 %v3985, %v3984
        %v4057 = vpack.c.b16 %v3987, %v3986
        %v4058 = vpack.c.b16 %v3989, %v3988
        %v4059 = vpack.c.b16 %v3991, %v3990
        %v4060 = vpack.c.b16 %v3993, %v3992
        %v4061 = vpack.c.b16 %v3995, %v3994
        %v4062 = vpack.c.b16 %v3997, %v3996
        %v4063 = vpack.c.b16 %v3999, %v3998
        %v4064 = vpack.c.b16 %v4001, %v4000
        %v4065 = vpack.c.b16 %v4003, %v4002
        %v4066 = vpack.c.b16 %v4005, %v4004
        %v4067 = vpack.c.b16 %v4007, %v4006
        %v4068 = vpack.c.b16 %v4009, %v4008
        %v4069 = vpack.c.b16 %v4011, %v4010
        %v4070 = vpack.c.b16 %v4013, %v4012
        %v4071 = vpack.c.b16 %v4015, %v4014
        %v4072 = vpack.c.b16 %v4017, %v4016
        %v4073 = vpack.c.b16 %v4019, %v4018
        %v4074 = vpack.c.b16 %v4021, %v4020
        %v4075 = vpack.c.b16 %v4023, %v4022
        %v4076 = vpack.c.b16 %v4025, %v4024
        %v4077 = vpack.c.b16 %v4027, %v4026
        %v4078 = vpack.c.b16 %v4029, %v4028
        %v4079 = vpack.c.b16 %v4031, %v4030
        %v4080 = vpack.c.b16 %v4033, %v4032
        %v4081 = vpack.c.b16 %v4035, %v4034
        %v4082 = vpack.c.b16 %v4037, %v4036
        %v4083 = vpack.c.b16 %v4039, %v4038
        %v4084 = vpack.c.b16 %v4041, %v4040
        %v4085 = vpack.c.b16 %v4043, %v4042
        %v4086 = vpack.c.b16 %v4045, %v4044
        %v4087 = vpack.c.b16 %v4047, %v4046
        %v4088 = vpack.c.b16 %v4049, %v4048
        %v4089 = vpack.c.b16 %v4051, %v4050
        %v4090 = vpack.c.b16 %v4053, %v4052
        %v4091 = vpack.c.b16 %v4055, %v4054
        %v4129 = vsel %vm3806, %v3827, 0
        %v4132 = vsel %vm3806, %v3832, 0
        %4134 = vmatprep.subr.bf16.mxu0 0
        %4135 = vmatpush1.bf16.msra.mxu0 %v4056
        %4136 = vmatprep.subr.bf16.mxu0 0
        %4137 = vmatpush1.bf16.msra.mxu0 %v4057
        %4138 = vmatprep.subr.bf16.mxu0 0
        %4139 = vmatpush1.bf16.msra.mxu0 %v4058
        %4140 = vmatprep.subr.bf16.mxu0 0
        %4141 = vmatpush1.bf16.msra.mxu0 %v4059
        %4142 = vmatprep.subr.bf16.mxu0 0
        %4143 = vmatpush1.bf16.msra.mxu0 %v4060
        %4144 = vmatprep.subr.bf16.mxu0 0
        %4145 = vmatpush1.bf16.msra.mxu0 %v4061
        %4146 = vmatprep.subr.bf16.mxu0 0
        %4147 = vmatpush1.bf16.msra.mxu0 %v4062
        %4148 = vmatprep.subr.bf16.mxu0 0
        %4149 = vmatpush1.bf16.msra.mxu0 %v4063
        %4150 = vmatprep.subr.bf16.mxu0 0
        %4151 = vmatpush1.bf16.msra.mxu0 %v4064
        %4152 = vmatprep.subr.bf16.mxu0 0
        %4153 = vmatpush1.bf16.msra.mxu0 %v4065
        %4154 = vmatprep.subr.bf16.mxu0 0
        %4155 = vmatpush1.bf16.msra.mxu0 %v4066
        %4156 = vmatprep.subr.bf16.mxu0 0
        %4157 = vmatpush1.bf16.msra.mxu0 %v4067
        %4158 = vmatprep.subr.bf16.mxu0 0
        %4159 = vmatpush1.bf16.msra.mxu0 %v4068
        %4160 = vmatprep.subr.bf16.mxu0 0
        %4161 = vmatpush1.bf16.msra.mxu0 %v4069
        %4162 = vmatprep.subr.bf16.mxu0 0
        %4163 = vmatpush1.bf16.msra.mxu0 %v4070
        %4164 = vmatprep.subr.bf16.mxu0 0
        %4165 = vmatpush1.bf16.msra.mxu0 %v4071
        %4166 = vmatprep.mubr.bf16.mxu0 %v3824
        %4167 = vmatmul.mubr.bf16.gmra.mrb[0].mxu0 %v3823
        %v4168 = vpop.f32.mrb[0].mxu0
        %v4169 = vadd.f32 %v3910, %v4168
        %v4170 = vpop.f32.mrb[0].mxu0
        %v4171 = vpop.f32.mrb[0].mxu0
        %v4172 = vadd.f32 %v3910, %v4171
        %v4173 = vpop.f32.mrb[0].mxu0
        %4174 = vmatprep.mubr.bf16.mxu0 %v3829
        %4175 = vmatmul.mubr.bf16.gmra.mrb[0].mxu0 %v3828
        %v4176 = vpop.f32.mrb[0].mxu0
        %v4177 = vadd.f32 %v3910, %v4176
        %v4178 = vpop.f32.mrb[0].mxu0
        %v4179 = vpop.f32.mrb[0].mxu0
        %v4180 = vadd.f32 %v3910, %v4179
        %v4181 = vpop.f32.mrb[0].mxu0
        %4182 = vdwg.mxu0
        %4183 = vmatprep.subr.bf16.mxu0 0
        %4184 = vmatpush1.bf16.msra.mxu0 %v4072
        %4185 = vmatprep.subr.bf16.mxu0 0
        %4186 = vmatpush1.bf16.msra.mxu0 %v4073
        %4187 = vmatprep.subr.bf16.mxu0 0
        %4188 = vmatpush1.bf16.msra.mxu0 %v4074
        %4189 = vmatprep.subr.bf16.mxu0 0
        %4190 = vmatpush1.bf16.msra.mxu0 %v4075
        %4191 = vmatprep.subr.bf16.mxu0 0
        %4192 = vmatpush1.bf16.msra.mxu0 %v4076
        %4193 = vmatprep.subr.bf16.mxu0 0
        %4194 = vmatpush1.bf16.msra.mxu0 %v4077
        %4195 = vmatprep.subr.bf16.mxu0 0
        %4196 = vmatpush1.bf16.msra.mxu0 %v4078
        %4197 = vmatprep.subr.bf16.mxu0 0
        %4198 = vmatpush1.bf16.msra.mxu0 %v4079
        %4199 = vmatprep.subr.bf16.mxu0 0
        %4200 = vmatpush1.bf16.msra.mxu0 %v4080
        %4201 = vmatprep.subr.bf16.mxu0 0
        %4202 = vmatpush1.bf16.msra.mxu0 %v4081
        %4203 = vmatprep.subr.bf16.mxu0 0
        %4204 = vmatpush1.bf16.msra.mxu0 %v4082
        %4205 = vmatprep.subr.bf16.mxu0 0
        %4206 = vmatpush1.bf16.msra.mxu0 %v4083
        %4207 = vmatprep.subr.bf16.mxu0 0
        %4208 = vmatpush1.bf16.msra.mxu0 %v4084
        %4209 = vmatprep.subr.bf16.mxu0 0
        %4210 = vmatpush1.bf16.msra.mxu0 %v4085
        %4211 = vmatprep.subr.bf16.mxu0 0
        %4212 = vmatpush1.bf16.msra.mxu0 %v4086
        %4213 = vmatprep.subr.bf16.mxu0 0
        %4214 = vmatpush1.bf16.msra.mxu0 %v4087
        %4215 = vmatprep.mubr.bf16.mxu0 %v3826
        %4216 = vmatmul.mubr.bf16.gmra.mrb[0].mxu0 %v3825
        %v4217 = vpop.f32.mrb[0].mxu0
        %v4218 = vadd.f32 %v4169, %v4217
        %v4219 = vpop.f32.mrb[0].mxu0
        %v4220 = vpop.f32.mrb[0].mxu0
        %v4221 = vadd.f32 %v4172, %v4220
        %v4222 = vpop.f32.mrb[0].mxu0
        %4223 = vmatprep.mubr.bf16.mxu0 %v3831
        %4224 = vmatmul.mubr.bf16.gmra.mrb[0].mxu0 %v3830
        %v4225 = vpop.f32.mrb[0].mxu0
        %v4226 = vadd.f32 %v4177, %v4225
        %v4227 = vpop.f32.mrb[0].mxu0
        %v4228 = vpop.f32.mrb[0].mxu0
        %v4229 = vadd.f32 %v4180, %v4228
        %v4230 = vpop.f32.mrb[0].mxu0
        %4231 = vdwg.mxu0
        %4232 = vmatprep.subr.bf16.mxu0 0
        %4233 = vmatpush1.bf16.msra.mxu0 %v4088
        %4234 = vmatprep.subr.bf16.mxu0 0
        %4235 = vmatpush1.bf16.msra.mxu0 %v4089
        %4236 = vmatprep.subr.bf16.mxu0 0
        %4237 = vmatpush1.bf16.msra.mxu0 %v4090
        %4238 = vmatprep.subr.bf16.mxu0 0
        %4239 = vmatpush1.bf16.msra.mxu0 %v4091
        %4240 = vmatprep.subr.bf16.mxu0 0
        %4241 = vmatpush1.bf16.msra.mxu0 0
        %4242 = vmatprep.subr.bf16.mxu0 0
        %4243 = vmatpush1.bf16.msra.mxu0 0
        %4244 = vmatprep.subr.bf16.mxu0 0
        %4245 = vmatpush1.bf16.msra.mxu0 0
        %4246 = vmatprep.subr.bf16.mxu0 0
        %4247 = vmatpush1.bf16.msra.mxu0 0
        %4248 = vmatprep.subr.bf16.mxu0 0
        %4249 = vmatpush1.bf16.msra.mxu0 0
        %4250 = vmatprep.subr.bf16.mxu0 0
        %4251 = vmatpush1.bf16.msra.mxu0 0
        %4252 = vmatprep.subr.bf16.mxu0 0
        %4253 = vmatpush1.bf16.msra.mxu0 0
        %4254 = vmatprep.subr.bf16.mxu0 0
        %4255 = vmatpush1.bf16.msra.mxu0 0
        %4256 = vmatprep.subr.bf16.mxu0 0
        %4257 = vmatpush1.bf16.msra.mxu0 0
        %4258 = vmatprep.subr.bf16.mxu0 0
        %4259 = vmatpush1.bf16.msra.mxu0 0
        %4260 = vmatprep.subr.bf16.mxu0 0
        %4261 = vmatpush1.bf16.msra.mxu0 0
        %4262 = vmatprep.subr.bf16.mxu0 0
        %4263 = vmatpush1.bf16.msra.mxu0 0
        %4264 = vmatprep.mubr.bf16.mxu0 0
        %4265 = vmatmul.mubr.bf16.gmra.mrb[0].mxu0 %v4129
        %v4266 = vpop.f32.mrb[0].mxu0
        %v4267 = vadd.f32 %v4218, %v4266
        %v4268 = vpop.f32.mrb[0].mxu0
        %v4269 = vpop.f32.mrb[0].mxu0
        %v4270 = vadd.f32 %v4221, %v4269
        %v4271 = vpop.f32.mrb[0].mxu0
        %4272 = vmatprep.mubr.bf16.mxu0 0
        %4273 = vmatmul.mubr.bf16.gmra.mrb[0].mxu0 %v4132
        %v4274 = vpop.f32.mrb[0].mxu0
        %v4275 = vadd.f32 %v4226, %v4274
        %v4276 = vpop.f32.mrb[0].mxu0
        %v4277 = vpop.f32.mrb[0].mxu0
        %v4278 = vadd.f32 %v4229, %v4277
        %v4279 = vpop.f32.mrb[0].mxu0
        %4280 = vdwg.mxu0
        %v4281 = vmax.f32 %v4267, 0.0
        %v4282 = vmax.f32 %v4270, 0.0
        %v4283 = vmax.f32 %v4275, 0.0
        %v4284 = vmax.f32 %v4278, 0.0
        %v4285 = vpack.c.bf16 %v4282, %v4281
        %v4286 = vpack.c.bf16 %v4284, %v4283
        %v4287 = vld [vmem:[%s7] sm:$0xf]
        %v4288 = vld [vmem:[%s7 + $0x4] sm:$0xf]
        %v4289 = vld [vmem:[%s7 + $0x8] sm:$0xf]
        %v4290 = vld [vmem:[%s7 + $0xc] sm:$0xf]
        %v4291 = vld [vmem:[%s7 + $0x10] sm:$0xf]
        %v4292 = vld [vmem:[%s7 + $0x14] sm:$0xf]
        %v4293 = vld [vmem:[%s7 + $0x18] sm:$0xf]
        %v4294 = vld [vmem:[%s7 + $0x1c] sm:$0xf]
        %v4295 = vld [vmem:[%s7 + $0x20] sm:$0xf]
        %v4296 = vld [vmem:[%s7 + $0x24] sm:$0xf]
        %v4297 = vld [vmem:[%s7 + $0x28] sm:$0xf]
        %v4298 = vld [vmem:[%s7 + $0x2c] sm:$0xf]
        %v4299 = vld [vmem:[%s7 + $0x30] sm:$0xf]
        %v4300 = vld [vmem:[%s7 + $0x34] sm:$0xf]
        %v4301 = vld [vmem:[%s7 + $0x38] sm:$0xf]
        %v4302 = vld [vmem:[%s7 + $0x3c] sm:$0xf]
        %v4303 = vld [vmem:[%s7 + $0x40] sm:$0xf]
        %v4304 = vld [vmem:[%s7 + $0x44] sm:$0xf]
        %v4305 = vld [vmem:[%s7 + $0x48] sm:$0xf]
        %v4306 = vld [vmem:[%s7 + $0x4c] sm:$0xf]
        %v4307 = vld [vmem:[%s7 + $0x50] sm:$0xf]
        %v4308 = vld [vmem:[%s7 + $0x54] sm:$0xf]
        %v4309 = vld [vmem:[%s7 + $0x58] sm:$0xf]
        %v4310 = vld [vmem:[%s7 + $0x5c] sm:$0xf]
        %v4311 = vld [vmem:[%s7 + $0x60] sm:$0xf]
        %v4312 = vld [vmem:[%s7 + $0x64] sm:$0xf]
        %v4313 = vld [vmem:[%s7 + $0x68] sm:$0xf]
        %v4314 = vld [vmem:[%s7 + $0x6c] sm:$0xf]
        %v4315 = vld [vmem:[%s7 + $0x70] sm:$0x1]
        %v4345 = vunpack.c.l.b16 %v4287
        %v4346 = vunpack.c.l.b16 %v4288
        %v4347 = vunpack.c.l.b16 %v4289
        %v4348 = vunpack.c.l.b16 %v4290
        %v4349 = vunpack.c.l.b16 %v4291
        %v4350 = vunpack.c.l.b16 %v4292
        %v4351 = vunpack.c.l.b16 %v4293
        %v4352 = vunpack.c.l.b16 %v4294
        %v4353 = vunpack.c.l.b16 %v4295
        %v4354 = vunpack.c.l.b16 %v4296
        %v4355 = vunpack.c.l.b16 %v4297
        %v4356 = vunpack.c.l.b16 %v4298
        %v4357 = vunpack.c.l.b16 %v4299
        %v4358 = vunpack.c.l.b16 %v4300
        %v4359 = vunpack.c.l.b16 %v4301
        %v4360 = vunpack.c.l.b16 %v4302
        %v4361 = vunpack.c.l.b16 %v4303
        %v4362 = vunpack.c.l.b16 %v4304
        %v4363 = vunpack.c.l.b16 %v4305
        %v4364 = vunpack.c.l.b16 %v4306
        %v4365 = vunpack.c.l.b16 %v4307
        %v4366 = vunpack.c.l.b16 %v4308
        %v4367 = vunpack.c.l.b16 %v4309
        %v4368 = vunpack.c.l.b16 %v4310
        %v4369 = vunpack.c.l.b16 %v4311
        %v4370 = vunpack.c.l.b16 %v4312
        %v4371 = vunpack.c.l.b16 %v4313
        %v4372 = vunpack.c.l.b16 %v4314
        %v4373 = vunpack.c.l.b16 %v4315
        %v4374 = vpack.c.b16 %v4346, %v4345
        %v4375 = vpack.c.b16 %v4348, %v4347
        %v4376 = vpack.c.b16 %v4350, %v4349
        %v4377 = vpack.c.b16 %v4352, %v4351
        %v4378 = vpack.c.b16 %v4354, %v4353
        %v4379 = vpack.c.b16 %v4356, %v4355
        %v4380 = vpack.c.b16 %v4358, %v4357
        %v4381 = vpack.c.b16 %v4360, %v4359
        %v4382 = vpack.c.b16 %v4362, %v4361
        %v4383 = vpack.c.b16 %v4364, %v4363
        %v4384 = vpack.c.b16 %v4366, %v4365
        %v4385 = vpack.c.b16 %v4368, %v4367
        %v4386 = vpack.c.b16 %v4370, %v4369
        %v4387 = vpack.c.b16 %v4372, %v4371
        %v4388 = vpack.c.b16 %v4373, %v4373
        %v4390 = vsel %vm853, %v4374, 0
        %v4393 = vsel %vm853, %v4375, 0
        %v4396 = vsel %vm853, %v4376, 0
        %v4399 = vsel %vm853, %v4377, 0
        %v4402 = vsel %vm853, %v4378, 0
        %v4405 = vsel %vm853, %v4379, 0
        %v4408 = vsel %vm853, %v4380, 0
        %v4411 = vsel %vm853, %v4381, 0
        %v4414 = vsel %vm853, %v4382, 0
        %v4417 = vsel %vm853, %v4383, 0
        %v4420 = vsel %vm853, %v4384, 0
        %v4423 = vsel %vm853, %v4385, 0
        %v4426 = vsel %vm853, %v4386, 0
        %v4429 = vsel %vm853, %v4387, 0
        %v4432 = vsel %vm853, %v4388, 0
        %v4435 = vand.u32 %v4286, %v914
        %4437 = vmatprep.subr.bf16.mxu0 0
        %4438 = vmatpush1.bf16.msra.mxu0 %v4285
        %4439 = vmatprep.subr.bf16.mxu0 0
        %4440 = vmatpush1.bf16.msra.mxu0 %v4435
        %4441 = vmatprep.subr.bf16.mxu0 0
        %4442 = vmatpush1.bf16.msra.mxu0 0
        %4443 = vmatprep.subr.bf16.mxu0 0
        %4444 = vmatpush1.bf16.msra.mxu0 0
        %4445 = vmatprep.subr.bf16.mxu0 0
        %4446 = vmatpush1.bf16.msra.mxu0 0
        %4447 = vmatprep.subr.bf16.mxu0 0
        %4448 = vmatpush1.bf16.msra.mxu0 0
        %4449 = vmatprep.subr.bf16.mxu0 0
        %4450 = vmatpush1.bf16.msra.mxu0 0
        %4451 = vmatprep.subr.bf16.mxu0 0
        %4452 = vmatpush1.bf16.msra.mxu0 0
        %4453 = vmatprep.subr.bf16.mxu0 0
        %4454 = vmatpush1.bf16.msra.mxu0 0
        %4455 = vmatprep.subr.bf16.mxu0 0
        %4456 = vmatpush1.bf16.msra.mxu0 0
        %4457 = vmatprep.subr.bf16.mxu0 0
        %4458 = vmatpush1.bf16.msra.mxu0 0
        %4459 = vmatprep.subr.bf16.mxu0 0
        %4460 = vmatpush1.bf16.msra.mxu0 0
        %4461 = vmatprep.subr.bf16.mxu0 0
        %4462 = vmatpush1.bf16.msra.mxu0 0
        %4463 = vmatprep.subr.bf16.mxu0 0
        %4464 = vmatpush1.bf16.msra.mxu0 0
        %4465 = vmatprep.subr.bf16.mxu0 0
        %4466 = vmatpush1.bf16.msra.mxu0 0
        %4467 = vmatprep.subr.bf16.mxu0 0
        %4468 = vmatpush1.bf16.msra.mxu0 0
        %4469 = vmatprep.mubr.bf16.mxu0 0
        %4470 = vmatmul.mubr.bf16.gmra.mrb[0].mxu0 %v4390
        %v4471 = vpop.f32.mrb[0].mxu0
        %v4472 = vadd.f32 0.0, %v4471
        %v4473 = vpop.f32.mrb[0].mxu0
        %v4474 = vpop.f32.mrb[0].mxu0
        %v4475 = vadd.f32 0.0, %v4474
        %v4476 = vpop.f32.mrb[0].mxu0
        %4477 = vmatprep.mubr.bf16.mxu0 0
        %4478 = vmatmul.mubr.bf16.gmra.mrb[0].mxu0 %v4393
        %v4479 = vpop.f32.mrb[0].mxu0
        %v4480 = vadd.f32 0.0, %v4479
        %v4481 = vpop.f32.mrb[0].mxu0
        %v4482 = vpop.f32.mrb[0].mxu0
        %v4483 = vadd.f32 0.0, %v4482
        %v4484 = vpop.f32.mrb[0].mxu0
        %4485 = vmatprep.mubr.bf16.mxu0 0
        %4486 = vmatmul.mubr.bf16.gmra.mrb[0].mxu0 %v4396
        %v4487 = vpop.f32.mrb[0].mxu0
        %v4488 = vadd.f32 0.0, %v4487
        %v4489 = vpop.f32.mrb[0].mxu0
        %v4490 = vpop.f32.mrb[0].mxu0
        %v4491 = vadd.f32 0.0, %v4490
        %v4492 = vpop.f32.mrb[0].mxu0
        %4493 = vmatprep.mubr.bf16.mxu0 0
        %4494 = vmatmul.mubr.bf16.gmra.mrb[0].mxu0 %v4399
        %v4495 = vpop.f32.mrb[0].mxu0
        %v4496 = vadd.f32 0.0, %v4495
        %v4497 = vpop.f32.mrb[0].mxu0
        %v4498 = vpop.f32.mrb[0].mxu0
        %v4499 = vadd.f32 0.0, %v4498
        %v4500 = vpop.f32.mrb[0].mxu0
        %4501 = vmatprep.mubr.bf16.mxu0 0
        %4502 = vmatmul.mubr.bf16.gmra.mrb[0].mxu0 %v4402
        %v4503 = vpop.f32.mrb[0].mxu0
        %v4504 = vadd.f32 0.0, %v4503
        %v4505 = vpop.f32.mrb[0].mxu0
        %v4506 = vpop.f32.mrb[0].mxu0
        %v4507 = vadd.f32 0.0, %v4506
        %v4508 = vpop.f32.mrb[0].mxu0
        %4509 = vmatprep.mubr.bf16.mxu0 0
        %4510 = vmatmul.mubr.bf16.gmra.mrb[0].mxu0 %v4405
        %v4511 = vpop.f32.mrb[0].mxu0
        %v4512 = vadd.f32 0.0, %v4511
        %v4513 = vpop.f32.mrb[0].mxu0
        %v4514 = vpop.f32.mrb[0].mxu0
        %v4515 = vadd.f32 0.0, %v4514
        %v4516 = vpop.f32.mrb[0].mxu0
        %4517 = vmatprep.mubr.bf16.mxu0 0
        %4518 = vmatmul.mubr.bf16.gmra.mrb[0].mxu0 %v4408
        %v4519 = vpop.f32.mrb[0].mxu0
        %v4520 = vadd.f32 0.0, %v4519
        %v4521 = vpop.f32.mrb[0].mxu0
        %v4522 = vpop.f32.mrb[0].mxu0
        %v4523 = vadd.f32 0.0, %v4522
        %v4524 = vpop.f32.mrb[0].mxu0
        %4525 = vmatprep.mubr.bf16.mxu0 0
        %4526 = vmatmul.mubr.bf16.gmra.mrb[0].mxu0 %v4411
        %v4527 = vpop.f32.mrb[0].mxu0
        %v4528 = vadd.f32 0.0, %v4527
        %v4529 = vpop.f32.mrb[0].mxu0
        %v4530 = vpop.f32.mrb[0].mxu0
        %v4531 = vadd.f32 0.0, %v4530
        %v4532 = vpop.f32.mrb[0].mxu0
        %4533 = vmatprep.mubr.bf16.mxu0 0
        %4534 = vmatmul.mubr.bf16.gmra.mrb[0].mxu0 %v4414
        %v4535 = vpop.f32.mrb[0].mxu0
        %v4536 = vadd.f32 0.0, %v4535
        %v4537 = vpop.f32.mrb[0].mxu0
        %v4538 = vpop.f32.mrb[0].mxu0
        %v4539 = vadd.f32 0.0, %v4538
        %v4540 = vpop.f32.mrb[0].mxu0
        %4541 = vmatprep.mubr.bf16.mxu0 0
        %4542 = vmatmul.mubr.bf16.gmra.mrb[0].mxu0 %v4417
        %v4543 = vpop.f32.mrb[0].mxu0
        %v4544 = vadd.f32 0.0, %v4543
        %v4545 = vpop.f32.mrb[0].mxu0
        %v4546 = vpop.f32.mrb[0].mxu0
        %v4547 = vadd.f32 0.0, %v4546
        %v4548 = vpop.f32.mrb[0].mxu0
        %4549 = vmatprep.mubr.bf16.mxu0 0
        %4550 = vmatmul.mubr.bf16.gmra.mrb[0].mxu0 %v4420
        %v4551 = vpop.f32.mrb[0].mxu0
        %v4552 = vadd.f32 0.0, %v4551
        %v4553 = vpop.f32.mrb[0].mxu0
        %v4554 = vpop.f32.mrb[0].mxu0
        %v4555 = vadd.f32 0.0, %v4554
        %v4556 = vpop.f32.mrb[0].mxu0
        %4557 = vmatprep.mubr.bf16.mxu0 0
        %4558 = vmatmul.mubr.bf16.gmra.mrb[0].mxu0 %v4423
        %v4559 = vpop.f32.mrb[0].mxu0
        %v4560 = vadd.f32 0.0, %v4559
        %v4561 = vpop.f32.mrb[0].mxu0
        %v4562 = vpop.f32.mrb[0].mxu0
        %v4563 = vadd.f32 0.0, %v4562
        %v4564 = vpop.f32.mrb[0].mxu0
        %4565 = vmatprep.mubr.bf16.mxu0 0
        %4566 = vmatmul.mubr.bf16.gmra.mrb[0].mxu0 %v4426
        %v4567 = vpop.f32.mrb[0].mxu0
        %v4568 = vadd.f32 0.0, %v4567
        %v4569 = vpop.f32.mrb[0].mxu0
        %v4570 = vpop.f32.mrb[0].mxu0
        %v4571 = vadd.f32 0.0, %v4570
        %v4572 = vpop.f32.mrb[0].mxu0
        %4573 = vmatprep.mubr.bf16.mxu0 0
        %4574 = vmatmul.mubr.bf16.gmra.mrb[0].mxu0 %v4429
        %v4575 = vpop.f32.mrb[0].mxu0
        %v4576 = vadd.f32 0.0, %v4575
        %v4577 = vpop.f32.mrb[0].mxu0
        %v4578 = vpop.f32.mrb[0].mxu0
        %v4579 = vadd.f32 0.0, %v4578
        %v4580 = vpop.f32.mrb[0].mxu0
        %4581 = vmatprep.mubr.bf16.mxu0 0
        %4582 = vmatmul.mubr.bf16.gmra.mrb[0].mxu0 %v4432
        %v4583 = vpop.f32.mrb[0].mxu0
        %v4584 = vadd.f32 0.0, %v4583
        %v4585 = vpop.f32.mrb[0].mxu0
        %v4586 = vpop.f32.mrb[0].mxu0
        %v4587 = vpop.f32.mrb[0].mxu0
        %4588 = vdwg.mxu0
        %v4593 = vrot.slane %v4483, 1
        %v4594 = vrot.slane %v4488, 1
        %v4595 = vsel %vm2990, %v4593, %v4594
        %v4596 = vrot.slane %v4491, 1
        %v4597 = vsel %vm2990, %v4594, %v4596
        %v4598 = vrot.slane %v4496, 1
        %v4599 = vsel %vm2990, %v4596, %v4598
        %v4607 = vrot.slane %v4496, 2
        %v4608 = vrot.slane %v4499, 2
        %v4609 = vsel %vm3044, %v4607, %v4608
        %v4610 = vrot.slane %v4504, 2
        %v4611 = vsel %vm3044, %v4608, %v4610
        %v4612 = vrot.slane %v4507, 2
        %v4613 = vsel %vm3044, %v4610, %v4612
        %v4621 = vrot.slane %v4507, 3
        %v4622 = vrot.slane %v4512, 3
        %v4623 = vsel %vm912, %v4621, %v4622
        %v4624 = vrot.slane %v4515, 3
        %v4625 = vsel %vm912, %v4622, %v4624
        %v4626 = vrot.slane %v4520, 3
        %v4627 = vsel %vm912, %v4624, %v4626
        %v4635 = vrot.slane %v4520, 4
        %v4636 = vrot.slane %v4523, 4
        %v4637 = vsel %vm911, %v4635, %v4636
        %v4638 = vrot.slane %v4528, 4
        %v4639 = vsel %vm911, %v4636, %v4638
        %v4640 = vrot.slane %v4531, 4
        %v4641 = vsel %vm911, %v4638, %v4640
        %v4649 = vrot.slane %v4531, 5
        %v4650 = vrot.slane %v4536, 5
        %v4651 = vsel %vm3204, %v4649, %v4650
        %v4652 = vrot.slane %v4539, 5
        %v4653 = vsel %vm3204, %v4650, %v4652
        %v4654 = vrot.slane %v4544, 5
        %v4655 = vsel %vm3204, %v4652, %v4654
        %v4663 = vrot.slane %v4544, 6
        %v4664 = vrot.slane %v4547, 6
        %v4665 = vsel %vm3258, %v4663, %v4664
        %v4666 = vrot.slane %v4552, 6
        %v4667 = vsel %vm3258, %v4664, %v4666
        %v4668 = vrot.slane %v4555, 6
        %v4669 = vsel %vm3258, %v4666, %v4668
        %v4677 = vrot.slane %v4555, 7
        %v4678 = vrot.slane %v4560, 7
        %v4679 = vsel %vm2171, %v4677, %v4678
        %v4680 = vrot.slane %v4563, 7
        %v4681 = vsel %vm2171, %v4678, %v4680
        %v4682 = vrot.slane %v4568, 7
        %v4683 = vsel %vm2171, %v4680, %v4682
        %v4688 = vpack.c.bf16 %v4475, %v4472
        %v4689 = vpack.c.bf16 %v4597, %v4595
        %v4690 = vpack.c.bf16 %v4611, %v4609
        %v4691 = vpack.c.bf16 %v4625, %v4623
        %v4692 = vpack.c.bf16 %v4639, %v4637
        %v4693 = vpack.c.bf16 %v4653, %v4651
        %v4694 = vpack.c.bf16 %v4667, %v4665
        %v4695 = vpack.c.bf16 %v4681, %v4679
        %v4696 = vpack.c.bf16 %v4576, %v4571
        %v4697 = vpack.c.bf16 %v4483, %v4480
        %v4698 = vpack.c.bf16 %v4598, %v4599
        %v4699 = vpack.c.bf16 %v4612, %v4613
        %v4700 = vpack.c.bf16 %v4626, %v4627
        %v4701 = vpack.c.bf16 %v4640, %v4641
        %v4702 = vpack.c.bf16 %v4654, %v4655
        %v4703 = vpack.c.bf16 %v4668, %v4669
        %v4704 = vpack.c.bf16 %v4682, %v4683
        %v4705 = vpack.c.bf16 %v4584, %v4579
        %v4706 = vld [vmem:[%s8] sm:$0xff]
        %v4707 = vld [vmem:[%s8 + $0x8] sm:$0xff]
        %v4708 = vld [vmem:[%s8 + $0x10] sm:$0xff]
        %v4709 = vld [vmem:[%s8 + $0x18] sm:$0xff]
        %v4710 = vld [vmem:[%s8 + $0x20] sm:$0xff]
        %v4711 = vld [vmem:[%s8 + $0x28] sm:$0xff]
        %v4712 = vld [vmem:[%s8 + $0x30] sm:$0xff]
        %v4713 = vld [vmem:[%s8 + $0x38] sm:$0xff]
        %v4714 = vld [vmem:[%s8 + $0x40] sm:$0xff]
        %v4715 = vld [vmem:[%s8 + $0x48] sm:$0xff]
        %v4716 = vld [vmem:[%s8 + $0x50] sm:$0xff]
        %v4717 = vld [vmem:[%s8 + $0x58] sm:$0xff]
        %v4718 = vld [vmem:[%s8 + $0x60] sm:$0xff]
        %v4719 = vld [vmem:[%s8 + $0x68] sm:$0xff]
        %v4720 = vld [vmem:[%s8 + $0x70] sm:$0xff]
        %v4721 = vld [vmem:[%s8 + $0x78] sm:$0xff]
        %v4722 = vld [vmem:[%s8 + $0x80] sm:$0xff]
        %v4723 = vld [vmem:[%s8 + $0x88] sm:$0xff]
        %v4724 = vld [vmem:[%s8 + $0x90] sm:$0xff]
        %v4725 = vld [vmem:[%s8 + $0x98] sm:$0xff]
        %v4726 = vld [vmem:[%s8 + $0xa0] sm:$0xff]
        %v4727 = vld [vmem:[%s8 + $0xa8] sm:$0xff]
        %v4728 = vld [vmem:[%s8 + $0xb0] sm:$0xff]
        %v4729 = vld [vmem:[%s8 + $0xb8] sm:$0xff]
        %v4730 = vld [vmem:[%s8 + $0xc0] sm:$0xff]
        %v4731 = vld [vmem:[%s8 + $0xc8] sm:$0xff]
        %v4732 = vld [vmem:[%s8 + $0xd0] sm:$0xff]
        %v4733 = vld [vmem:[%s8 + $0xd8] sm:$0xff]
        %v4734 = vld [vmem:[%s8 + $0xe0] sm:$0xff]
        %v4735 = vld [vmem:[%s8 + $0xe8] sm:$0xff]
        %v4736 = vld [vmem:[%s8 + $0xf0] sm:$0xff]
        %v4737 = vld [vmem:[%s8 + $0xf8] sm:$0xff]
        %v4738 = vld [vmem:[%s8 + $0x100] sm:$0xff]
        %v4739 = vld [vmem:[%s8 + $0x108] sm:$0xff]
        %v4740 = vld [vmem:[%s8 + $0x110] sm:$0xff]
        %v4741 = vld [vmem:[%s8 + $0x118] sm:$0xff]
        %v4742 = vld [vmem:[%s8 + $0x120] sm:$0xff]
        %v4743 = vld [vmem:[%s8 + $0x128] sm:$0xff]
        %v4744 = vld [vmem:[%s8 + $0x130] sm:$0xff]
        %v4745 = vld [vmem:[%s8 + $0x138] sm:$0xff]
        %v4746 = vld [vmem:[%s8 + $0x140] sm:$0xff]
        %v4747 = vld [vmem:[%s8 + $0x148] sm:$0xff]
        %v4748 = vld [vmem:[%s8 + $0x150] sm:$0xff]
        %v4749 = vld [vmem:[%s8 + $0x158] sm:$0xff]
        %v4750 = vld [vmem:[%s8 + $0x160] sm:$0xff]
        %v4751 = vld [vmem:[%s8 + $0x168] sm:$0xff]
        %v4752 = vld [vmem:[%s8 + $0x170] sm:$0xff]
        %v4753 = vld [vmem:[%s8 + $0x178] sm:$0xff]
        %v4754 = vld [vmem:[%s8 + $0x180] sm:$0xff]
        %v4755 = vld [vmem:[%s8 + $0x188] sm:$0xff]
        %v4756 = vld [vmem:[%s8 + $0x190] sm:$0xff]
        %v4757 = vld [vmem:[%s8 + $0x198] sm:$0xff]
        %v4758 = vld [vmem:[%s8 + $0x1a0] sm:$0xff]
        %v4759 = vld [vmem:[%s8 + $0x1a8] sm:$0xff]
        %v4760 = vld [vmem:[%s8 + $0x1b0] sm:$0xff]
        %v4761 = vld [vmem:[%s8 + $0x1b8] sm:$0xff]
        %v4762 = vld [vmem:[%s8 + $0x1c0] sm:$0xff]
        %v4763 = vld [vmem:[%s8 + $0x1c8] sm:$0xff]
        %v4764 = vld [vmem:[%s8 + $0x1d0] sm:$0xff]
        %v4765 = vld [vmem:[%s8 + $0x1d8] sm:$0xff]
        %v4766 = vld [vmem:[%s8 + $0x1e0] sm:$0xff]
        %v4767 = vld [vmem:[%s8 + $0x1e8] sm:$0xff]
        %v4768 = vld [vmem:[%s8 + $0x1f0] sm:$0xff]
        %v4769 = vld [vmem:[%s8 + $0x1f8] sm:$0xff]
        %v4770 = vld [vmem:[%s8 + $0x200] sm:$0xff]
        %v4771 = vld [vmem:[%s8 + $0x208] sm:$0xff]
        %v4772 = vld [vmem:[%s8 + $0x210] sm:$0xff]
        %v4773 = vld [vmem:[%s8 + $0x218] sm:$0xff]
        %v4774 = vld [vmem:[%s8 + $0x220] sm:$0xff]
        %v4775 = vld [vmem:[%s8 + $0x228] sm:$0xff]
        %v4776 = vld [vmem:[%s8 + $0x230] sm:$0xff]
        %v4777 = vld [vmem:[%s8 + $0x238] sm:$0xff]
        %v4778 = vld [vmem:[%s8 + $0x240] sm:$0xff]
        %v4779 = vld [vmem:[%s8 + $0x248] sm:$0xff]
        %v4780 = vld [vmem:[%s8 + $0x250] sm:$0xff]
        %v4781 = vld [vmem:[%s8 + $0x258] sm:$0xff]
        %v4782 = vld [vmem:[%s8 + $0x260] sm:$0xff]
        %v4783 = vld [vmem:[%s8 + $0x268] sm:$0xff]
        %v4784 = vld [vmem:[%s8 + $0x270] sm:$0xff]
        %v4785 = vld [vmem:[%s8 + $0x278] sm:$0xff]
        %v4786 = vld [vmem:[%s8 + $0x280] sm:$0xff]
        %v4787 = vld [vmem:[%s8 + $0x288] sm:$0xff]
        %v4788 = vld [vmem:[%s8 + $0x290] sm:$0xff]
        %v4789 = vld [vmem:[%s8 + $0x298] sm:$0xff]
        %v4790 = vld [vmem:[%s8 + $0x2a0] sm:$0xff]
        %v4791 = vld [vmem:[%s8 + $0x2a8] sm:$0xff]
        %v4792 = vld [vmem:[%s8 + $0x2b0] sm:$0xff]
        %v4793 = vld [vmem:[%s8 + $0x2b8] sm:$0xff]
        %v4794 = vld [vmem:[%s8 + $0x2c0] sm:$0xff]
        %v4795 = vld [vmem:[%s8 + $0x2c8] sm:$0xff]
        %v4796 = vld [vmem:[%s8 + $0x2d0] sm:$0xff]
        %v4797 = vld [vmem:[%s8 + $0x2d8] sm:$0xff]
        %v4798 = vld [vmem:[%s8 + $0x2e0] sm:$0xff]
        %v4799 = vld [vmem:[%s8 + $0x2e8] sm:$0xff]
        %v4800 = vld [vmem:[%s8 + $0x2f0] sm:$0xff]
        %v4801 = vld [vmem:[%s8 + $0x2f8] sm:$0xff]
        %v4802 = vld [vmem:[%s8 + $0x300] sm:$0xff]
        %v4803 = vld [vmem:[%s8 + $0x308] sm:$0xff]
        %v4804 = vld [vmem:[%s8 + $0x310] sm:$0xff]
        %v4805 = vld [vmem:[%s8 + $0x318] sm:$0xff]
        %v4806 = vld [vmem:[%s8 + $0x320] sm:$0xff]
        %v4807 = vld [vmem:[%s8 + $0x328] sm:$0xff]
        %v4808 = vld [vmem:[%s8 + $0x330] sm:$0xff]
        %v4809 = vld [vmem:[%s8 + $0x338] sm:$0xff]
        %v4810 = vld [vmem:[%s8 + $0x340] sm:$0xff]
        %v4811 = vld [vmem:[%s8 + $0x348] sm:$0xff]
        %v4812 = vld [vmem:[%s8 + $0x350] sm:$0xff]
        %v4813 = vld [vmem:[%s8 + $0x358] sm:$0xff]
        %v4814 = vld [vmem:[%s8 + $0x360] sm:$0xff]
        %v4815 = vld [vmem:[%s8 + $0x368] sm:$0xff]
        %v4816 = vld [vmem:[%s8 + $0x370] sm:$0xff]
        %v4817 = vld [vmem:[%s8 + $0x378] sm:$0xff]
        %v4818 = vld [vmem:[%s8 + $0x380] sm:$0xff]
        %v4819 = vld [vmem:[%s8 + $0x388] sm:$0xff]
        %v4820 = vld [vmem:[%s8 + $0x390] sm:$0xff]
        %v4821 = vld [vmem:[%s8 + $0x398] sm:$0xff]
        %v4822 = vld [vmem:[%s8 + $0x3a0] sm:$0xff]
        %v4823 = vld [vmem:[%s8 + $0x3a8] sm:$0xff]
        %v4824 = vld [vmem:[%s8 + $0x3b0] sm:$0xff]
        %v4825 = vld [vmem:[%s8 + $0x3b8] sm:$0xff]
        %v4826 = vld [vmem:[%s8 + $0x3c0] sm:$0xff]
        %v4827 = vld [vmem:[%s8 + $0x3c8] sm:$0xff]
        %v4828 = vld [vmem:[%s8 + $0x3d0] sm:$0xff]
        %v4829 = vld [vmem:[%s8 + $0x3d8] sm:$0xff]
        %v4830 = vld [vmem:[%s8 + $0x3e0] sm:$0xff]
        %v4831 = vld [vmem:[%s8 + $0x3e8] sm:$0xff]
        %v4832 = vld [vmem:[%s8 + $0x3f0] sm:$0xff]
        %v4833 = vld [vmem:[%s8 + $0x3f8] sm:$0xff]
        %v4834 = vld [vmem:[%s8 + $0x400] sm:$0xff]
        %v4835 = vld [vmem:[%s8 + $0x408] sm:$0xff]
        %v4836 = vld [vmem:[%s8 + $0x410] sm:$0xff]
        %v4837 = vld [vmem:[%s8 + $0x418] sm:$0xff]
        %v4838 = vld [vmem:[%s8 + $0x420] sm:$0xff]
        %v4839 = vld [vmem:[%s8 + $0x428] sm:$0xff]
        %v4840 = vld [vmem:[%s8 + $0x430] sm:$0xff]
        %v4841 = vld [vmem:[%s8 + $0x438] sm:$0xff]
        %v4842 = vld [vmem:[%s8 + $0x440] sm:$0xff]
        %v4843 = vld [vmem:[%s8 + $0x448] sm:$0xff]
        %v4844 = vld [vmem:[%s8 + $0x450] sm:$0xff]
        %v4845 = vld [vmem:[%s8 + $0x458] sm:$0xff]
        %v4846 = vld [vmem:[%s8 + $0x460] sm:$0xff]
        %v4847 = vld [vmem:[%s8 + $0x468] sm:$0xff]
        %v4848 = vld [vmem:[%s8 + $0x470] sm:$0xff]
        %v4849 = vld [vmem:[%s8 + $0x478] sm:$0xff]
        %v4850 = vld [vmem:[%s9] sm:$0x3]
        %v4852 = vlaneseq
        %v4853 = vshrl.u32 %v4852, 7
        %v4854 = vsub.s32 0, %v4853
        %v4855 = vrot.slane %v4850, %v4854
        %v4856 = vlaneseq
        %v4857 = vshrl.u32 %v4856, 7
        %v4858 = vsub.s32 1, %v4857
        %v4859 = vrot.slane %v4850, %v4858
        %v5006 = vunpack.c.l.b16 %v4706
        %v5007 = vunpack.c.h.b16 %v4706
        %v5008 = vunpack.c.l.b16 %v4707
        %v5009 = vunpack.c.h.b16 %v4707
        %v5010 = vunpack.c.l.b16 %v4708
        %v5011 = vunpack.c.h.b16 %v4708
        %v5012 = vunpack.c.l.b16 %v4709
        %v5013 = vunpack.c.h.b16 %v4709
        %v5014 = vunpack.c.l.b16 %v4710
        %v5015 = vunpack.c.h.b16 %v4710
        %v5016 = vunpack.c.l.b16 %v4711
        %v5017 = vunpack.c.h.b16 %v4711
        %v5018 = vunpack.c.l.b16 %v4712
        %v5019 = vunpack.c.h.b16 %v4712
        %v5020 = vunpack.c.l.b16 %v4713
        %v5021 = vunpack.c.h.b16 %v4713
        %v5022 = vunpack.c.l.b16 %v4714
        %v5023 = vunpack.c.h.b16 %v4714
        %v5024 = vunpack.c.l.b16 %v4715
        %v5025 = vunpack.c.h.b16 %v4715
        %v5026 = vunpack.c.l.b16 %v4716
        %v5027 = vunpack.c.h.b16 %v4716
        %v5028 = vunpack.c.l.b16 %v4717
        %v5029 = vunpack.c.h.b16 %v4717
        %v5030 = vunpack.c.l.b16 %v4718
        %v5031 = vunpack.c.h.b16 %v4718
        %v5032 = vunpack.c.l.b16 %v4719
        %v5033 = vunpack.c.h.b16 %v4719
        %v5034 = vunpack.c.l.b16 %v4720
        %v5035 = vunpack.c.h.b16 %v4720
        %v5036 = vunpack.c.l.b16 %v4721
        %v5037 = vunpack.c.h.b16 %v4721
        %v5038 = vunpack.c.l.b16 %v4722
        %v5039 = vunpack.c.h.b16 %v4722
        %v5040 = vunpack.c.l.b16 %v4723
        %v5041 = vunpack.c.h.b16 %v4723
        %v5042 = vunpack.c.l.b16 %v4724
        %v5043 = vunpack.c.h.b16 %v4724
        %v5044 = vunpack.c.l.b16 %v4725
        %v5045 = vunpack.c.h.b16 %v4725
        %v5046 = vunpack.c.l.b16 %v4726
        %v5047 = vunpack.c.h.b16 %v4726
        %v5048 = vunpack.c.l.b16 %v4727
        %v5049 = vunpack.c.h.b16 %v4727
        %v5050 = vunpack.c.l.b16 %v4728
        %v5051 = vunpack.c.h.b16 %v4728
        %v5052 = vunpack.c.l.b16 %v4729
        %v5053 = vunpack.c.h.b16 %v4729
        %v5054 = vunpack.c.l.b16 %v4730
        %v5055 = vunpack.c.h.b16 %v4730
        %v5056 = vunpack.c.l.b16 %v4731
        %v5057 = vunpack.c.h.b16 %v4731
        %v5058 = vunpack.c.l.b16 %v4732
        %v5059 = vunpack.c.h.b16 %v4732
        %v5060 = vunpack.c.l.b16 %v4733
        %v5061 = vunpack.c.h.b16 %v4733
        %v5062 = vunpack.c.l.b16 %v4734
        %v5063 = vunpack.c.h.b16 %v4734
        %v5064 = vunpack.c.l.b16 %v4735
        %v5065 = vunpack.c.h.b16 %v4735
        %v5066 = vunpack.c.l.b16 %v4736
        %v5067 = vunpack.c.h.b16 %v4736
        %v5068 = vunpack.c.l.b16 %v4737
        %v5069 = vunpack.c.h.b16 %v4737
        %v5070 = vunpack.c.l.b16 %v4738
        %v5071 = vunpack.c.h.b16 %v4738
        %v5072 = vunpack.c.l.b16 %v4739
        %v5073 = vunpack.c.h.b16 %v4739
        %v5074 = vunpack.c.l.b16 %v4740
        %v5075 = vunpack.c.h.b16 %v4740
        %v5076 = vunpack.c.l.b16 %v4741
        %v5077 = vunpack.c.h.b16 %v4741
        %v5078 = vunpack.c.l.b16 %v4742
        %v5079 = vunpack.c.h.b16 %v4742
        %v5080 = vunpack.c.l.b16 %v4743
        %v5081 = vunpack.c.h.b16 %v4743
        %v5082 = vunpack.c.l.b16 %v4744
        %v5083 = vunpack.c.h.b16 %v4744
        %v5084 = vunpack.c.l.b16 %v4745
        %v5085 = vunpack.c.h.b16 %v4745
        %v5086 = vunpack.c.l.b16 %v4746
        %v5087 = vunpack.c.h.b16 %v4746
        %v5088 = vunpack.c.l.b16 %v4747
        %v5089 = vunpack.c.h.b16 %v4747
        %v5090 = vunpack.c.l.b16 %v4748
        %v5091 = vunpack.c.h.b16 %v4748
        %v5092 = vunpack.c.l.b16 %v4749
        %v5093 = vunpack.c.h.b16 %v4749
        %v5094 = vunpack.c.l.b16 %v4750
        %v5095 = vunpack.c.h.b16 %v4750
        %v5096 = vunpack.c.l.b16 %v4751
        %v5097 = vunpack.c.h.b16 %v4751
        %v5098 = vunpack.c.l.b16 %v4752
        %v5099 = vunpack.c.h.b16 %v4752
        %v5100 = vunpack.c.l.b16 %v4753
        %v5101 = vunpack.c.h.b16 %v4753
        %v5102 = vunpack.c.l.b16 %v4754
        %v5103 = vunpack.c.h.b16 %v4754
        %v5104 = vunpack.c.l.b16 %v4755
        %v5105 = vunpack.c.h.b16 %v4755
        %v5106 = vunpack.c.l.b16 %v4756
        %v5107 = vunpack.c.h.b16 %v4756
        %v5108 = vunpack.c.l.b16 %v4757
        %v5109 = vunpack.c.h.b16 %v4757
        %v5110 = vunpack.c.l.b16 %v4758
        %v5111 = vunpack.c.h.b16 %v4758
        %v5112 = vunpack.c.l.b16 %v4759
        %v5113 = vunpack.c.h.b16 %v4759
        %v5114 = vunpack.c.l.b16 %v4760
        %v5115 = vunpack.c.h.b16 %v4760
        %v5116 = vunpack.c.l.b16 %v4761
        %v5117 = vunpack.c.h.b16 %v4761
        %v5118 = vunpack.c.l.b16 %v4762
        %v5119 = vunpack.c.h.b16 %v4762
        %v5120 = vunpack.c.l.b16 %v4763
        %v5121 = vunpack.c.h.b16 %v4763
        %v5122 = vunpack.c.l.b16 %v4764
        %v5123 = vunpack.c.h.b16 %v4764
        %v5124 = vunpack.c.l.b16 %v4765
        %v5125 = vunpack.c.h.b16 %v4765
        %v5126 = vunpack.c.l.b16 %v4766
        %v5127 = vunpack.c.h.b16 %v4766
        %v5128 = vunpack.c.l.b16 %v4767
        %v5129 = vunpack.c.h.b16 %v4767
        %v5130 = vunpack.c.l.b16 %v4768
        %v5131 = vunpack.c.h.b16 %v4768
        %v5132 = vunpack.c.l.b16 %v4769
        %v5133 = vunpack.c.h.b16 %v4769
        %v5134 = vunpack.c.l.b16 %v4770
        %v5135 = vunpack.c.h.b16 %v4770
        %v5136 = vunpack.c.l.b16 %v4771
        %v5137 = vunpack.c.h.b16 %v4771
        %v5138 = vunpack.c.l.b16 %v4772
        %v5139 = vunpack.c.h.b16 %v4772
        %v5140 = vunpack.c.l.b16 %v4773
        %v5141 = vunpack.c.h.b16 %v4773
        %v5142 = vunpack.c.l.b16 %v4774
        %v5143 = vunpack.c.h.b16 %v4774
        %v5144 = vunpack.c.l.b16 %v4775
        %v5145 = vunpack.c.h.b16 %v4775
        %v5146 = vunpack.c.l.b16 %v4776
        %v5147 = vunpack.c.h.b16 %v4776
        %v5148 = vunpack.c.l.b16 %v4777
        %v5149 = vunpack.c.h.b16 %v4777
        %v5150 = vunpack.c.l.b16 %v4778
        %v5151 = vunpack.c.h.b16 %v4778
        %v5152 = vunpack.c.l.b16 %v4779
        %v5153 = vunpack.c.h.b16 %v4779
        %v5154 = vunpack.c.l.b16 %v4780
        %v5155 = vunpack.c.h.b16 %v4780
        %v5156 = vunpack.c.l.b16 %v4781
        %v5157 = vunpack.c.h.b16 %v4781
        %v5158 = vunpack.c.l.b16 %v4782
        %v5159 = vunpack.c.h.b16 %v4782
        %v5160 = vunpack.c.l.b16 %v4783
        %v5161 = vunpack.c.h.b16 %v4783
        %v5162 = vunpack.c.l.b16 %v4784
        %v5163 = vunpack.c.h.b16 %v4784
        %v5164 = vunpack.c.l.b16 %v4785
        %v5165 = vunpack.c.h.b16 %v4785
        %v5166 = vunpack.c.l.b16 %v4786
        %v5167 = vunpack.c.h.b16 %v4786
        %v5168 = vunpack.c.l.b16 %v4787
        %v5169 = vunpack.c.h.b16 %v4787
        %v5170 = vunpack.c.l.b16 %v4788
        %v5171 = vunpack.c.h.b16 %v4788
        %v5172 = vunpack.c.l.b16 %v4789
        %v5173 = vunpack.c.h.b16 %v4789
        %v5174 = vunpack.c.l.b16 %v4790
        %v5175 = vunpack.c.h.b16 %v4790
        %v5176 = vunpack.c.l.b16 %v4791
        %v5177 = vunpack.c.h.b16 %v4791
        %v5178 = vunpack.c.l.b16 %v4792
        %v5179 = vunpack.c.h.b16 %v4792
        %v5180 = vunpack.c.l.b16 %v4793
        %v5181 = vunpack.c.h.b16 %v4793
        %v5182 = vunpack.c.l.b16 %v4794
        %v5183 = vunpack.c.h.b16 %v4794
        %v5184 = vunpack.c.l.b16 %v4795
        %v5185 = vunpack.c.h.b16 %v4795
        %v5186 = vunpack.c.l.b16 %v4796
        %v5187 = vunpack.c.h.b16 %v4796
        %v5188 = vunpack.c.l.b16 %v4797
        %v5189 = vunpack.c.h.b16 %v4797
        %v5190 = vunpack.c.l.b16 %v4798
        %v5191 = vunpack.c.h.b16 %v4798
        %v5192 = vunpack.c.l.b16 %v4799
        %v5193 = vunpack.c.h.b16 %v4799
        %v5194 = vunpack.c.l.b16 %v4800
        %v5195 = vunpack.c.h.b16 %v4800
        %v5196 = vunpack.c.l.b16 %v4801
        %v5197 = vunpack.c.h.b16 %v4801
        %v5198 = vunpack.c.l.b16 %v4802
        %v5199 = vunpack.c.h.b16 %v4802
        %v5200 = vunpack.c.l.b16 %v4803
        %v5201 = vunpack.c.h.b16 %v4803
        %v5202 = vunpack.c.l.b16 %v4804
        %v5203 = vunpack.c.h.b16 %v4804
        %v5204 = vunpack.c.l.b16 %v4805
        %v5205 = vunpack.c.h.b16 %v4805
        %v5206 = vunpack.c.l.b16 %v4806
        %v5207 = vunpack.c.h.b16 %v4806
        %v5208 = vunpack.c.l.b16 %v4807
        %v5209 = vunpack.c.h.b16 %v4807
        %v5210 = vunpack.c.l.b16 %v4808
        %v5211 = vunpack.c.h.b16 %v4808
        %v5212 = vunpack.c.l.b16 %v4809
        %v5213 = vunpack.c.h.b16 %v4809
        %v5214 = vunpack.c.l.b16 %v4810
        %v5215 = vunpack.c.h.b16 %v4810
        %v5216 = vunpack.c.l.b16 %v4811
        %v5217 = vunpack.c.h.b16 %v4811
        %v5218 = vunpack.c.l.b16 %v4812
        %v5219 = vunpack.c.h.b16 %v4812
        %v5220 = vunpack.c.l.b16 %v4813
        %v5221 = vunpack.c.h.b16 %v4813
        %v5222 = vunpack.c.l.b16 %v4814
        %v5223 = vunpack.c.h.b16 %v4814
        %v5224 = vunpack.c.l.b16 %v4815
        %v5225 = vunpack.c.h.b16 %v4815
        %v5226 = vunpack.c.l.b16 %v4816
        %v5227 = vunpack.c.h.b16 %v4816
        %v5228 = vunpack.c.l.b16 %v4817
        %v5229 = vunpack.c.h.b16 %v4817
        %v5230 = vunpack.c.l.b16 %v4818
        %v5231 = vunpack.c.h.b16 %v4818
        %v5232 = vunpack.c.l.b16 %v4819
        %v5233 = vunpack.c.h.b16 %v4819
        %v5234 = vunpack.c.l.b16 %v4820
        %v5235 = vunpack.c.h.b16 %v4820
        %v5236 = vunpack.c.l.b16 %v4821
        %v5237 = vunpack.c.h.b16 %v4821
        %v5238 = vunpack.c.l.b16 %v4822
        %v5239 = vunpack.c.h.b16 %v4822
        %v5240 = vunpack.c.l.b16 %v4823
        %v5241 = vunpack.c.h.b16 %v4823
        %v5242 = vunpack.c.l.b16 %v4824
        %v5243 = vunpack.c.h.b16 %v4824
        %v5244 = vunpack.c.l.b16 %v4825
        %v5245 = vunpack.c.h.b16 %v4825
        %v5246 = vunpack.c.l.b16 %v4826
        %v5247 = vunpack.c.h.b16 %v4826
        %v5248 = vunpack.c.l.b16 %v4827
        %v5249 = vunpack.c.h.b16 %v4827
        %v5250 = vunpack.c.l.b16 %v4828
        %v5251 = vunpack.c.h.b16 %v4828
        %v5252 = vunpack.c.l.b16 %v4829
        %v5253 = vunpack.c.h.b16 %v4829
        %v5254 = vunpack.c.l.b16 %v4830
        %v5255 = vunpack.c.h.b16 %v4830
        %v5256 = vunpack.c.l.b16 %v4831
        %v5257 = vunpack.c.h.b16 %v4831
        %v5258 = vunpack.c.l.b16 %v4832
        %v5259 = vunpack.c.h.b16 %v4832
        %v5260 = vunpack.c.l.b16 %v4833
        %v5261 = vunpack.c.h.b16 %v4833
        %v5262 = vunpack.c.l.b16 %v4834
        %v5263 = vunpack.c.h.b16 %v4834
        %v5264 = vunpack.c.l.b16 %v4835
        %v5265 = vunpack.c.h.b16 %v4835
        %v5266 = vunpack.c.l.b16 %v4836
        %v5267 = vunpack.c.h.b16 %v4836
        %v5268 = vunpack.c.l.b16 %v4837
        %v5269 = vunpack.c.h.b16 %v4837
        %v5270 = vunpack.c.l.b16 %v4838
        %v5271 = vunpack.c.h.b16 %v4838
        %v5272 = vunpack.c.l.b16 %v4839
        %v5273 = vunpack.c.h.b16 %v4839
        %v5274 = vunpack.c.l.b16 %v4840
        %v5275 = vunpack.c.h.b16 %v4840
        %v5276 = vunpack.c.l.b16 %v4841
        %v5277 = vunpack.c.h.b16 %v4841
        %v5278 = vunpack.c.l.b16 %v4842
        %v5279 = vunpack.c.h.b16 %v4842
        %v5280 = vunpack.c.l.b16 %v4843
        %v5281 = vunpack.c.h.b16 %v4843
        %v5282 = vunpack.c.l.b16 %v4844
        %v5283 = vunpack.c.h.b16 %v4844
        %v5284 = vunpack.c.l.b16 %v4845
        %v5285 = vunpack.c.h.b16 %v4845
        %v5286 = vunpack.c.l.b16 %v4846
        %v5287 = vunpack.c.h.b16 %v4846
        %v5288 = vunpack.c.l.b16 %v4847
        %v5289 = vunpack.c.h.b16 %v4847
        %v5290 = vunpack.c.l.b16 %v4848
        %v5291 = vunpack.c.h.b16 %v4848
        %v5292 = vunpack.c.l.b16 %v4849
        %v5293 = vunpack.c.h.b16 %v4849
        %v5294 = vpack.c.b16 %v5008, %v5006
        %v5295 = vpack.c.b16 %v5009, %v5007
        %v5296 = vpack.c.b16 %v5012, %v5010
        %v5297 = vpack.c.b16 %v5013, %v5011
        %v5298 = vpack.c.b16 %v5016, %v5014
        %v5299 = vpack.c.b16 %v5017, %v5015
        %v5300 = vpack.c.b16 %v5020, %v5018
        %v5301 = vpack.c.b16 %v5021, %v5019
        %v5302 = vpack.c.b16 %v5024, %v5022
        %v5303 = vpack.c.b16 %v5025, %v5023
        %v5304 = vpack.c.b16 %v5028, %v5026
        %v5305 = vpack.c.b16 %v5029, %v5027
        %v5306 = vpack.c.b16 %v5032, %v5030
        %v5307 = vpack.c.b16 %v5033, %v5031
        %v5308 = vpack.c.b16 %v5036, %v5034
        %v5309 = vpack.c.b16 %v5037, %v5035
        %v5310 = vpack.c.b16 %v5040, %v5038
        %v5311 = vpack.c.b16 %v5041, %v5039
        %v5312 = vpack.c.b16 %v5044, %v5042
        %v5313 = vpack.c.b16 %v5045, %v5043
        %v5314 = vpack.c.b16 %v5048, %v5046
        %v5315 = vpack.c.b16 %v5049, %v5047
        %v5316 = vpack.c.b16 %v5052, %v5050
        %v5317 = vpack.c.b16 %v5053, %v5051
        %v5318 = vpack.c.b16 %v5056, %v5054
        %v5319 = vpack.c.b16 %v5057, %v5055
        %v5320 = vpack.c.b16 %v5060, %v5058
        %v5321 = vpack.c.b16 %v5061, %v5059
        %v5322 = vpack.c.b16 %v5064, %v5062
        %v5323 = vpack.c.b16 %v5065, %v5063
        %v5324 = vpack.c.b16 %v5068, %v5066
        %v5325 = vpack.c.b16 %v5069, %v5067
        %v5326 = vpack.c.b16 %v5072, %v5070
        %v5327 = vpack.c.b16 %v5073, %v5071
        %v5328 = vpack.c.b16 %v5076, %v5074
        %v5329 = vpack.c.b16 %v5077, %v5075
        %v5330 = vpack.c.b16 %v5080, %v5078
        %v5331 = vpack.c.b16 %v5081, %v5079
        %v5332 = vpack.c.b16 %v5084, %v5082
        %v5333 = vpack.c.b16 %v5085, %v5083
        %v5334 = vpack.c.b16 %v5088, %v5086
        %v5335 = vpack.c.b16 %v5089, %v5087
        %v5336 = vpack.c.b16 %v5092, %v5090
        %v5337 = vpack.c.b16 %v5093, %v5091
        %v5338 = vpack.c.b16 %v5096, %v5094
        %v5339 = vpack.c.b16 %v5097, %v5095
        %v5340 = vpack.c.b16 %v5100, %v5098
        %v5341 = vpack.c.b16 %v5101, %v5099
        %v5342 = vpack.c.b16 %v5104, %v5102
        %v5343 = vpack.c.b16 %v5105, %v5103
        %v5344 = vpack.c.b16 %v5108, %v5106
        %v5345 = vpack.c.b16 %v5109, %v5107
        %v5346 = vpack.c.b16 %v5112, %v5110
        %v5347 = vpack.c.b16 %v5113, %v5111
        %v5348 = vpack.c.b16 %v5116, %v5114
        %v5349 = vpack.c.b16 %v5117, %v5115
        %v5350 = vpack.c.b16 %v5120, %v5118
        %v5351 = vpack.c.b16 %v5121, %v5119
        %v5352 = vpack.c.b16 %v5124, %v5122
        %v5353 = vpack.c.b16 %v5125, %v5123
        %v5354 = vpack.c.b16 %v5128, %v5126
        %v5355 = vpack.c.b16 %v5129, %v5127
        %v5356 = vpack.c.b16 %v5132, %v5130
        %v5357 = vpack.c.b16 %v5133, %v5131
        %v5358 = vpack.c.b16 %v5136, %v5134
        %v5359 = vpack.c.b16 %v5137, %v5135
        %v5360 = vpack.c.b16 %v5140, %v5138
        %v5361 = vpack.c.b16 %v5141, %v5139
        %v5362 = vpack.c.b16 %v5144, %v5142
        %v5363 = vpack.c.b16 %v5145, %v5143
        %v5364 = vpack.c.b16 %v5148, %v5146
        %v5365 = vpack.c.b16 %v5149, %v5147
        %v5366 = vpack.c.b16 %v5152, %v5150
        %v5367 = vpack.c.b16 %v5153, %v5151
        %v5368 = vpack.c.b16 %v5156, %v5154
        %v5369 = vpack.c.b16 %v5157, %v5155
        %v5370 = vpack.c.b16 %v5160, %v5158
        %v5371 = vpack.c.b16 %v5161, %v5159
        %v5372 = vpack.c.b16 %v5164, %v5162
        %v5373 = vpack.c.b16 %v5165, %v5163
        %v5374 = vpack.c.b16 %v5168, %v5166
        %v5375 = vpack.c.b16 %v5169, %v5167
        %v5376 = vpack.c.b16 %v5172, %v5170
        %v5377 = vpack.c.b16 %v5173, %v5171
        %v5378 = vpack.c.b16 %v5176, %v5174
        %v5379 = vpack.c.b16 %v5177, %v5175
        %v5380 = vpack.c.b16 %v5180, %v5178
        %v5381 = vpack.c.b16 %v5181, %v5179
        %v5382 = vpack.c.b16 %v5184, %v5182
        %v5383 = vpack.c.b16 %v5185, %v5183
        %v5384 = vpack.c.b16 %v5188, %v5186
        %v5385 = vpack.c.b16 %v5189, %v5187
        %v5386 = vpack.c.b16 %v5192, %v5190
        %v5387 = vpack.c.b16 %v5193, %v5191
        %v5388 = vpack.c.b16 %v5196, %v5194
        %v5389 = vpack.c.b16 %v5197, %v5195
        %v5390 = vpack.c.b16 %v5200, %v5198
        %v5391 = vpack.c.b16 %v5201, %v5199
        %v5392 = vpack.c.b16 %v5204, %v5202
        %v5393 = vpack.c.b16 %v5205, %v5203
        %v5394 = vpack.c.b16 %v5208, %v5206
        %v5395 = vpack.c.b16 %v5209, %v5207
        %v5396 = vpack.c.b16 %v5212, %v5210
        %v5397 = vpack.c.b16 %v5213, %v5211
        %v5398 = vpack.c.b16 %v5216, %v5214
        %v5399 = vpack.c.b16 %v5217, %v5215
        %v5400 = vpack.c.b16 %v5220, %v5218
        %v5401 = vpack.c.b16 %v5221, %v5219
        %v5402 = vpack.c.b16 %v5224, %v5222
        %v5403 = vpack.c.b16 %v5225, %v5223
        %v5404 = vpack.c.b16 %v5228, %v5226
        %v5405 = vpack.c.b16 %v5229, %v5227
        %v5406 = vpack.c.b16 %v5232, %v5230
        %v5407 = vpack.c.b16 %v5233, %v5231
        %v5408 = vpack.c.b16 %v5236, %v5234
        %v5409 = vpack.c.b16 %v5237, %v5235
        %v5410 = vpack.c.b16 %v5240, %v5238
        %v5411 = vpack.c.b16 %v5241, %v5239
        %v5412 = vpack.c.b16 %v5244, %v5242
        %v5413 = vpack.c.b16 %v5245, %v5243
        %v5414 = vpack.c.b16 %v5248, %v5246
        %v5415 = vpack.c.b16 %v5249, %v5247
        %v5416 = vpack.c.b16 %v5252, %v5250
        %v5417 = vpack.c.b16 %v5253, %v5251
        %v5418 = vpack.c.b16 %v5256, %v5254
        %v5419 = vpack.c.b16 %v5257, %v5255
        %v5420 = vpack.c.b16 %v5260, %v5258
        %v5421 = vpack.c.b16 %v5261, %v5259
        %v5422 = vpack.c.b16 %v5264, %v5262
        %v5423 = vpack.c.b16 %v5265, %v5263
        %v5424 = vpack.c.b16 %v5268, %v5266
        %v5425 = vpack.c.b16 %v5269, %v5267
        %v5426 = vpack.c.b16 %v5272, %v5270
        %v5427 = vpack.c.b16 %v5273, %v5271
        %v5428 = vpack.c.b16 %v5276, %v5274
        %v5429 = vpack.c.b16 %v5277, %v5275
        %v5430 = vpack.c.b16 %v5280, %v5278
        %v5431 = vpack.c.b16 %v5281, %v5279
        %v5432 = vpack.c.b16 %v5284, %v5282
        %v5433 = vpack.c.b16 %v5285, %v5283
        %v5434 = vpack.c.b16 %v5288, %v5286
        %v5435 = vpack.c.b16 %v5289, %v5287
        %v5436 = vpack.c.b16 %v5292, %v5290
        %v5437 = vpack.c.b16 %v5293, %v5291
        %5582 = vmatprep.subr.bf16.mxu0 %v5295
        %5583 = vmatpush1.bf16.msra.mxu0 %v5294
        %5584 = vmatprep.subr.bf16.mxu0 %v5297
        %5585 = vmatpush1.bf16.msra.mxu0 %v5296
        %5586 = vmatprep.subr.bf16.mxu0 %v5299
        %5587 = vmatpush1.bf16.msra.mxu0 %v5298
        %5588 = vmatprep.subr.bf16.mxu0 %v5301
        %5589 = vmatpush1.bf16.msra.mxu0 %v5300
        %5590 = vmatprep.subr.bf16.mxu0 %v5303
        %5591 = vmatpush1.bf16.msra.mxu0 %v5302
        %5592 = vmatprep.subr.bf16.mxu0 %v5305
        %5593 = vmatpush1.bf16.msra.mxu0 %v5304
        %5594 = vmatprep.subr.bf16.mxu0 %v5307
        %5595 = vmatpush1.bf16.msra.mxu0 %v5306
        %5596 = vmatprep.subr.bf16.mxu0 %v5309
        %5597 = vmatpush1.bf16.msra.mxu0 %v5308
        %5598 = vmatprep.subr.bf16.mxu0 %v5311
        %5599 = vmatpush1.bf16.msra.mxu0 %v5310
        %5600 = vmatprep.subr.bf16.mxu0 %v5313
        %5601 = vmatpush1.bf16.msra.mxu0 %v5312
        %5602 = vmatprep.subr.bf16.mxu0 %v5315
        %5603 = vmatpush1.bf16.msra.mxu0 %v5314
        %5604 = vmatprep.subr.bf16.mxu0 %v5317
        %5605 = vmatpush1.bf16.msra.mxu0 %v5316
        %5606 = vmatprep.subr.bf16.mxu0 %v5319
        %5607 = vmatpush1.bf16.msra.mxu0 %v5318
        %5608 = vmatprep.subr.bf16.mxu0 %v5321
        %5609 = vmatpush1.bf16.msra.mxu0 %v5320
        %5610 = vmatprep.subr.bf16.mxu0 %v5323
        %5611 = vmatpush1.bf16.msra.mxu0 %v5322
        %5612 = vmatprep.subr.bf16.mxu0 %v5325
        %5613 = vmatpush1.bf16.msra.mxu0 %v5324
        %5614 = vmatprep.mubr.bf16.mxu0 %v4689
        %5615 = vmatmul.mubr.bf16.gmra.mrb[0].mxu0 %v4688
        %v5616 = vpop.f32.mrb[0].mxu0
        %v5617 = vadd.f32 %v4855, %v5616
        %v5618 = vpop.f32.mrb[0].mxu0
        %v5619 = vadd.f32 %v4859, %v5618
        %v5620 = vpop.f32.mrb[0].mxu0
        %v5621 = vadd.f32 %v4855, %v5620
        %v5622 = vpop.f32.mrb[0].mxu0
        %v5623 = vadd.f32 %v4859, %v5622
        %5624 = vmatprep.mubr.bf16.mxu0 %v4698
        %5625 = vmatmul.mubr.bf16.gmra.mrb[0].mxu0 %v4697
        %v5626 = vpop.f32.mrb[0].mxu0
        %v5627 = vadd.f32 %v4855, %v5626
        %v5628 = vpop.f32.mrb[0].mxu0
        %v5629 = vadd.f32 %v4859, %v5628
        %v5630 = vpop.f32.mrb[0].mxu0
        %v5631 = vadd.f32 %v4855, %v5630
        %v5632 = vpop.f32.mrb[0].mxu0
        %v5633 = vadd.f32 %v4859, %v5632
        %5634 = vdwg.mxu0
        %5635 = vmatprep.subr.bf16.mxu0 %v5327
        %5636 = vmatpush1.bf16.msra.mxu0 %v5326
        %5637 = vmatprep.subr.bf16.mxu0 %v5329
        %5638 = vmatpush1.bf16.msra.mxu0 %v5328
        %5639 = vmatprep.subr.bf16.mxu0 %v5331
        %5640 = vmatpush1.bf16.msra.mxu0 %v5330
        %5641 = vmatprep.subr.bf16.mxu0 %v5333
        %5642 = vmatpush1.bf16.msra.mxu0 %v5332
        %5643 = vmatprep.subr.bf16.mxu0 %v5335
        %5644 = vmatpush1.bf16.msra.mxu0 %v5334
        %5645 = vmatprep.subr.bf16.mxu0 %v5337
        %5646 = vmatpush1.bf16.msra.mxu0 %v5336
        %5647 = vmatprep.subr.bf16.mxu0 %v5339
        %5648 = vmatpush1.bf16.msra.mxu0 %v5338
        %5649 = vmatprep.subr.bf16.mxu0 %v5341
        %5650 = vmatpush1.bf16.msra.mxu0 %v5340
        %5651 = vmatprep.subr.bf16.mxu0 %v5343
        %5652 = vmatpush1.bf16.msra.mxu0 %v5342
        %5653 = vmatprep.subr.bf16.mxu0 %v5345
        %5654 = vmatpush1.bf16.msra.mxu0 %v5344
        %5655 = vmatprep.subr.bf16.mxu0 %v5347
        %5656 = vmatpush1.bf16.msra.mxu0 %v5346
        %5657 = vmatprep.subr.bf16.mxu0 %v5349
        %5658 = vmatpush1.bf16.msra.mxu0 %v5348
        %5659 = vmatprep.subr.bf16.mxu0 %v5351
        %5660 = vmatpush1.bf16.msra.mxu0 %v5350
        %5661 = vmatprep.subr.bf16.mxu0 %v5353
        %5662 = vmatpush1.bf16.msra.mxu0 %v5352
        %5663 = vmatprep.subr.bf16.mxu0 %v5355
        %5664 = vmatpush1.bf16.msra.mxu0 %v5354
        %5665 = vmatprep.subr.bf16.mxu0 %v5357
        %5666 = vmatpush1.bf16.msra.mxu0 %v5356
        %5667 = vmatprep.mubr.bf16.mxu0 %v4691
        %5668 = vmatmul.mubr.bf16.gmra.mrb[0].mxu0 %v4690
        %v5669 = vpop.f32.mrb[0].mxu0
        %v5670 = vadd.f32 %v5617, %v5669
        %v5671 = vpop.f32.mrb[0].mxu0
        %v5672 = vadd.f32 %v5619, %v5671
        %v5673 = vpop.f32.mrb[0].mxu0
        %v5674 = vadd.f32 %v5621, %v5673
        %v5675 = vpop.f32.mrb[0].mxu0
        %v5676 = vadd.f32 %v5623, %v5675
        %5677 = vmatprep.mubr.bf16.mxu0 %v4700
        %5678 = vmatmul.mubr.bf16.gmra.mrb[0].mxu0 %v4699
        %v5679 = vpop.f32.mrb[0].mxu0
        %v5680 = vadd.f32 %v5627, %v5679
        %v5681 = vpop.f32.mrb[0].mxu0
        %v5682 = vadd.f32 %v5629, %v5681
        %v5683 = vpop.f32.mrb[0].mxu0
        %v5684 = vadd.f32 %v5631, %v5683
        %v5685 = vpop.f32.mrb[0].mxu0
        %v5686 = vadd.f32 %v5633, %v5685
        %5687 = vdwg.mxu0
        %5688 = vmatprep.subr.bf16.mxu0 %v5359
        %5689 = vmatpush1.bf16.msra.mxu0 %v5358
        %5690 = vmatprep.subr.bf16.mxu0 %v5361
        %5691 = vmatpush1.bf16.msra.mxu0 %v5360
        %5692 = vmatprep.subr.bf16.mxu0 %v5363
        %5693 = vmatpush1.bf16.msra.mxu0 %v5362
        %5694 = vmatprep.subr.bf16.mxu0 %v5365
        %5695 = vmatpush1.bf16.msra.mxu0 %v5364
        %5696 = vmatprep.subr.bf16.mxu0 %v5367
        %5697 = vmatpush1.bf16.msra.mxu0 %v5366
        %5698 = vmatprep.subr.bf16.mxu0 %v5369
        %5699 = vmatpush1.bf16.msra.mxu0 %v5368
        %5700 = vmatprep.subr.bf16.mxu0 %v5371
        %5701 = vmatpush1.bf16.msra.mxu0 %v5370
        %5702 = vmatprep.subr.bf16.mxu0 %v5373
        %5703 = vmatpush1.bf16.msra.mxu0 %v5372
        %5704 = vmatprep.subr.bf16.mxu0 %v5375
        %5705 = vmatpush1.bf16.msra.mxu0 %v5374
        %5706 = vmatprep.subr.bf16.mxu0 %v5377
        %5707 = vmatpush1.bf16.msra.mxu0 %v5376
        %5708 = vmatprep.subr.bf16.mxu0 %v5379
        %5709 = vmatpush1.bf16.msra.mxu0 %v5378
        %5710 = vmatprep.subr.bf16.mxu0 %v5381
        %5711 = vmatpush1.bf16.msra.mxu0 %v5380
        %5712 = vmatprep.subr.bf16.mxu0 %v5383
        %5713 = vmatpush1.bf16.msra.mxu0 %v5382
        %5714 = vmatprep.subr.bf16.mxu0 %v5385
        %5715 = vmatpush1.bf16.msra.mxu0 %v5384
        %5716 = vmatprep.subr.bf16.mxu0 %v5387
        %5717 = vmatpush1.bf16.msra.mxu0 %v5386
        %5718 = vmatprep.subr.bf16.mxu0 %v5389
        %5719 = vmatpush1.bf16.msra.mxu0 %v5388
        %5720 = vmatprep.mubr.bf16.mxu0 %v4693
        %5721 = vmatmul.mubr.bf16.gmra.mrb[0].mxu0 %v4692
        %v5722 = vpop.f32.mrb[0].mxu0
        %v5723 = vadd.f32 %v5670, %v5722
        %v5724 = vpop.f32.mrb[0].mxu0
        %v5725 = vadd.f32 %v5672, %v5724
        %v5726 = vpop.f32.mrb[0].mxu0
        %v5727 = vadd.f32 %v5674, %v5726
        %v5728 = vpop.f32.mrb[0].mxu0
        %v5729 = vadd.f32 %v5676, %v5728
        %5730 = vmatprep.mubr.bf16.mxu0 %v4702
        %5731 = vmatmul.mubr.bf16.gmra.mrb[0].mxu0 %v4701
        %v5732 = vpop.f32.mrb[0].mxu0
        %v5733 = vadd.f32 %v5680, %v5732
        %v5734 = vpop.f32.mrb[0].mxu0
        %v5735 = vadd.f32 %v5682, %v5734
        %v5736 = vpop.f32.mrb[0].mxu0
        %v5737 = vadd.f32 %v5684, %v5736
        %v5738 = vpop.f32.mrb[0].mxu0
        %v5739 = vadd.f32 %v5686, %v5738
        %5740 = vdwg.mxu0
        %5741 = vmatprep.subr.bf16.mxu0 %v5391
        %5742 = vmatpush1.bf16.msra.mxu0 %v5390
        %5743 = vmatprep.subr.bf16.mxu0 %v5393
        %5744 = vmatpush1.bf16.msra.mxu0 %v5392
        %5745 = vmatprep.subr.bf16.mxu0 %v5395
        %5746 = vmatpush1.bf16.msra.mxu0 %v5394
        %5747 = vmatprep.subr.bf16.mxu0 %v5397
        %5748 = vmatpush1.bf16.msra.mxu0 %v5396
        %5749 = vmatprep.subr.bf16.mxu0 %v5399
        %5750 = vmatpush1.bf16.msra.mxu0 %v5398
        %5751 = vmatprep.subr.bf16.mxu0 %v5401
        %5752 = vmatpush1.bf16.msra.mxu0 %v5400
        %5753 = vmatprep.subr.bf16.mxu0 %v5403
        %5754 = vmatpush1.bf16.msra.mxu0 %v5402
        %5755 = vmatprep.subr.bf16.mxu0 %v5405
        %5756 = vmatpush1.bf16.msra.mxu0 %v5404
        %5757 = vmatprep.subr.bf16.mxu0 %v5407
        %5758 = vmatpush1.bf16.msra.mxu0 %v5406
        %5759 = vmatprep.subr.bf16.mxu0 %v5409
        %5760 = vmatpush1.bf16.msra.mxu0 %v5408
        %5761 = vmatprep.subr.bf16.mxu0 %v5411
        %5762 = vmatpush1.bf16.msra.mxu0 %v5410
        %5763 = vmatprep.subr.bf16.mxu0 %v5413
        %5764 = vmatpush1.bf16.msra.mxu0 %v5412
        %5765 = vmatprep.subr.bf16.mxu0 %v5415
        %5766 = vmatpush1.bf16.msra.mxu0 %v5414
        %5767 = vmatprep.subr.bf16.mxu0 %v5417
        %5768 = vmatpush1.bf16.msra.mxu0 %v5416
        %5769 = vmatprep.subr.bf16.mxu0 %v5419
        %5770 = vmatpush1.bf16.msra.mxu0 %v5418
        %5771 = vmatprep.subr.bf16.mxu0 %v5421
        %5772 = vmatpush1.bf16.msra.mxu0 %v5420
        %5773 = vmatprep.mubr.bf16.mxu0 %v4695
        %5774 = vmatmul.mubr.bf16.gmra.mrb[0].mxu0 %v4694
        %v5775 = vpop.f32.mrb[0].mxu0
        %v5776 = vadd.f32 %v5723, %v5775
        %v5777 = vpop.f32.mrb[0].mxu0
        %v5778 = vadd.f32 %v5725, %v5777
        %v5779 = vpop.f32.mrb[0].mxu0
        %v5780 = vadd.f32 %v5727, %v5779
        %v5781 = vpop.f32.mrb[0].mxu0
        %v5782 = vadd.f32 %v5729, %v5781
        %5783 = vmatprep.mubr.bf16.mxu0 %v4704
        %5784 = vmatmul.mubr.bf16.gmra.mrb[0].mxu0 %v4703
        %v5785 = vpop.f32.mrb[0].mxu0
        %v5786 = vadd.f32 %v5733, %v5785
        %v5787 = vpop.f32.mrb[0].mxu0
        %v5788 = vadd.f32 %v5735, %v5787
        %v5789 = vpop.f32.mrb[0].mxu0
        %v5790 = vadd.f32 %v5737, %v5789
        %v5791 = vpop.f32.mrb[0].mxu0
        %v5792 = vadd.f32 %v5739, %v5791
        %5793 = vdwg.mxu0
        %5794 = vmatprep.subr.bf16.mxu0 %v5423
        %5795 = vmatpush1.bf16.msra.mxu0 %v5422
        %5796 = vmatprep.subr.bf16.mxu0 %v5425
        %5797 = vmatpush1.bf16.msra.mxu0 %v5424
        %5798 = vmatprep.subr.bf16.mxu0 %v5427
        %5799 = vmatpush1.bf16.msra.mxu0 %v5426
        %5800 = vmatprep.subr.bf16.mxu0 %v5429
        %5801 = vmatpush1.bf16.msra.mxu0 %v5428
        %5802 = vmatprep.subr.bf16.mxu0 %v5431
        %5803 = vmatpush1.bf16.msra.mxu0 %v5430
        %5804 = vmatprep.subr.bf16.mxu0 %v5433
        %5805 = vmatpush1.bf16.msra.mxu0 %v5432
        %5806 = vmatprep.subr.bf16.mxu0 %v5435
        %5807 = vmatpush1.bf16.msra.mxu0 %v5434
        %5808 = vmatprep.subr.bf16.mxu0 %v5437
        %5809 = vmatpush1.bf16.msra.mxu0 %v5436
        %5810 = vmatprep.subr.bf16.mxu0 0
        %5811 = vmatpush1.bf16.msra.mxu0 0
        %5812 = vmatprep.subr.bf16.mxu0 0
        %5813 = vmatpush1.bf16.msra.mxu0 0
        %5814 = vmatprep.subr.bf16.mxu0 0
        %5815 = vmatpush1.bf16.msra.mxu0 0
        %5816 = vmatprep.subr.bf16.mxu0 0
        %5817 = vmatpush1.bf16.msra.mxu0 0
        %5818 = vmatprep.subr.bf16.mxu0 0
        %5819 = vmatpush1.bf16.msra.mxu0 0
        %5820 = vmatprep.subr.bf16.mxu0 0
        %5821 = vmatpush1.bf16.msra.mxu0 0
        %5822 = vmatprep.subr.bf16.mxu0 0
        %5823 = vmatpush1.bf16.msra.mxu0 0
        %5824 = vmatprep.subr.bf16.mxu0 0
        %5825 = vmatpush1.bf16.msra.mxu0 0
        %5826 = vmatprep.mubr.bf16.mxu0 0
        %5827 = vmatmul.mubr.bf16.gmra.mrb[0].mxu0 %v4696
        %v5828 = vpop.f32.mrb[0].mxu0
        %v5829 = vadd.f32 %v5776, %v5828
        %v5830 = vpop.f32.mrb[0].mxu0
        %v5831 = vadd.f32 %v5778, %v5830
        %v5832 = vpop.f32.mrb[0].mxu0
        %v5833 = vadd.f32 %v5780, %v5832
        %v5834 = vpop.f32.mrb[0].mxu0
        %v5835 = vadd.f32 %v5782, %v5834
        %5836 = vmatprep.mubr.bf16.mxu0 0
        %5837 = vmatmul.mubr.bf16.gmra.mrb[0].mxu0 %v4705
        %v5838 = vpop.f32.mrb[0].mxu0
        %v5839 = vadd.f32 %v5786, %v5838
        %v5840 = vpop.f32.mrb[0].mxu0
        %v5841 = vadd.f32 %v5788, %v5840
        %v5842 = vpop.f32.mrb[0].mxu0
        %v5843 = vadd.f32 %v5790, %v5842
        %v5844 = vpop.f32.mrb[0].mxu0
        %v5845 = vadd.f32 %v5792, %v5844
        %5846 = vdwg.mxu0
        %v5847 = vmax.f32 %v5829, 0.0
        %v5848 = vmax.f32 %v5831, 0.0
        %v5849 = vmax.f32 %v5833, 0.0
        %v5850 = vmax.f32 %v5835, 0.0
        %v5851 = vmax.f32 %v5839, 0.0
        %v5852 = vmax.f32 %v5841, 0.0
        %v5853 = vmax.f32 %v5843, 0.0
        %v5854 = vmax.f32 %v5845, 0.0
        %v5855 = vpack.c.bf16 %v5849, %v5847
        %v5856 = vpack.c.bf16 %v5850, %v5848
        %v5857 = vpack.c.bf16 %v5853, %v5851
        %v5858 = vpack.c.bf16 %v5854, %v5852
        %v5859 = vld [vmem:[%s10] sm:$0xf]
        %v5860 = vld [vmem:[%s10 + $0x4] sm:$0xf]
        %v5861 = vld [vmem:[%s10 + $0x8] sm:$0xf]
        %v5862 = vld [vmem:[%s10 + $0xc] sm:$0xf]
        %v5863 = vld [vmem:[%s10 + $0x10] sm:$0xf]
        %v5864 = vld [vmem:[%s10 + $0x14] sm:$0xf]
        %v5865 = vld [vmem:[%s10 + $0x18] sm:$0xf]
        %v5866 = vld [vmem:[%s10 + $0x1c] sm:$0xf]
        %v5867 = vld [vmem:[%s10 + $0x20] sm:$0xf]
        %v5868 = vld [vmem:[%s10 + $0x24] sm:$0xf]
        %v5869 = vld [vmem:[%s10 + $0x28] sm:$0xf]
        %v5870 = vld [vmem:[%s10 + $0x2c] sm:$0xf]
        %v5871 = vld [vmem:[%s10 + $0x30] sm:$0xf]
        %v5872 = vld [vmem:[%s10 + $0x34] sm:$0xf]
        %v5873 = vld [vmem:[%s10 + $0x38] sm:$0xf]
        %v5874 = vld [vmem:[%s10 + $0x3c] sm:$0xf]
        %v5875 = vld [vmem:[%s10 + $0x40] sm:$0xf]
        %v5876 = vld [vmem:[%s10 + $0x44] sm:$0xf]
        %v5877 = vld [vmem:[%s10 + $0x48] sm:$0xf]
        %v5878 = vld [vmem:[%s10 + $0x4c] sm:$0xf]
        %v5879 = vld [vmem:[%s10 + $0x50] sm:$0xf]
        %v5880 = vld [vmem:[%s10 + $0x54] sm:$0xf]
        %v5881 = vld [vmem:[%s10 + $0x58] sm:$0xf]
        %v5882 = vld [vmem:[%s10 + $0x5c] sm:$0xf]
        %v5883 = vld [vmem:[%s10 + $0x60] sm:$0xf]
        %v5884 = vld [vmem:[%s10 + $0x64] sm:$0xf]
        %v5885 = vld [vmem:[%s10 + $0x68] sm:$0xf]
        %v5886 = vld [vmem:[%s10 + $0x6c] sm:$0xf]
        %v5887 = vld [vmem:[%s10 + $0x70] sm:$0x1]
        %v5917 = vunpack.c.l.b16 %v5859
        %v5918 = vunpack.c.l.b16 %v5860
        %v5919 = vunpack.c.l.b16 %v5861
        %v5920 = vunpack.c.l.b16 %v5862
        %v5921 = vunpack.c.l.b16 %v5863
        %v5922 = vunpack.c.l.b16 %v5864
        %v5923 = vunpack.c.l.b16 %v5865
        %v5924 = vunpack.c.l.b16 %v5866
        %v5925 = vunpack.c.l.b16 %v5867
        %v5926 = vunpack.c.l.b16 %v5868
        %v5927 = vunpack.c.l.b16 %v5869
        %v5928 = vunpack.c.l.b16 %v5870
        %v5929 = vunpack.c.l.b16 %v5871
        %v5930 = vunpack.c.l.b16 %v5872
        %v5931 = vunpack.c.l.b16 %v5873
        %v5932 = vunpack.c.l.b16 %v5874
        %v5933 = vunpack.c.l.b16 %v5875
        %v5934 = vunpack.c.l.b16 %v5876
        %v5935 = vunpack.c.l.b16 %v5877
        %v5936 = vunpack.c.l.b16 %v5878
        %v5937 = vunpack.c.l.b16 %v5879
        %v5938 = vunpack.c.l.b16 %v5880
        %v5939 = vunpack.c.l.b16 %v5881
        %v5940 = vunpack.c.l.b16 %v5882
        %v5941 = vunpack.c.l.b16 %v5883
        %v5942 = vunpack.c.l.b16 %v5884
        %v5943 = vunpack.c.l.b16 %v5885
        %v5944 = vunpack.c.l.b16 %v5886
        %v5945 = vunpack.c.l.b16 %v5887
        %v5946 = vpack.c.b16 %v5918, %v5917
        %v5947 = vpack.c.b16 %v5920, %v5919
        %v5948 = vpack.c.b16 %v5922, %v5921
        %v5949 = vpack.c.b16 %v5924, %v5923
        %v5950 = vpack.c.b16 %v5926, %v5925
        %v5951 = vpack.c.b16 %v5928, %v5927
        %v5952 = vpack.c.b16 %v5930, %v5929
        %v5953 = vpack.c.b16 %v5932, %v5931
        %v5954 = vpack.c.b16 %v5934, %v5933
        %v5955 = vpack.c.b16 %v5936, %v5935
        %v5956 = vpack.c.b16 %v5938, %v5937
        %v5957 = vpack.c.b16 %v5940, %v5939
        %v5958 = vpack.c.b16 %v5942, %v5941
        %v5959 = vpack.c.b16 %v5944, %v5943
        %v5960 = vpack.c.b16 %v5945, %v5945
        %v5962 = vsel %vm853, %v5946, 0
        %v5965 = vsel %vm853, %v5947, 0
        %v5968 = vsel %vm853, %v5948, 0
        %v5971 = vsel %vm853, %v5949, 0
        %v5974 = vsel %vm853, %v5950, 0
        %v5977 = vsel %vm853, %v5951, 0
        %v5980 = vsel %vm853, %v5952, 0
        %v5983 = vsel %vm853, %v5953, 0
        %v5986 = vsel %vm853, %v5954, 0
        %v5989 = vsel %vm853, %v5955, 0
        %v5992 = vsel %vm853, %v5956, 0
        %v5995 = vsel %vm853, %v5957, 0
        %v5998 = vsel %vm853, %v5958, 0
        %v6001 = vsel %vm853, %v5959, 0
        %v6004 = vsel %vm853, %v5960, 0
        %v6007 = vand.u32 %v5857, %v914
        %v6010 = vand.u32 %v5858, %v914
        %6012 = vmatprep.subr.bf16.mxu0 %v5856
        %6013 = vmatpush1.bf16.msra.mxu0 %v5855
        %6014 = vmatprep.subr.bf16.mxu0 %v6010
        %6015 = vmatpush1.bf16.msra.mxu0 %v6007
        %6016 = vmatprep.subr.bf16.mxu0 0
        %6017 = vmatpush1.bf16.msra.mxu0 0
        %6018 = vmatprep.subr.bf16.mxu0 0
        %6019 = vmatpush1.bf16.msra.mxu0 0
        %6020 = vmatprep.subr.bf16.mxu0 0
        %6021 = vmatpush1.bf16.msra.mxu0 0
        %6022 = vmatprep.subr.bf16.mxu0 0
        %6023 = vmatpush1.bf16.msra.mxu0 0
        %6024 = vmatprep.subr.bf16.mxu0 0
        %6025 = vmatpush1.bf16.msra.mxu0 0
        %6026 = vmatprep.subr.bf16.mxu0 0
        %6027 = vmatpush1.bf16.msra.mxu0 0
        %6028 = vmatprep.subr.bf16.mxu0 0
        %6029 = vmatpush1.bf16.msra.mxu0 0
        %6030 = vmatprep.subr.bf16.mxu0 0
        %6031 = vmatpush1.bf16.msra.mxu0 0
        %6032 = vmatprep.subr.bf16.mxu0 0
        %6033 = vmatpush1.bf16.msra.mxu0 0
        %6034 = vmatprep.subr.bf16.mxu0 0
        %6035 = vmatpush1.bf16.msra.mxu0 0
        %6036 = vmatprep.subr.bf16.mxu0 0
        %6037 = vmatpush1.bf16.msra.mxu0 0
        %6038 = vmatprep.subr.bf16.mxu0 0
        %6039 = vmatpush1.bf16.msra.mxu0 0
        %6040 = vmatprep.subr.bf16.mxu0 0
        %6041 = vmatpush1.bf16.msra.mxu0 0
        %6042 = vmatprep.subr.bf16.mxu0 0
        %6043 = vmatpush1.bf16.msra.mxu0 0
        %6044 = vmatprep.mubr.bf16.mxu0 0
        %6045 = vmatmul.mubr.bf16.gmra.mrb[0].mxu0 %v5962
        %v6046 = vpop.f32.mrb[0].mxu0
        %v6047 = vadd.f32 0.0, %v6046
        %v6048 = vpop.f32.mrb[0].mxu0
        %v6049 = vadd.f32 0.0, %v6048
        %v6050 = vpop.f32.mrb[0].mxu0
        %v6051 = vadd.f32 0.0, %v6050
        %v6052 = vpop.f32.mrb[0].mxu0
        %v6053 = vadd.f32 0.0, %v6052
        %6054 = vmatprep.mubr.bf16.mxu0 0
        %6055 = vmatmul.mubr.bf16.gmra.mrb[0].mxu0 %v5965
        %v6056 = vpop.f32.mrb[0].mxu0
        %v6057 = vadd.f32 0.0, %v6056
        %v6058 = vpop.f32.mrb[0].mxu0
        %v6059 = vadd.f32 0.0, %v6058
        %v6060 = vpop.f32.mrb[0].mxu0
        %v6061 = vadd.f32 0.0, %v6060
        %v6062 = vpop.f32.mrb[0].mxu0
        %v6063 = vadd.f32 0.0, %v6062
        %6064 = vmatprep.mubr.bf16.mxu0 0
        %6065 = vmatmul.mubr.bf16.gmra.mrb[0].mxu0 %v5968
        %v6066 = vpop.f32.mrb[0].mxu0
        %v6067 = vadd.f32 0.0, %v6066
        %v6068 = vpop.f32.mrb[0].mxu0
        %v6069 = vadd.f32 0.0, %v6068
        %v6070 = vpop.f32.mrb[0].mxu0
        %v6071 = vadd.f32 0.0, %v6070
        %v6072 = vpop.f32.mrb[0].mxu0
        %v6073 = vadd.f32 0.0, %v6072
        %6074 = vmatprep.mubr.bf16.mxu0 0
        %6075 = vmatmul.mubr.bf16.gmra.mrb[0].mxu0 %v5971
        %v6076 = vpop.f32.mrb[0].mxu0
        %v6077 = vadd.f32 0.0, %v6076
        %v6078 = vpop.f32.mrb[0].mxu0
        %v6079 = vadd.f32 0.0, %v6078
        %v6080 = vpop.f32.mrb[0].mxu0
        %v6081 = vadd.f32 0.0, %v6080
        %v6082 = vpop.f32.mrb[0].mxu0
        %v6083 = vadd.f32 0.0, %v6082
        %6084 = vmatprep.mubr.bf16.mxu0 0
        %6085 = vmatmul.mubr.bf16.gmra.mrb[0].mxu0 %v5974
        %v6086 = vpop.f32.mrb[0].mxu0
        %v6087 = vadd.f32 0.0, %v6086
        %v6088 = vpop.f32.mrb[0].mxu0
        %v6089 = vadd.f32 0.0, %v6088
        %v6090 = vpop.f32.mrb[0].mxu0
        %v6091 = vadd.f32 0.0, %v6090
        %v6092 = vpop.f32.mrb[0].mxu0
        %v6093 = vadd.f32 0.0, %v6092
        %6094 = vmatprep.mubr.bf16.mxu0 0
        %6095 = vmatmul.mubr.bf16.gmra.mrb[0].mxu0 %v5977
        %v6096 = vpop.f32.mrb[0].mxu0
        %v6097 = vadd.f32 0.0, %v6096
        %v6098 = vpop.f32.mrb[0].mxu0
        %v6099 = vadd.f32 0.0, %v6098
        %v6100 = vpop.f32.mrb[0].mxu0
        %v6101 = vadd.f32 0.0, %v6100
        %v6102 = vpop.f32.mrb[0].mxu0
        %v6103 = vadd.f32 0.0, %v6102
        %6104 = vmatprep.mubr.bf16.mxu0 0
        %6105 = vmatmul.mubr.bf16.gmra.mrb[0].mxu0 %v5980
        %v6106 = vpop.f32.mrb[0].mxu0
        %v6107 = vadd.f32 0.0, %v6106
        %v6108 = vpop.f32.mrb[0].mxu0
        %v6109 = vadd.f32 0.0, %v6108
        %v6110 = vpop.f32.mrb[0].mxu0
        %v6111 = vadd.f32 0.0, %v6110
        %v6112 = vpop.f32.mrb[0].mxu0
        %v6113 = vadd.f32 0.0, %v6112
        %6114 = vmatprep.mubr.bf16.mxu0 0
        %6115 = vmatmul.mubr.bf16.gmra.mrb[0].mxu0 %v5983
        %v6116 = vpop.f32.mrb[0].mxu0
        %v6117 = vadd.f32 0.0, %v6116
        %v6118 = vpop.f32.mrb[0].mxu0
        %v6119 = vadd.f32 0.0, %v6118
        %v6120 = vpop.f32.mrb[0].mxu0
        %v6121 = vadd.f32 0.0, %v6120
        %v6122 = vpop.f32.mrb[0].mxu0
        %v6123 = vadd.f32 0.0, %v6122
        %6124 = vmatprep.mubr.bf16.mxu0 0
        %6125 = vmatmul.mubr.bf16.gmra.mrb[0].mxu0 %v5986
        %v6126 = vpop.f32.mrb[0].mxu0
        %v6127 = vadd.f32 0.0, %v6126
        %v6128 = vpop.f32.mrb[0].mxu0
        %v6129 = vadd.f32 0.0, %v6128
        %v6130 = vpop.f32.mrb[0].mxu0
        %v6131 = vadd.f32 0.0, %v6130
        %v6132 = vpop.f32.mrb[0].mxu0
        %v6133 = vadd.f32 0.0, %v6132
        %6134 = vmatprep.mubr.bf16.mxu0 0
        %6135 = vmatmul.mubr.bf16.gmra.mrb[0].mxu0 %v5989
        %v6136 = vpop.f32.mrb[0].mxu0
        %v6137 = vadd.f32 0.0, %v6136
        %v6138 = vpop.f32.mrb[0].mxu0
        %v6139 = vadd.f32 0.0, %v6138
        %v6140 = vpop.f32.mrb[0].mxu0
        %v6141 = vadd.f32 0.0, %v6140
        %v6142 = vpop.f32.mrb[0].mxu0
        %v6143 = vadd.f32 0.0, %v6142
        %6144 = vmatprep.mubr.bf16.mxu0 0
        %6145 = vmatmul.mubr.bf16.gmra.mrb[0].mxu0 %v5992
        %v6146 = vpop.f32.mrb[0].mxu0
        %v6147 = vadd.f32 0.0, %v6146
        %v6148 = vpop.f32.mrb[0].mxu0
        %v6149 = vadd.f32 0.0, %v6148
        %v6150 = vpop.f32.mrb[0].mxu0
        %v6151 = vadd.f32 0.0, %v6150
        %v6152 = vpop.f32.mrb[0].mxu0
        %v6153 = vadd.f32 0.0, %v6152
        %6154 = vmatprep.mubr.bf16.mxu0 0
        %6155 = vmatmul.mubr.bf16.gmra.mrb[0].mxu0 %v5995
        %v6156 = vpop.f32.mrb[0].mxu0
        %v6157 = vadd.f32 0.0, %v6156
        %v6158 = vpop.f32.mrb[0].mxu0
        %v6159 = vadd.f32 0.0, %v6158
        %v6160 = vpop.f32.mrb[0].mxu0
        %v6161 = vadd.f32 0.0, %v6160
        %v6162 = vpop.f32.mrb[0].mxu0
        %v6163 = vadd.f32 0.0, %v6162
        %6164 = vmatprep.mubr.bf16.mxu0 0
        %6165 = vmatmul.mubr.bf16.gmra.mrb[0].mxu0 %v5998
        %v6166 = vpop.f32.mrb[0].mxu0
        %v6167 = vadd.f32 0.0, %v6166
        %v6168 = vpop.f32.mrb[0].mxu0
        %v6169 = vadd.f32 0.0, %v6168
        %v6170 = vpop.f32.mrb[0].mxu0
        %v6171 = vadd.f32 0.0, %v6170
        %v6172 = vpop.f32.mrb[0].mxu0
        %v6173 = vadd.f32 0.0, %v6172
        %6174 = vmatprep.mubr.bf16.mxu0 0
        %6175 = vmatmul.mubr.bf16.gmra.mrb[0].mxu0 %v6001
        %v6176 = vpop.f32.mrb[0].mxu0
        %v6177 = vadd.f32 0.0, %v6176
        %v6178 = vpop.f32.mrb[0].mxu0
        %v6179 = vadd.f32 0.0, %v6178
        %v6180 = vpop.f32.mrb[0].mxu0
        %v6181 = vadd.f32 0.0, %v6180
        %v6182 = vpop.f32.mrb[0].mxu0
        %v6183 = vadd.f32 0.0, %v6182
        %6184 = vmatprep.mubr.bf16.mxu0 0
        %6185 = vmatmul.mubr.bf16.gmra.mrb[0].mxu0 %v6004
        %v6186 = vpop.f32.mrb[0].mxu0
        %v6187 = vadd.f32 0.0, %v6186
        %v6188 = vpop.f32.mrb[0].mxu0
        %v6189 = vadd.f32 0.0, %v6188
        %v6190 = vpop.f32.mrb[0].mxu0
        %v6191 = vpop.f32.mrb[0].mxu0
        %6192 = vdwg.mxu0
        %v6201 = vrot.slane %v6061, 1
        %v6202 = vrot.slane %v6067, 1
        %v6203 = vsel %vm2990, %v6201, %v6202
        %v6204 = vrot.slane %v6063, 1
        %v6205 = vrot.slane %v6069, 1
        %v6206 = vsel %vm2990, %v6204, %v6205
        %v6207 = vrot.slane %v6071, 1
        %v6208 = vsel %vm2990, %v6202, %v6207
        %v6209 = vrot.slane %v6073, 1
        %v6210 = vsel %vm2990, %v6205, %v6209
        %v6211 = vrot.slane %v6077, 1
        %v6212 = vsel %vm2990, %v6207, %v6211
        %v6213 = vrot.slane %v6079, 1
        %v6214 = vsel %vm2990, %v6209, %v6213
        %v6229 = vrot.slane %v6077, 2
        %v6230 = vrot.slane %v6081, 2
        %v6231 = vsel %vm3044, %v6229, %v6230
        %v6232 = vrot.slane %v6079, 2
        %v6233 = vrot.slane %v6083, 2
        %v6234 = vsel %vm3044, %v6232, %v6233
        %v6235 = vrot.slane %v6087, 2
        %v6236 = vsel %vm3044, %v6230, %v6235
        %v6237 = vrot.slane %v6089, 2
        %v6238 = vsel %vm3044, %v6233, %v6237
        %v6239 = vrot.slane %v6091, 2
        %v6240 = vsel %vm3044, %v6235, %v6239
        %v6241 = vrot.slane %v6093, 2
        %v6242 = vsel %vm3044, %v6237, %v6241
        %v6257 = vrot.slane %v6091, 3
        %v6258 = vrot.slane %v6097, 3
        %v6259 = vsel %vm912, %v6257, %v6258
        %v6260 = vrot.slane %v6093, 3
        %v6261 = vrot.slane %v6099, 3
        %v6262 = vsel %vm912, %v6260, %v6261
        %v6263 = vrot.slane %v6101, 3
        %v6264 = vsel %vm912, %v6258, %v6263
        %v6265 = vrot.slane %v6103, 3
        %v6266 = vsel %vm912, %v6261, %v6265
        %v6267 = vrot.slane %v6107, 3
        %v6268 = vsel %vm912, %v6263, %v6267
        %v6269 = vrot.slane %v6109, 3
        %v6270 = vsel %vm912, %v6265, %v6269
        %v6285 = vrot.slane %v6107, 4
        %v6286 = vrot.slane %v6111, 4
        %v6287 = vsel %vm911, %v6285, %v6286
        %v6288 = vrot.slane %v6109, 4
        %v6289 = vrot.slane %v6113, 4
        %v6290 = vsel %vm911, %v6288, %v6289
        %v6291 = vrot.slane %v6117, 4
        %v6292 = vsel %vm911, %v6286, %v6291
        %v6293 = vrot.slane %v6119, 4
        %v6294 = vsel %vm911, %v6289, %v6293
        %v6295 = vrot.slane %v6121, 4
        %v6296 = vsel %vm911, %v6291, %v6295
        %v6297 = vrot.slane %v6123, 4
        %v6298 = vsel %vm911, %v6293, %v6297
        %v6313 = vrot.slane %v6121, 5
        %v6314 = vrot.slane %v6127, 5
        %v6315 = vsel %vm3204, %v6313, %v6314
        %v6316 = vrot.slane %v6123, 5
        %v6317 = vrot.slane %v6129, 5
        %v6318 = vsel %vm3204, %v6316, %v6317
        %v6319 = vrot.slane %v6131, 5
        %v6320 = vsel %vm3204, %v6314, %v6319
        %v6321 = vrot.slane %v6133, 5
        %v6322 = vsel %vm3204, %v6317, %v6321
        %v6323 = vrot.slane %v6137, 5
        %v6324 = vsel %vm3204, %v6319, %v6323
        %v6325 = vrot.slane %v6139, 5
        %v6326 = vsel %vm3204, %v6321, %v6325
        %v6341 = vrot.slane %v6137, 6
        %v6342 = vrot.slane %v6141, 6
        %v6343 = vsel %vm3258, %v6341, %v6342
        %v6344 = vrot.slane %v6139, 6
        %v6345 = vrot.slane %v6143, 6
        %v6346 = vsel %vm3258, %v6344, %v6345
        %v6347 = vrot.slane %v6147, 6
        %v6348 = vsel %vm3258, %v6342, %v6347
        %v6349 = vrot.slane %v6149, 6
        %v6350 = vsel %vm3258, %v6345, %v6349
        %v6351 = vrot.slane %v6151, 6
        %v6352 = vsel %vm3258, %v6347, %v6351
        %v6353 = vrot.slane %v6153, 6
        %v6354 = vsel %vm3258, %v6349, %v6353
        %v6369 = vrot.slane %v6151, 7
        %v6370 = vrot.slane %v6157, 7
        %v6371 = vsel %vm2171, %v6369, %v6370
        %v6372 = vrot.slane %v6153, 7
        %v6373 = vrot.slane %v6159, 7
        %v6374 = vsel %vm2171, %v6372, %v6373
        %v6375 = vrot.slane %v6161, 7
        %v6376 = vsel %vm2171, %v6370, %v6375
        %v6377 = vrot.slane %v6163, 7
        %v6378 = vsel %vm2171, %v6373, %v6377
        %v6379 = vrot.slane %v6167, 7
        %v6380 = vsel %vm2171, %v6375, %v6379
        %v6381 = vrot.slane %v6169, 7
        %v6382 = vsel %vm2171, %v6377, %v6381
        %v6391 = vpack.c.bf16 %v6051, %v6047
        %v6392 = vpack.c.bf16 %v6053, %v6049
        %v6393 = vpack.c.bf16 %v6208, %v6203
        %v6394 = vpack.c.bf16 %v6210, %v6206
        %v6395 = vpack.c.bf16 %v6236, %v6231
        %v6396 = vpack.c.bf16 %v6238, %v6234
        %v6397 = vpack.c.bf16 %v6264, %v6259
        %v6398 = vpack.c.bf16 %v6266, %v6262
        %v6399 = vpack.c.bf16 %v6292, %v6287
        %v6400 = vpack.c.bf16 %v6294, %v6290
        %v6401 = vpack.c.bf16 %v6320, %v6315
        %v6402 = vpack.c.bf16 %v6322, %v6318
        %v6403 = vpack.c.bf16 %v6348, %v6343
        %v6404 = vpack.c.bf16 %v6350, %v6346
        %v6405 = vpack.c.bf16 %v6376, %v6371
        %v6406 = vpack.c.bf16 %v6378, %v6374
        %v6407 = vpack.c.bf16 %v6177, %v6171
        %v6408 = vpack.c.bf16 %v6179, %v6173
        %v6409 = vpack.c.bf16 %v6061, %v6057
        %v6410 = vpack.c.bf16 %v6063, %v6059
        %v6411 = vpack.c.bf16 %v6211, %v6212
        %v6412 = vpack.c.bf16 %v6213, %v6214
        %v6413 = vpack.c.bf16 %v6239, %v6240
        %v6414 = vpack.c.bf16 %v6241, %v6242
        %v6415 = vpack.c.bf16 %v6267, %v6268
        %v6416 = vpack.c.bf16 %v6269, %v6270
        %v6417 = vpack.c.bf16 %v6295, %v6296
        %v6418 = vpack.c.bf16 %v6297, %v6298
        %v6419 = vpack.c.bf16 %v6323, %v6324
        %v6420 = vpack.c.bf16 %v6325, %v6326
        %v6421 = vpack.c.bf16 %v6351, %v6352
        %v6422 = vpack.c.bf16 %v6353, %v6354
        %v6423 = vpack.c.bf16 %v6379, %v6380
        %v6424 = vpack.c.bf16 %v6381, %v6382
        %v6425 = vpack.c.bf16 %v6187, %v6181
        %v6426 = vpack.c.bf16 %v6189, %v6183
        %v6427 = vld [vmem:[%s11] sm:$0xf]
        %v6428 = vld [vmem:[%s11 + $0x4] sm:$0xf]
        %v6429 = vld [vmem:[%s11 + $0x8] sm:$0xf]
        %v6430 = vld [vmem:[%s11 + $0xc] sm:$0xf]
        %v6431 = vld [vmem:[%s11 + $0x10] sm:$0xf]
        %v6432 = vld [vmem:[%s11 + $0x14] sm:$0xf]
        %v6433 = vld [vmem:[%s11 + $0x18] sm:$0xf]
        %v6434 = vld [vmem:[%s11 + $0x1c] sm:$0xf]
        %v6435 = vld [vmem:[%s11 + $0x20] sm:$0xf]
        %v6436 = vld [vmem:[%s11 + $0x24] sm:$0xf]
        %v6437 = vld [vmem:[%s11 + $0x28] sm:$0xf]
        %v6438 = vld [vmem:[%s11 + $0x2c] sm:$0xf]
        %v6439 = vld [vmem:[%s11 + $0x30] sm:$0xf]
        %v6440 = vld [vmem:[%s11 + $0x34] sm:$0xf]
        %v6441 = vld [vmem:[%s11 + $0x38] sm:$0xf]
        %v6442 = vld [vmem:[%s11 + $0x3c] sm:$0xf]
        %v6443 = vld [vmem:[%s11 + $0x40] sm:$0xf]
        %v6444 = vld [vmem:[%s11 + $0x44] sm:$0xf]
        %v6445 = vld [vmem:[%s11 + $0x48] sm:$0xf]
        %v6446 = vld [vmem:[%s11 + $0x4c] sm:$0xf]
        %v6447 = vld [vmem:[%s11 + $0x50] sm:$0xf]
        %v6448 = vld [vmem:[%s11 + $0x54] sm:$0xf]
        %v6449 = vld [vmem:[%s11 + $0x58] sm:$0xf]
        %v6450 = vld [vmem:[%s11 + $0x5c] sm:$0xf]
        %v6451 = vld [vmem:[%s11 + $0x60] sm:$0xf]
        %v6452 = vld [vmem:[%s11 + $0x64] sm:$0xf]
        %v6453 = vld [vmem:[%s11 + $0x68] sm:$0xf]
        %v6454 = vld [vmem:[%s11 + $0x6c] sm:$0xf]
        %v6455 = vld [vmem:[%s11 + $0x70] sm:$0xf]
        %v6456 = vld [vmem:[%s11 + $0x74] sm:$0xf]
        %v6457 = vld [vmem:[%s11 + $0x78] sm:$0xf]
        %v6458 = vld [vmem:[%s11 + $0x7c] sm:$0xf]
        %v6459 = vld [vmem:[%s11 + $0x80] sm:$0xf]
        %v6460 = vld [vmem:[%s11 + $0x84] sm:$0xf]
        %v6461 = vld [vmem:[%s11 + $0x88] sm:$0xf]
        %v6462 = vld [vmem:[%s11 + $0x8c] sm:$0xf]
        %v6463 = vld [vmem:[%s11 + $0x90] sm:$0xf]
        %v6464 = vld [vmem:[%s11 + $0x94] sm:$0xf]
        %v6465 = vld [vmem:[%s11 + $0x98] sm:$0xf]
        %v6466 = vld [vmem:[%s11 + $0x9c] sm:$0xf]
        %v6467 = vld [vmem:[%s11 + $0xa0] sm:$0xf]
        %v6468 = vld [vmem:[%s11 + $0xa4] sm:$0xf]
        %v6469 = vld [vmem:[%s11 + $0xa8] sm:$0xf]
        %v6470 = vld [vmem:[%s11 + $0xac] sm:$0xf]
        %v6471 = vld [vmem:[%s11 + $0xb0] sm:$0xf]
        %v6472 = vld [vmem:[%s11 + $0xb4] sm:$0xf]
        %v6473 = vld [vmem:[%s11 + $0xb8] sm:$0xf]
        %v6474 = vld [vmem:[%s11 + $0xbc] sm:$0xf]
        %v6475 = vld [vmem:[%s11 + $0xc0] sm:$0xf]
        %v6476 = vld [vmem:[%s11 + $0xc4] sm:$0xf]
        %v6477 = vld [vmem:[%s11 + $0xc8] sm:$0xf]
        %v6478 = vld [vmem:[%s11 + $0xcc] sm:$0xf]
        %v6479 = vld [vmem:[%s11 + $0xd0] sm:$0xf]
        %v6480 = vld [vmem:[%s11 + $0xd4] sm:$0xf]
        %v6481 = vld [vmem:[%s11 + $0xd8] sm:$0xf]
        %v6482 = vld [vmem:[%s11 + $0xdc] sm:$0xf]
        %v6483 = vld [vmem:[%s11 + $0xe0] sm:$0xf]
        %v6484 = vld [vmem:[%s11 + $0xe4] sm:$0xf]
        %v6485 = vld [vmem:[%s11 + $0xe8] sm:$0xf]
        %v6486 = vld [vmem:[%s11 + $0xec] sm:$0xf]
        %v6487 = vld [vmem:[%s11 + $0xf0] sm:$0xf]
        %v6488 = vld [vmem:[%s11 + $0xf4] sm:$0xf]
        %v6489 = vld [vmem:[%s11 + $0xf8] sm:$0xf]
        %v6490 = vld [vmem:[%s11 + $0xfc] sm:$0xf]
        %v6491 = vld [vmem:[%s11 + $0x100] sm:$0xf]
        %v6492 = vld [vmem:[%s11 + $0x104] sm:$0xf]
        %v6493 = vld [vmem:[%s11 + $0x108] sm:$0xf]
        %v6494 = vld [vmem:[%s11 + $0x10c] sm:$0xf]
        %v6495 = vld [vmem:[%s11 + $0x110] sm:$0xf]
        %v6496 = vld [vmem:[%s11 + $0x114] sm:$0xf]
        %v6497 = vld [vmem:[%s11 + $0x118] sm:$0xf]
        %v6498 = vld [vmem:[%s11 + $0x11c] sm:$0xf]
        %v6499 = vld [vmem:[%s11 + $0x120] sm:$0xf]
        %v6500 = vld [vmem:[%s11 + $0x124] sm:$0xf]
        %v6501 = vld [vmem:[%s11 + $0x128] sm:$0xf]
        %v6502 = vld [vmem:[%s11 + $0x12c] sm:$0xf]
        %v6503 = vld [vmem:[%s11 + $0x130] sm:$0xf]
        %v6504 = vld [vmem:[%s11 + $0x134] sm:$0xf]
        %v6505 = vld [vmem:[%s11 + $0x138] sm:$0xf]
        %v6506 = vld [vmem:[%s11 + $0x13c] sm:$0xf]
        %v6507 = vld [vmem:[%s11 + $0x140] sm:$0xf]
        %v6508 = vld [vmem:[%s11 + $0x144] sm:$0xf]
        %v6509 = vld [vmem:[%s11 + $0x148] sm:$0xf]
        %v6510 = vld [vmem:[%s11 + $0x14c] sm:$0xf]
        %v6511 = vld [vmem:[%s11 + $0x150] sm:$0xf]
        %v6512 = vld [vmem:[%s11 + $0x154] sm:$0xf]
        %v6513 = vld [vmem:[%s11 + $0x158] sm:$0xf]
        %v6514 = vld [vmem:[%s11 + $0x15c] sm:$0xf]
        %v6515 = vld [vmem:[%s11 + $0x160] sm:$0xf]
        %v6516 = vld [vmem:[%s11 + $0x164] sm:$0xf]
        %v6517 = vld [vmem:[%s11 + $0x168] sm:$0xf]
        %v6518 = vld [vmem:[%s11 + $0x16c] sm:$0xf]
        %v6519 = vld [vmem:[%s11 + $0x170] sm:$0xf]
        %v6520 = vld [vmem:[%s11 + $0x174] sm:$0xf]
        %v6521 = vld [vmem:[%s11 + $0x178] sm:$0xf]
        %v6522 = vld [vmem:[%s11 + $0x17c] sm:$0xf]
        %v6523 = vld [vmem:[%s11 + $0x180] sm:$0xf]
        %v6524 = vld [vmem:[%s11 + $0x184] sm:$0xf]
        %v6525 = vld [vmem:[%s11 + $0x188] sm:$0xf]
        %v6526 = vld [vmem:[%s11 + $0x18c] sm:$0xf]
        %v6527 = vld [vmem:[%s11 + $0x190] sm:$0xf]
        %v6528 = vld [vmem:[%s11 + $0x194] sm:$0xf]
        %v6529 = vld [vmem:[%s11 + $0x198] sm:$0xf]
        %v6530 = vld [vmem:[%s11 + $0x19c] sm:$0xf]
        %v6531 = vld [vmem:[%s11 + $0x1a0] sm:$0xf]
        %v6532 = vld [vmem:[%s11 + $0x1a4] sm:$0xf]
        %v6533 = vld [vmem:[%s11 + $0x1a8] sm:$0xf]
        %v6534 = vld [vmem:[%s11 + $0x1ac] sm:$0xf]
        %v6535 = vld [vmem:[%s11 + $0x1b0] sm:$0xf]
        %v6536 = vld [vmem:[%s11 + $0x1b4] sm:$0xf]
        %v6537 = vld [vmem:[%s11 + $0x1b8] sm:$0xf]
        %v6538 = vld [vmem:[%s11 + $0x1bc] sm:$0xf]
        %v6539 = vld [vmem:[%s11 + $0x1c0] sm:$0xf]
        %v6540 = vld [vmem:[%s11 + $0x1c4] sm:$0xf]
        %v6541 = vld [vmem:[%s11 + $0x1c8] sm:$0xf]
        %v6542 = vld [vmem:[%s11 + $0x1cc] sm:$0xf]
        %v6543 = vld [vmem:[%s11 + $0x1d0] sm:$0xf]
        %v6544 = vld [vmem:[%s11 + $0x1d4] sm:$0xf]
        %v6545 = vld [vmem:[%s11 + $0x1d8] sm:$0xf]
        %v6546 = vld [vmem:[%s11 + $0x1dc] sm:$0xf]
        %v6547 = vld [vmem:[%s11 + $0x1e0] sm:$0xf]
        %v6548 = vld [vmem:[%s11 + $0x1e4] sm:$0xf]
        %v6549 = vld [vmem:[%s11 + $0x1e8] sm:$0xf]
        %v6550 = vld [vmem:[%s11 + $0x1ec] sm:$0xf]
        %v6551 = vld [vmem:[%s11 + $0x1f0] sm:$0xf]
        %v6552 = vld [vmem:[%s11 + $0x1f4] sm:$0xf]
        %v6553 = vld [vmem:[%s11 + $0x1f8] sm:$0xf]
        %v6554 = vld [vmem:[%s11 + $0x1fc] sm:$0xf]
        %v6555 = vld [vmem:[%s11 + $0x200] sm:$0xf]
        %v6556 = vld [vmem:[%s11 + $0x204] sm:$0xf]
        %v6557 = vld [vmem:[%s11 + $0x208] sm:$0xf]
        %v6558 = vld [vmem:[%s11 + $0x20c] sm:$0xf]
        %v6559 = vld [vmem:[%s11 + $0x210] sm:$0xf]
        %v6560 = vld [vmem:[%s11 + $0x214] sm:$0xf]
        %v6561 = vld [vmem:[%s11 + $0x218] sm:$0xf]
        %v6562 = vld [vmem:[%s11 + $0x21c] sm:$0xf]
        %v6563 = vld [vmem:[%s11 + $0x220] sm:$0xf]
        %v6564 = vld [vmem:[%s11 + $0x224] sm:$0xf]
        %v6565 = vld [vmem:[%s11 + $0x228] sm:$0xf]
        %v6566 = vld [vmem:[%s11 + $0x22c] sm:$0xf]
        %v6567 = vld [vmem:[%s11 + $0x230] sm:$0xf]
        %v6568 = vld [vmem:[%s11 + $0x234] sm:$0xf]
        %v6569 = vld [vmem:[%s11 + $0x238] sm:$0xf]
        %v6570 = vld [vmem:[%s11 + $0x23c] sm:$0xf]
        %v6571 = vld [vmem:[%s11 + $0x240] sm:$0xf]
        %v6572 = vld [vmem:[%s11 + $0x244] sm:$0xf]
        %v6573 = vld [vmem:[%s11 + $0x248] sm:$0xf]
        %v6574 = vld [vmem:[%s11 + $0x24c] sm:$0xf]
        %v6575 = vld [vmem:[%s11 + $0x250] sm:$0xf]
        %v6576 = vld [vmem:[%s11 + $0x254] sm:$0xf]
        %v6577 = vld [vmem:[%s11 + $0x258] sm:$0xf]
        %v6578 = vld [vmem:[%s11 + $0x25c] sm:$0xf]
        %v6579 = vld [vmem:[%s11 + $0x260] sm:$0xf]
        %v6580 = vld [vmem:[%s11 + $0x264] sm:$0xf]
        %v6581 = vld [vmem:[%s11 + $0x268] sm:$0xf]
        %v6582 = vld [vmem:[%s11 + $0x26c] sm:$0xf]
        %v6583 = vld [vmem:[%s11 + $0x270] sm:$0xf]
        %v6584 = vld [vmem:[%s11 + $0x274] sm:$0xf]
        %v6585 = vld [vmem:[%s11 + $0x278] sm:$0xf]
        %v6586 = vld [vmem:[%s11 + $0x27c] sm:$0xf]
        %v6587 = vld [vmem:[%s11 + $0x280] sm:$0xf]
        %v6588 = vld [vmem:[%s11 + $0x284] sm:$0xf]
        %v6589 = vld [vmem:[%s11 + $0x288] sm:$0xf]
        %v6590 = vld [vmem:[%s11 + $0x28c] sm:$0xf]
        %v6591 = vld [vmem:[%s11 + $0x290] sm:$0xf]
        %v6592 = vld [vmem:[%s11 + $0x294] sm:$0xf]
        %v6593 = vld [vmem:[%s11 + $0x298] sm:$0xf]
        %v6594 = vld [vmem:[%s11 + $0x29c] sm:$0xf]
        %v6595 = vld [vmem:[%s11 + $0x2a0] sm:$0xf]
        %v6596 = vld [vmem:[%s11 + $0x2a4] sm:$0xf]
        %v6597 = vld [vmem:[%s11 + $0x2a8] sm:$0xf]
        %v6598 = vld [vmem:[%s11 + $0x2ac] sm:$0xf]
        %v6599 = vld [vmem:[%s11 + $0x2b0] sm:$0xf]
        %v6600 = vld [vmem:[%s11 + $0x2b4] sm:$0xf]
        %v6601 = vld [vmem:[%s11 + $0x2b8] sm:$0xf]
        %v6602 = vld [vmem:[%s11 + $0x2bc] sm:$0xf]
        %v6603 = vld [vmem:[%s11 + $0x2c0] sm:$0xf]
        %v6604 = vld [vmem:[%s11 + $0x2c4] sm:$0xf]
        %v6605 = vld [vmem:[%s11 + $0x2c8] sm:$0xf]
        %v6606 = vld [vmem:[%s11 + $0x2cc] sm:$0xf]
        %v6607 = vld [vmem:[%s11 + $0x2d0] sm:$0xf]
        %v6608 = vld [vmem:[%s11 + $0x2d4] sm:$0xf]
        %v6609 = vld [vmem:[%s11 + $0x2d8] sm:$0xf]
        %v6610 = vld [vmem:[%s11 + $0x2dc] sm:$0xf]
        %v6611 = vld [vmem:[%s11 + $0x2e0] sm:$0xf]
        %v6612 = vld [vmem:[%s11 + $0x2e4] sm:$0xf]
        %v6613 = vld [vmem:[%s11 + $0x2e8] sm:$0xf]
        %v6614 = vld [vmem:[%s11 + $0x2ec] sm:$0xf]
        %v6615 = vld [vmem:[%s11 + $0x2f0] sm:$0xf]
        %v6616 = vld [vmem:[%s11 + $0x2f4] sm:$0xf]
        %v6617 = vld [vmem:[%s11 + $0x2f8] sm:$0xf]
        %v6618 = vld [vmem:[%s11 + $0x2fc] sm:$0xf]
        %v6619 = vld [vmem:[%s11 + $0x300] sm:$0xf]
        %v6620 = vld [vmem:[%s11 + $0x304] sm:$0xf]
        %v6621 = vld [vmem:[%s11 + $0x308] sm:$0xf]
        %v6622 = vld [vmem:[%s11 + $0x30c] sm:$0xf]
        %v6623 = vld [vmem:[%s11 + $0x310] sm:$0xf]
        %v6624 = vld [vmem:[%s11 + $0x314] sm:$0xf]
        %v6625 = vld [vmem:[%s11 + $0x318] sm:$0xf]
        %v6626 = vld [vmem:[%s11 + $0x31c] sm:$0xf]
        %v6627 = vld [vmem:[%s11 + $0x320] sm:$0xf]
        %v6628 = vld [vmem:[%s11 + $0x324] sm:$0xf]
        %v6629 = vld [vmem:[%s11 + $0x328] sm:$0xf]
        %v6630 = vld [vmem:[%s11 + $0x32c] sm:$0xf]
        %v6631 = vld [vmem:[%s11 + $0x330] sm:$0xf]
        %v6632 = vld [vmem:[%s11 + $0x334] sm:$0xf]
        %v6633 = vld [vmem:[%s11 + $0x338] sm:$0xf]
        %v6634 = vld [vmem:[%s11 + $0x33c] sm:$0xf]
        %v6635 = vld [vmem:[%s11 + $0x340] sm:$0xf]
        %v6636 = vld [vmem:[%s11 + $0x344] sm:$0xf]
        %v6637 = vld [vmem:[%s11 + $0x348] sm:$0xf]
        %v6638 = vld [vmem:[%s11 + $0x34c] sm:$0xf]
        %v6639 = vld [vmem:[%s11 + $0x350] sm:$0xf]
        %v6640 = vld [vmem:[%s11 + $0x354] sm:$0xf]
        %v6641 = vld [vmem:[%s11 + $0x358] sm:$0xf]
        %v6642 = vld [vmem:[%s11 + $0x35c] sm:$0xf]
        %v6643 = vld [vmem:[%s11 + $0x360] sm:$0xf]
        %v6644 = vld [vmem:[%s11 + $0x364] sm:$0xf]
        %v6645 = vld [vmem:[%s11 + $0x368] sm:$0xf]
        %v6646 = vld [vmem:[%s11 + $0x36c] sm:$0xf]
        %v6647 = vld [vmem:[%s11 + $0x370] sm:$0xf]
        %v6648 = vld [vmem:[%s11 + $0x374] sm:$0xf]
        %v6649 = vld [vmem:[%s11 + $0x378] sm:$0xf]
        %v6650 = vld [vmem:[%s11 + $0x37c] sm:$0xf]
        %v6651 = vld [vmem:[%s11 + $0x380] sm:$0xf]
        %v6652 = vld [vmem:[%s11 + $0x384] sm:$0xf]
        %v6653 = vld [vmem:[%s11 + $0x388] sm:$0xf]
        %v6654 = vld [vmem:[%s11 + $0x38c] sm:$0xf]
        %v6655 = vld [vmem:[%s11 + $0x390] sm:$0xf]
        %v6656 = vld [vmem:[%s11 + $0x394] sm:$0xf]
        %v6657 = vld [vmem:[%s11 + $0x398] sm:$0xf]
        %v6658 = vld [vmem:[%s11 + $0x39c] sm:$0xf]
        %v6659 = vld [vmem:[%s11 + $0x3a0] sm:$0xf]
        %v6660 = vld [vmem:[%s11 + $0x3a4] sm:$0xf]
        %v6661 = vld [vmem:[%s11 + $0x3a8] sm:$0xf]
        %v6662 = vld [vmem:[%s11 + $0x3ac] sm:$0xf]
        %v6663 = vld [vmem:[%s11 + $0x3b0] sm:$0xf]
        %v6664 = vld [vmem:[%s11 + $0x3b4] sm:$0xf]
        %v6665 = vld [vmem:[%s11 + $0x3b8] sm:$0xf]
        %v6666 = vld [vmem:[%s11 + $0x3bc] sm:$0xf]
        %v6667 = vld [vmem:[%s11 + $0x3c0] sm:$0xf]
        %v6668 = vld [vmem:[%s11 + $0x3c4] sm:$0xf]
        %v6669 = vld [vmem:[%s11 + $0x3c8] sm:$0xf]
        %v6670 = vld [vmem:[%s11 + $0x3cc] sm:$0xf]
        %v6671 = vld [vmem:[%s11 + $0x3d0] sm:$0xf]
        %v6672 = vld [vmem:[%s11 + $0x3d4] sm:$0xf]
        %v6673 = vld [vmem:[%s11 + $0x3d8] sm:$0xf]
        %v6674 = vld [vmem:[%s11 + $0x3dc] sm:$0xf]
        %v6675 = vld [vmem:[%s11 + $0x3e0] sm:$0xf]
        %v6676 = vld [vmem:[%s11 + $0x3e4] sm:$0xf]
        %v6677 = vld [vmem:[%s11 + $0x3e8] sm:$0xf]
        %v6678 = vld [vmem:[%s11 + $0x3ec] sm:$0xf]
        %v6679 = vld [vmem:[%s11 + $0x3f0] sm:$0xf]
        %v6680 = vld [vmem:[%s11 + $0x3f4] sm:$0xf]
        %v6681 = vld [vmem:[%s11 + $0x3f8] sm:$0xf]
        %v6682 = vld [vmem:[%s11 + $0x3fc] sm:$0xf]
        %v6683 = vld [vmem:[%s11 + $0x400] sm:$0xf]
        %v6684 = vld [vmem:[%s11 + $0x404] sm:$0xf]
        %v6685 = vld [vmem:[%s11 + $0x408] sm:$0xf]
        %v6686 = vld [vmem:[%s11 + $0x40c] sm:$0xf]
        %v6687 = vld [vmem:[%s11 + $0x410] sm:$0xf]
        %v6688 = vld [vmem:[%s11 + $0x414] sm:$0xf]
        %v6689 = vld [vmem:[%s11 + $0x418] sm:$0xf]
        %v6690 = vld [vmem:[%s11 + $0x41c] sm:$0xf]
        %v6691 = vld [vmem:[%s11 + $0x420] sm:$0xf]
        %v6692 = vld [vmem:[%s11 + $0x424] sm:$0xf]
        %v6693 = vld [vmem:[%s11 + $0x428] sm:$0xf]
        %v6694 = vld [vmem:[%s11 + $0x42c] sm:$0xf]
        %v6695 = vld [vmem:[%s11 + $0x430] sm:$0xf]
        %v6696 = vld [vmem:[%s11 + $0x434] sm:$0xf]
        %v6697 = vld [vmem:[%s11 + $0x438] sm:$0xf]
        %v6698 = vld [vmem:[%s11 + $0x43c] sm:$0xf]
        %v6699 = vld [vmem:[%s11 + $0x440] sm:$0xf]
        %v6700 = vld [vmem:[%s11 + $0x444] sm:$0xf]
        %v6701 = vld [vmem:[%s11 + $0x448] sm:$0xf]
        %v6702 = vld [vmem:[%s11 + $0x44c] sm:$0xf]
        %v6703 = vld [vmem:[%s11 + $0x450] sm:$0xf]
        %v6704 = vld [vmem:[%s11 + $0x454] sm:$0xf]
        %v6705 = vld [vmem:[%s11 + $0x458] sm:$0xf]
        %v6706 = vld [vmem:[%s11 + $0x45c] sm:$0xf]
        %v6707 = vld [vmem:[%s11 + $0x460] sm:$0xf]
        %v6708 = vld [vmem:[%s11 + $0x464] sm:$0xf]
        %v6709 = vld [vmem:[%s11 + $0x468] sm:$0xf]
        %v6710 = vld [vmem:[%s11 + $0x46c] sm:$0xf]
        %v6711 = vld [vmem:[%s11 + $0x470] sm:$0xf]
        %v6712 = vld [vmem:[%s11 + $0x474] sm:$0xf]
        %v6713 = vld [vmem:[%s11 + $0x478] sm:$0xf]
        %v6714 = vld [vmem:[%s11 + $0x47c] sm:$0xf]
        %v6715 = vld [vmem:[%s12] sm:$0x1]
        %v6717 = vlaneseq
        %v6718 = vshrl.u32 %v6717, 7
        %v6719 = vsub.s32 0, %v6718
        %v6720 = vrot.slane %v6715, %v6719
        %v7010 = vunpack.c.l.b16 %v6427
        %v7011 = vunpack.c.l.b16 %v6428
        %v7012 = vunpack.c.l.b16 %v6429
        %v7013 = vunpack.c.l.b16 %v6430
        %v7014 = vunpack.c.l.b16 %v6431
        %v7015 = vunpack.c.l.b16 %v6432
        %v7016 = vunpack.c.l.b16 %v6433
        %v7017 = vunpack.c.l.b16 %v6434
        %v7018 = vunpack.c.l.b16 %v6435
        %v7019 = vunpack.c.l.b16 %v6436
        %v7020 = vunpack.c.l.b16 %v6437
        %v7021 = vunpack.c.l.b16 %v6438
        %v7022 = vunpack.c.l.b16 %v6439
        %v7023 = vunpack.c.l.b16 %v6440
        %v7024 = vunpack.c.l.b16 %v6441
        %v7025 = vunpack.c.l.b16 %v6442
        %v7026 = vunpack.c.l.b16 %v6443
        %v7027 = vunpack.c.l.b16 %v6444
        %v7028 = vunpack.c.l.b16 %v6445
        %v7029 = vunpack.c.l.b16 %v6446
        %v7030 = vunpack.c.l.b16 %v6447
        %v7031 = vunpack.c.l.b16 %v6448
        %v7032 = vunpack.c.l.b16 %v6449
        %v7033 = vunpack.c.l.b16 %v6450
        %v7034 = vunpack.c.l.b16 %v6451
        %v7035 = vunpack.c.l.b16 %v6452
        %v7036 = vunpack.c.l.b16 %v6453
        %v7037 = vunpack.c.l.b16 %v6454
        %v7038 = vunpack.c.l.b16 %v6455
        %v7039 = vunpack.c.l.b16 %v6456
        %v7040 = vunpack.c.l.b16 %v6457
        %v7041 = vunpack.c.l.b16 %v6458
        %v7042 = vunpack.c.l.b16 %v6459
        %v7043 = vunpack.c.l.b16 %v6460
        %v7044 = vunpack.c.l.b16 %v6461
        %v7045 = vunpack.c.l.b16 %v6462
        %v7046 = vunpack.c.l.b16 %v6463
        %v7047 = vunpack.c.l.b16 %v6464
        %v7048 = vunpack.c.l.b16 %v6465
        %v7049 = vunpack.c.l.b16 %v6466
        %v7050 = vunpack.c.l.b16 %v6467
        %v7051 = vunpack.c.l.b16 %v6468
        %v7052 = vunpack.c.l.b16 %v6469
        %v7053 = vunpack.c.l.b16 %v6470
        %v7054 = vunpack.c.l.b16 %v6471
        %v7055 = vunpack.c.l.b16 %v6472
        %v7056 = vunpack.c.l.b16 %v6473
        %v7057 = vunpack.c.l.b16 %v6474
        %v7058 = vunpack.c.l.b16 %v6475
        %v7059 = vunpack.c.l.b16 %v6476
        %v7060 = vunpack.c.l.b16 %v6477
        %v7061 = vunpack.c.l.b16 %v6478
        %v7062 = vunpack.c.l.b16 %v6479
        %v7063 = vunpack.c.l.b16 %v6480
        %v7064 = vunpack.c.l.b16 %v6481
        %v7065 = vunpack.c.l.b16 %v6482
        %v7066 = vunpack.c.l.b16 %v6483
        %v7067 = vunpack.c.l.b16 %v6484
        %v7068 = vunpack.c.l.b16 %v6485
        %v7069 = vunpack.c.l.b16 %v6486
        %v7070 = vunpack.c.l.b16 %v6487
        %v7071 = vunpack.c.l.b16 %v6488
        %v7072 = vunpack.c.l.b16 %v6489
        %v7073 = vunpack.c.l.b16 %v6490
        %v7074 = vunpack.c.l.b16 %v6491
        %v7075 = vunpack.c.l.b16 %v6492
        %v7076 = vunpack.c.l.b16 %v6493
        %v7077 = vunpack.c.l.b16 %v6494
        %v7078 = vunpack.c.l.b16 %v6495
        %v7079 = vunpack.c.l.b16 %v6496
        %v7080 = vunpack.c.l.b16 %v6497
        %v7081 = vunpack.c.l.b16 %v6498
        %v7082 = vunpack.c.l.b16 %v6499
        %v7083 = vunpack.c.l.b16 %v6500
        %v7084 = vunpack.c.l.b16 %v6501
        %v7085 = vunpack.c.l.b16 %v6502
        %v7086 = vunpack.c.l.b16 %v6503
        %v7087 = vunpack.c.l.b16 %v6504
        %v7088 = vunpack.c.l.b16 %v6505
        %v7089 = vunpack.c.l.b16 %v6506
        %v7090 = vunpack.c.l.b16 %v6507
        %v7091 = vunpack.c.l.b16 %v6508
        %v7092 = vunpack.c.l.b16 %v6509
        %v7093 = vunpack.c.l.b16 %v6510
        %v7094 = vunpack.c.l.b16 %v6511
        %v7095 = vunpack.c.l.b16 %v6512
        %v7096 = vunpack.c.l.b16 %v6513
        %v7097 = vunpack.c.l.b16 %v6514
        %v7098 = vunpack.c.l.b16 %v6515
        %v7099 = vunpack.c.l.b16 %v6516
        %v7100 = vunpack.c.l.b16 %v6517
        %v7101 = vunpack.c.l.b16 %v6518
        %v7102 = vunpack.c.l.b16 %v6519
        %v7103 = vunpack.c.l.b16 %v6520
        %v7104 = vunpack.c.l.b16 %v6521
        %v7105 = vunpack.c.l.b16 %v6522
        %v7106 = vunpack.c.l.b16 %v6523
        %v7107 = vunpack.c.l.b16 %v6524
        %v7108 = vunpack.c.l.b16 %v6525
        %v7109 = vunpack.c.l.b16 %v6526
        %v7110 = vunpack.c.l.b16 %v6527
        %v7111 = vunpack.c.l.b16 %v6528
        %v7112 = vunpack.c.l.b16 %v6529
        %v7113 = vunpack.c.l.b16 %v6530
        %v7114 = vunpack.c.l.b16 %v6531
        %v7115 = vunpack.c.l.b16 %v6532
        %v7116 = vunpack.c.l.b16 %v6533
        %v7117 = vunpack.c.l.b16 %v6534
        %v7118 = vunpack.c.l.b16 %v6535
        %v7119 = vunpack.c.l.b16 %v6536
        %v7120 = vunpack.c.l.b16 %v6537
        %v7121 = vunpack.c.l.b16 %v6538
        %v7122 = vunpack.c.l.b16 %v6539
        %v7123 = vunpack.c.l.b16 %v6540
        %v7124 = vunpack.c.l.b16 %v6541
        %v7125 = vunpack.c.l.b16 %v6542
        %v7126 = vunpack.c.l.b16 %v6543
        %v7127 = vunpack.c.l.b16 %v6544
        %v7128 = vunpack.c.l.b16 %v6545
        %v7129 = vunpack.c.l.b16 %v6546
        %v7130 = vunpack.c.l.b16 %v6547
        %v7131 = vunpack.c.l.b16 %v6548
        %v7132 = vunpack.c.l.b16 %v6549
        %v7133 = vunpack.c.l.b16 %v6550
        %v7134 = vunpack.c.l.b16 %v6551
        %v7135 = vunpack.c.l.b16 %v6552
        %v7136 = vunpack.c.l.b16 %v6553
        %v7137 = vunpack.c.l.b16 %v6554
        %v7138 = vunpack.c.l.b16 %v6555
        %v7139 = vunpack.c.l.b16 %v6556
        %v7140 = vunpack.c.l.b16 %v6557
        %v7141 = vunpack.c.l.b16 %v6558
        %v7142 = vunpack.c.l.b16 %v6559
        %v7143 = vunpack.c.l.b16 %v6560
        %v7144 = vunpack.c.l.b16 %v6561
        %v7145 = vunpack.c.l.b16 %v6562
        %v7146 = vunpack.c.l.b16 %v6563
        %v7147 = vunpack.c.l.b16 %v6564
        %v7148 = vunpack.c.l.b16 %v6565
        %v7149 = vunpack.c.l.b16 %v6566
        %v7150 = vunpack.c.l.b16 %v6567
        %v7151 = vunpack.c.l.b16 %v6568
        %v7152 = vunpack.c.l.b16 %v6569
        %v7153 = vunpack.c.l.b16 %v6570
        %v7154 = vunpack.c.l.b16 %v6571
        %v7155 = vunpack.c.l.b16 %v6572
        %v7156 = vunpack.c.l.b16 %v6573
        %v7157 = vunpack.c.l.b16 %v6574
        %v7158 = vunpack.c.l.b16 %v6575
        %v7159 = vunpack.c.l.b16 %v6576
        %v7160 = vunpack.c.l.b16 %v6577
        %v7161 = vunpack.c.l.b16 %v6578
        %v7162 = vunpack.c.l.b16 %v6579
        %v7163 = vunpack.c.l.b16 %v6580
        %v7164 = vunpack.c.l.b16 %v6581
        %v7165 = vunpack.c.l.b16 %v6582
        %v7166 = vunpack.c.l.b16 %v6583
        %v7167 = vunpack.c.l.b16 %v6584
        %v7168 = vunpack.c.l.b16 %v6585
        %v7169 = vunpack.c.l.b16 %v6586
        %v7170 = vunpack.c.l.b16 %v6587
        %v7171 = vunpack.c.l.b16 %v6588
        %v7172 = vunpack.c.l.b16 %v6589
        %v7173 = vunpack.c.l.b16 %v6590
        %v7174 = vunpack.c.l.b16 %v6591
        %v7175 = vunpack.c.l.b16 %v6592
        %v7176 = vunpack.c.l.b16 %v6593
        %v7177 = vunpack.c.l.b16 %v6594
        %v7178 = vunpack.c.l.b16 %v6595
        %v7179 = vunpack.c.l.b16 %v6596
        %v7180 = vunpack.c.l.b16 %v6597
        %v7181 = vunpack.c.l.b16 %v6598
        %v7182 = vunpack.c.l.b16 %v6599
        %v7183 = vunpack.c.l.b16 %v6600
        %v7184 = vunpack.c.l.b16 %v6601
        %v7185 = vunpack.c.l.b16 %v6602
        %v7186 = vunpack.c.l.b16 %v6603
        %v7187 = vunpack.c.l.b16 %v6604
        %v7188 = vunpack.c.l.b16 %v6605
        %v7189 = vunpack.c.l.b16 %v6606
        %v7190 = vunpack.c.l.b16 %v6607
        %v7191 = vunpack.c.l.b16 %v6608
        %v7192 = vunpack.c.l.b16 %v6609
        %v7193 = vunpack.c.l.b16 %v6610
        %v7194 = vunpack.c.l.b16 %v6611
        %v7195 = vunpack.c.l.b16 %v6612
        %v7196 = vunpack.c.l.b16 %v6613
        %v7197 = vunpack.c.l.b16 %v6614
        %v7198 = vunpack.c.l.b16 %v6615
        %v7199 = vunpack.c.l.b16 %v6616
        %v7200 = vunpack.c.l.b16 %v6617
        %v7201 = vunpack.c.l.b16 %v6618
        %v7202 = vunpack.c.l.b16 %v6619
        %v7203 = vunpack.c.l.b16 %v6620
        %v7204 = vunpack.c.l.b16 %v6621
        %v7205 = vunpack.c.l.b16 %v6622
        %v7206 = vunpack.c.l.b16 %v6623
        %v7207 = vunpack.c.l.b16 %v6624
        %v7208 = vunpack.c.l.b16 %v6625
        %v7209 = vunpack.c.l.b16 %v6626
        %v7210 = vunpack.c.l.b16 %v6627
        %v7211 = vunpack.c.l.b16 %v6628
        %v7212 = vunpack.c.l.b16 %v6629
        %v7213 = vunpack.c.l.b16 %v6630
        %v7214 = vunpack.c.l.b16 %v6631
        %v7215 = vunpack.c.l.b16 %v6632
        %v7216 = vunpack.c.l.b16 %v6633
        %v7217 = vunpack.c.l.b16 %v6634
        %v7218 = vunpack.c.l.b16 %v6635
        %v7219 = vunpack.c.l.b16 %v6636
        %v7220 = vunpack.c.l.b16 %v6637
        %v7221 = vunpack.c.l.b16 %v6638
        %v7222 = vunpack.c.l.b16 %v6639
        %v7223 = vunpack.c.l.b16 %v6640
        %v7224 = vunpack.c.l.b16 %v6641
        %v7225 = vunpack.c.l.b16 %v6642
        %v7226 = vunpack.c.l.b16 %v6643
        %v7227 = vunpack.c.l.b16 %v6644
        %v7228 = vunpack.c.l.b16 %v6645
        %v7229 = vunpack.c.l.b16 %v6646
        %v7230 = vunpack.c.l.b16 %v6647
        %v7231 = vunpack.c.l.b16 %v6648
        %v7232 = vunpack.c.l.b16 %v6649
        %v7233 = vunpack.c.l.b16 %v6650
        %v7234 = vunpack.c.l.b16 %v6651
        %v7235 = vunpack.c.l.b16 %v6652
        %v7236 = vunpack.c.l.b16 %v6653
        %v7237 = vunpack.c.l.b16 %v6654
        %v7238 = vunpack.c.l.b16 %v6655
        %v7239 = vunpack.c.l.b16 %v6656
        %v7240 = vunpack.c.l.b16 %v6657
        %v7241 = vunpack.c.l.b16 %v6658
        %v7242 = vunpack.c.l.b16 %v6659
        %v7243 = vunpack.c.l.b16 %v6660
        %v7244 = vunpack.c.l.b16 %v6661
        %v7245 = vunpack.c.l.b16 %v6662
        %v7246 = vunpack.c.l.b16 %v6663
        %v7247 = vunpack.c.l.b16 %v6664
        %v7248 = vunpack.c.l.b16 %v6665
        %v7249 = vunpack.c.l.b16 %v6666
        %v7250 = vunpack.c.l.b16 %v6667
        %v7251 = vunpack.c.l.b16 %v6668
        %v7252 = vunpack.c.l.b16 %v6669
        %v7253 = vunpack.c.l.b16 %v6670
        %v7254 = vunpack.c.l.b16 %v6671
        %v7255 = vunpack.c.l.b16 %v6672
        %v7256 = vunpack.c.l.b16 %v6673
        %v7257 = vunpack.c.l.b16 %v6674
        %v7258 = vunpack.c.l.b16 %v6675
        %v7259 = vunpack.c.l.b16 %v6676
        %v7260 = vunpack.c.l.b16 %v6677
        %v7261 = vunpack.c.l.b16 %v6678
        %v7262 = vunpack.c.l.b16 %v6679
        %v7263 = vunpack.c.l.b16 %v6680
        %v7264 = vunpack.c.l.b16 %v6681
        %v7265 = vunpack.c.l.b16 %v6682
        %v7266 = vunpack.c.l.b16 %v6683
        %v7267 = vunpack.c.l.b16 %v6684
        %v7268 = vunpack.c.l.b16 %v6685
        %v7269 = vunpack.c.l.b16 %v6686
        %v7270 = vunpack.c.l.b16 %v6687
        %v7271 = vunpack.c.l.b16 %v6688
        %v7272 = vunpack.c.l.b16 %v6689
        %v7273 = vunpack.c.l.b16 %v6690
        %v7274 = vunpack.c.l.b16 %v6691
        %v7275 = vunpack.c.l.b16 %v6692
        %v7276 = vunpack.c.l.b16 %v6693
        %v7277 = vunpack.c.l.b16 %v6694
        %v7278 = vunpack.c.l.b16 %v6695
        %v7279 = vunpack.c.l.b16 %v6696
        %v7280 = vunpack.c.l.b16 %v6697
        %v7281 = vunpack.c.l.b16 %v6698
        %v7282 = vunpack.c.l.b16 %v6699
        %v7283 = vunpack.c.l.b16 %v6700
        %v7284 = vunpack.c.l.b16 %v6701
        %v7285 = vunpack.c.l.b16 %v6702
        %v7286 = vunpack.c.l.b16 %v6703
        %v7287 = vunpack.c.l.b16 %v6704
        %v7288 = vunpack.c.l.b16 %v6705
        %v7289 = vunpack.c.l.b16 %v6706
        %v7290 = vunpack.c.l.b16 %v6707
        %v7291 = vunpack.c.l.b16 %v6708
        %v7292 = vunpack.c.l.b16 %v6709
        %v7293 = vunpack.c.l.b16 %v6710
        %v7294 = vunpack.c.l.b16 %v6711
        %v7295 = vunpack.c.l.b16 %v6712
        %v7296 = vunpack.c.l.b16 %v6713
        %v7297 = vunpack.c.l.b16 %v6714
        %v7298 = vpack.c.b16 %v7011, %v7010
        %v7299 = vpack.c.b16 %v7013, %v7012
        %v7300 = vpack.c.b16 %v7015, %v7014
        %v7301 = vpack.c.b16 %v7017, %v7016
        %v7302 = vpack.c.b16 %v7019, %v7018
        %v7303 = vpack.c.b16 %v7021, %v7020
        %v7304 = vpack.c.b16 %v7023, %v7022
        %v7305 = vpack.c.b16 %v7025, %v7024
        %v7306 = vpack.c.b16 %v7027, %v7026
        %v7307 = vpack.c.b16 %v7029, %v7028
        %v7308 = vpack.c.b16 %v7031, %v7030
        %v7309 = vpack.c.b16 %v7033, %v7032
        %v7310 = vpack.c.b16 %v7035, %v7034
        %v7311 = vpack.c.b16 %v7037, %v7036
        %v7312 = vpack.c.b16 %v7039, %v7038
        %v7313 = vpack.c.b16 %v7041, %v7040
        %v7314 = vpack.c.b16 %v7043, %v7042
        %v7315 = vpack.c.b16 %v7045, %v7044
        %v7316 = vpack.c.b16 %v7047, %v7046
        %v7317 = vpack.c.b16 %v7049, %v7048
        %v7318 = vpack.c.b16 %v7051, %v7050
        %v7319 = vpack.c.b16 %v7053, %v7052
        %v7320 = vpack.c.b16 %v7055, %v7054
        %v7321 = vpack.c.b16 %v7057, %v7056
        %v7322 = vpack.c.b16 %v7059, %v7058
        %v7323 = vpack.c.b16 %v7061, %v7060
        %v7324 = vpack.c.b16 %v7063, %v7062
        %v7325 = vpack.c.b16 %v7065, %v7064
        %v7326 = vpack.c.b16 %v7067, %v7066
        %v7327 = vpack.c.b16 %v7069, %v7068
        %v7328 = vpack.c.b16 %v7071, %v7070
        %v7329 = vpack.c.b16 %v7073, %v7072
        %v7330 = vpack.c.b16 %v7075, %v7074
        %v7331 = vpack.c.b16 %v7077, %v7076
        %v7332 = vpack.c.b16 %v7079, %v7078
        %v7333 = vpack.c.b16 %v7081, %v7080
        %v7334 = vpack.c.b16 %v7083, %v7082
        %v7335 = vpack.c.b16 %v7085, %v7084
        %v7336 = vpack.c.b16 %v7087, %v7086
        %v7337 = vpack.c.b16 %v7089, %v7088
        %v7338 = vpack.c.b16 %v7091, %v7090
        %v7339 = vpack.c.b16 %v7093, %v7092
        %v7340 = vpack.c.b16 %v7095, %v7094
        %v7341 = vpack.c.b16 %v7097, %v7096
        %v7342 = vpack.c.b16 %v7099, %v7098
        %v7343 = vpack.c.b16 %v7101, %v7100
        %v7344 = vpack.c.b16 %v7103, %v7102
        %v7345 = vpack.c.b16 %v7105, %v7104
        %v7346 = vpack.c.b16 %v7107, %v7106
        %v7347 = vpack.c.b16 %v7109, %v7108
        %v7348 = vpack.c.b16 %v7111, %v7110
        %v7349 = vpack.c.b16 %v7113, %v7112
        %v7350 = vpack.c.b16 %v7115, %v7114
        %v7351 = vpack.c.b16 %v7117, %v7116
        %v7352 = vpack.c.b16 %v7119, %v7118
        %v7353 = vpack.c.b16 %v7121, %v7120
        %v7354 = vpack.c.b16 %v7123, %v7122
        %v7355 = vpack.c.b16 %v7125, %v7124
        %v7356 = vpack.c.b16 %v7127, %v7126
        %v7357 = vpack.c.b16 %v7129, %v7128
        %v7358 = vpack.c.b16 %v7131, %v7130
        %v7359 = vpack.c.b16 %v7133, %v7132
        %v7360 = vpack.c.b16 %v7135, %v7134
        %v7361 = vpack.c.b16 %v7137, %v7136
        %v7362 = vpack.c.b16 %v7139, %v7138
        %v7363 = vpack.c.b16 %v7141, %v7140
        %v7364 = vpack.c.b16 %v7143, %v7142
        %v7365 = vpack.c.b16 %v7145, %v7144
        %v7366 = vpack.c.b16 %v7147, %v7146
        %v7367 = vpack.c.b16 %v7149, %v7148
        %v7368 = vpack.c.b16 %v7151, %v7150
        %v7369 = vpack.c.b16 %v7153, %v7152
        %v7370 = vpack.c.b16 %v7155, %v7154
        %v7371 = vpack.c.b16 %v7157, %v7156
        %v7372 = vpack.c.b16 %v7159, %v7158
        %v7373 = vpack.c.b16 %v7161, %v7160
        %v7374 = vpack.c.b16 %v7163, %v7162
        %v7375 = vpack.c.b16 %v7165, %v7164
        %v7376 = vpack.c.b16 %v7167, %v7166
        %v7377 = vpack.c.b16 %v7169, %v7168
        %v7378 = vpack.c.b16 %v7171, %v7170
        %v7379 = vpack.c.b16 %v7173, %v7172
        %v7380 = vpack.c.b16 %v7175, %v7174
        %v7381 = vpack.c.b16 %v7177, %v7176
        %v7382 = vpack.c.b16 %v7179, %v7178
        %v7383 = vpack.c.b16 %v7181, %v7180
        %v7384 = vpack.c.b16 %v7183, %v7182
        %v7385 = vpack.c.b16 %v7185, %v7184
        %v7386 = vpack.c.b16 %v7187, %v7186
        %v7387 = vpack.c.b16 %v7189, %v7188
        %v7388 = vpack.c.b16 %v7191, %v7190
        %v7389 = vpack.c.b16 %v7193, %v7192
        %v7390 = vpack.c.b16 %v7195, %v7194
        %v7391 = vpack.c.b16 %v7197, %v7196
        %v7392 = vpack.c.b16 %v7199, %v7198
        %v7393 = vpack.c.b16 %v7201, %v7200
        %v7394 = vpack.c.b16 %v7203, %v7202
        %v7395 = vpack.c.b16 %v7205, %v7204
        %v7396 = vpack.c.b16 %v7207, %v7206
        %v7397 = vpack.c.b16 %v7209, %v7208
        %v7398 = vpack.c.b16 %v7211, %v7210
        %v7399 = vpack.c.b16 %v7213, %v7212
        %v7400 = vpack.c.b16 %v7215, %v7214
        %v7401 = vpack.c.b16 %v7217, %v7216
        %v7402 = vpack.c.b16 %v7219, %v7218
        %v7403 = vpack.c.b16 %v7221, %v7220
        %v7404 = vpack.c.b16 %v7223, %v7222
        %v7405 = vpack.c.b16 %v7225, %v7224
        %v7406 = vpack.c.b16 %v7227, %v7226
        %v7407 = vpack.c.b16 %v7229, %v7228
        %v7408 = vpack.c.b16 %v7231, %v7230
        %v7409 = vpack.c.b16 %v7233, %v7232
        %v7410 = vpack.c.b16 %v7235, %v7234
        %v7411 = vpack.c.b16 %v7237, %v7236
        %v7412 = vpack.c.b16 %v7239, %v7238
        %v7413 = vpack.c.b16 %v7241, %v7240
        %v7414 = vpack.c.b16 %v7243, %v7242
        %v7415 = vpack.c.b16 %v7245, %v7244
        %v7416 = vpack.c.b16 %v7247, %v7246
        %v7417 = vpack.c.b16 %v7249, %v7248
        %v7418 = vpack.c.b16 %v7251, %v7250
        %v7419 = vpack.c.b16 %v7253, %v7252
        %v7420 = vpack.c.b16 %v7255, %v7254
        %v7421 = vpack.c.b16 %v7257, %v7256
        %v7422 = vpack.c.b16 %v7259, %v7258
        %v7423 = vpack.c.b16 %v7261, %v7260
        %v7424 = vpack.c.b16 %v7263, %v7262
        %v7425 = vpack.c.b16 %v7265, %v7264
        %v7426 = vpack.c.b16 %v7267, %v7266
        %v7427 = vpack.c.b16 %v7269, %v7268
        %v7428 = vpack.c.b16 %v7271, %v7270
        %v7429 = vpack.c.b16 %v7273, %v7272
        %v7430 = vpack.c.b16 %v7275, %v7274
        %v7431 = vpack.c.b16 %v7277, %v7276
        %v7432 = vpack.c.b16 %v7279, %v7278
        %v7433 = vpack.c.b16 %v7281, %v7280
        %v7434 = vpack.c.b16 %v7283, %v7282
        %v7435 = vpack.c.b16 %v7285, %v7284
        %v7436 = vpack.c.b16 %v7287, %v7286
        %v7437 = vpack.c.b16 %v7289, %v7288
        %v7438 = vpack.c.b16 %v7291, %v7290
        %v7439 = vpack.c.b16 %v7293, %v7292
        %v7440 = vpack.c.b16 %v7295, %v7294
        %v7441 = vpack.c.b16 %v7297, %v7296
        %7586 = vmatprep.subr.bf16.mxu0 0
        %7587 = vmatpush1.bf16.msra.mxu0 %v7298
        %7588 = vmatprep.subr.bf16.mxu0 0
        %7589 = vmatpush1.bf16.msra.mxu0 %v7299
        %7590 = vmatprep.subr.bf16.mxu0 0
        %7591 = vmatpush1.bf16.msra.mxu0 %v7300
        %7592 = vmatprep.subr.bf16.mxu0 0
        %7593 = vmatpush1.bf16.msra.mxu0 %v7301
        %7594 = vmatprep.subr.bf16.mxu0 0
        %7595 = vmatpush1.bf16.msra.mxu0 %v7302
        %7596 = vmatprep.subr.bf16.mxu0 0
        %7597 = vmatpush1.bf16.msra.mxu0 %v7303
        %7598 = vmatprep.subr.bf16.mxu0 0
        %7599 = vmatpush1.bf16.msra.mxu0 %v7304
        %7600 = vmatprep.subr.bf16.mxu0 0
        %7601 = vmatpush1.bf16.msra.mxu0 %v7305
        %7602 = vmatprep.subr.bf16.mxu0 0
        %7603 = vmatpush1.bf16.msra.mxu0 %v7306
        %7604 = vmatprep.subr.bf16.mxu0 0
        %7605 = vmatpush1.bf16.msra.mxu0 %v7307
        %7606 = vmatprep.subr.bf16.mxu0 0
        %7607 = vmatpush1.bf16.msra.mxu0 %v7308
        %7608 = vmatprep.subr.bf16.mxu0 0
        %7609 = vmatpush1.bf16.msra.mxu0 %v7309
        %7610 = vmatprep.subr.bf16.mxu0 0
        %7611 = vmatpush1.bf16.msra.mxu0 %v7310
        %7612 = vmatprep.subr.bf16.mxu0 0
        %7613 = vmatpush1.bf16.msra.mxu0 %v7311
        %7614 = vmatprep.subr.bf16.mxu0 0
        %7615 = vmatpush1.bf16.msra.mxu0 %v7312
        %7616 = vmatprep.subr.bf16.mxu0 0
        %7617 = vmatpush1.bf16.msra.mxu0 %v7313
        %7618 = vmatprep.mubr.bf16.mxu0 %v6392
        %7619 = vmatmul.mubr.bf16.gmra.mrb[0].mxu0 %v6391
        %v7620 = vpop.f32.mrb[0].mxu0
        %v7621 = vadd.f32 %v6720, %v7620
        %v7622 = vpop.f32.mrb[0].mxu0
        %v7623 = vpop.f32.mrb[0].mxu0
        %v7624 = vadd.f32 %v6720, %v7623
        %v7625 = vpop.f32.mrb[0].mxu0
        %7626 = vmatprep.mubr.bf16.mxu0 %v6410
        %7627 = vmatmul.mubr.bf16.gmra.mrb[0].mxu0 %v6409
        %v7628 = vpop.f32.mrb[0].mxu0
        %v7629 = vadd.f32 %v6720, %v7628
        %v7630 = vpop.f32.mrb[0].mxu0
        %v7631 = vpop.f32.mrb[0].mxu0
        %v7632 = vadd.f32 %v6720, %v7631
        %v7633 = vpop.f32.mrb[0].mxu0
        %7634 = vdwg.mxu0
        %7635 = vmatprep.subr.bf16.mxu0 0
        %7636 = vmatpush1.bf16.msra.mxu0 %v7314
        %7637 = vmatprep.subr.bf16.mxu0 0
        %7638 = vmatpush1.bf16.msra.mxu0 %v7315
        %7639 = vmatprep.subr.bf16.mxu0 0
        %7640 = vmatpush1.bf16.msra.mxu0 %v7316
        %7641 = vmatprep.subr.bf16.mxu0 0
        %7642 = vmatpush1.bf16.msra.mxu0 %v7317
        %7643 = vmatprep.subr.bf16.mxu0 0
        %7644 = vmatpush1.bf16.msra.mxu0 %v7318
        %7645 = vmatprep.subr.bf16.mxu0 0
        %7646 = vmatpush1.bf16.msra.mxu0 %v7319
        %7647 = vmatprep.subr.bf16.mxu0 0
        %7648 = vmatpush1.bf16.msra.mxu0 %v7320
        %7649 = vmatprep.subr.bf16.mxu0 0
        %7650 = vmatpush1.bf16.msra.mxu0 %v7321
        %7651 = vmatprep.subr.bf16.mxu0 0
        %7652 = vmatpush1.bf16.msra.mxu0 %v7322
        %7653 = vmatprep.subr.bf16.mxu0 0
        %7654 = vmatpush1.bf16.msra.mxu0 %v7323
        %7655 = vmatprep.subr.bf16.mxu0 0
        %7656 = vmatpush1.bf16.msra.mxu0 %v7324
        %7657 = vmatprep.subr.bf16.mxu0 0
        %7658 = vmatpush1.bf16.msra.mxu0 %v7325
        %7659 = vmatprep.subr.bf16.mxu0 0
        %7660 = vmatpush1.bf16.msra.mxu0 %v7326
        %7661 = vmatprep.subr.bf16.mxu0 0
        %7662 = vmatpush1.bf16.msra.mxu0 %v7327
        %7663 = vmatprep.subr.bf16.mxu0 0
        %7664 = vmatpush1.bf16.msra.mxu0 %v7328
        %7665 = vmatprep.subr.bf16.mxu0 0
        %7666 = vmatpush1.bf16.msra.mxu0 %v7329
        %7667 = vmatprep.mubr.bf16.mxu0 %v6394
        %7668 = vmatmul.mubr.bf16.gmra.mrb[0].mxu0 %v6393
        %v7669 = vpop.f32.mrb[0].mxu0
        %v7670 = vadd.f32 %v7621, %v7669
        %v7671 = vpop.f32.mrb[0].mxu0
        %v7672 = vpop.f32.mrb[0].mxu0
        %v7673 = vadd.f32 %v7624, %v7672
        %v7674 = vpop.f32.mrb[0].mxu0
        %7675 = vmatprep.mubr.bf16.mxu0 %v6412
        %7676 = vmatmul.mubr.bf16.gmra.mrb[0].mxu0 %v6411
        %v7677 = vpop.f32.mrb[0].mxu0
        %v7678 = vadd.f32 %v7629, %v7677
        %v7679 = vpop.f32.mrb[0].mxu0
        %v7680 = vpop.f32.mrb[0].mxu0
        %v7681 = vadd.f32 %v7632, %v7680
        %v7682 = vpop.f32.mrb[0].mxu0
        %7683 = vdwg.mxu0
        %7684 = vmatprep.subr.bf16.mxu0 0
        %7685 = vmatpush1.bf16.msra.mxu0 %v7330
        %7686 = vmatprep.subr.bf16.mxu0 0
        %7687 = vmatpush1.bf16.msra.mxu0 %v7331
        %7688 = vmatprep.subr.bf16.mxu0 0
        %7689 = vmatpush1.bf16.msra.mxu0 %v7332
        %7690 = vmatprep.subr.bf16.mxu0 0
        %7691 = vmatpush1.bf16.msra.mxu0 %v7333
        %7692 = vmatprep.subr.bf16.mxu0 0
        %7693 = vmatpush1.bf16.msra.mxu0 %v7334
        %7694 = vmatprep.subr.bf16.mxu0 0
        %7695 = vmatpush1.bf16.msra.mxu0 %v7335
        %7696 = vmatprep.subr.bf16.mxu0 0
        %7697 = vmatpush1.bf16.msra.mxu0 %v7336
        %7698 = vmatprep.subr.bf16.mxu0 0
        %7699 = vmatpush1.bf16.msra.mxu0 %v7337
        %7700 = vmatprep.subr.bf16.mxu0 0
        %7701 = vmatpush1.bf16.msra.mxu0 %v7338
        %7702 = vmatprep.subr.bf16.mxu0 0
        %7703 = vmatpush1.bf16.msra.mxu0 %v7339
        %7704 = vmatprep.subr.bf16.mxu0 0
        %7705 = vmatpush1.bf16.msra.mxu0 %v7340
        %7706 = vmatprep.subr.bf16.mxu0 0
        %7707 = vmatpush1.bf16.msra.mxu0 %v7341
        %7708 = vmatprep.subr.bf16.mxu0 0
        %7709 = vmatpush1.bf16.msra.mxu0 %v7342
        %7710 = vmatprep.subr.bf16.mxu0 0
        %7711 = vmatpush1.bf16.msra.mxu0 %v7343
        %7712 = vmatprep.subr.bf16.mxu0 0
        %7713 = vmatpush1.bf16.msra.mxu0 %v7344
        %7714 = vmatprep.subr.bf16.mxu0 0
        %7715 = vmatpush1.bf16.msra.mxu0 %v7345
        %7716 = vmatprep.mubr.bf16.mxu0 %v6396
        %7717 = vmatmul.mubr.bf16.gmra.mrb[0].mxu0 %v6395
        %v7718 = vpop.f32.mrb[0].mxu0
        %v7719 = vadd.f32 %v7670, %v7718
        %v7720 = vpop.f32.mrb[0].mxu0
        %v7721 = vpop.f32.mrb[0].mxu0
        %v7722 = vadd.f32 %v7673, %v7721
        %v7723 = vpop.f32.mrb[0].mxu0
        %7724 = vmatprep.mubr.bf16.mxu0 %v6414
        %7725 = vmatmul.mubr.bf16.gmra.mrb[0].mxu0 %v6413
        %v7726 = vpop.f32.mrb[0].mxu0
        %v7727 = vadd.f32 %v7678, %v7726
        %v7728 = vpop.f32.mrb[0].mxu0
        %v7729 = vpop.f32.mrb[0].mxu0
        %v7730 = vadd.f32 %v7681, %v7729
        %v7731 = vpop.f32.mrb[0].mxu0
        %7732 = vdwg.mxu0
        %7733 = vmatprep.subr.bf16.mxu0 0
        %7734 = vmatpush1.bf16.msra.mxu0 %v7346
        %7735 = vmatprep.subr.bf16.mxu0 0
        %7736 = vmatpush1.bf16.msra.mxu0 %v7347
        %7737 = vmatprep.subr.bf16.mxu0 0
        %7738 = vmatpush1.bf16.msra.mxu0 %v7348
        %7739 = vmatprep.subr.bf16.mxu0 0
        %7740 = vmatpush1.bf16.msra.mxu0 %v7349
        %7741 = vmatprep.subr.bf16.mxu0 0
        %7742 = vmatpush1.bf16.msra.mxu0 %v7350
        %7743 = vmatprep.subr.bf16.mxu0 0
        %7744 = vmatpush1.bf16.msra.mxu0 %v7351
        %7745 = vmatprep.subr.bf16.mxu0 0
        %7746 = vmatpush1.bf16.msra.mxu0 %v7352
        %7747 = vmatprep.subr.bf16.mxu0 0
        %7748 = vmatpush1.bf16.msra.mxu0 %v7353
        %7749 = vmatprep.subr.bf16.mxu0 0
        %7750 = vmatpush1.bf16.msra.mxu0 %v7354
        %7751 = vmatprep.subr.bf16.mxu0 0
        %7752 = vmatpush1.bf16.msra.mxu0 %v7355
        %7753 = vmatprep.subr.bf16.mxu0 0
        %7754 = vmatpush1.bf16.msra.mxu0 %v7356
        %7755 = vmatprep.subr.bf16.mxu0 0
        %7756 = vmatpush1.bf16.msra.mxu0 %v7357
        %7757 = vmatprep.subr.bf16.mxu0 0
        %7758 = vmatpush1.bf16.msra.mxu0 %v7358
        %7759 = vmatprep.subr.bf16.mxu0 0
        %7760 = vmatpush1.bf16.msra.mxu0 %v7359
        %7761 = vmatprep.subr.bf16.mxu0 0
        %7762 = vmatpush1.bf16.msra.mxu0 %v7360
        %7763 = vmatprep.subr.bf16.mxu0 0
        %7764 = vmatpush1.bf16.msra.mxu0 %v7361
        %7765 = vmatprep.mubr.bf16.mxu0 %v6398
        %7766 = vmatmul.mubr.bf16.gmra.mrb[0].mxu0 %v6397
        %v7767 = vpop.f32.mrb[0].mxu0
        %v7768 = vadd.f32 %v7719, %v7767
        %v7769 = vpop.f32.mrb[0].mxu0
        %v7770 = vpop.f32.mrb[0].mxu0
        %v7771 = vadd.f32 %v7722, %v7770
        %v7772 = vpop.f32.mrb[0].mxu0
        %7773 = vmatprep.mubr.bf16.mxu0 %v6416
        %7774 = vmatmul.mubr.bf16.gmra.mrb[0].mxu0 %v6415
        %v7775 = vpop.f32.mrb[0].mxu0
        %v7776 = vadd.f32 %v7727, %v7775
        %v7777 = vpop.f32.mrb[0].mxu0
        %v7778 = vpop.f32.mrb[0].mxu0
        %v7779 = vadd.f32 %v7730, %v7778
        %v7780 = vpop.f32.mrb[0].mxu0
        %7781 = vdwg.mxu0
        %7782 = vmatprep.subr.bf16.mxu0 0
        %7783 = vmatpush1.bf16.msra.mxu0 %v7362
        %7784 = vmatprep.subr.bf16.mxu0 0
        %7785 = vmatpush1.bf16.msra.mxu0 %v7363
        %7786 = vmatprep.subr.bf16.mxu0 0
        %7787 = vmatpush1.bf16.msra.mxu0 %v7364
        %7788 = vmatprep.subr.bf16.mxu0 0
        %7789 = vmatpush1.bf16.msra.mxu0 %v7365
        %7790 = vmatprep.subr.bf16.mxu0 0
        %7791 = vmatpush1.bf16.msra.mxu0 %v7366
        %7792 = vmatprep.subr.bf16.mxu0 0
        %7793 = vmatpush1.bf16.msra.mxu0 %v7367
        %7794 = vmatprep.subr.bf16.mxu0 0
        %7795 = vmatpush1.bf16.msra.mxu0 %v7368
        %7796 = vmatprep.subr.bf16.mxu0 0
        %7797 = vmatpush1.bf16.msra.mxu0 %v7369
        %7798 = vmatprep.subr.bf16.mxu0 0
        %7799 = vmatpush1.bf16.msra.mxu0 %v7370
        %7800 = vmatprep.subr.bf16.mxu0 0
        %7801 = vmatpush1.bf16.msra.mxu0 %v7371
        %7802 = vmatprep.subr.bf16.mxu0 0
        %7803 = vmatpush1.bf16.msra.mxu0 %v7372
        %7804 = vmatprep.subr.bf16.mxu0 0
        %7805 = vmatpush1.bf16.msra.mxu0 %v7373
        %7806 = vmatprep.subr.bf16.mxu0 0
        %7807 = vmatpush1.bf16.msra.mxu0 %v7374
        %7808 = vmatprep.subr.bf16.mxu0 0
        %7809 = vmatpush1.bf16.msra.mxu0 %v7375
        %7810 = vmatprep.subr.bf16.mxu0 0
        %7811 = vmatpush1.bf16.msra.mxu0 %v7376
        %7812 = vmatprep.subr.bf16.mxu0 0
        %7813 = vmatpush1.bf16.msra.mxu0 %v7377
        %7814 = vmatprep.mubr.bf16.mxu0 %v6400
        %7815 = vmatmul.mubr.bf16.gmra.mrb[0].mxu0 %v6399
        %v7816 = vpop.f32.mrb[0].mxu0
        %v7817 = vadd.f32 %v7768, %v7816
        %v7818 = vpop.f32.mrb[0].mxu0
        %v7819 = vpop.f32.mrb[0].mxu0
        %v7820 = vadd.f32 %v7771, %v7819
        %v7821 = vpop.f32.mrb[0].mxu0
        %7822 = vmatprep.mubr.bf16.mxu0 %v6418
        %7823 = vmatmul.mubr.bf16.gmra.mrb[0].mxu0 %v6417
        %v7824 = vpop.f32.mrb[0].mxu0
        %v7825 = vadd.f32 %v7776, %v7824
        %v7826 = vpop.f32.mrb[0].mxu0
        %v7827 = vpop.f32.mrb[0].mxu0
        %v7828 = vadd.f32 %v7779, %v7827
        %v7829 = vpop.f32.mrb[0].mxu0
        %7830 = vdwg.mxu0
        %7831 = vmatprep.subr.bf16.mxu0 0
        %7832 = vmatpush1.bf16.msra.mxu0 %v7378
        %7833 = vmatprep.subr.bf16.mxu0 0
        %7834 = vmatpush1.bf16.msra.mxu0 %v7379
        %7835 = vmatprep.subr.bf16.mxu0 0
        %7836 = vmatpush1.bf16.msra.mxu0 %v7380
        %7837 = vmatprep.subr.bf16.mxu0 0
        %7838 = vmatpush1.bf16.msra.mxu0 %v7381
        %7839 = vmatprep.subr.bf16.mxu0 0
        %7840 = vmatpush1.bf16.msra.mxu0 %v7382
        %7841 = vmatprep.subr.bf16.mxu0 0
        %7842 = vmatpush1.bf16.msra.mxu0 %v7383
        %7843 = vmatprep.subr.bf16.mxu0 0
        %7844 = vmatpush1.bf16.msra.mxu0 %v7384
        %7845 = vmatprep.subr.bf16.mxu0 0
        %7846 = vmatpush1.bf16.msra.mxu0 %v7385
        %7847 = vmatprep.subr.bf16.mxu0 0
        %7848 = vmatpush1.bf16.msra.mxu0 %v7386
        %7849 = vmatprep.subr.bf16.mxu0 0
        %7850 = vmatpush1.bf16.msra.mxu0 %v7387
        %7851 = vmatprep.subr.bf16.mxu0 0
        %7852 = vmatpush1.bf16.msra.mxu0 %v7388
        %7853 = vmatprep.subr.bf16.mxu0 0
        %7854 = vmatpush1.bf16.msra.mxu0 %v7389
        %7855 = vmatprep.subr.bf16.mxu0 0
        %7856 = vmatpush1.bf16.msra.mxu0 %v7390
        %7857 = vmatprep.subr.bf16.mxu0 0
        %7858 = vmatpush1.bf16.msra.mxu0 %v7391
        %7859 = vmatprep.subr.bf16.mxu0 0
        %7860 = vmatpush1.bf16.msra.mxu0 %v7392
        %7861 = vmatprep.subr.bf16.mxu0 0
        %7862 = vmatpush1.bf16.msra.mxu0 %v7393
        %7863 = vmatprep.mubr.bf16.mxu0 %v6402
        %7864 = vmatmul.mubr.bf16.gmra.mrb[0].mxu0 %v6401
        %v7865 = vpop.f32.mrb[0].mxu0
        %v7866 = vadd.f32 %v7817, %v7865
        %v7867 = vpop.f32.mrb[0].mxu0
        %v7868 = vpop.f32.mrb[0].mxu0
        %v7869 = vadd.f32 %v7820, %v7868
        %v7870 = vpop.f32.mrb[0].mxu0
        %7871 = vmatprep.mubr.bf16.mxu0 %v6420
        %7872 = vmatmul.mubr.bf16.gmra.mrb[0].mxu0 %v6419
        %v7873 = vpop.f32.mrb[0].mxu0
        %v7874 = vadd.f32 %v7825, %v7873
        %v7875 = vpop.f32.mrb[0].mxu0
        %v7876 = vpop.f32.mrb[0].mxu0
        %v7877 = vadd.f32 %v7828, %v7876
        %v7878 = vpop.f32.mrb[0].mxu0
        %7879 = vdwg.mxu0
        %7880 = vmatprep.subr.bf16.mxu0 0
        %7881 = vmatpush1.bf16.msra.mxu0 %v7394
        %7882 = vmatprep.subr.bf16.mxu0 0
        %7883 = vmatpush1.bf16.msra.mxu0 %v7395
        %7884 = vmatprep.subr.bf16.mxu0 0
        %7885 = vmatpush1.bf16.msra.mxu0 %v7396
        %7886 = vmatprep.subr.bf16.mxu0 0
        %7887 = vmatpush1.bf16.msra.mxu0 %v7397
        %7888 = vmatprep.subr.bf16.mxu0 0
        %7889 = vmatpush1.bf16.msra.mxu0 %v7398
        %7890 = vmatprep.subr.bf16.mxu0 0
        %7891 = vmatpush1.bf16.msra.mxu0 %v7399
        %7892 = vmatprep.subr.bf16.mxu0 0
        %7893 = vmatpush1.bf16.msra.mxu0 %v7400
        %7894 = vmatprep.subr.bf16.mxu0 0
        %7895 = vmatpush1.bf16.msra.mxu0 %v7401
        %7896 = vmatprep.subr.bf16.mxu0 0
        %7897 = vmatpush1.bf16.msra.mxu0 %v7402
        %7898 = vmatprep.subr.bf16.mxu0 0
        %7899 = vmatpush1.bf16.msra.mxu0 %v7403
        %7900 = vmatprep.subr.bf16.mxu0 0
        %7901 = vmatpush1.bf16.msra.mxu0 %v7404
        %7902 = vmatprep.subr.bf16.mxu0 0
        %7903 = vmatpush1.bf16.msra.mxu0 %v7405
        %7904 = vmatprep.subr.bf16.mxu0 0
        %7905 = vmatpush1.bf16.msra.mxu0 %v7406
        %7906 = vmatprep.subr.bf16.mxu0 0
        %7907 = vmatpush1.bf16.msra.mxu0 %v7407
        %7908 = vmatprep.subr.bf16.mxu0 0
        %7909 = vmatpush1.bf16.msra.mxu0 %v7408
        %7910 = vmatprep.subr.bf16.mxu0 0
        %7911 = vmatpush1.bf16.msra.mxu0 %v7409
        %7912 = vmatprep.mubr.bf16.mxu0 %v6404
        %7913 = vmatmul.mubr.bf16.gmra.mrb[0].mxu0 %v6403
        %v7914 = vpop.f32.mrb[0].mxu0
        %v7915 = vadd.f32 %v7866, %v7914
        %v7916 = vpop.f32.mrb[0].mxu0
        %v7917 = vpop.f32.mrb[0].mxu0
        %v7918 = vadd.f32 %v7869, %v7917
        %v7919 = vpop.f32.mrb[0].mxu0
        %7920 = vmatprep.mubr.bf16.mxu0 %v6422
        %7921 = vmatmul.mubr.bf16.gmra.mrb[0].mxu0 %v6421
        %v7922 = vpop.f32.mrb[0].mxu0
        %v7923 = vadd.f32 %v7874, %v7922
        %v7924 = vpop.f32.mrb[0].mxu0
        %v7925 = vpop.f32.mrb[0].mxu0
        %v7926 = vadd.f32 %v7877, %v7925
        %v7927 = vpop.f32.mrb[0].mxu0
        %7928 = vdwg.mxu0
        %7929 = vmatprep.subr.bf16.mxu0 0
        %7930 = vmatpush1.bf16.msra.mxu0 %v7410
        %7931 = vmatprep.subr.bf16.mxu0 0
        %7932 = vmatpush1.bf16.msra.mxu0 %v7411
        %7933 = vmatprep.subr.bf16.mxu0 0
        %7934 = vmatpush1.bf16.msra.mxu0 %v7412
        %7935 = vmatprep.subr.bf16.mxu0 0
        %7936 = vmatpush1.bf16.msra.mxu0 %v7413
        %7937 = vmatprep.subr.bf16.mxu0 0
        %7938 = vmatpush1.bf16.msra.mxu0 %v7414
        %7939 = vmatprep.subr.bf16.mxu0 0
        %7940 = vmatpush1.bf16.msra.mxu0 %v7415
        %7941 = vmatprep.subr.bf16.mxu0 0
        %7942 = vmatpush1.bf16.msra.mxu0 %v7416
        %7943 = vmatprep.subr.bf16.mxu0 0
        %7944 = vmatpush1.bf16.msra.mxu0 %v7417
        %7945 = vmatprep.subr.bf16.mxu0 0
        %7946 = vmatpush1.bf16.msra.mxu0 %v7418
        %7947 = vmatprep.subr.bf16.mxu0 0
        %7948 = vmatpush1.bf16.msra.mxu0 %v7419
        %7949 = vmatprep.subr.bf16.mxu0 0
        %7950 = vmatpush1.bf16.msra.mxu0 %v7420
        %7951 = vmatprep.subr.bf16.mxu0 0
        %7952 = vmatpush1.bf16.msra.mxu0 %v7421
        %7953 = vmatprep.subr.bf16.mxu0 0
        %7954 = vmatpush1.bf16.msra.mxu0 %v7422
        %7955 = vmatprep.subr.bf16.mxu0 0
        %7956 = vmatpush1.bf16.msra.mxu0 %v7423
        %7957 = vmatprep.subr.bf16.mxu0 0
        %7958 = vmatpush1.bf16.msra.mxu0 %v7424
        %7959 = vmatprep.subr.bf16.mxu0 0
        %7960 = vmatpush1.bf16.msra.mxu0 %v7425
        %7961 = vmatprep.mubr.bf16.mxu0 %v6406
        %7962 = vmatmul.mubr.bf16.gmra.mrb[0].mxu0 %v6405
        %v7963 = vpop.f32.mrb[0].mxu0
        %v7964 = vadd.f32 %v7915, %v7963
        %v7965 = vpop.f32.mrb[0].mxu0
        %v7966 = vpop.f32.mrb[0].mxu0
        %v7967 = vadd.f32 %v7918, %v7966
        %v7968 = vpop.f32.mrb[0].mxu0
        %7969 = vmatprep.mubr.bf16.mxu0 %v6424
        %7970 = vmatmul.mubr.bf16.gmra.mrb[0].mxu0 %v6423
        %v7971 = vpop.f32.mrb[0].mxu0
        %v7972 = vadd.f32 %v7923, %v7971
        %v7973 = vpop.f32.mrb[0].mxu0
        %v7974 = vpop.f32.mrb[0].mxu0
        %v7975 = vadd.f32 %v7926, %v7974
        %v7976 = vpop.f32.mrb[0].mxu0
        %7977 = vdwg.mxu0
        %7978 = vmatprep.subr.bf16.mxu0 0
        %7979 = vmatpush1.bf16.msra.mxu0 %v7426
        %7980 = vmatprep.subr.bf16.mxu0 0
        %7981 = vmatpush1.bf16.msra.mxu0 %v7427
        %7982 = vmatprep.subr.bf16.mxu0 0
        %7983 = vmatpush1.bf16.msra.mxu0 %v7428
        %7984 = vmatprep.subr.bf16.mxu0 0
        %7985 = vmatpush1.bf16.msra.mxu0 %v7429
        %7986 = vmatprep.subr.bf16.mxu0 0
        %7987 = vmatpush1.bf16.msra.mxu0 %v7430
        %7988 = vmatprep.subr.bf16.mxu0 0
        %7989 = vmatpush1.bf16.msra.mxu0 %v7431
        %7990 = vmatprep.subr.bf16.mxu0 0
        %7991 = vmatpush1.bf16.msra.mxu0 %v7432
        %7992 = vmatprep.subr.bf16.mxu0 0
        %7993 = vmatpush1.bf16.msra.mxu0 %v7433
        %7994 = vmatprep.subr.bf16.mxu0 0
        %7995 = vmatpush1.bf16.msra.mxu0 %v7434
        %7996 = vmatprep.subr.bf16.mxu0 0
        %7997 = vmatpush1.bf16.msra.mxu0 %v7435
        %7998 = vmatprep.subr.bf16.mxu0 0
        %7999 = vmatpush1.bf16.msra.mxu0 %v7436
        %8000 = vmatprep.subr.bf16.mxu0 0
        %8001 = vmatpush1.bf16.msra.mxu0 %v7437
        %8002 = vmatprep.subr.bf16.mxu0 0
        %8003 = vmatpush1.bf16.msra.mxu0 %v7438
        %8004 = vmatprep.subr.bf16.mxu0 0
        %8005 = vmatpush1.bf16.msra.mxu0 %v7439
        %8006 = vmatprep.subr.bf16.mxu0 0
        %8007 = vmatpush1.bf16.msra.mxu0 %v7440
        %8008 = vmatprep.subr.bf16.mxu0 0
        %8009 = vmatpush1.bf16.msra.mxu0 %v7441
        %8010 = vmatprep.mubr.bf16.mxu0 %v6408
        %8011 = vmatmul.mubr.bf16.gmra.mrb[0].mxu0 %v6407
        %v8012 = vpop.f32.mrb[0].mxu0
        %v8013 = vadd.f32 %v7964, %v8012
        %v8014 = vpop.f32.mrb[0].mxu0
        %v8015 = vpop.f32.mrb[0].mxu0
        %v8016 = vadd.f32 %v7967, %v8015
        %v8017 = vpop.f32.mrb[0].mxu0
        %8018 = vmatprep.mubr.bf16.mxu0 %v6426
        %8019 = vmatmul.mubr.bf16.gmra.mrb[0].mxu0 %v6425
        %v8020 = vpop.f32.mrb[0].mxu0
        %v8021 = vadd.f32 %v7972, %v8020
        %v8022 = vpop.f32.mrb[0].mxu0
        %v8023 = vpop.f32.mrb[0].mxu0
        %v8024 = vadd.f32 %v7975, %v8023
        %v8025 = vpop.f32.mrb[0].mxu0
        %8026 = vdwg.mxu0
        %v8027 = vmax.f32 %v8013, 0.0
        %v8028 = vmax.f32 %v8016, 0.0
        %v8029 = vmax.f32 %v8021, 0.0
        %v8030 = vmax.f32 %v8024, 0.0
        %v8031 = vpack.c.bf16 %v8028, %v8027
        %v8032 = vpack.c.bf16 %v8030, %v8029
        %v8033 = vld [vmem:[#allocation8] sm:$0xf]
        %v8034 = vld [vmem:[#allocation8 + $0x4] sm:$0xf]
        %v8035 = vld [vmem:[#allocation8 + $0x8] sm:$0xf]
        %v8036 = vld [vmem:[#allocation8 + $0xc] sm:$0xf]
        %v8037 = vld [vmem:[#allocation8 + $0x10] sm:$0xf]
        %v8038 = vld [vmem:[#allocation8 + $0x14] sm:$0xf]
        %v8039 = vld [vmem:[#allocation8 + $0x18] sm:$0xf]
        %v8040 = vld [vmem:[#allocation8 + $0x1c] sm:$0xf]
        %v8041 = vld [vmem:[#allocation8 + $0x20] sm:$0xf]
        %v8042 = vld [vmem:[#allocation8 + $0x24] sm:$0xf]
        %v8043 = vld [vmem:[#allocation8 + $0x28] sm:$0x1]
        %v8055 = vunpack.c.l.b16 %v8033
        %v8056 = vunpack.c.l.b16 %v8034
        %v8057 = vunpack.c.l.b16 %v8035
        %v8058 = vunpack.c.l.b16 %v8036
        %v8059 = vunpack.c.l.b16 %v8037
        %v8060 = vunpack.c.l.b16 %v8038
        %v8061 = vunpack.c.l.b16 %v8039
        %v8062 = vunpack.c.l.b16 %v8040
        %v8063 = vunpack.c.l.b16 %v8041
        %v8064 = vunpack.c.l.b16 %v8042
        %v8065 = vunpack.c.l.b16 %v8043
        %v8066 = vpack.c.b16 %v8056, %v8055
        %v8067 = vpack.c.b16 %v8058, %v8057
        %v8068 = vpack.c.b16 %v8060, %v8059
        %v8069 = vpack.c.b16 %v8062, %v8061
        %v8070 = vpack.c.b16 %v8064, %v8063
        %v8071 = vpack.c.b16 %v8065, %v8065
        %v8073 = vsel %vm853, %v8066, 0
        %v8076 = vsel %vm853, %v8067, 0
        %v8079 = vsel %vm853, %v8068, 0
        %v8082 = vsel %vm853, %v8069, 0
        %v8085 = vsel %vm853, %v8070, 0
        %v8088 = vsel %vm853, %v8071, 0
        %v8091 = vand.u32 %v8032, %v914
        %8093 = vmatprep.subr.bf16.mxu0 0
        %8094 = vmatpush1.bf16.msra.mxu0 %v8031
        %8095 = vmatprep.subr.bf16.mxu0 0
        %8096 = vmatpush1.bf16.msra.mxu0 %v8091
        %8097 = vmatprep.subr.bf16.mxu0 0
        %8098 = vmatpush1.bf16.msra.mxu0 0
        %8099 = vmatprep.subr.bf16.mxu0 0
        %8100 = vmatpush1.bf16.msra.mxu0 0
        %8101 = vmatprep.subr.bf16.mxu0 0
        %8102 = vmatpush1.bf16.msra.mxu0 0
        %8103 = vmatprep.subr.bf16.mxu0 0
        %8104 = vmatpush1.bf16.msra.mxu0 0
        %8105 = vmatprep.subr.bf16.mxu0 0
        %8106 = vmatpush1.bf16.msra.mxu0 0
        %8107 = vmatprep.subr.bf16.mxu0 0
        %8108 = vmatpush1.bf16.msra.mxu0 0
        %8109 = vmatprep.subr.bf16.mxu0 0
        %8110 = vmatpush1.bf16.msra.mxu0 0
        %8111 = vmatprep.subr.bf16.mxu0 0
        %8112 = vmatpush1.bf16.msra.mxu0 0
        %8113 = vmatprep.subr.bf16.mxu0 0
        %8114 = vmatpush1.bf16.msra.mxu0 0
        %8115 = vmatprep.subr.bf16.mxu0 0
        %8116 = vmatpush1.bf16.msra.mxu0 0
        %8117 = vmatprep.subr.bf16.mxu0 0
        %8118 = vmatpush1.bf16.msra.mxu0 0
        %8119 = vmatprep.subr.bf16.mxu0 0
        %8120 = vmatpush1.bf16.msra.mxu0 0
        %8121 = vmatprep.subr.bf16.mxu0 0
        %8122 = vmatpush1.bf16.msra.mxu0 0
        %8123 = vmatprep.subr.bf16.mxu0 0
        %8124 = vmatpush1.bf16.msra.mxu0 0
        %8125 = vmatprep.mubr.bf16.mxu0 0
        %8126 = vmatmul.mubr.bf16.gmra.mrb[0].mxu0 %v8073
        %v8127 = vpop.f32.mrb[0].mxu0
        %v8128 = vadd.f32 0.0, %v8127
        %v8129 = vpop.f32.mrb[0].mxu0
        %v8130 = vpop.f32.mrb[0].mxu0
        %v8131 = vadd.f32 0.0, %v8130
        %v8132 = vpop.f32.mrb[0].mxu0
        %8133 = vmatprep.mubr.bf16.mxu0 0
        %8134 = vmatmul.mubr.bf16.gmra.mrb[0].mxu0 %v8076
        %v8135 = vpop.f32.mrb[0].mxu0
        %v8136 = vadd.f32 0.0, %v8135
        %v8137 = vpop.f32.mrb[0].mxu0
        %v8138 = vpop.f32.mrb[0].mxu0
        %v8139 = vadd.f32 0.0, %v8138
        %v8140 = vpop.f32.mrb[0].mxu0
        %8141 = vmatprep.mubr.bf16.mxu0 0
        %8142 = vmatmul.mubr.bf16.gmra.mrb[0].mxu0 %v8079
        %v8143 = vpop.f32.mrb[0].mxu0
        %v8144 = vadd.f32 0.0, %v8143
        %v8145 = vpop.f32.mrb[0].mxu0
        %v8146 = vpop.f32.mrb[0].mxu0
        %v8147 = vadd.f32 0.0, %v8146
        %v8148 = vpop.f32.mrb[0].mxu0
        %8149 = vmatprep.mubr.bf16.mxu0 0
        %8150 = vmatmul.mubr.bf16.gmra.mrb[0].mxu0 %v8082
        %v8151 = vpop.f32.mrb[0].mxu0
        %v8152 = vadd.f32 0.0, %v8151
        %v8153 = vpop.f32.mrb[0].mxu0
        %v8154 = vpop.f32.mrb[0].mxu0
        %v8155 = vadd.f32 0.0, %v8154
        %v8156 = vpop.f32.mrb[0].mxu0
        %8157 = vmatprep.mubr.bf16.mxu0 0
        %8158 = vmatmul.mubr.bf16.gmra.mrb[0].mxu0 %v8085
        %v8159 = vpop.f32.mrb[0].mxu0
        %v8160 = vadd.f32 0.0, %v8159
        %v8161 = vpop.f32.mrb[0].mxu0
        %v8162 = vpop.f32.mrb[0].mxu0
        %v8163 = vadd.f32 0.0, %v8162
        %v8164 = vpop.f32.mrb[0].mxu0
        %8165 = vmatprep.mubr.bf16.mxu0 0
        %8166 = vmatmul.mubr.bf16.gmra.mrb[0].mxu0 %v8088
        %v8167 = vpop.f32.mrb[0].mxu0
        %v8168 = vadd.f32 0.0, %v8167
        %v8169 = vpop.f32.mrb[0].mxu0
        %v8170 = vpop.f32.mrb[0].mxu0
        %v8171 = vpop.f32.mrb[0].mxu0
        %8172 = vdwg.mxu0
        %v8175 = vrot.slane %v8131, 1
        %v8176 = vrot.slane %v8136, 1
        %v8177 = vsel %vm2990, %v8175, %v8176
        %v8181 = vrot.slane %v8136, 2
        %v8182 = vrot.slane %v8139, 2
        %v8183 = vsel %vm3044, %v8181, %v8182
        %v8187 = vrot.slane %v8139, 3
        %v8188 = vrot.slane %v8144, 3
        %v8189 = vsel %vm912, %v8187, %v8188
        %v8193 = vrot.slane %v8144, 4
        %v8194 = vrot.slane %v8147, 4
        %v8195 = vsel %vm911, %v8193, %v8194
        %v8199 = vrot.slane %v8147, 5
        %v8200 = vrot.slane %v8152, 5
        %v8201 = vsel %vm3204, %v8199, %v8200
        %v8205 = vrot.slane %v8152, 6
        %v8206 = vrot.slane %v8155, 6
        %v8207 = vsel %vm3258, %v8205, %v8206
        %v8211 = vrot.slane %v8155, 7
        %v8212 = vrot.slane %v8160, 7
        %v8213 = vsel %vm2171, %v8211, %v8212
        %v8216 = vpack.c.bf16 %v8131, %v8128
        %v8217 = vpack.c.bf16 %v8176, %v8177
        %v8218 = vpack.c.bf16 %v8182, %v8183
        %v8219 = vpack.c.bf16 %v8188, %v8189
        %v8220 = vpack.c.bf16 %v8194, %v8195
        %v8221 = vpack.c.bf16 %v8200, %v8201
        %v8222 = vpack.c.bf16 %v8206, %v8207
        %v8223 = vpack.c.bf16 %v8212, %v8213
        %v8224 = vpack.c.bf16 %v8168, %v8163
        %v8225 = vld [vmem:[%s14] sm:$0xff]
        %v8226 = vld [vmem:[%s14 + $0x8] sm:$0xff]
        %v8227 = vld [vmem:[%s14 + $0x10] sm:$0xff]
        %v8228 = vld [vmem:[%s14 + $0x18] sm:$0xff]
        %v8229 = vld [vmem:[%s14 + $0x20] sm:$0xff]
        %v8230 = vld [vmem:[%s14 + $0x28] sm:$0xff]
        %v8231 = vld [vmem:[%s14 + $0x30] sm:$0xff]
        %v8232 = vld [vmem:[%s14 + $0x38] sm:$0xff]
        %v8233 = vld [vmem:[%s14 + $0x40] sm:$0xff]
        %v8234 = vld [vmem:[%s14 + $0x48] sm:$0xff]
        %v8235 = vld [vmem:[%s14 + $0x50] sm:$0xff]
        %v8236 = vld [vmem:[%s14 + $0x58] sm:$0xff]
        %v8237 = vld [vmem:[%s14 + $0x60] sm:$0xff]
        %v8238 = vld [vmem:[%s14 + $0x68] sm:$0xff]
        %v8239 = vld [vmem:[%s14 + $0x70] sm:$0xff]
        %v8240 = vld [vmem:[%s14 + $0x78] sm:$0xff]
        %v8241 = vld [vmem:[%s14 + $0x80] sm:$0xff]
        %v8242 = vld [vmem:[%s14 + $0x88] sm:$0xff]
        %v8243 = vld [vmem:[%s14 + $0x90] sm:$0xff]
        %v8244 = vld [vmem:[%s14 + $0x98] sm:$0xff]
        %v8245 = vld [vmem:[%s14 + $0xa0] sm:$0xff]
        %v8246 = vld [vmem:[%s14 + $0xa8] sm:$0xff]
        %v8247 = vld [vmem:[%s14 + $0xb0] sm:$0xff]
        %v8248 = vld [vmem:[%s14 + $0xb8] sm:$0xff]
        %v8249 = vld [vmem:[%s14 + $0xc0] sm:$0xff]
        %v8250 = vld [vmem:[%s14 + $0xc8] sm:$0xff]
        %v8251 = vld [vmem:[%s14 + $0xd0] sm:$0xff]
        %v8252 = vld [vmem:[%s14 + $0xd8] sm:$0xff]
        %v8253 = vld [vmem:[%s14 + $0xe0] sm:$0xff]
        %v8254 = vld [vmem:[%s14 + $0xe8] sm:$0xff]
        %v8255 = vld [vmem:[%s14 + $0xf0] sm:$0xff]
        %v8256 = vld [vmem:[%s14 + $0xf8] sm:$0xff]
        %v8257 = vld [vmem:[%s14 + $0x100] sm:$0xff]
        %v8258 = vld [vmem:[%s14 + $0x108] sm:$0xff]
        %v8259 = vld [vmem:[%s14 + $0x110] sm:$0xff]
        %v8260 = vld [vmem:[%s14 + $0x118] sm:$0xff]
        %v8261 = vld [vmem:[%s14 + $0x120] sm:$0xff]
        %v8262 = vld [vmem:[%s14 + $0x128] sm:$0xff]
        %v8263 = vld [vmem:[%s14 + $0x130] sm:$0xff]
        %v8264 = vld [vmem:[%s14 + $0x138] sm:$0xff]
        %v8265 = vld [vmem:[%s14 + $0x140] sm:$0xff]
        %v8266 = vld [vmem:[%s14 + $0x148] sm:$0xff]
        %v8267 = vld [vmem:[%s14 + $0x150] sm:$0xff]
        %v8268 = vld [vmem:[%s14 + $0x158] sm:$0xff]
        %v8269 = vld [vmem:[%s14 + $0x160] sm:$0xff]
        %v8270 = vld [vmem:[%s14 + $0x168] sm:$0xff]
        %v8271 = vld [vmem:[%s14 + $0x170] sm:$0xff]
        %v8272 = vld [vmem:[%s14 + $0x178] sm:$0xff]
        %v8273 = vld [vmem:[%s14 + $0x180] sm:$0xff]
        %v8274 = vld [vmem:[%s14 + $0x188] sm:$0xff]
        %v8275 = vld [vmem:[%s14 + $0x190] sm:$0xff]
        %v8276 = vld [vmem:[%s14 + $0x198] sm:$0xff]
        %v8277 = vld [vmem:[%s14 + $0x1a0] sm:$0xff]
        %v8278 = vld [vmem:[%s14 + $0x1a8] sm:$0xff]
        %v8279 = vld [vmem:[%s14 + $0x1b0] sm:$0xff]
        %v8280 = vld [vmem:[%s14 + $0x1b8] sm:$0xff]
        %v8281 = vld [vmem:[%s14 + $0x1c0] sm:$0xff]
        %v8282 = vld [vmem:[%s14 + $0x1c8] sm:$0xff]
        %v8283 = vld [vmem:[%s14 + $0x1d0] sm:$0xff]
        %v8284 = vld [vmem:[%s14 + $0x1d8] sm:$0xff]
        %v8285 = vld [vmem:[%s14 + $0x1e0] sm:$0xff]
        %v8286 = vld [vmem:[%s14 + $0x1e8] sm:$0xff]
        %v8287 = vld [vmem:[%s14 + $0x1f0] sm:$0xff]
        %v8288 = vld [vmem:[%s14 + $0x1f8] sm:$0xff]
        %v8289 = vld [vmem:[%s14 + $0x200] sm:$0xff]
        %v8290 = vld [vmem:[%s14 + $0x208] sm:$0xff]
        %v8291 = vld [vmem:[%s14 + $0x210] sm:$0xff]
        %v8292 = vld [vmem:[%s14 + $0x218] sm:$0xff]
        %v8293 = vld [vmem:[%s14 + $0x220] sm:$0xff]
        %v8294 = vld [vmem:[%s14 + $0x228] sm:$0xff]
        %v8295 = vld [vmem:[%s14 + $0x230] sm:$0xff]
        %v8296 = vld [vmem:[%s14 + $0x238] sm:$0xff]
        %v8297 = vld [vmem:[%s14 + $0x240] sm:$0xff]
        %v8298 = vld [vmem:[%s14 + $0x248] sm:$0xff]
        %v8299 = vld [vmem:[%s14 + $0x250] sm:$0xff]
        %v8300 = vld [vmem:[%s14 + $0x258] sm:$0xff]
        %v8301 = vld [vmem:[%s14 + $0x260] sm:$0xff]
        %v8302 = vld [vmem:[%s14 + $0x268] sm:$0xff]
        %v8303 = vld [vmem:[%s14 + $0x270] sm:$0xff]
        %v8304 = vld [vmem:[%s14 + $0x278] sm:$0xff]
        %v8305 = vld [vmem:[%s14 + $0x280] sm:$0xff]
        %v8306 = vld [vmem:[%s14 + $0x288] sm:$0xff]
        %v8307 = vld [vmem:[%s14 + $0x290] sm:$0xff]
        %v8308 = vld [vmem:[%s14 + $0x298] sm:$0xff]
        %v8309 = vld [vmem:[%s14 + $0x2a0] sm:$0xff]
        %v8310 = vld [vmem:[%s14 + $0x2a8] sm:$0xff]
        %v8311 = vld [vmem:[%s14 + $0x2b0] sm:$0xff]
        %v8312 = vld [vmem:[%s14 + $0x2b8] sm:$0xff]
        %v8313 = vld [vmem:[%s14 + $0x2c0] sm:$0xff]
        %v8314 = vld [vmem:[%s14 + $0x2c8] sm:$0xff]
        %v8315 = vld [vmem:[%s14 + $0x2d0] sm:$0xff]
        %v8316 = vld [vmem:[%s14 + $0x2d8] sm:$0xff]
        %v8317 = vld [vmem:[%s14 + $0x2e0] sm:$0xff]
        %v8318 = vld [vmem:[%s14 + $0x2e8] sm:$0xff]
        %v8319 = vld [vmem:[%s14 + $0x2f0] sm:$0xff]
        %v8320 = vld [vmem:[%s14 + $0x2f8] sm:$0xff]
        %v8321 = vld [vmem:[%s14 + $0x300] sm:$0xff]
        %v8322 = vld [vmem:[%s14 + $0x308] sm:$0xff]
        %v8323 = vld [vmem:[%s14 + $0x310] sm:$0xff]
        %v8324 = vld [vmem:[%s14 + $0x318] sm:$0xff]
        %v8325 = vld [vmem:[%s14 + $0x320] sm:$0xff]
        %v8326 = vld [vmem:[%s14 + $0x328] sm:$0xff]
        %v8327 = vld [vmem:[%s14 + $0x330] sm:$0xff]
        %v8328 = vld [vmem:[%s14 + $0x338] sm:$0xff]
        %v8329 = vld [vmem:[%s14 + $0x340] sm:$0xff]
        %v8330 = vld [vmem:[%s14 + $0x348] sm:$0xff]
        %v8331 = vld [vmem:[%s14 + $0x350] sm:$0xff]
        %v8332 = vld [vmem:[%s14 + $0x358] sm:$0xff]
        %v8333 = vld [vmem:[%s14 + $0x360] sm:$0xff]
        %v8334 = vld [vmem:[%s14 + $0x368] sm:$0xff]
        %v8335 = vld [vmem:[%s14 + $0x370] sm:$0xff]
        %v8336 = vld [vmem:[%s14 + $0x378] sm:$0xff]
        %v8337 = vld [vmem:[%s14 + $0x380] sm:$0xff]
        %v8338 = vld [vmem:[%s14 + $0x388] sm:$0xff]
        %v8339 = vld [vmem:[%s14 + $0x390] sm:$0xff]
        %v8340 = vld [vmem:[%s14 + $0x398] sm:$0xff]
        %v8341 = vld [vmem:[%s14 + $0x3a0] sm:$0xff]
        %v8342 = vld [vmem:[%s14 + $0x3a8] sm:$0xff]
        %v8343 = vld [vmem:[%s14 + $0x3b0] sm:$0xff]
        %v8344 = vld [vmem:[%s14 + $0x3b8] sm:$0xff]
        %v8345 = vld [vmem:[%s14 + $0x3c0] sm:$0xff]
        %v8346 = vld [vmem:[%s14 + $0x3c8] sm:$0xff]
        %v8347 = vld [vmem:[%s14 + $0x3d0] sm:$0xff]
        %v8348 = vld [vmem:[%s14 + $0x3d8] sm:$0xff]
        %v8349 = vld [vmem:[%s14 + $0x3e0] sm:$0xff]
        %v8350 = vld [vmem:[%s14 + $0x3e8] sm:$0xff]
        %v8351 = vld [vmem:[%s14 + $0x3f0] sm:$0xff]
        %v8352 = vld [vmem:[%s14 + $0x3f8] sm:$0xff]
        %v8353 = vld [vmem:[%s14 + $0x400] sm:$0xff]
        %v8354 = vld [vmem:[%s14 + $0x408] sm:$0xff]
        %v8355 = vld [vmem:[%s14 + $0x410] sm:$0xff]
        %v8356 = vld [vmem:[%s14 + $0x418] sm:$0xff]
        %v8357 = vld [vmem:[%s14 + $0x420] sm:$0xff]
        %v8358 = vld [vmem:[%s14 + $0x428] sm:$0xff]
        %v8359 = vld [vmem:[%s14 + $0x430] sm:$0xff]
        %v8360 = vld [vmem:[%s14 + $0x438] sm:$0xff]
        %v8361 = vld [vmem:[%s14 + $0x440] sm:$0xff]
        %v8362 = vld [vmem:[%s14 + $0x448] sm:$0xff]
        %v8363 = vld [vmem:[%s14 + $0x450] sm:$0xff]
        %v8364 = vld [vmem:[%s14 + $0x458] sm:$0xff]
        %v8365 = vld [vmem:[%s14 + $0x460] sm:$0xff]
        %v8366 = vld [vmem:[%s14 + $0x468] sm:$0xff]
        %v8367 = vld [vmem:[%s14 + $0x470] sm:$0xff]
        %v8368 = vld [vmem:[%s14 + $0x478] sm:$0xff]
        %v8369 = vld [vmem:[%s15] sm:$0x3]
        %v8371 = vlaneseq
        %v8372 = vshrl.u32 %v8371, 7
        %v8373 = vsub.s32 0, %v8372
        %v8374 = vrot.slane %v8369, %v8373
        %v8375 = vlaneseq
        %v8376 = vshrl.u32 %v8375, 7
        %v8377 = vsub.s32 1, %v8376
        %v8378 = vrot.slane %v8369, %v8377
        %v8525 = vunpack.c.l.b16 %v8225
        %v8526 = vunpack.c.h.b16 %v8225
        %v8527 = vunpack.c.l.b16 %v8226
        %v8528 = vunpack.c.h.b16 %v8226
        %v8529 = vunpack.c.l.b16 %v8227
        %v8530 = vunpack.c.h.b16 %v8227
        %v8531 = vunpack.c.l.b16 %v8228
        %v8532 = vunpack.c.h.b16 %v8228
        %v8533 = vunpack.c.l.b16 %v8229
        %v8534 = vunpack.c.h.b16 %v8229
        %v8535 = vunpack.c.l.b16 %v8230
        %v8536 = vunpack.c.h.b16 %v8230
        %v8537 = vunpack.c.l.b16 %v8231
        %v8538 = vunpack.c.h.b16 %v8231
        %v8539 = vunpack.c.l.b16 %v8232
        %v8540 = vunpack.c.h.b16 %v8232
        %v8541 = vunpack.c.l.b16 %v8233
        %v8542 = vunpack.c.h.b16 %v8233
        %v8543 = vunpack.c.l.b16 %v8234
        %v8544 = vunpack.c.h.b16 %v8234
        %v8545 = vunpack.c.l.b16 %v8235
        %v8546 = vunpack.c.h.b16 %v8235
        %v8547 = vunpack.c.l.b16 %v8236
        %v8548 = vunpack.c.h.b16 %v8236
        %v8549 = vunpack.c.l.b16 %v8237
        %v8550 = vunpack.c.h.b16 %v8237
        %v8551 = vunpack.c.l.b16 %v8238
        %v8552 = vunpack.c.h.b16 %v8238
        %v8553 = vunpack.c.l.b16 %v8239
        %v8554 = vunpack.c.h.b16 %v8239
        %v8555 = vunpack.c.l.b16 %v8240
        %v8556 = vunpack.c.h.b16 %v8240
        %v8557 = vunpack.c.l.b16 %v8241
        %v8558 = vunpack.c.h.b16 %v8241
        %v8559 = vunpack.c.l.b16 %v8242
        %v8560 = vunpack.c.h.b16 %v8242
        %v8561 = vunpack.c.l.b16 %v8243
        %v8562 = vunpack.c.h.b16 %v8243
        %v8563 = vunpack.c.l.b16 %v8244
        %v8564 = vunpack.c.h.b16 %v8244
        %v8565 = vunpack.c.l.b16 %v8245
        %v8566 = vunpack.c.h.b16 %v8245
        %v8567 = vunpack.c.l.b16 %v8246
        %v8568 = vunpack.c.h.b16 %v8246
        %v8569 = vunpack.c.l.b16 %v8247
        %v8570 = vunpack.c.h.b16 %v8247
        %v8571 = vunpack.c.l.b16 %v8248
        %v8572 = vunpack.c.h.b16 %v8248
        %v8573 = vunpack.c.l.b16 %v8249
        %v8574 = vunpack.c.h.b16 %v8249
        %v8575 = vunpack.c.l.b16 %v8250
        %v8576 = vunpack.c.h.b16 %v8250
        %v8577 = vunpack.c.l.b16 %v8251
        %v8578 = vunpack.c.h.b16 %v8251
        %v8579 = vunpack.c.l.b16 %v8252
        %v8580 = vunpack.c.h.b16 %v8252
        %v8581 = vunpack.c.l.b16 %v8253
        %v8582 = vunpack.c.h.b16 %v8253
        %v8583 = vunpack.c.l.b16 %v8254
        %v8584 = vunpack.c.h.b16 %v8254
        %v8585 = vunpack.c.l.b16 %v8255
        %v8586 = vunpack.c.h.b16 %v8255
        %v8587 = vunpack.c.l.b16 %v8256
        %v8588 = vunpack.c.h.b16 %v8256
        %v8589 = vunpack.c.l.b16 %v8257
        %v8590 = vunpack.c.h.b16 %v8257
        %v8591 = vunpack.c.l.b16 %v8258
        %v8592 = vunpack.c.h.b16 %v8258
        %v8593 = vunpack.c.l.b16 %v8259
        %v8594 = vunpack.c.h.b16 %v8259
        %v8595 = vunpack.c.l.b16 %v8260
        %v8596 = vunpack.c.h.b16 %v8260
        %v8597 = vunpack.c.l.b16 %v8261
        %v8598 = vunpack.c.h.b16 %v8261
        %v8599 = vunpack.c.l.b16 %v8262
        %v8600 = vunpack.c.h.b16 %v8262
        %v8601 = vunpack.c.l.b16 %v8263
        %v8602 = vunpack.c.h.b16 %v8263
        %v8603 = vunpack.c.l.b16 %v8264
        %v8604 = vunpack.c.h.b16 %v8264
        %v8605 = vunpack.c.l.b16 %v8265
        %v8606 = vunpack.c.h.b16 %v8265
        %v8607 = vunpack.c.l.b16 %v8266
        %v8608 = vunpack.c.h.b16 %v8266
        %v8609 = vunpack.c.l.b16 %v8267
        %v8610 = vunpack.c.h.b16 %v8267
        %v8611 = vunpack.c.l.b16 %v8268
        %v8612 = vunpack.c.h.b16 %v8268
        %v8613 = vunpack.c.l.b16 %v8269
        %v8614 = vunpack.c.h.b16 %v8269
        %v8615 = vunpack.c.l.b16 %v8270
        %v8616 = vunpack.c.h.b16 %v8270
        %v8617 = vunpack.c.l.b16 %v8271
        %v8618 = vunpack.c.h.b16 %v8271
        %v8619 = vunpack.c.l.b16 %v8272
        %v8620 = vunpack.c.h.b16 %v8272
        %v8621 = vunpack.c.l.b16 %v8273
        %v8622 = vunpack.c.h.b16 %v8273
        %v8623 = vunpack.c.l.b16 %v8274
        %v8624 = vunpack.c.h.b16 %v8274
        %v8625 = vunpack.c.l.b16 %v8275
        %v8626 = vunpack.c.h.b16 %v8275
        %v8627 = vunpack.c.l.b16 %v8276
        %v8628 = vunpack.c.h.b16 %v8276
        %v8629 = vunpack.c.l.b16 %v8277
        %v8630 = vunpack.c.h.b16 %v8277
        %v8631 = vunpack.c.l.b16 %v8278
        %v8632 = vunpack.c.h.b16 %v8278
        %v8633 = vunpack.c.l.b16 %v8279
        %v8634 = vunpack.c.h.b16 %v8279
        %v8635 = vunpack.c.l.b16 %v8280
        %v8636 = vunpack.c.h.b16 %v8280
        %v8637 = vunpack.c.l.b16 %v8281
        %v8638 = vunpack.c.h.b16 %v8281
        %v8639 = vunpack.c.l.b16 %v8282
        %v8640 = vunpack.c.h.b16 %v8282
        %v8641 = vunpack.c.l.b16 %v8283
        %v8642 = vunpack.c.h.b16 %v8283
        %v8643 = vunpack.c.l.b16 %v8284
        %v8644 = vunpack.c.h.b16 %v8284
        %v8645 = vunpack.c.l.b16 %v8285
        %v8646 = vunpack.c.h.b16 %v8285
        %v8647 = vunpack.c.l.b16 %v8286
        %v8648 = vunpack.c.h.b16 %v8286
        %v8649 = vunpack.c.l.b16 %v8287
        %v8650 = vunpack.c.h.b16 %v8287
        %v8651 = vunpack.c.l.b16 %v8288
        %v8652 = vunpack.c.h.b16 %v8288
        %v8653 = vunpack.c.l.b16 %v8289
        %v8654 = vunpack.c.h.b16 %v8289
        %v8655 = vunpack.c.l.b16 %v8290
        %v8656 = vunpack.c.h.b16 %v8290
        %v8657 = vunpack.c.l.b16 %v8291
        %v8658 = vunpack.c.h.b16 %v8291
        %v8659 = vunpack.c.l.b16 %v8292
        %v8660 = vunpack.c.h.b16 %v8292
        %v8661 = vunpack.c.l.b16 %v8293
        %v8662 = vunpack.c.h.b16 %v8293
        %v8663 = vunpack.c.l.b16 %v8294
        %v8664 = vunpack.c.h.b16 %v8294
        %v8665 = vunpack.c.l.b16 %v8295
        %v8666 = vunpack.c.h.b16 %v8295
        %v8667 = vunpack.c.l.b16 %v8296
        %v8668 = vunpack.c.h.b16 %v8296
        %v8669 = vunpack.c.l.b16 %v8297
        %v8670 = vunpack.c.h.b16 %v8297
        %v8671 = vunpack.c.l.b16 %v8298
        %v8672 = vunpack.c.h.b16 %v8298
        %v8673 = vunpack.c.l.b16 %v8299
        %v8674 = vunpack.c.h.b16 %v8299
        %v8675 = vunpack.c.l.b16 %v8300
        %v8676 = vunpack.c.h.b16 %v8300
        %v8677 = vunpack.c.l.b16 %v8301
        %v8678 = vunpack.c.h.b16 %v8301
        %v8679 = vunpack.c.l.b16 %v8302
        %v8680 = vunpack.c.h.b16 %v8302
        %v8681 = vunpack.c.l.b16 %v8303
        %v8682 = vunpack.c.h.b16 %v8303
        %v8683 = vunpack.c.l.b16 %v8304
        %v8684 = vunpack.c.h.b16 %v8304
        %v8685 = vunpack.c.l.b16 %v8305
        %v8686 = vunpack.c.h.b16 %v8305
        %v8687 = vunpack.c.l.b16 %v8306
        %v8688 = vunpack.c.h.b16 %v8306
        %v8689 = vunpack.c.l.b16 %v8307
        %v8690 = vunpack.c.h.b16 %v8307
        %v8691 = vunpack.c.l.b16 %v8308
        %v8692 = vunpack.c.h.b16 %v8308
        %v8693 = vunpack.c.l.b16 %v8309
        %v8694 = vunpack.c.h.b16 %v8309
        %v8695 = vunpack.c.l.b16 %v8310
        %v8696 = vunpack.c.h.b16 %v8310
        %v8697 = vunpack.c.l.b16 %v8311
        %v8698 = vunpack.c.h.b16 %v8311
        %v8699 = vunpack.c.l.b16 %v8312
        %v8700 = vunpack.c.h.b16 %v8312
        %v8701 = vunpack.c.l.b16 %v8313
        %v8702 = vunpack.c.h.b16 %v8313
        %v8703 = vunpack.c.l.b16 %v8314
        %v8704 = vunpack.c.h.b16 %v8314
        %v8705 = vunpack.c.l.b16 %v8315
        %v8706 = vunpack.c.h.b16 %v8315
        %v8707 = vunpack.c.l.b16 %v8316
        %v8708 = vunpack.c.h.b16 %v8316
        %v8709 = vunpack.c.l.b16 %v8317
        %v8710 = vunpack.c.h.b16 %v8317
        %v8711 = vunpack.c.l.b16 %v8318
        %v8712 = vunpack.c.h.b16 %v8318
        %v8713 = vunpack.c.l.b16 %v8319
        %v8714 = vunpack.c.h.b16 %v8319
        %v8715 = vunpack.c.l.b16 %v8320
        %v8716 = vunpack.c.h.b16 %v8320
        %v8717 = vunpack.c.l.b16 %v8321
        %v8718 = vunpack.c.h.b16 %v8321
        %v8719 = vunpack.c.l.b16 %v8322
        %v8720 = vunpack.c.h.b16 %v8322
        %v8721 = vunpack.c.l.b16 %v8323
        %v8722 = vunpack.c.h.b16 %v8323
        %v8723 = vunpack.c.l.b16 %v8324
        %v8724 = vunpack.c.h.b16 %v8324
        %v8725 = vunpack.c.l.b16 %v8325
        %v8726 = vunpack.c.h.b16 %v8325
        %v8727 = vunpack.c.l.b16 %v8326
        %v8728 = vunpack.c.h.b16 %v8326
        %v8729 = vunpack.c.l.b16 %v8327
        %v8730 = vunpack.c.h.b16 %v8327
        %v8731 = vunpack.c.l.b16 %v8328
        %v8732 = vunpack.c.h.b16 %v8328
        %v8733 = vunpack.c.l.b16 %v8329
        %v8734 = vunpack.c.h.b16 %v8329
        %v8735 = vunpack.c.l.b16 %v8330
        %v8736 = vunpack.c.h.b16 %v8330
        %v8737 = vunpack.c.l.b16 %v8331
        %v8738 = vunpack.c.h.b16 %v8331
        %v8739 = vunpack.c.l.b16 %v8332
        %v8740 = vunpack.c.h.b16 %v8332
        %v8741 = vunpack.c.l.b16 %v8333
        %v8742 = vunpack.c.h.b16 %v8333
        %v8743 = vunpack.c.l.b16 %v8334
        %v8744 = vunpack.c.h.b16 %v8334
        %v8745 = vunpack.c.l.b16 %v8335
        %v8746 = vunpack.c.h.b16 %v8335
        %v8747 = vunpack.c.l.b16 %v8336
        %v8748 = vunpack.c.h.b16 %v8336
        %v8749 = vunpack.c.l.b16 %v8337
        %v8750 = vunpack.c.h.b16 %v8337
        %v8751 = vunpack.c.l.b16 %v8338
        %v8752 = vunpack.c.h.b16 %v8338
        %v8753 = vunpack.c.l.b16 %v8339
        %v8754 = vunpack.c.h.b16 %v8339
        %v8755 = vunpack.c.l.b16 %v8340
        %v8756 = vunpack.c.h.b16 %v8340
        %v8757 = vunpack.c.l.b16 %v8341
        %v8758 = vunpack.c.h.b16 %v8341
        %v8759 = vunpack.c.l.b16 %v8342
        %v8760 = vunpack.c.h.b16 %v8342
        %v8761 = vunpack.c.l.b16 %v8343
        %v8762 = vunpack.c.h.b16 %v8343
        %v8763 = vunpack.c.l.b16 %v8344
        %v8764 = vunpack.c.h.b16 %v8344
        %v8765 = vunpack.c.l.b16 %v8345
        %v8766 = vunpack.c.h.b16 %v8345
        %v8767 = vunpack.c.l.b16 %v8346
        %v8768 = vunpack.c.h.b16 %v8346
        %v8769 = vunpack.c.l.b16 %v8347
        %v8770 = vunpack.c.h.b16 %v8347
        %v8771 = vunpack.c.l.b16 %v8348
        %v8772 = vunpack.c.h.b16 %v8348
        %v8773 = vunpack.c.l.b16 %v8349
        %v8774 = vunpack.c.h.b16 %v8349
        %v8775 = vunpack.c.l.b16 %v8350
        %v8776 = vunpack.c.h.b16 %v8350
        %v8777 = vunpack.c.l.b16 %v8351
        %v8778 = vunpack.c.h.b16 %v8351
        %v8779 = vunpack.c.l.b16 %v8352
        %v8780 = vunpack.c.h.b16 %v8352
        %v8781 = vunpack.c.l.b16 %v8353
        %v8782 = vunpack.c.h.b16 %v8353
        %v8783 = vunpack.c.l.b16 %v8354
        %v8784 = vunpack.c.h.b16 %v8354
        %v8785 = vunpack.c.l.b16 %v8355
        %v8786 = vunpack.c.h.b16 %v8355
        %v8787 = vunpack.c.l.b16 %v8356
        %v8788 = vunpack.c.h.b16 %v8356
        %v8789 = vunpack.c.l.b16 %v8357
        %v8790 = vunpack.c.h.b16 %v8357
        %v8791 = vunpack.c.l.b16 %v8358
        %v8792 = vunpack.c.h.b16 %v8358
        %v8793 = vunpack.c.l.b16 %v8359
        %v8794 = vunpack.c.h.b16 %v8359
        %v8795 = vunpack.c.l.b16 %v8360
        %v8796 = vunpack.c.h.b16 %v8360
        %v8797 = vunpack.c.l.b16 %v8361
        %v8798 = vunpack.c.h.b16 %v8361
        %v8799 = vunpack.c.l.b16 %v8362
        %v8800 = vunpack.c.h.b16 %v8362
        %v8801 = vunpack.c.l.b16 %v8363
        %v8802 = vunpack.c.h.b16 %v8363
        %v8803 = vunpack.c.l.b16 %v8364
        %v8804 = vunpack.c.h.b16 %v8364
        %v8805 = vunpack.c.l.b16 %v8365
        %v8806 = vunpack.c.h.b16 %v8365
        %v8807 = vunpack.c.l.b16 %v8366
        %v8808 = vunpack.c.h.b16 %v8366
        %v8809 = vunpack.c.l.b16 %v8367
        %v8810 = vunpack.c.h.b16 %v8367
        %v8811 = vunpack.c.l.b16 %v8368
        %v8812 = vunpack.c.h.b16 %v8368
        %v8813 = vpack.c.b16 %v8527, %v8525
        %v8814 = vpack.c.b16 %v8528, %v8526
        %v8815 = vpack.c.b16 %v8531, %v8529
        %v8816 = vpack.c.b16 %v8532, %v8530
        %v8817 = vpack.c.b16 %v8535, %v8533
        %v8818 = vpack.c.b16 %v8536, %v8534
        %v8819 = vpack.c.b16 %v8539, %v8537
        %v8820 = vpack.c.b16 %v8540, %v8538
        %v8821 = vpack.c.b16 %v8543, %v8541
        %v8822 = vpack.c.b16 %v8544, %v8542
        %v8823 = vpack.c.b16 %v8547, %v8545
        %v8824 = vpack.c.b16 %v8548, %v8546
        %v8825 = vpack.c.b16 %v8551, %v8549
        %v8826 = vpack.c.b16 %v8552, %v8550
        %v8827 = vpack.c.b16 %v8555, %v8553
        %v8828 = vpack.c.b16 %v8556, %v8554
        %v8829 = vpack.c.b16 %v8559, %v8557
        %v8830 = vpack.c.b16 %v8560, %v8558
        %v8831 = vpack.c.b16 %v8563, %v8561
        %v8832 = vpack.c.b16 %v8564, %v8562
        %v8833 = vpack.c.b16 %v8567, %v8565
        %v8834 = vpack.c.b16 %v8568, %v8566
        %v8835 = vpack.c.b16 %v8571, %v8569
        %v8836 = vpack.c.b16 %v8572, %v8570
        %v8837 = vpack.c.b16 %v8575, %v8573
        %v8838 = vpack.c.b16 %v8576, %v8574
        %v8839 = vpack.c.b16 %v8579, %v8577
        %v8840 = vpack.c.b16 %v8580, %v8578
        %v8841 = vpack.c.b16 %v8583, %v8581
        %v8842 = vpack.c.b16 %v8584, %v8582
        %v8843 = vpack.c.b16 %v8587, %v8585
        %v8844 = vpack.c.b16 %v8588, %v8586
        %v8845 = vpack.c.b16 %v8591, %v8589
        %v8846 = vpack.c.b16 %v8592, %v8590
        %v8847 = vpack.c.b16 %v8595, %v8593
        %v8848 = vpack.c.b16 %v8596, %v8594
        %v8849 = vpack.c.b16 %v8599, %v8597
        %v8850 = vpack.c.b16 %v8600, %v8598
        %v8851 = vpack.c.b16 %v8603, %v8601
        %v8852 = vpack.c.b16 %v8604, %v8602
        %v8853 = vpack.c.b16 %v8607, %v8605
        %v8854 = vpack.c.b16 %v8608, %v8606
        %v8855 = vpack.c.b16 %v8611, %v8609
        %v8856 = vpack.c.b16 %v8612, %v8610
        %v8857 = vpack.c.b16 %v8615, %v8613
        %v8858 = vpack.c.b16 %v8616, %v8614
        %v8859 = vpack.c.b16 %v8619, %v8617
        %v8860 = vpack.c.b16 %v8620, %v8618
        %v8861 = vpack.c.b16 %v8623, %v8621
        %v8862 = vpack.c.b16 %v8624, %v8622
        %v8863 = vpack.c.b16 %v8627, %v8625
        %v8864 = vpack.c.b16 %v8628, %v8626
        %v8865 = vpack.c.b16 %v8631, %v8629
        %v8866 = vpack.c.b16 %v8632, %v8630
        %v8867 = vpack.c.b16 %v8635, %v8633
        %v8868 = vpack.c.b16 %v8636, %v8634
        %v8869 = vpack.c.b16 %v8639, %v8637
        %v8870 = vpack.c.b16 %v8640, %v8638
        %v8871 = vpack.c.b16 %v8643, %v8641
        %v8872 = vpack.c.b16 %v8644, %v8642
        %v8873 = vpack.c.b16 %v8647, %v8645
        %v8874 = vpack.c.b16 %v8648, %v8646
        %v8875 = vpack.c.b16 %v8651, %v8649
        %v8876 = vpack.c.b16 %v8652, %v8650
        %v8877 = vpack.c.b16 %v8655, %v8653
        %v8878 = vpack.c.b16 %v8656, %v8654
        %v8879 = vpack.c.b16 %v8659, %v8657
        %v8880 = vpack.c.b16 %v8660, %v8658
        %v8881 = vpack.c.b16 %v8663, %v8661
        %v8882 = vpack.c.b16 %v8664, %v8662
        %v8883 = vpack.c.b16 %v8667, %v8665
        %v8884 = vpack.c.b16 %v8668, %v8666
        %v8885 = vpack.c.b16 %v8671, %v8669
        %v8886 = vpack.c.b16 %v8672, %v8670
        %v8887 = vpack.c.b16 %v8675, %v8673
        %v8888 = vpack.c.b16 %v8676, %v8674
        %v8889 = vpack.c.b16 %v8679, %v8677
        %v8890 = vpack.c.b16 %v8680, %v8678
        %v8891 = vpack.c.b16 %v8683, %v8681
        %v8892 = vpack.c.b16 %v8684, %v8682
        %v8893 = vpack.c.b16 %v8687, %v8685
        %v8894 = vpack.c.b16 %v8688, %v8686
        %v8895 = vpack.c.b16 %v8691, %v8689
        %v8896 = vpack.c.b16 %v8692, %v8690
        %v8897 = vpack.c.b16 %v8695, %v8693
        %v8898 = vpack.c.b16 %v8696, %v8694
        %v8899 = vpack.c.b16 %v8699, %v8697
        %v8900 = vpack.c.b16 %v8700, %v8698
        %v8901 = vpack.c.b16 %v8703, %v8701
        %v8902 = vpack.c.b16 %v8704, %v8702
        %v8903 = vpack.c.b16 %v8707, %v8705
        %v8904 = vpack.c.b16 %v8708, %v8706
        %v8905 = vpack.c.b16 %v8711, %v8709
        %v8906 = vpack.c.b16 %v8712, %v8710
        %v8907 = vpack.c.b16 %v8715, %v8713
        %v8908 = vpack.c.b16 %v8716, %v8714
        %v8909 = vpack.c.b16 %v8719, %v8717
        %v8910 = vpack.c.b16 %v8720, %v8718
        %v8911 = vpack.c.b16 %v8723, %v8721
        %v8912 = vpack.c.b16 %v8724, %v8722
        %v8913 = vpack.c.b16 %v8727, %v8725
        %v8914 = vpack.c.b16 %v8728, %v8726
        %v8915 = vpack.c.b16 %v8731, %v8729
        %v8916 = vpack.c.b16 %v8732, %v8730
        %v8917 = vpack.c.b16 %v8735, %v8733
        %v8918 = vpack.c.b16 %v8736, %v8734
        %v8919 = vpack.c.b16 %v8739, %v8737
        %v8920 = vpack.c.b16 %v8740, %v8738
        %v8921 = vpack.c.b16 %v8743, %v8741
        %v8922 = vpack.c.b16 %v8744, %v8742
        %v8923 = vpack.c.b16 %v8747, %v8745
        %v8924 = vpack.c.b16 %v8748, %v8746
        %v8925 = vpack.c.b16 %v8751, %v8749
        %v8926 = vpack.c.b16 %v8752, %v8750
        %v8927 = vpack.c.b16 %v8755, %v8753
        %v8928 = vpack.c.b16 %v8756, %v8754
        %v8929 = vpack.c.b16 %v8759, %v8757
        %v8930 = vpack.c.b16 %v8760, %v8758
        %v8931 = vpack.c.b16 %v8763, %v8761
        %v8932 = vpack.c.b16 %v8764, %v8762
        %v8933 = vpack.c.b16 %v8767, %v8765
        %v8934 = vpack.c.b16 %v8768, %v8766
        %v8935 = vpack.c.b16 %v8771, %v8769
        %v8936 = vpack.c.b16 %v8772, %v8770
        %v8937 = vpack.c.b16 %v8775, %v8773
        %v8938 = vpack.c.b16 %v8776, %v8774
        %v8939 = vpack.c.b16 %v8779, %v8777
        %v8940 = vpack.c.b16 %v8780, %v8778
        %v8941 = vpack.c.b16 %v8783, %v8781
        %v8942 = vpack.c.b16 %v8784, %v8782
        %v8943 = vpack.c.b16 %v8787, %v8785
        %v8944 = vpack.c.b16 %v8788, %v8786
        %v8945 = vpack.c.b16 %v8791, %v8789
        %v8946 = vpack.c.b16 %v8792, %v8790
        %v8947 = vpack.c.b16 %v8795, %v8793
        %v8948 = vpack.c.b16 %v8796, %v8794
        %v8949 = vpack.c.b16 %v8799, %v8797
        %v8950 = vpack.c.b16 %v8800, %v8798
        %v8951 = vpack.c.b16 %v8803, %v8801
        %v8952 = vpack.c.b16 %v8804, %v8802
        %v8953 = vpack.c.b16 %v8807, %v8805
        %v8954 = vpack.c.b16 %v8808, %v8806
        %v8955 = vpack.c.b16 %v8811, %v8809
        %v8956 = vpack.c.b16 %v8812, %v8810
        %9101 = vmatprep.subr.bf16.mxu0 %v8814
        %9102 = vmatpush1.bf16.msra.mxu0 %v8813
        %9103 = vmatprep.subr.bf16.mxu0 %v8816
        %9104 = vmatpush1.bf16.msra.mxu0 %v8815
        %9105 = vmatprep.subr.bf16.mxu0 %v8818
        %9106 = vmatpush1.bf16.msra.mxu0 %v8817
        %9107 = vmatprep.subr.bf16.mxu0 %v8820
        %9108 = vmatpush1.bf16.msra.mxu0 %v8819
        %9109 = vmatprep.subr.bf16.mxu0 %v8822
        %9110 = vmatpush1.bf16.msra.mxu0 %v8821
        %9111 = vmatprep.subr.bf16.mxu0 %v8824
        %9112 = vmatpush1.bf16.msra.mxu0 %v8823
        %9113 = vmatprep.subr.bf16.mxu0 %v8826
        %9114 = vmatpush1.bf16.msra.mxu0 %v8825
        %9115 = vmatprep.subr.bf16.mxu0 %v8828
        %9116 = vmatpush1.bf16.msra.mxu0 %v8827
        %9117 = vmatprep.subr.bf16.mxu0 %v8830
        %9118 = vmatpush1.bf16.msra.mxu0 %v8829
        %9119 = vmatprep.subr.bf16.mxu0 %v8832
        %9120 = vmatpush1.bf16.msra.mxu0 %v8831
        %9121 = vmatprep.subr.bf16.mxu0 %v8834
        %9122 = vmatpush1.bf16.msra.mxu0 %v8833
        %9123 = vmatprep.subr.bf16.mxu0 %v8836
        %9124 = vmatpush1.bf16.msra.mxu0 %v8835
        %9125 = vmatprep.subr.bf16.mxu0 %v8838
        %9126 = vmatpush1.bf16.msra.mxu0 %v8837
        %9127 = vmatprep.subr.bf16.mxu0 %v8840
        %9128 = vmatpush1.bf16.msra.mxu0 %v8839
        %9129 = vmatprep.subr.bf16.mxu0 %v8842
        %9130 = vmatpush1.bf16.msra.mxu0 %v8841
        %9131 = vmatprep.subr.bf16.mxu0 %v8844
        %9132 = vmatpush1.bf16.msra.mxu0 %v8843
        %9133 = vmatprep.mubr.bf16.mxu0 %v8217
        %9134 = vmatmul.mubr.bf16.gmra.mrb[0].mxu0 %v8216
        %v9135 = vpop.f32.mrb[0].mxu0
        %v9136 = vadd.f32 %v8374, %v9135
        %v9137 = vpop.f32.mrb[0].mxu0
        %v9138 = vadd.f32 %v8378, %v9137
        %v9139 = vpop.f32.mrb[0].mxu0
        %v9140 = vadd.f32 %v8374, %v9139
        %v9141 = vpop.f32.mrb[0].mxu0
        %v9142 = vadd.f32 %v8378, %v9141
        %9143 = vdwg.mxu0
        %9144 = vmatprep.subr.bf16.mxu0 %v8846
        %9145 = vmatpush1.bf16.msra.mxu0 %v8845
        %9146 = vmatprep.subr.bf16.mxu0 %v8848
        %9147 = vmatpush1.bf16.msra.mxu0 %v8847
        %9148 = vmatprep.subr.bf16.mxu0 %v8850
        %9149 = vmatpush1.bf16.msra.mxu0 %v8849
        %9150 = vmatprep.subr.bf16.mxu0 %v8852
        %9151 = vmatpush1.bf16.msra.mxu0 %v8851
        %9152 = vmatprep.subr.bf16.mxu0 %v8854
        %9153 = vmatpush1.bf16.msra.mxu0 %v8853
        %9154 = vmatprep.subr.bf16.mxu0 %v8856
        %9155 = vmatpush1.bf16.msra.mxu0 %v8855
        %9156 = vmatprep.subr.bf16.mxu0 %v8858
        %9157 = vmatpush1.bf16.msra.mxu0 %v8857
        %9158 = vmatprep.subr.bf16.mxu0 %v8860
        %9159 = vmatpush1.bf16.msra.mxu0 %v8859
        %9160 = vmatprep.subr.bf16.mxu0 %v8862
        %9161 = vmatpush1.bf16.msra.mxu0 %v8861
        %9162 = vmatprep.subr.bf16.mxu0 %v8864
        %9163 = vmatpush1.bf16.msra.mxu0 %v8863
        %9164 = vmatprep.subr.bf16.mxu0 %v8866
        %9165 = vmatpush1.bf16.msra.mxu0 %v8865
        %9166 = vmatprep.subr.bf16.mxu0 %v8868
        %9167 = vmatpush1.bf16.msra.mxu0 %v8867
        %9168 = vmatprep.subr.bf16.mxu0 %v8870
        %9169 = vmatpush1.bf16.msra.mxu0 %v8869
        %9170 = vmatprep.subr.bf16.mxu0 %v8872
        %9171 = vmatpush1.bf16.msra.mxu0 %v8871
        %9172 = vmatprep.subr.bf16.mxu0 %v8874
        %9173 = vmatpush1.bf16.msra.mxu0 %v8873
        %9174 = vmatprep.subr.bf16.mxu0 %v8876
        %9175 = vmatpush1.bf16.msra.mxu0 %v8875
        %9176 = vmatprep.mubr.bf16.mxu0 %v8219
        %9177 = vmatmul.mubr.bf16.gmra.mrb[0].mxu0 %v8218
        %v9178 = vpop.f32.mrb[0].mxu0
        %v9179 = vadd.f32 %v9136, %v9178
        %v9180 = vpop.f32.mrb[0].mxu0
        %v9181 = vadd.f32 %v9138, %v9180
        %v9182 = vpop.f32.mrb[0].mxu0
        %v9183 = vadd.f32 %v9140, %v9182
        %v9184 = vpop.f32.mrb[0].mxu0
        %v9185 = vadd.f32 %v9142, %v9184
        %9186 = vdwg.mxu0
        %9187 = vmatprep.subr.bf16.mxu0 %v8878
        %9188 = vmatpush1.bf16.msra.mxu0 %v8877
        %9189 = vmatprep.subr.bf16.mxu0 %v8880
        %9190 = vmatpush1.bf16.msra.mxu0 %v8879
        %9191 = vmatprep.subr.bf16.mxu0 %v8882
        %9192 = vmatpush1.bf16.msra.mxu0 %v8881
        %9193 = vmatprep.subr.bf16.mxu0 %v8884
        %9194 = vmatpush1.bf16.msra.mxu0 %v8883
        %9195 = vmatprep.subr.bf16.mxu0 %v8886
        %9196 = vmatpush1.bf16.msra.mxu0 %v8885
        %9197 = vmatprep.subr.bf16.mxu0 %v8888
        %9198 = vmatpush1.bf16.msra.mxu0 %v8887
        %9199 = vmatprep.subr.bf16.mxu0 %v8890
        %9200 = vmatpush1.bf16.msra.mxu0 %v8889
        %9201 = vmatprep.subr.bf16.mxu0 %v8892
        %9202 = vmatpush1.bf16.msra.mxu0 %v8891
        %9203 = vmatprep.subr.bf16.mxu0 %v8894
        %9204 = vmatpush1.bf16.msra.mxu0 %v8893
        %9205 = vmatprep.subr.bf16.mxu0 %v8896
        %9206 = vmatpush1.bf16.msra.mxu0 %v8895
        %9207 = vmatprep.subr.bf16.mxu0 %v8898
        %9208 = vmatpush1.bf16.msra.mxu0 %v8897
        %9209 = vmatprep.subr.bf16.mxu0 %v8900
        %9210 = vmatpush1.bf16.msra.mxu0 %v8899
        %9211 = vmatprep.subr.bf16.mxu0 %v8902
        %9212 = vmatpush1.bf16.msra.mxu0 %v8901
        %9213 = vmatprep.subr.bf16.mxu0 %v8904
        %9214 = vmatpush1.bf16.msra.mxu0 %v8903
        %9215 = vmatprep.subr.bf16.mxu0 %v8906
        %9216 = vmatpush1.bf16.msra.mxu0 %v8905
        %9217 = vmatprep.subr.bf16.mxu0 %v8908
        %9218 = vmatpush1.bf16.msra.mxu0 %v8907
        %9219 = vmatprep.mubr.bf16.mxu0 %v8221
        %9220 = vmatmul.mubr.bf16.gmra.mrb[0].mxu0 %v8220
        %v9221 = vpop.f32.mrb[0].mxu0
        %v9222 = vadd.f32 %v9179, %v9221
        %v9223 = vpop.f32.mrb[0].mxu0
        %v9224 = vadd.f32 %v9181, %v9223
        %v9225 = vpop.f32.mrb[0].mxu0
        %v9226 = vadd.f32 %v9183, %v9225
        %v9227 = vpop.f32.mrb[0].mxu0
        %v9228 = vadd.f32 %v9185, %v9227
        %9229 = vdwg.mxu0
        %9230 = vmatprep.subr.bf16.mxu0 %v8910
        %9231 = vmatpush1.bf16.msra.mxu0 %v8909
        %9232 = vmatprep.subr.bf16.mxu0 %v8912
        %9233 = vmatpush1.bf16.msra.mxu0 %v8911
        %9234 = vmatprep.subr.bf16.mxu0 %v8914
        %9235 = vmatpush1.bf16.msra.mxu0 %v8913
        %9236 = vmatprep.subr.bf16.mxu0 %v8916
        %9237 = vmatpush1.bf16.msra.mxu0 %v8915
        %9238 = vmatprep.subr.bf16.mxu0 %v8918
        %9239 = vmatpush1.bf16.msra.mxu0 %v8917
        %9240 = vmatprep.subr.bf16.mxu0 %v8920
        %9241 = vmatpush1.bf16.msra.mxu0 %v8919
        %9242 = vmatprep.subr.bf16.mxu0 %v8922
        %9243 = vmatpush1.bf16.msra.mxu0 %v8921
        %9244 = vmatprep.subr.bf16.mxu0 %v8924
        %9245 = vmatpush1.bf16.msra.mxu0 %v8923
        %9246 = vmatprep.subr.bf16.mxu0 %v8926
        %9247 = vmatpush1.bf16.msra.mxu0 %v8925
        %9248 = vmatprep.subr.bf16.mxu0 %v8928
        %9249 = vmatpush1.bf16.msra.mxu0 %v8927
        %9250 = vmatprep.subr.bf16.mxu0 %v8930
        %9251 = vmatpush1.bf16.msra.mxu0 %v8929
        %9252 = vmatprep.subr.bf16.mxu0 %v8932
        %9253 = vmatpush1.bf16.msra.mxu0 %v8931
        %9254 = vmatprep.subr.bf16.mxu0 %v8934
        %9255 = vmatpush1.bf16.msra.mxu0 %v8933
        %9256 = vmatprep.subr.bf16.mxu0 %v8936
        %9257 = vmatpush1.bf16.msra.mxu0 %v8935
        %9258 = vmatprep.subr.bf16.mxu0 %v8938
        %9259 = vmatpush1.bf16.msra.mxu0 %v8937
        %9260 = vmatprep.subr.bf16.mxu0 %v8940
        %9261 = vmatpush1.bf16.msra.mxu0 %v8939
        %9262 = vmatprep.mubr.bf16.mxu0 %v8223
        %9263 = vmatmul.mubr.bf16.gmra.mrb[0].mxu0 %v8222
        %v9264 = vpop.f32.mrb[0].mxu0
        %v9265 = vadd.f32 %v9222, %v9264
        %v9266 = vpop.f32.mrb[0].mxu0
        %v9267 = vadd.f32 %v9224, %v9266
        %v9268 = vpop.f32.mrb[0].mxu0
        %v9269 = vadd.f32 %v9226, %v9268
        %v9270 = vpop.f32.mrb[0].mxu0
        %v9271 = vadd.f32 %v9228, %v9270
        %9272 = vdwg.mxu0
        %9273 = vmatprep.subr.bf16.mxu0 %v8942
        %9274 = vmatpush1.bf16.msra.mxu0 %v8941
        %9275 = vmatprep.subr.bf16.mxu0 %v8944
        %9276 = vmatpush1.bf16.msra.mxu0 %v8943
        %9277 = vmatprep.subr.bf16.mxu0 %v8946
        %9278 = vmatpush1.bf16.msra.mxu0 %v8945
        %9279 = vmatprep.subr.bf16.mxu0 %v8948
        %9280 = vmatpush1.bf16.msra.mxu0 %v8947
        %9281 = vmatprep.subr.bf16.mxu0 %v8950
        %9282 = vmatpush1.bf16.msra.mxu0 %v8949
        %9283 = vmatprep.subr.bf16.mxu0 %v8952
        %9284 = vmatpush1.bf16.msra.mxu0 %v8951
        %9285 = vmatprep.subr.bf16.mxu0 %v8954
        %9286 = vmatpush1.bf16.msra.mxu0 %v8953
        %9287 = vmatprep.subr.bf16.mxu0 %v8956
        %9288 = vmatpush1.bf16.msra.mxu0 %v8955
        %9289 = vmatprep.subr.bf16.mxu0 0
        %9290 = vmatpush1.bf16.msra.mxu0 0
        %9291 = vmatprep.subr.bf16.mxu0 0
        %9292 = vmatpush1.bf16.msra.mxu0 0
        %9293 = vmatprep.subr.bf16.mxu0 0
        %9294 = vmatpush1.bf16.msra.mxu0 0
        %9295 = vmatprep.subr.bf16.mxu0 0
        %9296 = vmatpush1.bf16.msra.mxu0 0
        %9297 = vmatprep.subr.bf16.mxu0 0
        %9298 = vmatpush1.bf16.msra.mxu0 0
        %9299 = vmatprep.subr.bf16.mxu0 0
        %9300 = vmatpush1.bf16.msra.mxu0 0
        %9301 = vmatprep.subr.bf16.mxu0 0
        %9302 = vmatpush1.bf16.msra.mxu0 0
        %9303 = vmatprep.subr.bf16.mxu0 0
        %9304 = vmatpush1.bf16.msra.mxu0 0
        %9305 = vmatprep.mubr.bf16.mxu0 0
        %9306 = vmatmul.mubr.bf16.gmra.mrb[0].mxu0 %v8224
        %v9307 = vpop.f32.mrb[0].mxu0
        %v9308 = vadd.f32 %v9265, %v9307
        %v9309 = vpop.f32.mrb[0].mxu0
        %v9310 = vadd.f32 %v9267, %v9309
        %v9311 = vpop.f32.mrb[0].mxu0
        %v9312 = vadd.f32 %v9269, %v9311
        %v9313 = vpop.f32.mrb[0].mxu0
        %v9314 = vadd.f32 %v9271, %v9313
        %9315 = vdwg.mxu0
        %v9316 = vmax.f32 %v9308, 0.0
        %v9317 = vmax.f32 %v9310, 0.0
        %v9318 = vmax.f32 %v9312, 0.0
        %v9319 = vmax.f32 %v9314, 0.0
        %v9320 = vsel %vm2171, %v9318, 0.0
        %v9321 = vadd.f32 %v9316, %v9320
        %v9322 = vrot.slane %v9321, 4
        %v9323 = vadd.f32 %v9321, %v9322
        %v9324 = vrot.slane %v9323, 2
        %v9325 = vadd.f32 %v9323, %v9324
        %v9326 = vrot.slane %v9325, 1
        %v9327 = vadd.f32 %v9325, %v9326
        %v9328 = vsel %vm2171, %v9319, 0.0
        %v9329 = vadd.f32 %v9317, %v9328
        %v9330 = vrot.slane %v9329, 4
        %v9331 = vadd.f32 %v9329, %v9330
        %v9332 = vrot.slane %v9331, 2
        %v9333 = vadd.f32 %v9331, %v9332
        %v9334 = vrot.slane %v9333, 1
        %v9335 = vadd.f32 %v9333, %v9334
        %v9336 = vmul.f32 %v9327, 0.11111111
        %v9337 = vmul.f32 %v9335, 0.11111111
        %v9338 = vpack.c.bf16 %v9336, %v9336
        %v9339 = vpack.c.bf16 %v9337, %v9337
        %v9340 = vld [vmem:[#allocation10] sm:$0xff]
        %v9341 = vld [vmem:[#allocation10 + $0x8] sm:$0xff]
        %v9342 = vld [vmem:[#allocation10 + $0x10] sm:$0xff]
        %v9343 = vld [vmem:[#allocation10 + $0x18] sm:$0xff]
        %v9344 = vld [vmem:[#allocation10 + $0x20] sm:$0xff]
        %v9345 = vld [vmem:[#allocation10 + $0x28] sm:$0xff]
        %v9346 = vld [vmem:[#allocation10 + $0x30] sm:$0xff]
        %v9347 = vld [vmem:[#allocation10 + $0x38] sm:$0xff]
        %v9348 = vld [vmem:[#allocation10 + $0x40] sm:$0xff]
        %v9349 = vld [vmem:[#allocation10 + $0x48] sm:$0xff]
        %v9350 = vld [vmem:[#allocation10 + $0x50] sm:$0xff]
        %v9351 = vld [vmem:[#allocation10 + $0x58] sm:$0xff]
        %v9352 = vld [vmem:[#allocation10 + $0x60] sm:$0xff]
        %v9353 = vld [vmem:[#allocation10 + $0x68] sm:$0xff]
        %v9354 = vld [vmem:[#allocation10 + $0x70] sm:$0xff]
        %v9355 = vld [vmem:[#allocation10 + $0x78] sm:$0xff]
        %v9356 = vld [vmem:[#allocation10 + $0x80] sm:$0xff]
        %v9357 = vld [vmem:[#allocation10 + $0x88] sm:$0xff]
        %v9358 = vld [vmem:[#allocation10 + $0x90] sm:$0xff]
        %v9359 = vld [vmem:[#allocation10 + $0x98] sm:$0xff]
        %v9360 = vld [vmem:[#allocation10 + $0xa0] sm:$0xff]
        %v9361 = vld [vmem:[#allocation10 + $0xa8] sm:$0xff]
        %v9362 = vld [vmem:[#allocation10 + $0xb0] sm:$0xff]
        %v9363 = vld [vmem:[#allocation10 + $0xb8] sm:$0xff]
        %v9364 = vld [vmem:[#allocation10 + $0xc0] sm:$0xff]
        %v9365 = vld [vmem:[#allocation10 + $0xc8] sm:$0xff]
        %v9366 = vld [vmem:[#allocation10 + $0xd0] sm:$0xff]
        %v9367 = vld [vmem:[#allocation10 + $0xd8] sm:$0xff]
        %v9368 = vld [vmem:[#allocation10 + $0xe0] sm:$0xff]
        %v9369 = vld [vmem:[#allocation10 + $0xe8] sm:$0xff]
        %v9370 = vld [vmem:[#allocation10 + $0xf0] sm:$0xff]
        %v9371 = vld [vmem:[#allocation10 + $0xf8] sm:$0xff]
        %v9372 = vld [vmem:[%s17] sm:$0x3]
        %v9405 = vunpack.c.l.b16 %v9340
        %v9406 = vunpack.c.h.b16 %v9340
        %v9407 = vunpack.c.l.b16 %v9341
        %v9408 = vunpack.c.h.b16 %v9341
        %v9409 = vunpack.c.l.b16 %v9342
        %v9410 = vunpack.c.h.b16 %v9342
        %v9411 = vunpack.c.l.b16 %v9343
        %v9412 = vunpack.c.h.b16 %v9343
        %v9413 = vunpack.c.l.b16 %v9344
        %v9414 = vunpack.c.h.b16 %v9344
        %v9415 = vunpack.c.l.b16 %v9345
        %v9416 = vunpack.c.h.b16 %v9345
        %v9417 = vunpack.c.l.b16 %v9346
        %v9418 = vunpack.c.h.b16 %v9346
        %v9419 = vunpack.c.l.b16 %v9347
        %v9420 = vunpack.c.h.b16 %v9347
        %v9421 = vunpack.c.l.b16 %v9348
        %v9422 = vunpack.c.h.b16 %v9348
        %v9423 = vunpack.c.l.b16 %v9349
        %v9424 = vunpack.c.h.b16 %v9349
        %v9425 = vunpack.c.l.b16 %v9350
        %v9426 = vunpack.c.h.b16 %v9350
        %v9427 = vunpack.c.l.b16 %v9351
        %v9428 = vunpack.c.h.b16 %v9351
        %v9429 = vunpack.c.l.b16 %v9352
        %v9430 = vunpack.c.h.b16 %v9352
        %v9431 = vunpack.c.l.b16 %v9353
        %v9432 = vunpack.c.h.b16 %v9353
        %v9433 = vunpack.c.l.b16 %v9354
        %v9434 = vunpack.c.h.b16 %v9354
        %v9435 = vunpack.c.l.b16 %v9355
        %v9436 = vunpack.c.h.b16 %v9355
        %v9437 = vunpack.c.l.b16 %v9356
        %v9438 = vunpack.c.h.b16 %v9356
        %v9439 = vunpack.c.l.b16 %v9357
        %v9440 = vunpack.c.h.b16 %v9357
        %v9441 = vunpack.c.l.b16 %v9358
        %v9442 = vunpack.c.h.b16 %v9358
        %v9443 = vunpack.c.l.b16 %v9359
        %v9444 = vunpack.c.h.b16 %v9359
        %v9445 = vunpack.c.l.b16 %v9360
        %v9446 = vunpack.c.h.b16 %v9360
        %v9447 = vunpack.c.l.b16 %v9361
        %v9448 = vunpack.c.h.b16 %v9361
        %v9449 = vunpack.c.l.b16 %v9362
        %v9450 = vunpack.c.h.b16 %v9362
        %v9451 = vunpack.c.l.b16 %v9363
        %v9452 = vunpack.c.h.b16 %v9363
        %v9453 = vunpack.c.l.b16 %v9364
        %v9454 = vunpack.c.h.b16 %v9364
        %v9455 = vunpack.c.l.b16 %v9365
        %v9456 = vunpack.c.h.b16 %v9365
        %v9457 = vunpack.c.l.b16 %v9366
        %v9458 = vunpack.c.h.b16 %v9366
        %v9459 = vunpack.c.l.b16 %v9367
        %v9460 = vunpack.c.h.b16 %v9367
        %v9461 = vunpack.c.l.b16 %v9368
        %v9462 = vunpack.c.h.b16 %v9368
        %v9463 = vunpack.c.l.b16 %v9369
        %v9464 = vunpack.c.h.b16 %v9369
        %v9465 = vunpack.c.l.b16 %v9370
        %v9466 = vunpack.c.h.b16 %v9370
        %v9467 = vunpack.c.l.b16 %v9371
        %v9468 = vunpack.c.h.b16 %v9371
        %v9469 = vpack.c.b16 %v9407, %v9405
        %v9470 = vpack.c.b16 %v9408, %v9406
        %v9471 = vpack.c.b16 %v9411, %v9409
        %v9472 = vpack.c.b16 %v9412, %v9410
        %v9473 = vpack.c.b16 %v9415, %v9413
        %v9474 = vpack.c.b16 %v9416, %v9414
        %v9475 = vpack.c.b16 %v9419, %v9417
        %v9476 = vpack.c.b16 %v9420, %v9418
        %v9477 = vpack.c.b16 %v9423, %v9421
        %v9478 = vpack.c.b16 %v9424, %v9422
        %v9479 = vpack.c.b16 %v9427, %v9425
        %v9480 = vpack.c.b16 %v9428, %v9426
        %v9481 = vpack.c.b16 %v9431, %v9429
        %v9482 = vpack.c.b16 %v9432, %v9430
        %v9483 = vpack.c.b16 %v9435, %v9433
        %v9484 = vpack.c.b16 %v9436, %v9434
        %v9485 = vpack.c.b16 %v9439, %v9437
        %v9486 = vpack.c.b16 %v9440, %v9438
        %v9487 = vpack.c.b16 %v9443, %v9441
        %v9488 = vpack.c.b16 %v9444, %v9442
        %v9489 = vpack.c.b16 %v9447, %v9445
        %v9490 = vpack.c.b16 %v9448, %v9446
        %v9491 = vpack.c.b16 %v9451, %v9449
        %v9492 = vpack.c.b16 %v9452, %v9450
        %v9493 = vpack.c.b16 %v9455, %v9453
        %v9494 = vpack.c.b16 %v9456, %v9454
        %v9495 = vpack.c.b16 %v9459, %v9457
        %v9496 = vpack.c.b16 %v9460, %v9458
        %v9497 = vpack.c.b16 %v9463, %v9461
        %v9498 = vpack.c.b16 %v9464, %v9462
        %v9499 = vpack.c.b16 %v9467, %v9465
        %v9500 = vpack.c.b16 %v9468, %v9466
        %v9534 = vlaneseq
        %v9535 = vshrl.u32 %v9534, 7
        %v9536 = vsub.s32 0, %v9535
        %v9537 = vrot.slane %v9372, %v9536
        %v9538 = vlaneseq
        %v9539 = vshrl.u32 %v9538, 7
        %v9540 = vsub.s32 1, %v9539
        %v9541 = vrot.slane %v9372, %v9540
        %9544 = vmatprep.subr.bf16.mxu0 %v9470
        %9545 = vmatpush1.bf16.msra.mxu0 %v9469
        %9546 = vmatprep.subr.bf16.mxu0 %v9472
        %9547 = vmatpush1.bf16.msra.mxu0 %v9471
        %9548 = vmatprep.subr.bf16.mxu0 %v9474
        %9549 = vmatpush1.bf16.msra.mxu0 %v9473
        %9550 = vmatprep.subr.bf16.mxu0 %v9476
        %9551 = vmatpush1.bf16.msra.mxu0 %v9475
        %9552 = vmatprep.subr.bf16.mxu0 %v9478
        %9553 = vmatpush1.bf16.msra.mxu0 %v9477
        %9554 = vmatprep.subr.bf16.mxu0 %v9480
        %9555 = vmatpush1.bf16.msra.mxu0 %v9479
        %9556 = vmatprep.subr.bf16.mxu0 %v9482
        %9557 = vmatpush1.bf16.msra.mxu0 %v9481
        %9558 = vmatprep.subr.bf16.mxu0 %v9484
        %9559 = vmatpush1.bf16.msra.mxu0 %v9483
        %9560 = vmatprep.subr.bf16.mxu0 %v9486
        %9561 = vmatpush1.bf16.msra.mxu0 %v9485
        %9562 = vmatprep.subr.bf16.mxu0 %v9488
        %9563 = vmatpush1.bf16.msra.mxu0 %v9487
        %9564 = vmatprep.subr.bf16.mxu0 %v9490
        %9565 = vmatpush1.bf16.msra.mxu0 %v9489
        %9566 = vmatprep.subr.bf16.mxu0 %v9492
        %9567 = vmatpush1.bf16.msra.mxu0 %v9491
        %9568 = vmatprep.subr.bf16.mxu0 %v9494
        %9569 = vmatpush1.bf16.msra.mxu0 %v9493
        %9570 = vmatprep.subr.bf16.mxu0 %v9496
        %9571 = vmatpush1.bf16.msra.mxu0 %v9495
        %9572 = vmatprep.subr.bf16.mxu0 %v9498
        %9573 = vmatpush1.bf16.msra.mxu0 %v9497
        %9574 = vmatprep.subr.bf16.mxu0 %v9500
        %9575 = vmatpush1.bf16.msra.mxu0 %v9499
        %9576 = vmatprep.mubr.bf16.mxu0 %v9339
        %9577 = vmatmul.mubr.bf16.gmra.mrb[0].mxu0 %v9338
        %v9578 = vpop.f32.mrb[0].mxu0
        %v9579 = vadd.f32 %v9537, %v9578
        %v9580 = vpop.f32.mrb[0].mxu0
        %v9581 = vadd.f32 %v9541, %v9580
        %v9582 = vpop.f32.mrb[0].mxu0
        %v9583 = vpop.f32.mrb[0].mxu0
        %9584 = vdwg.mxu0
        %v9585 = vmax.f32 %v9579, 0.0
        %v9586 = vmax.f32 %v9581, 0.0
        %v9587 = vpack.c.bf16 %v9585, %v9585
        %v9588 = vpack.c.bf16 %v9586, %v9586
        %v9589 = vld [vmem:[%s18] sm:$0xf]
        %v9590 = vld [vmem:[%s18 + $0x4] sm:$0xf]
        %v9591 = vld [vmem:[%s18 + $0x8] sm:$0xf]
        %v9592 = vld [vmem:[%s18 + $0xc] sm:$0xf]
        %v9593 = vld [vmem:[%s18 + $0x10] sm:$0xf]
        %v9594 = vld [vmem:[%s18 + $0x14] sm:$0xf]
        %v9595 = vld [vmem:[%s18 + $0x18] sm:$0xf]
        %v9596 = vld [vmem:[%s18 + $0x1c] sm:$0xf]
        %v9597 = vld [vmem:[%s18 + $0x20] sm:$0xf]
        %v9598 = vld [vmem:[%s18 + $0x24] sm:$0xf]
        %v9599 = vld [vmem:[%s18 + $0x28] sm:$0xf]
        %v9600 = vld [vmem:[%s18 + $0x2c] sm:$0xf]
        %v9601 = vld [vmem:[%s18 + $0x30] sm:$0xf]
        %v9602 = vld [vmem:[%s18 + $0x34] sm:$0xf]
        %v9603 = vld [vmem:[%s18 + $0x38] sm:$0xf]
        %v9604 = vld [vmem:[%s18 + $0x3c] sm:$0xf]
        %v9605 = vld [vmem:[%s18 + $0x40] sm:$0xf]
        %v9606 = vld [vmem:[%s18 + $0x44] sm:$0xf]
        %v9607 = vld [vmem:[%s18 + $0x48] sm:$0xf]
        %v9608 = vld [vmem:[%s18 + $0x4c] sm:$0xf]
        %v9609 = vld [vmem:[%s18 + $0x50] sm:$0xf]
        %v9610 = vld [vmem:[%s18 + $0x54] sm:$0xf]
        %v9611 = vld [vmem:[%s18 + $0x58] sm:$0xf]
        %v9612 = vld [vmem:[%s18 + $0x5c] sm:$0xf]
        %v9613 = vld [vmem:[%s18 + $0x60] sm:$0xf]
        %v9614 = vld [vmem:[%s18 + $0x64] sm:$0xf]
        %v9615 = vld [vmem:[%s18 + $0x68] sm:$0xf]
        %v9616 = vld [vmem:[%s18 + $0x6c] sm:$0xf]
        %v9617 = vld [vmem:[%s18 + $0x70] sm:$0xf]
        %v9618 = vld [vmem:[%s18 + $0x74] sm:$0xf]
        %v9619 = vld [vmem:[%s18 + $0x78] sm:$0xf]
        %v9620 = vld [vmem:[%s18 + $0x7c] sm:$0xf]
        %v9621 = vld [vmem:[%s19] sm:$0x1]
        %v9654 = vunpack.c.l.b16 %v9589
        %v9655 = vunpack.c.l.b16 %v9590
        %v9656 = vunpack.c.l.b16 %v9591
        %v9657 = vunpack.c.l.b16 %v9592
        %v9658 = vunpack.c.l.b16 %v9593
        %v9659 = vunpack.c.l.b16 %v9594
        %v9660 = vunpack.c.l.b16 %v9595
        %v9661 = vunpack.c.l.b16 %v9596
        %v9662 = vunpack.c.l.b16 %v9597
        %v9663 = vunpack.c.l.b16 %v9598
        %v9664 = vunpack.c.l.b16 %v9599
        %v9665 = vunpack.c.l.b16 %v9600
        %v9666 = vunpack.c.l.b16 %v9601
        %v9667 = vunpack.c.l.b16 %v9602
        %v9668 = vunpack.c.l.b16 %v9603
        %v9669 = vunpack.c.l.b16 %v9604
        %v9670 = vunpack.c.l.b16 %v9605
        %v9671 = vunpack.c.l.b16 %v9606
        %v9672 = vunpack.c.l.b16 %v9607
        %v9673 = vunpack.c.l.b16 %v9608
        %v9674 = vunpack.c.l.b16 %v9609
        %v9675 = vunpack.c.l.b16 %v9610
        %v9676 = vunpack.c.l.b16 %v9611
        %v9677 = vunpack.c.l.b16 %v9612
        %v9678 = vunpack.c.l.b16 %v9613
        %v9679 = vunpack.c.l.b16 %v9614
        %v9680 = vunpack.c.l.b16 %v9615
        %v9681 = vunpack.c.l.b16 %v9616
        %v9682 = vunpack.c.l.b16 %v9617
        %v9683 = vunpack.c.l.b16 %v9618
        %v9684 = vunpack.c.l.b16 %v9619
        %v9685 = vunpack.c.l.b16 %v9620
        %v9686 = vpack.c.b16 %v9655, %v9654
        %v9687 = vpack.c.b16 %v9657, %v9656
        %v9688 = vpack.c.b16 %v9659, %v9658
        %v9689 = vpack.c.b16 %v9661, %v9660
        %v9690 = vpack.c.b16 %v9663, %v9662
        %v9691 = vpack.c.b16 %v9665, %v9664
        %v9692 = vpack.c.b16 %v9667, %v9666
        %v9693 = vpack.c.b16 %v9669, %v9668
        %v9694 = vpack.c.b16 %v9671, %v9670
        %v9695 = vpack.c.b16 %v9673, %v9672
        %v9696 = vpack.c.b16 %v9675, %v9674
        %v9697 = vpack.c.b16 %v9677, %v9676
        %v9698 = vpack.c.b16 %v9679, %v9678
        %v9699 = vpack.c.b16 %v9681, %v9680
        %v9700 = vpack.c.b16 %v9683, %v9682
        %v9701 = vpack.c.b16 %v9685, %v9684
        %9718 = vmatprep.subr.bf16.mxu0 0
        %9719 = vmatpush1.bf16.msra.mxu0 %v9686
        %9720 = vmatprep.subr.bf16.mxu0 0
        %9721 = vmatpush1.bf16.msra.mxu0 %v9687
        %9722 = vmatprep.subr.bf16.mxu0 0
        %9723 = vmatpush1.bf16.msra.mxu0 %v9688
        %9724 = vmatprep.subr.bf16.mxu0 0
        %9725 = vmatpush1.bf16.msra.mxu0 %v9689
        %9726 = vmatprep.subr.bf16.mxu0 0
        %9727 = vmatpush1.bf16.msra.mxu0 %v9690
        %9728 = vmatprep.subr.bf16.mxu0 0
        %9729 = vmatpush1.bf16.msra.mxu0 %v9691
        %9730 = vmatprep.subr.bf16.mxu0 0
        %9731 = vmatpush1.bf16.msra.mxu0 %v9692
        %9732 = vmatprep.subr.bf16.mxu0 0
        %9733 = vmatpush1.bf16.msra.mxu0 %v9693
        %9734 = vmatprep.subr.bf16.mxu0 0
        %9735 = vmatpush1.bf16.msra.mxu0 %v9694
        %9736 = vmatprep.subr.bf16.mxu0 0
        %9737 = vmatpush1.bf16.msra.mxu0 %v9695
        %9738 = vmatprep.subr.bf16.mxu0 0
        %9739 = vmatpush1.bf16.msra.mxu0 %v9696
        %9740 = vmatprep.subr.bf16.mxu0 0
        %9741 = vmatpush1.bf16.msra.mxu0 %v9697
        %9742 = vmatprep.subr.bf16.mxu0 0
        %9743 = vmatpush1.bf16.msra.mxu0 %v9698
        %9744 = vmatprep.subr.bf16.mxu0 0
        %9745 = vmatpush1.bf16.msra.mxu0 %v9699
        %9746 = vmatprep.subr.bf16.mxu0 0
        %9747 = vmatpush1.bf16.msra.mxu0 %v9700
        %9748 = vmatprep.subr.bf16.mxu0 0
        %9749 = vmatpush1.bf16.msra.mxu0 %v9701
        %9750 = vmatprep.mubr.bf16.mxu0 %v9588
        %9751 = vmatmul.mubr.bf16.gmra.mrb[0].mxu0 %v9587
        %v9752 = vpop.f32.mrb[0].mxu0
        %v9753 = vadd.f32 %v9621, %v9752
        %v9754 = vpop.f32.mrb[0].mxu0
        %v9755 = vpop.f32.mrb[0].mxu0
        %v9756 = vpop.f32.mrb[0].mxu0
        %9757 = vdwg.mxu0
        %vm9758 = vcmask 8192
        %9759 = vst.msk [vmem:[%s694] sm:$0x1] %vm9758, %v9753
        %s9760 = sand.u32 %s470, 1
        %s9761 = scalar_lea.sflag [#allocation4], %s9760
        %s9762 = sand.u32 %s470, 1
        %s9763 = scalar_lea.vmem [#allocation11], %s9762
        // Predicated region
        $region121: #{task3net_forward.1} parent=99 // pred_check
          %p9764 = pneg %p480
        $region122: #{task3net_forward.1} parent=99 // pred_check_branch
          %9766 = sbr.rel (%p9764) target = $region124
        $region123: #{task3net_forward.1} parent=99 // pred_region
          %s9768 = ssub.s32 16, 16
          %9769 = vsyncadd %s9761, %s9768
          %s9770 = smul.addr %s37, 16
          %s9771 = scalar_lea.hbm %s20, %s9770
          %s9773 = sshll.u32 %s9763, 4
          %s9774 = int_to_ptr.vmem [resolvable:$true] %s9773
          %9776 = dma.vmem_to_hbm [thread:$0]  %s9774, 16, %s9771, %s9761
        $region124: #{task3net_forward.1} parent=99 // pred_fallthru
          _
      $region100: #{task3net_forward.1} parent=5 // pred_fallthru
        _
      %p9777 = scmp.le.s32.totalorder 2, %s32
      // Predicated region
      $region125: #{task3net_forward.1} parent=5 // pred_check
        %p9778 = pneg %p9777
      $region126: #{task3net_forward.1} parent=5 // pred_check_branch
        %9780 = sbr.rel (%p9778) target = $region128
      $region127: #{task3net_forward.1} parent=5 // pred_region
        %s9781 = ssub.s32 %s32, 2
        // Predicated region
        $region129: #{task3net_forward.1} parent=127 // pred_check
          %p9782 = pneg %p486
        $region130: #{task3net_forward.1} parent=127 // pred_check_branch
          %9784 = sbr.rel (%p9782) target = $region132
        $region131: #{task3net_forward.1} parent=127 // pred_region
          %s9785 = sand.u32 %s471, 1
          %s9786 = scalar_lea.sflag [#allocation4], %s9785
          %s9787 = sand.u32 %s471, 1
          %s9788 = scalar_lea.vmem [#allocation11], %s9787
          %9789 = dma.done %s9786, 16
        $region132: #{task3net_forward.1} parent=127 // pred_fallthru
          _
      $region128: #{task3net_forward.1} parent=5 // pred_fallthru
        _
    $region6: #{task3net_forward.1} parent=1 // loop_footer
      %s36 = sadd.s32 1, %s32
    $region7: #{task3net_forward.1} parent=1 // loop_footer_branch
      %31 = sbr.rel target = $region3
    $region8: #{task3net_forward.1} parent=1 // loop_exit
      _
    %9790 = vsyncpa [#allocation3], 1
    %s9791 = scalar_lea.sflag [#allocation3], 1
    %9792 = vsyncpa %s9791, 1
    %9793 = vsyncpa [#allocation6], 1
    %9794 = vsyncpa [#allocation9], 1
    %9795 = vsyncpa [#allocation4], 1
    %s9796 = scalar_lea.sflag [#allocation4], 1
    %9797 = vsyncpa %s9796, 1

</llo_original>
